<compile_context>
chip_gen: v7x
topology: tpu7x:2x2x1
jax: 0.10.0
libtpu: 0.0.40
codegen_flags: <defaults>
</compile_context>

<pallas_src>
import functools

import jax
import jax.numpy as jnp
from jax.experimental import pallas as pl
from jax.experimental.pallas import tpu as pltpu

EPS = 1e-5  # nn.BatchNorm2d default eps

# "parallel" lets v7x's two TensorCores split the batch grid; 48 MB scoped VMEM is above the
# v5e (16 MiB) / v6e (32 MiB) scoped defaults and safely below v7x's 64 MiB physical VMEM.
_COMPILER_PARAMS = pltpu.CompilerParams(
    dimension_semantics=("parallel",),
    vmem_limit_bytes=48 * 1024 * 1024,
)


# ---------------------------------------------------------------------------
# In-kernel helper
# ---------------------------------------------------------------------------
def _conv3x3_tile(xin_f32, w_ref, pad_ref, st_ref, compute_dtype):
    """3x3 same-padding conv on one (H, W, Cin) f32 tile as a single K-folded MXU GEMM.

    Zero-pads `xin_f32` into the f32 VMEM halo scratch `pad_ref` ((H+2, W+2, Cin)), builds
    the (H*W, 9*Cin) tap matrix from nine shifted VMEM slices (no HBM im2col), runs one GEMM
    against `w_ref` ((9*Cin, Cout)) with f32 accumulation, and writes the per-tile BatchNorm
    partial stats (row 0 = sum, row 1 = sum of squares) into st_ref[0].
    Returns the (H*W, Cout) f32 conv result.
    """
    h, w, cin = xin_f32.shape
    pad_ref[...] = jnp.zeros_like(pad_ref)
    pad_ref[1:h + 1, 1:w + 1, :] = xin_f32
    cols = [pad_ref[dy:dy + h, dx:dx + w, :] for dy in range(3) for dx in range(3)]
    patches = jnp.concatenate(cols, axis=-1).reshape(h * w, 9 * cin)
    y = jnp.dot(patches.astype(compute_dtype), w_ref[...],
                preferred_element_type=jnp.float32)
    st_ref[0, 0:1, :] = jnp.sum(y, axis=0, keepdims=True)
    st_ref[0, 1:2, :] = jnp.sum(y * y, axis=0, keepdims=True)
    return y


# ---------------------------------------------------------------------------
# Pass 1: conv1 (+ fused 1x1 downsample BN stats)
# ---------------------------------------------------------------------------
def _conv1_pass(x, w1f, wdf, compute_dtype):
    """x: (N, H, W, Cin); w1f: (9*Cin, Cout); wdf: (Cin, Cout) or None.

    Returns y1 (N, H, W, Cout) pre-BN in compute_dtype, st1 (N, 2, Cout) f32 partial stats,
    and on the downsample path also std (N, 2, Cout) f32 partial stats of the 1x1 conv.
    """
    n, h, w, cin = x.shape
    cout = w1f.shape[1]

    if wdf is None:
        def kernel(x_ref, w_ref, y_ref, st_ref, pad_ref):
            y = _conv3x3_tile(x_ref[0].astype(jnp.float32), w_ref, pad_ref, st_ref,
                              compute_dtype)
            y_ref[0] = y.reshape(h, w, cout).astype(y_ref.dtype)
    else:
        def kernel(x_ref, w_ref, wd_ref, y_ref, st_ref, std_ref, pad_ref):
            y = _conv3x3_tile(x_ref[0].astype(jnp.float32), w_ref, pad_ref, st_ref,
                              compute_dtype)
            y_ref[0] = y.reshape(h, w, cout).astype(y_ref.dtype)
            # Fused 1x1 downsample: BN stats only; the value is recomputed in the output
            # pass, so the shortcut branch never round-trips an (M, Cout) array to HBM.
            xflat = x_ref[0].reshape(h * w, cin)
            idn = jnp.dot(xflat, wd_ref[...], preferred_element_type=jnp.float32)
            std_ref[0, 0:1, :] = jnp.sum(idn, axis=0, keepdims=True)
            std_ref[0, 1:2, :] = jnp.sum(idn * idn, axis=0, keepdims=True)

    x_spec = pl.BlockSpec((1, h, w, cin), lambda i: (i, 0, 0, 0))
    y_spec = pl.BlockSpec((1, h, w, cout), lambda i: (i, 0, 0, 0))
    st_spec = pl.BlockSpec((1, 2, cout), lambda i: (i, 0, 0))

    in_specs = [x_spec, pl.BlockSpec(w1f.shape, lambda i: (0, 0))]
    operands = [x, w1f]
    out_specs = [y_spec, st_spec]
    out_shape = [jax.ShapeDtypeStruct((n, h, w, cout), compute_dtype),
                 jax.ShapeDtypeStruct((n, 2, cout), jnp.float32)]
    if wdf is not None:
        in_specs.append(pl.BlockSpec(wdf.shape, lambda i: (0, 0)))
        operands.append(wdf)
        out_specs.append(st_spec)
        out_shape.append(jax.ShapeDtypeStruct((n, 2, cout), jnp.float32))

    return pl.pallas_call(
        kernel,
        grid=(n,),
        in_specs=in_specs,
        out_specs=tuple(out_specs),
        out_shape=tuple(out_shape),
        scratch_shapes=[pltpu.VMEM((h + 2, w + 2, cin), jnp.float32)],
        compiler_params=_COMPILER_PARAMS,
    )(*operands)


# ---------------------------------------------------------------------------
# Pass 2: fused BN1-apply + ReLU + conv2
# ---------------------------------------------------------------------------
def _conv2_pass(y1, w2f, scale1, shift1, compute_dtype):
    n, h, w, c = y1.shape

    def kernel(y1_ref, w_ref, sc_ref, sh_ref, y2_ref, st_ref, pad_ref):
        h1 = jnp.maximum(y1_ref[0].astype(jnp.float32) * sc_ref[...] + sh_ref[...], 0.0)
        y = _conv3x3_tile(h1, w_ref, pad_ref, st_ref, compute_dtype)
        y2_ref[0] = y.reshape(h, w, c).astype(y2_ref.dtype)

    tile4 = pl.BlockSpec((1, h, w, c), lambda i: (i, 0, 0, 0))
    vec = pl.BlockSpec((1, c), lambda i: (0, 0))
    return pl.pallas_call(
        kernel,
        grid=(n,),
        in_specs=[tile4, pl.BlockSpec(w2f.shape, lambda i: (0, 0)), vec, vec],
        out_specs=(tile4, pl.BlockSpec((1, 2, c), lambda i: (i, 0, 0))),
        out_shape=(jax.ShapeDtypeStruct((n, h, w, c), compute_dtype),
                   jax.ShapeDtypeStruct((n, 2, c), jnp.float32)),
        scratch_shapes=[pltpu.VMEM((h + 2, w + 2, c), jnp.float32)],
        compiler_params=_COMPILER_PARAMS,
    )(y1, w2f, scale1, shift1)


# ---------------------------------------------------------------------------
# Pass 3: BN2-apply + shortcut (identity or recomputed 1x1-conv/BN) + add + ReLU
# ---------------------------------------------------------------------------
def _output_pass(y2, x, scale2, shift2, wdf, scaled, shiftd):
    n, h, w, c = y2.shape
    cin = x.shape[-1]

    if wdf is None:
        def kernel(y2_ref, x_ref, sc2_ref, sh2_ref, o_ref):
            main = y2_ref[0].astype(jnp.float32) * sc2_ref[...] + sh2_ref[...]
            o_ref[0] = jnp.maximum(main + x_ref[0].astype(jnp.float32), 0.0)
    else:
        def kernel(y2_ref, x_ref, sc2_ref, sh2_ref, wd_ref, scd_ref, shd_ref, o_ref):
            main = y2_ref[0].astype(jnp.float32) * sc2_ref[...] + sh2_ref[...]
            xflat = x_ref[0].reshape(h * w, cin)
            idn = jnp.dot(xflat, wd_ref[...], preferred_element_type=jnp.float32)
            idn = idn.reshape(h, w, c) * scd_ref[...] + shd_ref[...]
            o_ref[0] = jnp.maximum(main + idn, 0.0)

    ytile = pl.BlockSpec((1, h, w, c), lambda i: (i, 0, 0, 0))
    xtile = pl.BlockSpec((1, h, w, cin), lambda i: (i, 0, 0, 0))
    vec = pl.BlockSpec((1, c), lambda i: (0, 0))
    in_specs = [ytile, xtile, vec, vec]
    operands = [y2, x, scale2, shift2]
    if wdf is not None:
        in_specs += [pl.BlockSpec(wdf.shape, lambda i: (0, 0)), vec, vec]
        operands += [wdf, scaled, shiftd]

    return pl.pallas_call(
        kernel,
        grid=(n,),
        in_specs=in_specs,
        out_specs=ytile,
        out_shape=jax.ShapeDtypeStruct((n, h, w, c), jnp.float32),
        compiler_params=_COMPILER_PARAMS,
    )(*operands)


# ---------------------------------------------------------------------------
# Wrapper-side glue
# ---------------------------------------------------------------------------
def _bn_affine(stats, count, gamma, beta):
    """Fold packed per-tile partial stats (row 0 = sum, row 1 = sumsq) into BN scale/shift."""
    s = jnp.sum(stats, axis=0)                     # (2, C)
    mean = s[0] / count
    # TODO(synk): E[x^2]-mean^2 can cancel catastrophically for large-magnitude activations
    # at scale; switch to a shifted / two-pass formulation if that regime matters.
    var = jnp.maximum(s[1] / count - mean * mean, 0.0)
    scale = gamma * jax.lax.rsqrt(var + EPS)
    shift = beta - mean * scale
    return scale[None, :], shift[None, :]          # (1, C) rows for in-kernel broadcast


def init_params(key, cin, cout):
    """Deterministic synthetic parameters matching the PyTorch module's shapes."""
    ks = jax.random.split(key, 6)
    p = {
        "w1": jax.random.normal(ks[0], (cout, cin, 3, 3), jnp.float32) * 0.1,
        "b1": jax.random.normal(ks[1], (cout,), jnp.float32) * 0.05,
        "g1": jnp.ones((cout,), jnp.float32),
        "beta1": jnp.zeros((cout,), jnp.float32),
        "w2": jax.random.normal(ks[2], (cout, cout, 3, 3), jnp.float32) * 0.1,
        "b2": jax.random.normal(ks[3], (cout,), jnp.float32) * 0.05,
        "g2": jnp.ones((cout,), jnp.float32),
        "beta2": jnp.zeros((cout,), jnp.float32),
    }
    if cin != cout:
        p["wd"] = jax.random.normal(ks[4], (cout, cin, 1, 1), jnp.float32) * 0.1
        p["bd"] = jax.random.normal(ks[5], (cout,), jnp.float32) * 0.05
        p["gd"] = jnp.ones((cout,), jnp.float32)
        p["betad"] = jnp.zeros((cout,), jnp.float32)
    return p


def residual_block_forward(x_nchw, params, *, compute_dtype=jnp.bfloat16):
    """Forward pass of ResidualBlock with train-mode (batch-statistics) BatchNorm.

    compute_dtype controls MXU operand / intermediate-activation dtype: bfloat16 gives
    2-4x MXU throughput and halves intermediate HBM traffic (accumulation stays f32);
    float32 reproduces the PyTorch numerics tightly.
    """
    x = jnp.transpose(x_nchw, (0, 2, 3, 1))  # NHWC: channels on the lane dim
    n, h, w, cin = x.shape
    cout = params["w1"].shape[0]
    m = n * h * w
    has_ds = "wd" in params

    def fold_w(wt):  # (Cout, Cin, 3, 3) -> (9*Cin, Cout), row order (dy, dx, cin)
        co, ci, kh, kw = wt.shape
        return jnp.transpose(wt, (2, 3, 1, 0)).reshape(kh * kw * ci, co).astype(compute_dtype)

    x_c = x.astype(compute_dtype)
    w1f = fold_w(params["w1"])
    w2f = fold_w(params["w2"])
    wdf = (jnp.transpose(params["wd"][:, :, 0, 0], (1, 0)).astype(compute_dtype)
           if has_ds else None)

    # NOTE: conv biases (b1/b2/bd) are intentionally NOT applied: a per-channel bias added
    # before train-mode BatchNorm cancels exactly in the mean subtraction.

    # Pass 1: conv1 GEMM (+ fused 1x1 downsample BN stats), one image per grid step.
    if has_ds:
        y1, st1, std = _conv1_pass(x_c, w1f, wdf, compute_dtype)
        scaled, shiftd = _bn_affine(std, m, params["gd"], params["betad"])
    else:
        y1, st1 = _conv1_pass(x_c, w1f, None, compute_dtype)
        scaled = shiftd = None
    scale1, shift1 = _bn_affine(st1, m, params["g1"], params["beta1"])

    # Pass 2: BN1-apply + ReLU fused into the conv2 GEMM.
    y2, st2 = _conv2_pass(y1, w2f, scale1, shift1, compute_dtype)
    scale2, shift2 = _bn_affine(st2, m, params["g2"], params["beta2"])

    # Pass 3: BN2-apply + shortcut (+ recomputed 1x1-conv/BN) + add + ReLU.
    out = _output_pass(y2, x_c, scale2, shift2, wdf, scaled, shiftd)
    return jnp.transpose(out, (0, 3, 1, 2))  # back to NCHW


# ---------------------------------------------------------------------------
# Pure-JAX reference (for correctness check)
# ---------------------------------------------------------------------------
def reference_forward(x_nchw, params):
    def conv(x, wt, b, pad):
        y = jax.lax.conv_general_dilated(
            x, wt, (1, 1), pad,
            dimension_numbers=("NCHW", "OIHW", "NCHW"),
            precision=jax.lax.Precision.HIGHEST)
        return y + b[None, :, None, None]

    def bn(x, g, beta):
        mean = jnp.mean(x, axis=(0, 2, 3), keepdims=True)
        var = jnp.mean((x - mean) ** 2, axis=(0, 2, 3), keepdims=True)
        return ((x - mean) * jax.lax.rsqrt(var + EPS)
                * g[None, :, None, None] + beta[None, :, None, None])

    out = conv(x_nchw, params["w1"], params["b1"], ((1, 1), (1, 1)))
    out = jax.nn.relu(bn(out, params["g1"], params["beta1"]))
    out = conv(out, params["w2"], params["b2"], ((1, 1), (1, 1)))
    out = bn(out, params["g2"], params["beta2"])
    if "wd" in params:
        idn = conv(x_nchw, params["wd"], params["bd"], ((0, 0), (0, 0)))
        idn = bn(idn, params["gd"], params["betad"])
    else:
        idn = x_nchw
    return jax.nn.relu(out + idn)


if __name__ == "__main__":
    key = jax.random.PRNGKey(0)
    kx, kp, kx2, kp2 = jax.random.split(key, 4)
    N, CIN, COUT, H, W = 2, 4, 8, 16, 16

    fwd_f32 = jax.jit(functools.partial(residual_block_forward, compute_dtype=jnp.float32))
    fwd_bf16 = jax.jit(functools.partial(residual_block_forward, compute_dtype=jnp.bfloat16))

    # Case 1: in_channels != out_channels (exercises the 1x1-conv/BN downsample path), f32.
    x = jax.random.normal(kx, (N, CIN, H, W), jnp.float32)
    params = init_params(kp, CIN, COUT)
    out = jax.block_until_ready(fwd_f32(x, params))
    assert out.shape == (N, COUT, H, W), out.shape
    ref = reference_forward(x, params)
    err = float(jnp.max(jnp.abs(out - ref)))
    assert err < 1e-3, f"downsample path (f32) mismatch vs reference: {err}"

    # Case 2: in_channels == out_channels (plain identity shortcut), f32.
    x2 = jax.random.normal(kx2, (N, COUT, H, W), jnp.float32)
    params2 = init_params(kp2, COUT, COUT)
    out2 = jax.block_until_ready(fwd_f32(x2, params2))
    assert out2.shape == (N, COUT, H, W), out2.shape
    err2 = float(jnp.max(jnp.abs(out2 - reference_forward(x2, params2))))
    assert err2 < 1e-3, f"identity path (f32) mismatch vs reference: {err2}"

    # Case 3: bfloat16 MXU operands (f32 accumulation) on the downsample path; looser
    # tolerance because of bf16 operand/intermediate rounding (~1e-2 scale after BN).
    out3 = jax.block_until_ready(fwd_bf16(x, params))
    err3 = float(jnp.max(jnp.abs(out3 - ref)))
    assert err3 < 1e-1, f"downsample path (bf16) mismatch vs reference: {err3}"

    print("KERNEL_OK")
</pallas_src>

<mosaic_0001>
module attributes {stable_mosaic.version = 11 : i64} {
  func.func @kernel(%arg0: i32, %arg1: memref<1x16x16x4xf32, #tpu.memory_space<vmem>>, %arg2: memref<36x8xf32, #tpu.memory_space<vmem>>, %arg3: memref<4x8xf32, #tpu.memory_space<vmem>>, %arg4: memref<1x16x16x8xf32, #tpu.memory_space<vmem>>, %arg5: memref<1x2x8xf32, #tpu.memory_space<vmem>>, %arg6: memref<1x2x8xf32, #tpu.memory_space<vmem>>, %arg7: memref<18x18x4xf32, #tpu.memory_space<vmem>>) attributes {dimension_semantics = [#tpu.dimension_semantics<parallel>], iteration_bounds = array<i64: 2>, scalar_prefetch = 0 : i64, scratch_operands = 1 : i64, tpu.core_type = #tpu.core_type<tc>, window_params = [{transform_indices = @transform_0, window_bounds = array<i64: 1, 16, 16, 4>}, {pipeline_mode = #tpu.pipeline_mode<synchronous>, transform_indices = @transform_1, window_bounds = array<i64: 36, 8>}, {pipeline_mode = #tpu.pipeline_mode<synchronous>, transform_indices = @transform_2, window_bounds = array<i64: 4, 8>}, {transform_indices = @transform_3, window_bounds = array<i64: 1, 16, 16, 8>}, {transform_indices = @transform_4, window_bounds = array<i64: 1, 2, 8>}, {transform_indices = @transform_5, window_bounds = array<i64: 1, 2, 8>}]} {
    %c0 = arith.constant 0 : index
    %c0_0 = arith.constant 0 : index
    %c0_1 = arith.constant 0 : index
    %c0_2 = arith.constant 0 : index
    %0 = vector.load %arg1[%c0, %c0_0, %c0_1, %c0_2] : memref<1x16x16x4xf32, #tpu.memory_space<vmem>>, vector<1x16x16x4xf32>
    %1 = vector.shape_cast %0 : vector<1x16x16x4xf32> to vector<16x16x4xf32>
    %cst = arith.constant 0.000000e+00 : f32
    %2 = vector.broadcast %cst : f32 to vector<18x18x4xf32>
    %c0_3 = arith.constant 0 : index
    %c0_4 = arith.constant 0 : index
    %c0_5 = arith.constant 0 : index
    %3 = vector.load %arg7[%c0_3, %c0_4, %c0_5] : memref<18x18x4xf32, #tpu.memory_space<vmem>>, vector<18x18x4xf32>
    tpu.vector_store %arg7[%c0_3, %c0_4, %c0_5], %2 {strides = array<i32>} : memref<18x18x4xf32, #tpu.memory_space<vmem>>, vector<18x18x4xf32>,
    %c1 = arith.constant 1 : index
    %c1_6 = arith.constant 1 : index
    %c0_7 = arith.constant 0 : index
    %4 = vector.load %arg7[%c1, %c1_6, %c0_7] : memref<18x18x4xf32, #tpu.memory_space<vmem>>, vector<16x16x4xf32>
    tpu.vector_store %arg7[%c1, %c1_6, %c0_7], %1 {strides = array<i32>} : memref<18x18x4xf32, #tpu.memory_space<vmem>>, vector<16x16x4xf32>,
    %c0_8 = arith.constant 0 : index
    %c0_9 = arith.constant 0 : index
    %c0_10 = arith.constant 0 : index
    %5 = vector.load %arg7[%c0_8, %c0_9, %c0_10] : memref<18x18x4xf32, #tpu.memory_space<vmem>>, vector<16x16x4xf32>
    %c0_11 = arith.constant 0 : index
    %c1_12 = arith.constant 1 : index
    %c0_13 = arith.constant 0 : index
    %6 = vector.load %arg7[%c0_11, %c1_12, %c0_13] : memref<18x18x4xf32, #tpu.memory_space<vmem>>, vector<16x16x4xf32>
    %c0_14 = arith.constant 0 : index
    %c2 = arith.constant 2 : index
    %c0_15 = arith.constant 0 : index
    %7 = vector.load %arg7[%c0_14, %c2, %c0_15] : memref<18x18x4xf32, #tpu.memory_space<vmem>>, vector<16x16x4xf32>
    %c1_16 = arith.constant 1 : index
    %c0_17 = arith.constant 0 : index
    %c0_18 = arith.constant 0 : index
    %8 = vector.load %arg7[%c1_16, %c0_17, %c0_18] : memref<18x18x4xf32, #tpu.memory_space<vmem>>, vector<16x16x4xf32>
    %c1_19 = arith.constant 1 : index
    %c1_20 = arith.constant 1 : index
    %c0_21 = arith.constant 0 : index
    %9 = vector.load %arg7[%c1_19, %c1_20, %c0_21] : memref<18x18x4xf32, #tpu.memory_space<vmem>>, vector<16x16x4xf32>
    %c1_22 = arith.constant 1 : index
    %c2_23 = arith.constant 2 : index
    %c0_24 = arith.constant 0 : index
    %10 = vector.load %arg7[%c1_22, %c2_23, %c0_24] : memref<18x18x4xf32, #tpu.memory_space<vmem>>, vector<16x16x4xf32>
    %c2_25 = arith.constant 2 : index
    %c0_26 = arith.constant 0 : index
    %c0_27 = arith.constant 0 : index
    %11 = vector.load %arg7[%c2_25, %c0_26, %c0_27] : memref<18x18x4xf32, #tpu.memory_space<vmem>>, vector<16x16x4xf32>
    %c2_28 = arith.constant 2 : index
    %c1_29 = arith.constant 1 : index
    %c0_30 = arith.constant 0 : index
    %12 = vector.load %arg7[%c2_28, %c1_29, %c0_30] : memref<18x18x4xf32, #tpu.memory_space<vmem>>, vector<16x16x4xf32>
    %c2_31 = arith.constant 2 : index
    %c2_32 = arith.constant 2 : index
    %c0_33 = arith.constant 0 : index
    %13 = vector.load %arg7[%c2_31, %c2_32, %c0_33] : memref<18x18x4xf32, #tpu.memory_space<vmem>>, vector<16x16x4xf32>
    %14 = tpu.concatenate %5, %6, %7, %8, %9, %10, %11, %12, %13 in 2 : vector<16x16x4xf32>, vector<16x16x4xf32>, vector<16x16x4xf32>, vector<16x16x4xf32>, vector<16x16x4xf32>, vector<16x16x4xf32>, vector<16x16x4xf32>, vector<16x16x4xf32>, vector<16x16x4xf32> -> vector<16x16x36xf32>
    %15 = vector.shape_cast %14 : vector<16x16x36xf32> to vector<256x36xf32>
    %c0_34 = arith.constant 0 : index
    %c0_35 = arith.constant 0 : index
    %16 = vector.load %arg2[%c0_34, %c0_35] : memref<36x8xf32, #tpu.memory_space<vmem>>, vector<36x8xf32>
    %cst_36 = arith.constant dense<0.000000e+00> : vector<256x8xf32>
    %17 = tpu.matmul %15, %16, %cst_36 {dimension_numbers = #tpu.dot_dimension_numbers<[1], [0], [0], [1], [0, 0, 1, 1], [], []>} : vector<256x36xf32>, vector<36x8xf32>, vector<256x8xf32> -> vector<256x8xf32>
    %cst_37 = arith.constant dense<0.000000e+00> : vector<8xf32>
    %18 = vector.multi_reduction <add>, %17, %cst_37 [0] : vector<256x8xf32> to vector<8xf32>
    %19 = vector.shape_cast %18 : vector<8xf32> to vector<1x8xf32>
    %c0_38 = arith.constant 0 : index
    %c0_39 = arith.constant 0 : index
    %c0_40 = arith.constant 0 : index
    %20 = vector.load %arg5[%c0_38, %c0_39, %c0_40] : memref<1x2x8xf32, #tpu.memory_space<vmem>>, vector<1x1x8xf32>
    %21 = vector.shape_cast %20 : vector<1x1x8xf32> to vector<1x8xf32>
    %22 = vector.shape_cast %19 : vector<1x8xf32> to vector<1x1x8xf32>
    tpu.vector_store %arg5[%c0_38, %c0_39, %c0_40], %22 {strides = array<i32>} : memref<1x2x8xf32, #tpu.memory_space<vmem>>, vector<1x1x8xf32>,
    %23 = arith.mulf %17, %17 : vector<256x8xf32>
    %cst_41 = arith.constant dense<0.000000e+00> : vector<8xf32>
    %24 = vector.multi_reduction <add>, %23, %cst_41 [0] : vector<256x8xf32> to vector<8xf32>
    %25 = vector.shape_cast %24 : vector<8xf32> to vector<1x8xf32>
    %c0_42 = arith.constant 0 : index
    %c1_43 = arith.constant 1 : index
    %c0_44 = arith.constant 0 : index
    %26 = vector.load %arg5[%c0_42, %c1_43, %c0_44] : memref<1x2x8xf32, #tpu.memory_space<vmem>>, vector<1x1x8xf32>
    %27 = vector.shape_cast %26 : vector<1x1x8xf32> to vector<1x8xf32>
    %28 = vector.shape_cast %25 : vector<1x8xf32> to vector<1x1x8xf32>
    tpu.vector_store %arg5[%c0_42, %c1_43, %c0_44], %28 {strides = array<i32>} : memref<1x2x8xf32, #tpu.memory_space<vmem>>, vector<1x1x8xf32>,
    %29 = vector.shape_cast %17 : vector<256x8xf32> to vector<16x16x8xf32>
    %c0_45 = arith.constant 0 : index
    %c0_46 = arith.constant 0 : index
    %c0_47 = arith.constant 0 : index
    %c0_48 = arith.constant 0 : index
    %30 = vector.load %arg4[%c0_45, %c0_46, %c0_47, %c0_48] : memref<1x16x16x8xf32, #tpu.memory_space<vmem>>, vector<1x16x16x8xf32>
    %31 = vector.shape_cast %30 : vector<1x16x16x8xf32> to vector<16x16x8xf32>
    %32 = vector.shape_cast %29 : vector<16x16x8xf32> to vector<1x16x16x8xf32>
    tpu.vector_store %arg4[%c0_45, %c0_46, %c0_47, %c0_48], %32 {strides = array<i32>} : memref<1x16x16x8xf32, #tpu.memory_space<vmem>>, vector<1x16x16x8xf32>,
    %c0_49 = arith.constant 0 : index
    %c0_50 = arith.constant 0 : index
    %c0_51 = arith.constant 0 : index
    %c0_52 = arith.constant 0 : index
    %33 = vector.load %arg1[%c0_49, %c0_50, %c0_51, %c0_52] : memref<1x16x16x4xf32, #tpu.memory_space<vmem>>, vector<1x16x16x4xf32>
    %34 = vector.shape_cast %33 : vector<1x16x16x4xf32> to vector<16x16x4xf32>
    %35 = vector.shape_cast %34 : vector<16x16x4xf32> to vector<256x4xf32>
    %c0_53 = arith.constant 0 : index
    %c0_54 = arith.constant 0 : index
    %36 = vector.load %arg3[%c0_53, %c0_54] : memref<4x8xf32, #tpu.memory_space<vmem>>, vector<4x8xf32>
    %cst_55 = arith.constant dense<0.000000e+00> : vector<256x8xf32>
    %37 = tpu.matmul %35, %36, %cst_55 {dimension_numbers = #tpu.dot_dimension_numbers<[1], [0], [0], [1], [0, 0, 1, 1], [], []>} : vector<256x4xf32>, vector<4x8xf32>, vector<256x8xf32> -> vector<256x8xf32>
    %cst_56 = arith.constant dense<0.000000e+00> : vector<8xf32>
    %38 = vector.multi_reduction <add>, %37, %cst_56 [0] : vector<256x8xf32> to vector<8xf32>
    %39 = vector.shape_cast %38 : vector<8xf32> to vector<1x8xf32>
    %c0_57 = arith.constant 0 : index
    %c0_58 = arith.constant 0 : index
    %c0_59 = arith.constant 0 : index
    %40 = vector.load %arg6[%c0_57, %c0_58, %c0_59] : memref<1x2x8xf32, #tpu.memory_space<vmem>>, vector<1x1x8xf32>
    %41 = vector.shape_cast %40 : vector<1x1x8xf32> to vector<1x8xf32>
    %42 = vector.shape_cast %39 : vector<1x8xf32> to vector<1x1x8xf32>
    tpu.vector_store %arg6[%c0_57, %c0_58, %c0_59], %42 {strides = array<i32>} : memref<1x2x8xf32, #tpu.memory_space<vmem>>, vector<1x1x8xf32>,
    %43 = arith.mulf %37, %37 : vector<256x8xf32>
    %cst_60 = arith.constant dense<0.000000e+00> : vector<8xf32>
    %44 = vector.multi_reduction <add>, %43, %cst_60 [0] : vector<256x8xf32> to vector<8xf32>
    %45 = vector.shape_cast %44 : vector<8xf32> to vector<1x8xf32>
    %c0_61 = arith.constant 0 : index
    %c1_62 = arith.constant 1 : index
    %c0_63 = arith.constant 0 : index
    %46 = vector.load %arg6[%c0_61, %c1_62, %c0_63] : memref<1x2x8xf32, #tpu.memory_space<vmem>>, vector<1x1x8xf32>
    %47 = vector.shape_cast %46 : vector<1x1x8xf32> to vector<1x8xf32>
    %48 = vector.shape_cast %45 : vector<1x8xf32> to vector<1x1x8xf32>
    tpu.vector_store %arg6[%c0_61, %c1_62, %c0_63], %48 {strides = array<i32>} : memref<1x2x8xf32, #tpu.memory_space<vmem>>, vector<1x1x8xf32>,
    return
  }
  func.func @transform_0(%arg0: i32) -> (i32, i32, i32, i32) {
    %c0_i32 = arith.constant 0 : i32
    %c0_i32_0 = arith.constant 0 : i32
    %c0_i32_1 = arith.constant 0 : i32
    %c0_i32_2 = arith.constant 0 : i32
    return %arg0, %c0_i32, %c0_i32_0, %c0_i32_1 : i32, i32, i32, i32
  }
  func.func @transform_1(%arg0: i32) -> (i32, i32) {
    %c0_i32 = arith.constant 0 : i32
    %c0_i32_0 = arith.constant 0 : i32
    %c0_i32_1 = arith.constant 0 : i32
    return %c0_i32, %c0_i32_0 : i32, i32
  }
  func.func @transform_2(%arg0: i32) -> (i32, i32) {
    %c0_i32 = arith.constant 0 : i32
    %c0_i32_0 = arith.constant 0 : i32
    %c0_i32_1 = arith.constant 0 : i32
    return %c0_i32, %c0_i32_0 : i32, i32
  }
  func.func @transform_3(%arg0: i32) -> (i32, i32, i32, i32) {
    %c0_i32 = arith.constant 0 : i32
    %c0_i32_0 = arith.constant 0 : i32
    %c0_i32_1 = arith.constant 0 : i32
    %c0_i32_2 = arith.constant 0 : i32
    return %arg0, %c0_i32, %c0_i32_0, %c0_i32_1 : i32, i32, i32, i32
  }
  func.func @transform_4(%arg0: i32) -> (i32, i32, i32) {
    %c0_i32 = arith.constant 0 : i32
    %c0_i32_0 = arith.constant 0 : i32
    %c0_i32_1 = arith.constant 0 : i32
    return %arg0, %c0_i32, %c0_i32_0 : i32, i32, i32
  }
  func.func @transform_5(%arg0: i32) -> (i32, i32, i32) {
    %c0_i32 = arith.constant 0 : i32
    %c0_i32_0 = arith.constant 0 : i32
    %c0_i32_1 = arith.constant 0 : i32
    return %arg0, %c0_i32, %c0_i32_0 : i32, i32, i32
  }
}

module attributes {stable_mosaic.version = 11 : i64} {
  func.func @kernel(%arg0: i32, %arg1: memref<1x16x16x8xf32, #tpu.memory_space<vmem>>, %arg2: memref<72x8xf32, #tpu.memory_space<vmem>>, %arg3: memref<1x8xf32, #tpu.memory_space<vmem>>, %arg4: memref<1x8xf32, #tpu.memory_space<vmem>>, %arg5: memref<1x16x16x8xf32, #tpu.memory_space<vmem>>, %arg6: memref<1x2x8xf32, #tpu.memory_space<vmem>>, %arg7: memref<18x18x8xf32, #tpu.memory_space<vmem>>) attributes {dimension_semantics = [#tpu.dimension_semantics<parallel>], iteration_bounds = array<i64: 2>, scalar_prefetch = 0 : i64, scratch_operands = 1 : i64, tpu.core_type = #tpu.core_type<tc>, window_params = [{transform_indices = @transform_0, window_bounds = array<i64: 1, 16, 16, 8>}, {pipeline_mode = #tpu.pipeline_mode<synchronous>, transform_indices = @transform_1, window_bounds = array<i64: 72, 8>}, {pipeline_mode = #tpu.pipeline_mode<synchronous>, transform_indices = @transform_2, window_bounds = array<i64: 1, 8>}, {pipeline_mode = #tpu.pipeline_mode<synchronous>, transform_indices = @transform_3, window_bounds = array<i64: 1, 8>}, {transform_indices = @transform_4, window_bounds = array<i64: 1, 16, 16, 8>}, {transform_indices = @transform_5, window_bounds = array<i64: 1, 2, 8>}]} {
    %c0 = arith.constant 0 : index
    %c0_0 = arith.constant 0 : index
    %c0_1 = arith.constant 0 : index
    %c0_2 = arith.constant 0 : index
    %0 = vector.load %arg1[%c0, %c0_0, %c0_1, %c0_2] : memref<1x16x16x8xf32, #tpu.memory_space<vmem>>, vector<1x16x16x8xf32>
    %1 = vector.shape_cast %0 : vector<1x16x16x8xf32> to vector<16x16x8xf32>
    %c0_3 = arith.constant 0 : index
    %c0_4 = arith.constant 0 : index
    %2 = vector.load %arg3[%c0_3, %c0_4] : memref<1x8xf32, #tpu.memory_space<vmem>>, vector<1x8xf32>
    %3 = vector.shape_cast %2 : vector<1x8xf32> to vector<1x1x8xf32>
    %4 = vector.broadcast %3 : vector<1x1x8xf32> to vector<16x16x8xf32>
    %5 = arith.mulf %1, %4 : vector<16x16x8xf32>
    %c0_5 = arith.constant 0 : index
    %c0_6 = arith.constant 0 : index
    %6 = vector.load %arg4[%c0_5, %c0_6] : memref<1x8xf32, #tpu.memory_space<vmem>>, vector<1x8xf32>
    %7 = vector.shape_cast %6 : vector<1x8xf32> to vector<1x1x8xf32>
    %8 = vector.broadcast %7 : vector<1x1x8xf32> to vector<16x16x8xf32>
    %9 = arith.addf %5, %8 : vector<16x16x8xf32>
    %cst = arith.constant 0.000000e+00 : f32
    %10 = vector.broadcast %cst : f32 to vector<16x16x8xf32>
    %11 = arith.maximumf %9, %10 : vector<16x16x8xf32>
    %cst_7 = arith.constant 0.000000e+00 : f32
    %12 = vector.broadcast %cst_7 : f32 to vector<18x18x8xf32>
    %c0_8 = arith.constant 0 : index
    %c0_9 = arith.constant 0 : index
    %c0_10 = arith.constant 0 : index
    %13 = vector.load %arg7[%c0_8, %c0_9, %c0_10] : memref<18x18x8xf32, #tpu.memory_space<vmem>>, vector<18x18x8xf32>
    tpu.vector_store %arg7[%c0_8, %c0_9, %c0_10], %12 {strides = array<i32>} : memref<18x18x8xf32, #tpu.memory_space<vmem>>, vector<18x18x8xf32>,
    %c1 = arith.constant 1 : index
    %c1_11 = arith.constant 1 : index
    %c0_12 = arith.constant 0 : index
    %14 = vector.load %arg7[%c1, %c1_11, %c0_12] : memref<18x18x8xf32, #tpu.memory_space<vmem>>, vector<16x16x8xf32>
    tpu.vector_store %arg7[%c1, %c1_11, %c0_12], %11 {strides = array<i32>} : memref<18x18x8xf32, #tpu.memory_space<vmem>>, vector<16x16x8xf32>,
    %c0_13 = arith.constant 0 : index
    %c0_14 = arith.constant 0 : index
    %c0_15 = arith.constant 0 : index
    %15 = vector.load %arg7[%c0_13, %c0_14, %c0_15] : memref<18x18x8xf32, #tpu.memory_space<vmem>>, vector<16x16x8xf32>
    %c0_16 = arith.constant 0 : index
    %c1_17 = arith.constant 1 : index
    %c0_18 = arith.constant 0 : index
    %16 = vector.load %arg7[%c0_16, %c1_17, %c0_18] : memref<18x18x8xf32, #tpu.memory_space<vmem>>, vector<16x16x8xf32>
    %c0_19 = arith.constant 0 : index
    %c2 = arith.constant 2 : index
    %c0_20 = arith.constant 0 : index
    %17 = vector.load %arg7[%c0_19, %c2, %c0_20] : memref<18x18x8xf32, #tpu.memory_space<vmem>>, vector<16x16x8xf32>
    %c1_21 = arith.constant 1 : index
    %c0_22 = arith.constant 0 : index
    %c0_23 = arith.constant 0 : index
    %18 = vector.load %arg7[%c1_21, %c0_22, %c0_23] : memref<18x18x8xf32, #tpu.memory_space<vmem>>, vector<16x16x8xf32>
    %c1_24 = arith.constant 1 : index
    %c1_25 = arith.constant 1 : index
    %c0_26 = arith.constant 0 : index
    %19 = vector.load %arg7[%c1_24, %c1_25, %c0_26] : memref<18x18x8xf32, #tpu.memory_space<vmem>>, vector<16x16x8xf32>
    %c1_27 = arith.constant 1 : index
    %c2_28 = arith.constant 2 : index
    %c0_29 = arith.constant 0 : index
    %20 = vector.load %arg7[%c1_27, %c2_28, %c0_29] : memref<18x18x8xf32, #tpu.memory_space<vmem>>, vector<16x16x8xf32>
    %c2_30 = arith.constant 2 : index
    %c0_31 = arith.constant 0 : index
    %c0_32 = arith.constant 0 : index
    %21 = vector.load %arg7[%c2_30, %c0_31, %c0_32] : memref<18x18x8xf32, #tpu.memory_space<vmem>>, vector<16x16x8xf32>
    %c2_33 = arith.constant 2 : index
    %c1_34 = arith.constant 1 : index
    %c0_35 = arith.constant 0 : index
    %22 = vector.load %arg7[%c2_33, %c1_34, %c0_35] : memref<18x18x8xf32, #tpu.memory_space<vmem>>, vector<16x16x8xf32>
    %c2_36 = arith.constant 2 : index
    %c2_37 = arith.constant 2 : index
    %c0_38 = arith.constant 0 : index
    %23 = vector.load %arg7[%c2_36, %c2_37, %c0_38] : memref<18x18x8xf32, #tpu.memory_space<vmem>>, vector<16x16x8xf32>
    %24 = tpu.concatenate %15, %16, %17, %18, %19, %20, %21, %22, %23 in 2 : vector<16x16x8xf32>, vector<16x16x8xf32>, vector<16x16x8xf32>, vector<16x16x8xf32>, vector<16x16x8xf32>, vector<16x16x8xf32>, vector<16x16x8xf32>, vector<16x16x8xf32>, vector<16x16x8xf32> -> vector<16x16x72xf32>
    %25 = vector.shape_cast %24 : vector<16x16x72xf32> to vector<256x72xf32>
    %c0_39 = arith.constant 0 : index
    %c0_40 = arith.constant 0 : index
    %26 = vector.load %arg2[%c0_39, %c0_40] : memref<72x8xf32, #tpu.memory_space<vmem>>, vector<72x8xf32>
    %cst_41 = arith.constant dense<0.000000e+00> : vector<256x8xf32>
    %27 = tpu.matmul %25, %26, %cst_41 {dimension_numbers = #tpu.dot_dimension_numbers<[1], [0], [0], [1], [0, 0, 1, 1], [], []>} : vector<256x72xf32>, vector<72x8xf32>, vector<256x8xf32> -> vector<256x8xf32>
    %cst_42 = arith.constant dense<0.000000e+00> : vector<8xf32>
    %28 = vector.multi_reduction <add>, %27, %cst_42 [0] : vector<256x8xf32> to vector<8xf32>
    %29 = vector.shape_cast %28 : vector<8xf32> to vector<1x8xf32>
    %c0_43 = arith.constant 0 : index
    %c0_44 = arith.constant 0 : index
    %c0_45 = arith.constant 0 : index
    %30 = vector.load %arg6[%c0_43, %c0_44, %c0_45] : memref<1x2x8xf32, #tpu.memory_space<vmem>>, vector<1x1x8xf32>
    %31 = vector.shape_cast %30 : vector<1x1x8xf32> to vector<1x8xf32>
    %32 = vector.shape_cast %29 : vector<1x8xf32> to vector<1x1x8xf32>
    tpu.vector_store %arg6[%c0_43, %c0_44, %c0_45], %32 {strides = array<i32>} : memref<1x2x8xf32, #tpu.memory_space<vmem>>, vector<1x1x8xf32>,
    %33 = arith.mulf %27, %27 : vector<256x8xf32>
    %cst_46 = arith.constant dense<0.000000e+00> : vector<8xf32>
    %34 = vector.multi_reduction <add>, %33, %cst_46 [0] : vector<256x8xf32> to vector<8xf32>
    %35 = vector.shape_cast %34 : vector<8xf32> to vector<1x8xf32>
    %c0_47 = arith.constant 0 : index
    %c1_48 = arith.constant 1 : index
    %c0_49 = arith.constant 0 : index
    %36 = vector.load %arg6[%c0_47, %c1_48, %c0_49] : memref<1x2x8xf32, #tpu.memory_space<vmem>>, vector<1x1x8xf32>
    %37 = vector.shape_cast %36 : vector<1x1x8xf32> to vector<1x8xf32>
    %38 = vector.shape_cast %35 : vector<1x8xf32> to vector<1x1x8xf32>
    tpu.vector_store %arg6[%c0_47, %c1_48, %c0_49], %38 {strides = array<i32>} : memref<1x2x8xf32, #tpu.memory_space<vmem>>, vector<1x1x8xf32>,
    %39 = vector.shape_cast %27 : vector<256x8xf32> to vector<16x16x8xf32>
    %c0_50 = arith.constant 0 : index
    %c0_51 = arith.constant 0 : index
    %c0_52 = arith.constant 0 : index
    %c0_53 = arith.constant 0 : index
    %40 = vector.load %arg5[%c0_50, %c0_51, %c0_52, %c0_53] : memref<1x16x16x8xf32, #tpu.memory_space<vmem>>, vector<1x16x16x8xf32>
    %41 = vector.shape_cast %40 : vector<1x16x16x8xf32> to vector<16x16x8xf32>
    %42 = vector.shape_cast %39 : vector<16x16x8xf32> to vector<1x16x16x8xf32>
    tpu.vector_store %arg5[%c0_50, %c0_51, %c0_52, %c0_53], %42 {strides = array<i32>} : memref<1x16x16x8xf32, #tpu.memory_space<vmem>>, vector<1x16x16x8xf32>,
    return
  }
  func.func @transform_0(%arg0: i32) -> (i32, i32, i32, i32) {
    %c0_i32 = arith.constant 0 : i32
    %c0_i32_0 = arith.constant 0 : i32
    %c0_i32_1 = arith.constant 0 : i32
    %c0_i32_2 = arith.constant 0 : i32
    return %arg0, %c0_i32, %c0_i32_0, %c0_i32_1 : i32, i32, i32, i32
  }
  func.func @transform_1(%arg0: i32) -> (i32, i32) {
    %c0_i32 = arith.constant 0 : i32
    %c0_i32_0 = arith.constant 0 : i32
    %c0_i32_1 = arith.constant 0 : i32
    return %c0_i32, %c0_i32_0 : i32, i32
  }
  func.func @transform_2(%arg0: i32) -> (i32, i32) {
    %c0_i32 = arith.constant 0 : i32
    %c0_i32_0 = arith.constant 0 : i32
    %c0_i32_1 = arith.constant 0 : i32
    return %c0_i32, %c0_i32_0 : i32, i32
  }
  func.func @transform_3(%arg0: i32) -> (i32, i32) {
    %c0_i32 = arith.constant 0 : i32
    %c0_i32_0 = arith.constant 0 : i32
    %c0_i32_1 = arith.constant 0 : i32
    return %c0_i32, %c0_i32_0 : i32, i32
  }
  func.func @transform_4(%arg0: i32) -> (i32, i32, i32, i32) {
    %c0_i32 = arith.constant 0 : i32
    %c0_i32_0 = arith.constant 0 : i32
    %c0_i32_1 = arith.constant 0 : i32
    %c0_i32_2 = arith.constant 0 : i32
    return %arg0, %c0_i32, %c0_i32_0, %c0_i32_1 : i32, i32, i32, i32
  }
  func.func @transform_5(%arg0: i32) -> (i32, i32, i32) {
    %c0_i32 = arith.constant 0 : i32
    %c0_i32_0 = arith.constant 0 : i32
    %c0_i32_1 = arith.constant 0 : i32
    return %arg0, %c0_i32, %c0_i32_0 : i32, i32, i32
  }
}

module attributes {stable_mosaic.version = 11 : i64} {
  func.func @kernel(%arg0: i32, %arg1: memref<1x16x16x8xf32, #tpu.memory_space<vmem>>, %arg2: memref<1x16x16x4xf32, #tpu.memory_space<vmem>>, %arg3: memref<1x8xf32, #tpu.memory_space<vmem>>, %arg4: memref<1x8xf32, #tpu.memory_space<vmem>>, %arg5: memref<4x8xf32, #tpu.memory_space<vmem>>, %arg6: memref<1x8xf32, #tpu.memory_space<vmem>>, %arg7: memref<1x8xf32, #tpu.memory_space<vmem>>, %arg8: memref<1x16x16x8xf32, #tpu.memory_space<vmem>>) attributes {dimension_semantics = [#tpu.dimension_semantics<parallel>], iteration_bounds = array<i64: 2>, scalar_prefetch = 0 : i64, scratch_operands = 0 : i64, tpu.core_type = #tpu.core_type<tc>, window_params = [{transform_indices = @transform_0, window_bounds = array<i64: 1, 16, 16, 8>}, {transform_indices = @transform_1, window_bounds = array<i64: 1, 16, 16, 4>}, {pipeline_mode = #tpu.pipeline_mode<synchronous>, transform_indices = @transform_2, window_bounds = array<i64: 1, 8>}, {pipeline_mode = #tpu.pipeline_mode<synchronous>, transform_indices = @transform_3, window_bounds = array<i64: 1, 8>}, {pipeline_mode = #tpu.pipeline_mode<synchronous>, transform_indices = @transform_4, window_bounds = array<i64: 4, 8>}, {pipeline_mode = #tpu.pipeline_mode<synchronous>, transform_indices = @transform_5, window_bounds = array<i64: 1, 8>}, {pipeline_mode = #tpu.pipeline_mode<synchronous>, transform_indices = @transform_6, window_bounds = array<i64: 1, 8>}, {transform_indices = @transform_7, window_bounds = array<i64: 1, 16, 16, 8>}]} {
    %c0 = arith.constant 0 : index
    %c0_0 = arith.constant 0 : index
    %c0_1 = arith.constant 0 : index
    %c0_2 = arith.constant 0 : index
    %0 = vector.load %arg1[%c0, %c0_0, %c0_1, %c0_2] : memref<1x16x16x8xf32, #tpu.memory_space<vmem>>, vector<1x16x16x8xf32>
    %1 = vector.shape_cast %0 : vector<1x16x16x8xf32> to vector<16x16x8xf32>
    %c0_3 = arith.constant 0 : index
    %c0_4 = arith.constant 0 : index
    %2 = vector.load %arg3[%c0_3, %c0_4] : memref<1x8xf32, #tpu.memory_space<vmem>>, vector<1x8xf32>
    %3 = vector.shape_cast %2 : vector<1x8xf32> to vector<1x1x8xf32>
    %4 = vector.broadcast %3 : vector<1x1x8xf32> to vector<16x16x8xf32>
    %5 = arith.mulf %1, %4 : vector<16x16x8xf32>
    %c0_5 = arith.constant 0 : index
    %c0_6 = arith.constant 0 : index
    %6 = vector.load %arg4[%c0_5, %c0_6] : memref<1x8xf32, #tpu.memory_space<vmem>>, vector<1x8xf32>
    %7 = vector.shape_cast %6 : vector<1x8xf32> to vector<1x1x8xf32>
    %8 = vector.broadcast %7 : vector<1x1x8xf32> to vector<16x16x8xf32>
    %9 = arith.addf %5, %8 : vector<16x16x8xf32>
    %c0_7 = arith.constant 0 : index
    %c0_8 = arith.constant 0 : index
    %c0_9 = arith.constant 0 : index
    %c0_10 = arith.constant 0 : index
    %10 = vector.load %arg2[%c0_7, %c0_8, %c0_9, %c0_10] : memref<1x16x16x4xf32, #tpu.memory_space<vmem>>, vector<1x16x16x4xf32>
    %11 = vector.shape_cast %10 : vector<1x16x16x4xf32> to vector<16x16x4xf32>
    %12 = vector.shape_cast %11 : vector<16x16x4xf32> to vector<256x4xf32>
    %c0_11 = arith.constant 0 : index
    %c0_12 = arith.constant 0 : index
    %13 = vector.load %arg5[%c0_11, %c0_12] : memref<4x8xf32, #tpu.memory_space<vmem>>, vector<4x8xf32>
    %cst = arith.constant dense<0.000000e+00> : vector<256x8xf32>
    %14 = tpu.matmul %12, %13, %cst {dimension_numbers = #tpu.dot_dimension_numbers<[1], [0], [0], [1], [0, 0, 1, 1], [], []>} : vector<256x4xf32>, vector<4x8xf32>, vector<256x8xf32> -> vector<256x8xf32>
    %15 = vector.shape_cast %14 : vector<256x8xf32> to vector<16x16x8xf32>
    %c0_13 = arith.constant 0 : index
    %c0_14 = arith.constant 0 : index
    %16 = vector.load %arg6[%c0_13, %c0_14] : memref<1x8xf32, #tpu.memory_space<vmem>>, vector<1x8xf32>
    %17 = vector.shape_cast %16 : vector<1x8xf32> to vector<1x1x8xf32>
    %18 = vector.broadcast %17 : vector<1x1x8xf32> to vector<16x16x8xf32>
    %19 = arith.mulf %15, %18 : vector<16x16x8xf32>
    %c0_15 = arith.constant 0 : index
    %c0_16 = arith.constant 0 : index
    %20 = vector.load %arg7[%c0_15, %c0_16] : memref<1x8xf32, #tpu.memory_space<vmem>>, vector<1x8xf32>
    %21 = vector.shape_cast %20 : vector<1x8xf32> to vector<1x1x8xf32>
    %22 = vector.broadcast %21 : vector<1x1x8xf32> to vector<16x16x8xf32>
    %23 = arith.addf %19, %22 : vector<16x16x8xf32>
    %24 = arith.addf %9, %23 : vector<16x16x8xf32>
    %cst_17 = arith.constant 0.000000e+00 : f32
    %25 = vector.broadcast %cst_17 : f32 to vector<16x16x8xf32>
    %26 = arith.maximumf %24, %25 : vector<16x16x8xf32>
    %c0_18 = arith.constant 0 : index
    %c0_19 = arith.constant 0 : index
    %c0_20 = arith.constant 0 : index
    %c0_21 = arith.constant 0 : index
    %27 = vector.load %arg8[%c0_18, %c0_19, %c0_20, %c0_21] : memref<1x16x16x8xf32, #tpu.memory_space<vmem>>, vector<1x16x16x8xf32>
    %28 = vector.shape_cast %27 : vector<1x16x16x8xf32> to vector<16x16x8xf32>
    %29 = vector.shape_cast %26 : vector<16x16x8xf32> to vector<1x16x16x8xf32>
    tpu.vector_store %arg8[%c0_18, %c0_19, %c0_20, %c0_21], %29 {strides = array<i32>} : memref<1x16x16x8xf32, #tpu.memory_space<vmem>>, vector<1x16x16x8xf32>,
    return
  }
  func.func @transform_0(%arg0: i32) -> (i32, i32, i32, i32) {
    %c0_i32 = arith.constant 0 : i32
    %c0_i32_0 = arith.constant 0 : i32
    %c0_i32_1 = arith.constant 0 : i32
    %c0_i32_2 = arith.constant 0 : i32
    return %arg0, %c0_i32, %c0_i32_0, %c0_i32_1 : i32, i32, i32, i32
  }
  func.func @transform_1(%arg0: i32) -> (i32, i32, i32, i32) {
    %c0_i32 = arith.constant 0 : i32
    %c0_i32_0 = arith.constant 0 : i32
    %c0_i32_1 = arith.constant 0 : i32
    %c0_i32_2 = arith.constant 0 : i32
    return %arg0, %c0_i32, %c0_i32_0, %c0_i32_1 : i32, i32, i32, i32
  }
  func.func @transform_2(%arg0: i32) -> (i32, i32) {
    %c0_i32 = arith.constant 0 : i32
    %c0_i32_0 = arith.constant 0 : i32
    %c0_i32_1 = arith.constant 0 : i32
    return %c0_i32, %c0_i32_0 : i32, i32
  }
  func.func @transform_3(%arg0: i32) -> (i32, i32) {
    %c0_i32 = arith.constant 0 : i32
    %c0_i32_0 = arith.constant 0 : i32
    %c0_i32_1 = arith.constant 0 : i32
    return %c0_i32, %c0_i32_0 : i32, i32
  }
  func.func @transform_4(%arg0: i32) -> (i32, i32) {
    %c0_i32 = arith.constant 0 : i32
    %c0_i32_0 = arith.constant 0 : i32
    %c0_i32_1 = arith.constant 0 : i32
    return %c0_i32, %c0_i32_0 : i32, i32
  }
  func.func @transform_5(%arg0: i32) -> (i32, i32) {
    %c0_i32 = arith.constant 0 : i32
    %c0_i32_0 = arith.constant 0 : i32
    %c0_i32_1 = arith.constant 0 : i32
    return %c0_i32, %c0_i32_0 : i32, i32
  }
  func.func @transform_6(%arg0: i32) -> (i32, i32) {
    %c0_i32 = arith.constant 0 : i32
    %c0_i32_0 = arith.constant 0 : i32
    %c0_i32_1 = arith.constant 0 : i32
    return %c0_i32, %c0_i32_0 : i32, i32
  }
  func.func @transform_7(%arg0: i32) -> (i32, i32, i32, i32) {
    %c0_i32 = arith.constant 0 : i32
    %c0_i32_0 = arith.constant 0 : i32
    %c0_i32_1 = arith.constant 0 : i32
    %c0_i32_2 = arith.constant 0 : i32
    return %arg0, %c0_i32, %c0_i32_0, %c0_i32_1 : i32, i32, i32, i32
  }
}

</mosaic_0001>

<llo_original>
// kernel: residual_block_forward.5
$region0: #{residual_block_forward.5}
  #allocation0 [shape = 'u32[]', space=smem, size = 0x4, offset = 0x4, fixed_abs, tag = 'smem constant byte address 0x4 - core index']
  #allocation1 [shape = 'u32[144,128]{1,0:T(1,128)}', space=vmem, size = 0x12000, scoped, tag = 'internal scratch']
  %s0 = inlined_call_operand.vmem [shape: f32[2,16,16,8], index: 0, kind: input, shape index: {}]
  %s1 = inlined_call_operand.vmem [shape: f32[2,16,16,4], index: 1, kind: input, shape index: {}]
  %s2 = inlined_call_operand.vmem [shape: f32[1,8], index: 2, kind: input, shape index: {}]
  %s3 = inlined_call_operand.vmem [shape: f32[1,8], index: 3, kind: input, shape index: {}]
  %s4 = inlined_call_operand.vmem [shape: f32[4,8], index: 4, kind: input, shape index: {}]
  %s5 = inlined_call_operand.vmem [shape: f32[1,8], index: 5, kind: input, shape index: {}]
  %s6 = inlined_call_operand.vmem [shape: f32[1,8], index: 6, kind: input, shape index: {}]
  %s7 = inlined_call_operand.vmem [shape: f32[2,16,16,8], index: 7, kind: output, shape index: {}]
  %s8 = sld [smem:[#allocation0]]
  $region61: #{residual_block_forward.5} parent=0
    _
  %s10 = ssub.s32 1, %s8
  %s11 = scalar_select 0, %s10, %s8
  loop: start=0, step=1, limit=4
  $region2: #{residual_block_forward.5} parent=0 // loop_pre_header
    _
  $region3: #{residual_block_forward.5} parent=0 // loop_header
    %s13 = sphi 0, %s17
    %p14 = scmp.ge.s32.totalorder %s13, 4
    %s23 = sphi 0, %s25
    %s26 = sphi 0, %s23
    %s27 = sphi 0, %s26
    %s43 = sphi 0, %s27
    %s49 = sphi 0, %s51
    %s52 = sphi 0, %s49
    %s53 = sphi 0, %s52
    %s69 = sphi 0, %s53
    %s73 = sphi 0, %s73
    %s75 = sphi 0, %s73
    %s76 = sphi 0, %s75
    %s90 = sphi 0, %s76
    %s94 = sphi 0, %s94
    %s96 = sphi 0, %s94
    %s97 = sphi 0, %s96
    %s111 = sphi 0, %s97
    %s115 = sphi 0, %s115
    %s117 = sphi 0, %s115
    %s118 = sphi 0, %s117
    %s132 = sphi 0, %s118
    %s136 = sphi 0, %s136
    %s138 = sphi 0, %s136
    %s139 = sphi 0, %s138
    %s153 = sphi 0, %s139
    %s157 = sphi 0, %s157
    %s159 = sphi 0, %s157
    %s160 = sphi 0, %s159
    %s174 = sphi 0, %s160
    %s180 = sphi 0, %s182
    %s183 = sphi 0, %s180
    %s184 = sphi 0, %s183
    %s200 = sphi 0, %s184
  $region4: #{residual_block_forward.5} parent=0 // loop_header_branch
    %16 = sbr.rel (%p14) target = $region8
  $region5: #{residual_block_forward.5} parent=0 // loop_body
    %s18 = ssub.s32 %s13, 1
    %s19 = ssub.s32 %s13, 2
    %s20 = sadd.s32 %s13, 1
    %s21 = ssub.s32 %s13, %s20
    %p22 = scmp.eq.s32.totalorder %s21, 0
    %s24 = sadd.s32 %s23, 1
    %s25 = scalar_select %p22, %s23, %s24
    %p28 = pneg %p22
    %p29 = scmp.eq.s32.totalorder %s13, 1
    %p30 = por %p28, %p29
    %p31 = scmp.ne.s32.totalorder %s23, %s26
    %p32 = scmp.eq.s32.totalorder %s13, 0
    %p33 = por %p31, %p32
    %p34 = scmp.ne.s32.totalorder %s23, %s26
    %p35 = scmp.eq.s32.totalorder %s18, 1
    %p36 = por %p34, %p35
    %p37 = scmp.ne.s32.totalorder %s26, %s27
    %p38 = scmp.eq.s32.totalorder %s18, 0
    %p39 = por %p37, %p38
    %p40 = scmp.ne.s32.totalorder %s26, %s27
    %p41 = scmp.eq.s32.totalorder %s19, 1
    %p42 = por %p40, %p41
    %p44 = scmp.ne.s32.totalorder %s27, %s43
    %p45 = scmp.eq.s32.totalorder %s19, 0
    %p46 = por %p44, %p45
    %s47 = ssub.s32 %s13, %s20
    %p48 = scmp.eq.s32.totalorder %s47, 0
    %s50 = sadd.s32 %s49, 1
    %s51 = scalar_select %p48, %s49, %s50
    %p54 = pneg %p48
    %p55 = scmp.eq.s32.totalorder %s13, 1
    %p56 = por %p54, %p55
    %p57 = scmp.ne.s32.totalorder %s49, %s52
    %p58 = scmp.eq.s32.totalorder %s13, 0
    %p59 = por %p57, %p58
    %p60 = scmp.ne.s32.totalorder %s49, %s52
    %p61 = scmp.eq.s32.totalorder %s18, 1
    %p62 = por %p60, %p61
    %p63 = scmp.ne.s32.totalorder %s52, %s53
    %p64 = scmp.eq.s32.totalorder %s18, 0
    %p65 = por %p63, %p64
    %p66 = scmp.ne.s32.totalorder %s52, %s53
    %p67 = scmp.eq.s32.totalorder %s19, 1
    %p68 = por %p66, %p67
    %p70 = scmp.ne.s32.totalorder %s53, %s69
    %p71 = scmp.eq.s32.totalorder %s19, 0
    %p72 = por %p70, %p71
    %s74 = sadd.s32 %s73, 1
    %p77 = scmp.eq.s32.totalorder %s13, 1
    %p78 = scmp.ne.s32.totalorder %s73, %s75
    %p79 = scmp.eq.s32.totalorder %s13, 0
    %p80 = por %p78, %p79
    %p81 = scmp.ne.s32.totalorder %s73, %s75
    %p82 = scmp.eq.s32.totalorder %s18, 1
    %p83 = por %p81, %p82
    %p84 = scmp.ne.s32.totalorder %s75, %s76
    %p85 = scmp.eq.s32.totalorder %s18, 0
    %p86 = por %p84, %p85
    %p87 = scmp.ne.s32.totalorder %s75, %s76
    %p88 = scmp.eq.s32.totalorder %s19, 1
    %p89 = por %p87, %p88
    %p91 = scmp.ne.s32.totalorder %s76, %s90
    %p92 = scmp.eq.s32.totalorder %s19, 0
    %p93 = por %p91, %p92
    %s95 = sadd.s32 %s94, 1
    %p98 = scmp.eq.s32.totalorder %s13, 1
    %p99 = scmp.ne.s32.totalorder %s94, %s96
    %p100 = scmp.eq.s32.totalorder %s13, 0
    %p101 = por %p99, %p100
    %p102 = scmp.ne.s32.totalorder %s94, %s96
    %p103 = scmp.eq.s32.totalorder %s18, 1
    %p104 = por %p102, %p103
    %p105 = scmp.ne.s32.totalorder %s96, %s97
    %p106 = scmp.eq.s32.totalorder %s18, 0
    %p107 = por %p105, %p106
    %p108 = scmp.ne.s32.totalorder %s96, %s97
    %p109 = scmp.eq.s32.totalorder %s19, 1
    %p110 = por %p108, %p109
    %p112 = scmp.ne.s32.totalorder %s97, %s111
    %p113 = scmp.eq.s32.totalorder %s19, 0
    %p114 = por %p112, %p113
    %s116 = sadd.s32 %s115, 1
    %p119 = scmp.eq.s32.totalorder %s13, 1
    %p120 = scmp.ne.s32.totalorder %s115, %s117
    %p121 = scmp.eq.s32.totalorder %s13, 0
    %p122 = por %p120, %p121
    %p123 = scmp.ne.s32.totalorder %s115, %s117
    %p124 = scmp.eq.s32.totalorder %s18, 1
    %p125 = por %p123, %p124
    %p126 = scmp.ne.s32.totalorder %s117, %s118
    %p127 = scmp.eq.s32.totalorder %s18, 0
    %p128 = por %p126, %p127
    %p129 = scmp.ne.s32.totalorder %s117, %s118
    %p130 = scmp.eq.s32.totalorder %s19, 1
    %p131 = por %p129, %p130
    %p133 = scmp.ne.s32.totalorder %s118, %s132
    %p134 = scmp.eq.s32.totalorder %s19, 0
    %p135 = por %p133, %p134
    %s137 = sadd.s32 %s136, 1
    %p140 = scmp.eq.s32.totalorder %s13, 1
    %p141 = scmp.ne.s32.totalorder %s136, %s138
    %p142 = scmp.eq.s32.totalorder %s13, 0
    %p143 = por %p141, %p142
    %p144 = scmp.ne.s32.totalorder %s136, %s138
    %p145 = scmp.eq.s32.totalorder %s18, 1
    %p146 = por %p144, %p145
    %p147 = scmp.ne.s32.totalorder %s138, %s139
    %p148 = scmp.eq.s32.totalorder %s18, 0
    %p149 = por %p147, %p148
    %p150 = scmp.ne.s32.totalorder %s138, %s139
    %p151 = scmp.eq.s32.totalorder %s19, 1
    %p152 = por %p150, %p151
    %p154 = scmp.ne.s32.totalorder %s139, %s153
    %p155 = scmp.eq.s32.totalorder %s19, 0
    %p156 = por %p154, %p155
    %s158 = sadd.s32 %s157, 1
    %p161 = scmp.eq.s32.totalorder %s13, 1
    %p162 = scmp.ne.s32.totalorder %s157, %s159
    %p163 = scmp.eq.s32.totalorder %s13, 0
    %p164 = por %p162, %p163
    %p165 = scmp.ne.s32.totalorder %s157, %s159
    %p166 = scmp.eq.s32.totalorder %s18, 1
    %p167 = por %p165, %p166
    %p168 = scmp.ne.s32.totalorder %s159, %s160
    %p169 = scmp.eq.s32.totalorder %s18, 0
    %p170 = por %p168, %p169
    %p171 = scmp.ne.s32.totalorder %s159, %s160
    %p172 = scmp.eq.s32.totalorder %s19, 1
    %p173 = por %p171, %p172
    %p175 = scmp.ne.s32.totalorder %s160, %s174
    %p176 = scmp.eq.s32.totalorder %s19, 0
    %p177 = por %p175, %p176
    %s178 = ssub.s32 %s13, %s20
    %p179 = scmp.eq.s32.totalorder %s178, 0
    %s181 = sadd.s32 %s180, 1
    %s182 = scalar_select %p179, %s180, %s181
    %p185 = pneg %p179
    %p186 = scmp.eq.s32.totalorder %s13, 1
    %p187 = por %p185, %p186
    %p188 = scmp.ne.s32.totalorder %s180, %s183
    %p189 = scmp.eq.s32.totalorder %s13, 0
    %p190 = por %p188, %p189
    %p191 = scmp.ne.s32.totalorder %s180, %s183
    %p192 = scmp.eq.s32.totalorder %s18, 1
    %p193 = por %p191, %p192
    %p194 = scmp.ne.s32.totalorder %s183, %s184
    %p195 = scmp.eq.s32.totalorder %s18, 0
    %p196 = por %p194, %p195
    %p197 = scmp.ne.s32.totalorder %s183, %s184
    %p198 = scmp.eq.s32.totalorder %s19, 1
    %p199 = por %p197, %p198
    %p201 = scmp.ne.s32.totalorder %s184, %s200
    %p202 = scmp.eq.s32.totalorder %s19, 0
    %p203 = por %p201, %p202
    %p204 = scmp.le.s32.totalorder 1, %s13
    %p205 = scmp.lt.s32.totalorder %s13, 3
    %p206 = pnand %p204, %p205
    %p207 = pneg %p206
    // Predicated region
    $region9: #{residual_block_forward.5} parent=5 // pred_check
      _
    $region10: #{residual_block_forward.5} parent=5 // pred_check_branch
      %209 = sbr.rel (%p206) target = $region12
    $region11: #{residual_block_forward.5} parent=5 // pred_region
      %s210 = ssub.s32 %s13, 1
      // Predicated region
      $region13: #{residual_block_forward.5} parent=11 // pred_check
        %p211 = pneg %p86
      $region14: #{residual_block_forward.5} parent=11 // pred_check_branch
        %213 = sbr.rel (%p211) target = $region16
      $region15: #{residual_block_forward.5} parent=11 // pred_region
        _
      $region16: #{residual_block_forward.5} parent=11 // pred_fallthru
        _
      // Predicated region
      $region17: #{residual_block_forward.5} parent=11 // pred_check
        %p214 = pneg %p107
      $region18: #{residual_block_forward.5} parent=11 // pred_check_branch
        %216 = sbr.rel (%p214) target = $region20
      $region19: #{residual_block_forward.5} parent=11 // pred_region
        _
      $region20: #{residual_block_forward.5} parent=11 // pred_fallthru
        _
      // Predicated region
      $region21: #{residual_block_forward.5} parent=11 // pred_check
        %p217 = pneg %p128
      $region22: #{residual_block_forward.5} parent=11 // pred_check_branch
        %219 = sbr.rel (%p217) target = $region24
      $region23: #{residual_block_forward.5} parent=11 // pred_region
        _
      $region24: #{residual_block_forward.5} parent=11 // pred_fallthru
        _
      // Predicated region
      $region25: #{residual_block_forward.5} parent=11 // pred_check
        %p220 = pneg %p149
      $region26: #{residual_block_forward.5} parent=11 // pred_check_branch
        %222 = sbr.rel (%p220) target = $region28
      $region27: #{residual_block_forward.5} parent=11 // pred_region
        _
      $region28: #{residual_block_forward.5} parent=11 // pred_fallthru
        _
      // Predicated region
      $region29: #{residual_block_forward.5} parent=11 // pred_check
        %p223 = pneg %p170
      $region30: #{residual_block_forward.5} parent=11 // pred_check_branch
        %225 = sbr.rel (%p223) target = $region32
      $region31: #{residual_block_forward.5} parent=11 // pred_region
        _
      $region32: #{residual_block_forward.5} parent=11 // pred_fallthru
        _
    $region12: #{residual_block_forward.5} parent=5 // pred_fallthru
      _
    %p226 = scmp.lt.s32.totalorder %s13, 2
    // Predicated region
    $region33: #{residual_block_forward.5} parent=5 // pred_check
      %p227 = pneg %p226
    $region34: #{residual_block_forward.5} parent=5 // pred_check_branch
      %229 = sbr.rel (%p227) target = $region36
    $region35: #{residual_block_forward.5} parent=5 // pred_region
      // Predicated region
      $region37: #{residual_block_forward.5} parent=35 // pred_check
        %p230 = pneg %p33
      $region38: #{residual_block_forward.5} parent=35 // pred_check_branch
        %232 = sbr.rel (%p230) target = $region40
      $region39: #{residual_block_forward.5} parent=35 // pred_region
        %p233 = scmp.lt.s32.totalorder %s13, 1
        %s234 = scalar_select %p233, %s13, 1
        %s235 = smul.addr %s234, 32
        %s236 = smul.addr %s235, 8
        %s237 = scalar_lea.vmem %s0, %s236
      $region40: #{residual_block_forward.5} parent=35 // pred_fallthru
        _
      // Predicated region
      $region41: #{residual_block_forward.5} parent=35 // pred_check
        %p238 = pneg %p59
      $region42: #{residual_block_forward.5} parent=35 // pred_check_branch
        %240 = sbr.rel (%p238) target = $region44
      $region43: #{residual_block_forward.5} parent=35 // pred_region
        %p241 = scmp.lt.s32.totalorder %s13, 1
        %s242 = scalar_select %p241, %s13, 1
        %s243 = smul.addr %s242, 32
        %s244 = smul.addr %s243, 8
        %s245 = scalar_lea.vmem %s1, %s244
      $region44: #{residual_block_forward.5} parent=35 // pred_fallthru
        _
    $region36: #{residual_block_forward.5} parent=5 // pred_fallthru
      _
    %p246 = scmp.le.s32.totalorder 1, %s13
    %p247 = scmp.lt.s32.totalorder %s13, 3
    %p248 = pnand %p246, %p247
    %p249 = pneg %p248
    // Predicated region
    $region45: #{residual_block_forward.5} parent=5 // pred_check
      _
    $region46: #{residual_block_forward.5} parent=5 // pred_check_branch
      %251 = sbr.rel (%p248) target = $region48
    $region47: #{residual_block_forward.5} parent=5 // pred_region
      %s252 = ssub.s32 %s13, 1
      %p253 = scmp.lt.s32.totalorder %s18, 1
      %s254 = scalar_select %p253, %s18, 1
      %s255 = smul.addr %s254, 32
      %s256 = smul.addr %s255, 8
      %s257 = scalar_lea.vmem %s0, %s256
      %p258 = pneg %p39
      %p259 = pneg %p36
      %p260 = scmp.lt.s32.totalorder %s18, 1
      %s261 = scalar_select %p260, %s18, 1
      %s262 = smul.addr %s261, 32
      %s263 = smul.addr %s262, 8
      %s264 = scalar_lea.vmem %s1, %s263
      %p265 = pneg %p65
      %p266 = pneg %p62
      %p267 = pneg %p86
      %p268 = pneg %p83
      %p269 = pneg %p107
      %p270 = pneg %p104
      %p271 = pneg %p128
      %p272 = pneg %p125
      %p273 = pneg %p149
      %p274 = pneg %p146
      %p275 = pneg %p170
      %p276 = pneg %p167
      %p277 = pneg %p196
      %p278 = pneg %p193
      %p279 = scmp.lt.s32.totalorder %s18, 1
      %s280 = scalar_select %p279, %s18, 1
      %s281 = smul.addr %s280, 32
      %s282 = smul.addr %s281, 8
      %s283 = scalar_lea.vmem %s7, %s282
      %p284 = scmp.lt.s32.totalorder %s18, 1
      %s285 = scalar_select %p284, %s18, 1
      %s286 = smul.addr %s285, 32
      %s287 = smul.addr %s286, 8
      %s288 = scalar_lea.vmem %s0, %s287
      %p289 = scmp.lt.s32.totalorder %s18, 1
      %s290 = scalar_select %p289, %s18, 1
      %s291 = smul.addr %s290, 32
      %s292 = smul.addr %s291, 8
      %s293 = scalar_lea.vmem %s1, %s292
      %p294 = scmp.lt.s32.totalorder %s18, 1
      %s295 = scalar_select %p294, %s18, 1
      %s296 = smul.addr %s295, 32
      %s297 = smul.addr %s296, 8
      %s298 = scalar_lea.vmem %s7, %s297
      %v299 = vld [vmem:[%s288] sm:$0xff]
      %v300 = vld [vmem:[%s288 + $0x8] sm:$0xff]
      %v301 = vld [vmem:[%s288 + $0x10] sm:$0xff]
      %v302 = vld [vmem:[%s288 + $0x18] sm:$0xff]
      %v303 = vld [vmem:[%s288 + $0x20] sm:$0xff]
      %v304 = vld [vmem:[%s288 + $0x28] sm:$0xff]
      %v305 = vld [vmem:[%s288 + $0x30] sm:$0xff]
      %v306 = vld [vmem:[%s288 + $0x38] sm:$0xff]
      %v307 = vld [vmem:[%s288 + $0x40] sm:$0xff]
      %v308 = vld [vmem:[%s288 + $0x48] sm:$0xff]
      %v309 = vld [vmem:[%s288 + $0x50] sm:$0xff]
      %v310 = vld [vmem:[%s288 + $0x58] sm:$0xff]
      %v311 = vld [vmem:[%s288 + $0x60] sm:$0xff]
      %v312 = vld [vmem:[%s288 + $0x68] sm:$0xff]
      %v313 = vld [vmem:[%s288 + $0x70] sm:$0xff]
      %v314 = vld [vmem:[%s288 + $0x78] sm:$0xff]
      %v315 = vld [vmem:[%s288 + $0x80] sm:$0xff]
      %v316 = vld [vmem:[%s288 + $0x88] sm:$0xff]
      %v317 = vld [vmem:[%s288 + $0x90] sm:$0xff]
      %v318 = vld [vmem:[%s288 + $0x98] sm:$0xff]
      %v319 = vld [vmem:[%s288 + $0xa0] sm:$0xff]
      %v320 = vld [vmem:[%s288 + $0xa8] sm:$0xff]
      %v321 = vld [vmem:[%s288 + $0xb0] sm:$0xff]
      %v322 = vld [vmem:[%s288 + $0xb8] sm:$0xff]
      %v323 = vld [vmem:[%s288 + $0xc0] sm:$0xff]
      %v324 = vld [vmem:[%s288 + $0xc8] sm:$0xff]
      %v325 = vld [vmem:[%s288 + $0xd0] sm:$0xff]
      %v326 = vld [vmem:[%s288 + $0xd8] sm:$0xff]
      %v327 = vld [vmem:[%s288 + $0xe0] sm:$0xff]
      %v328 = vld [vmem:[%s288 + $0xe8] sm:$0xff]
      %v329 = vld [vmem:[%s288 + $0xf0] sm:$0xff]
      %v330 = vld [vmem:[%s288 + $0xf8] sm:$0xff]
      %v331 = vld [vmem:[%s2] sm:$0x1]
      %v333 = vlaneseq
      %v334 = vshrl.u32 %v333, 7
      %v335 = vsub.s32 0, %v334
      %v336 = vrot.slane %v331, %v335
      %v338 = vmul.f32 %v299, %v336
      %v339 = vmul.f32 %v300, %v336
      %v340 = vmul.f32 %v301, %v336
      %v341 = vmul.f32 %v302, %v336
      %v342 = vmul.f32 %v303, %v336
      %v343 = vmul.f32 %v304, %v336
      %v344 = vmul.f32 %v305, %v336
      %v345 = vmul.f32 %v306, %v336
      %v346 = vmul.f32 %v307, %v336
      %v347 = vmul.f32 %v308, %v336
      %v348 = vmul.f32 %v309, %v336
      %v349 = vmul.f32 %v310, %v336
      %v350 = vmul.f32 %v311, %v336
      %v351 = vmul.f32 %v312, %v336
      %v352 = vmul.f32 %v313, %v336
      %v353 = vmul.f32 %v314, %v336
      %v354 = vmul.f32 %v315, %v336
      %v355 = vmul.f32 %v316, %v336
      %v356 = vmul.f32 %v317, %v336
      %v357 = vmul.f32 %v318, %v336
      %v358 = vmul.f32 %v319, %v336
      %v359 = vmul.f32 %v320, %v336
      %v360 = vmul.f32 %v321, %v336
      %v361 = vmul.f32 %v322, %v336
      %v362 = vmul.f32 %v323, %v336
      %v363 = vmul.f32 %v324, %v336
      %v364 = vmul.f32 %v325, %v336
      %v365 = vmul.f32 %v326, %v336
      %v366 = vmul.f32 %v327, %v336
      %v367 = vmul.f32 %v328, %v336
      %v368 = vmul.f32 %v329, %v336
      %v369 = vmul.f32 %v330, %v336
      %v370 = vld [vmem:[%s3] sm:$0x1]
      %v372 = vlaneseq
      %v373 = vshrl.u32 %v372, 7
      %v374 = vsub.s32 0, %v373
      %v375 = vrot.slane %v370, %v374
      %v377 = vadd.f32 %v338, %v375
      %v378 = vadd.f32 %v339, %v375
      %v379 = vadd.f32 %v340, %v375
      %v380 = vadd.f32 %v341, %v375
      %v381 = vadd.f32 %v342, %v375
      %v382 = vadd.f32 %v343, %v375
      %v383 = vadd.f32 %v344, %v375
      %v384 = vadd.f32 %v345, %v375
      %v385 = vadd.f32 %v346, %v375
      %v386 = vadd.f32 %v347, %v375
      %v387 = vadd.f32 %v348, %v375
      %v388 = vadd.f32 %v349, %v375
      %v389 = vadd.f32 %v350, %v375
      %v390 = vadd.f32 %v351, %v375
      %v391 = vadd.f32 %v352, %v375
      %v392 = vadd.f32 %v353, %v375
      %v393 = vadd.f32 %v354, %v375
      %v394 = vadd.f32 %v355, %v375
      %v395 = vadd.f32 %v356, %v375
      %v396 = vadd.f32 %v357, %v375
      %v397 = vadd.f32 %v358, %v375
      %v398 = vadd.f32 %v359, %v375
      %v399 = vadd.f32 %v360, %v375
      %v400 = vadd.f32 %v361, %v375
      %v401 = vadd.f32 %v362, %v375
      %v402 = vadd.f32 %v363, %v375
      %v403 = vadd.f32 %v364, %v375
      %v404 = vadd.f32 %v365, %v375
      %v405 = vadd.f32 %v366, %v375
      %v406 = vadd.f32 %v367, %v375
      %v407 = vadd.f32 %v368, %v375
      %v408 = vadd.f32 %v369, %v375
      %v409 = vld [vmem:[%s293] sm:$0xff]
      %v410 = vld [vmem:[%s293 + $0x8] sm:$0xff]
      %v411 = vld [vmem:[%s293 + $0x10] sm:$0xff]
      %v412 = vld [vmem:[%s293 + $0x18] sm:$0xff]
      %v413 = vld [vmem:[%s293 + $0x20] sm:$0xff]
      %v414 = vld [vmem:[%s293 + $0x28] sm:$0xff]
      %v415 = vld [vmem:[%s293 + $0x30] sm:$0xff]
      %v416 = vld [vmem:[%s293 + $0x38] sm:$0xff]
      %v417 = vld [vmem:[%s293 + $0x40] sm:$0xff]
      %v418 = vld [vmem:[%s293 + $0x48] sm:$0xff]
      %v419 = vld [vmem:[%s293 + $0x50] sm:$0xff]
      %v420 = vld [vmem:[%s293 + $0x58] sm:$0xff]
      %v421 = vld [vmem:[%s293 + $0x60] sm:$0xff]
      %v422 = vld [vmem:[%s293 + $0x68] sm:$0xff]
      %v423 = vld [vmem:[%s293 + $0x70] sm:$0xff]
      %v424 = vld [vmem:[%s293 + $0x78] sm:$0xff]
      %v425 = vld [vmem:[%s293 + $0x80] sm:$0xff]
      %v426 = vld [vmem:[%s293 + $0x88] sm:$0xff]
      %v427 = vld [vmem:[%s293 + $0x90] sm:$0xff]
      %v428 = vld [vmem:[%s293 + $0x98] sm:$0xff]
      %v429 = vld [vmem:[%s293 + $0xa0] sm:$0xff]
      %v430 = vld [vmem:[%s293 + $0xa8] sm:$0xff]
      %v431 = vld [vmem:[%s293 + $0xb0] sm:$0xff]
      %v432 = vld [vmem:[%s293 + $0xb8] sm:$0xff]
      %v433 = vld [vmem:[%s293 + $0xc0] sm:$0xff]
      %v434 = vld [vmem:[%s293 + $0xc8] sm:$0xff]
      %v435 = vld [vmem:[%s293 + $0xd0] sm:$0xff]
      %v436 = vld [vmem:[%s293 + $0xd8] sm:$0xff]
      %v437 = vld [vmem:[%s293 + $0xe0] sm:$0xff]
      %v438 = vld [vmem:[%s293 + $0xe8] sm:$0xff]
      %v439 = vld [vmem:[%s293 + $0xf0] sm:$0xff]
      %v440 = vld [vmem:[%s293 + $0xf8] sm:$0xff]
      %v441 = vld [vmem:[%s4] sm:$0xf]
      %vm442 = vcmask 31744
      %v444 = vsel %vm442, %v409, 0
      %v447 = vsel %vm442, %v410, 0
      %v450 = vsel %vm442, %v411, 0
      %v453 = vsel %vm442, %v412, 0
      %v456 = vsel %vm442, %v413, 0
      %v459 = vsel %vm442, %v414, 0
      %v462 = vsel %vm442, %v415, 0
      %v465 = vsel %vm442, %v416, 0
      %v468 = vsel %vm442, %v417, 0
      %v471 = vsel %vm442, %v418, 0
      %v474 = vsel %vm442, %v419, 0
      %v477 = vsel %vm442, %v420, 0
      %v480 = vsel %vm442, %v421, 0
      %v483 = vsel %vm442, %v422, 0
      %v486 = vsel %vm442, %v423, 0
      %v489 = vsel %vm442, %v424, 0
      %v492 = vsel %vm442, %v425, 0
      %v495 = vsel %vm442, %v426, 0
      %v498 = vsel %vm442, %v427, 0
      %v501 = vsel %vm442, %v428, 0
      %v504 = vsel %vm442, %v429, 0
      %v507 = vsel %vm442, %v430, 0
      %v510 = vsel %vm442, %v431, 0
      %v513 = vsel %vm442, %v432, 0
      %v516 = vsel %vm442, %v433, 0
      %v519 = vsel %vm442, %v434, 0
      %v522 = vsel %vm442, %v435, 0
      %v525 = vsel %vm442, %v436, 0
      %v528 = vsel %vm442, %v437, 0
      %v531 = vsel %vm442, %v438, 0
      %v534 = vsel %vm442, %v439, 0
      %v537 = vsel %vm442, %v440, 0
      %vm539 = vcmask 1043456
      %v541 = vsel %vm539, %v441, 0
      %543 = vmatprep.subr.mxu0 0.0
      %544 = vmatpush1.msra.mxu0 %v541
      %545 = vmatprep.subr.mxu0 0.0
      %546 = vmatpush1.msra.mxu0 0.0
      %547 = vmatprep.subr.mxu0 0.0
      %548 = vmatpush1.msra.mxu0 0.0
      %549 = vmatprep.subr.mxu0 0.0
      %550 = vmatpush1.msra.mxu0 0.0
      %551 = vmatprep.subr.mxu0 0.0
      %552 = vmatpush1.msra.mxu0 0.0
      %553 = vmatprep.subr.mxu0 0.0
      %554 = vmatpush1.msra.mxu0 0.0
      %555 = vmatprep.subr.mxu0 0.0
      %556 = vmatpush1.msra.mxu0 0.0
      %557 = vmatprep.subr.mxu0 0.0
      %558 = vmatpush1.msra.mxu0 0.0
      %559 = vmatprep.subr.mxu0 0.0
      %560 = vmatpush1.msra.mxu0 0.0
      %561 = vmatprep.subr.mxu0 0.0
      %562 = vmatpush1.msra.mxu0 0.0
      %563 = vmatprep.subr.mxu0 0.0
      %564 = vmatpush1.msra.mxu0 0.0
      %565 = vmatprep.subr.mxu0 0.0
      %566 = vmatpush1.msra.mxu0 0.0
      %567 = vmatprep.subr.mxu0 0.0
      %568 = vmatpush1.msra.mxu0 0.0
      %569 = vmatprep.subr.mxu0 0.0
      %570 = vmatpush1.msra.mxu0 0.0
      %571 = vmatprep.subr.mxu0 0.0
      %572 = vmatpush1.msra.mxu0 0.0
      %573 = vmatprep.subr.mxu0 0.0
      %574 = vmatpush1.msra.mxu0 0.0
      %575 = vmatprep.subr.mxu0 0.0
      %576 = vmatpush1.msra.mxu0 0.0
      %577 = vmatprep.subr.mxu0 0.0
      %578 = vmatpush1.msra.mxu0 0.0
      %579 = vmatprep.subr.mxu0 0.0
      %580 = vmatpush1.msra.mxu0 0.0
      %581 = vmatprep.subr.mxu0 0.0
      %582 = vmatpush1.msra.mxu0 0.0
      %583 = vmatprep.subr.mxu0 0.0
      %584 = vmatpush1.msra.mxu0 0.0
      %585 = vmatprep.subr.mxu0 0.0
      %586 = vmatpush1.msra.mxu0 0.0
      %587 = vmatprep.subr.mxu0 0.0
      %588 = vmatpush1.msra.mxu0 0.0
      %589 = vmatprep.subr.mxu0 0.0
      %590 = vmatpush1.msra.mxu0 0.0
      %591 = vmatprep.subr.mxu0 0.0
      %592 = vmatpush1.msra.mxu0 0.0
      %593 = vmatprep.subr.mxu0 0.0
      %594 = vmatpush1.msra.mxu0 0.0
      %595 = vmatprep.subr.mxu0 0.0
      %596 = vmatpush1.msra.mxu0 0.0
      %597 = vmatprep.subr.mxu0 0.0
      %598 = vmatpush1.msra.mxu0 0.0
      %599 = vmatprep.subr.mxu0 0.0
      %600 = vmatpush1.msra.mxu0 0.0
      %601 = vmatprep.subr.mxu0 0.0
      %602 = vmatpush1.msra.mxu0 0.0
      %603 = vmatprep.subr.mxu0 0.0
      %604 = vmatpush1.msra.mxu0 0.0
      %605 = vmatprep.subr.mxu0 0.0
      %606 = vmatpush1.msra.mxu0 0.0
      %607 = vmatprep.mubr.f32.mxu0 0.0
      %608 = vmatmul.mubr.f32.gmra.mrb[0].mxu0 %v444
      %v609 = vpop.f32.mrb[0].mxu0
      %v610 = vadd.f32 0.0, %v609
      %v611 = vpop.f32.mrb[0].mxu0
      %612 = vmatprep.mubr.f32.mxu0 0.0
      %613 = vmatmul.mubr.f32.gmra.mrb[0].mxu0 %v447
      %v614 = vpop.f32.mrb[0].mxu0
      %v615 = vadd.f32 0.0, %v614
      %v616 = vpop.f32.mrb[0].mxu0
      %617 = vmatprep.mubr.f32.mxu0 0.0
      %618 = vmatmul.mubr.f32.gmra.mrb[0].mxu0 %v450
      %v619 = vpop.f32.mrb[0].mxu0
      %v620 = vadd.f32 0.0, %v619
      %v621 = vpop.f32.mrb[0].mxu0
      %622 = vmatprep.mubr.f32.mxu0 0.0
      %623 = vmatmul.mubr.f32.gmra.mrb[0].mxu0 %v453
      %v624 = vpop.f32.mrb[0].mxu0
      %v625 = vadd.f32 0.0, %v624
      %v626 = vpop.f32.mrb[0].mxu0
      %627 = vmatprep.mubr.f32.mxu0 0.0
      %628 = vmatmul.mubr.f32.gmra.mrb[0].mxu0 %v456
      %v629 = vpop.f32.mrb[0].mxu0
      %v630 = vadd.f32 0.0, %v629
      %v631 = vpop.f32.mrb[0].mxu0
      %632 = vmatprep.mubr.f32.mxu0 0.0
      %633 = vmatmul.mubr.f32.gmra.mrb[0].mxu0 %v459
      %v634 = vpop.f32.mrb[0].mxu0
      %v635 = vadd.f32 0.0, %v634
      %v636 = vpop.f32.mrb[0].mxu0
      %637 = vmatprep.mubr.f32.mxu0 0.0
      %638 = vmatmul.mubr.f32.gmra.mrb[0].mxu0 %v462
      %v639 = vpop.f32.mrb[0].mxu0
      %v640 = vadd.f32 0.0, %v639
      %v641 = vpop.f32.mrb[0].mxu0
      %642 = vmatprep.mubr.f32.mxu0 0.0
      %643 = vmatmul.mubr.f32.gmra.mrb[0].mxu0 %v465
      %v644 = vpop.f32.mrb[0].mxu0
      %v645 = vadd.f32 0.0, %v644
      %v646 = vpop.f32.mrb[0].mxu0
      %647 = vmatprep.mubr.f32.mxu0 0.0
      %648 = vmatmul.mubr.f32.gmra.mrb[0].mxu0 %v468
      %v649 = vpop.f32.mrb[0].mxu0
      %v650 = vadd.f32 0.0, %v649
      %v651 = vpop.f32.mrb[0].mxu0
      %652 = vmatprep.mubr.f32.mxu0 0.0
      %653 = vmatmul.mubr.f32.gmra.mrb[0].mxu0 %v471
      %v654 = vpop.f32.mrb[0].mxu0
      %v655 = vadd.f32 0.0, %v654
      %v656 = vpop.f32.mrb[0].mxu0
      %657 = vmatprep.mubr.f32.mxu0 0.0
      %658 = vmatmul.mubr.f32.gmra.mrb[0].mxu0 %v474
      %v659 = vpop.f32.mrb[0].mxu0
      %v660 = vadd.f32 0.0, %v659
      %v661 = vpop.f32.mrb[0].mxu0
      %662 = vmatprep.mubr.f32.mxu0 0.0
      %663 = vmatmul.mubr.f32.gmra.mrb[0].mxu0 %v477
      %v664 = vpop.f32.mrb[0].mxu0
      %v665 = vadd.f32 0.0, %v664
      %v666 = vpop.f32.mrb[0].mxu0
      %667 = vmatprep.mubr.f32.mxu0 0.0
      %668 = vmatmul.mubr.f32.gmra.mrb[0].mxu0 %v480
      %v669 = vpop.f32.mrb[0].mxu0
      %v670 = vadd.f32 0.0, %v669
      %v671 = vpop.f32.mrb[0].mxu0
      %672 = vmatprep.mubr.f32.mxu0 0.0
      %673 = vmatmul.mubr.f32.gmra.mrb[0].mxu0 %v483
      %v674 = vpop.f32.mrb[0].mxu0
      %v675 = vadd.f32 0.0, %v674
      %v676 = vpop.f32.mrb[0].mxu0
      %677 = vmatprep.mubr.f32.mxu0 0.0
      %678 = vmatmul.mubr.f32.gmra.mrb[0].mxu0 %v486
      %v679 = vpop.f32.mrb[0].mxu0
      %v680 = vadd.f32 0.0, %v679
      %v681 = vpop.f32.mrb[0].mxu0
      %682 = vmatprep.mubr.f32.mxu0 0.0
      %683 = vmatmul.mubr.f32.gmra.mrb[0].mxu0 %v489
      %v684 = vpop.f32.mrb[0].mxu0
      %v685 = vadd.f32 0.0, %v684
      %v686 = vpop.f32.mrb[0].mxu0
      %687 = vmatprep.mubr.f32.mxu0 0.0
      %688 = vmatmul.mubr.f32.gmra.mrb[0].mxu0 %v492
      %v689 = vpop.f32.mrb[0].mxu0
      %v690 = vadd.f32 0.0, %v689
      %v691 = vpop.f32.mrb[0].mxu0
      %692 = vmatprep.mubr.f32.mxu0 0.0
      %693 = vmatmul.mubr.f32.gmra.mrb[0].mxu0 %v495
      %v694 = vpop.f32.mrb[0].mxu0
      %v695 = vadd.f32 0.0, %v694
      %v696 = vpop.f32.mrb[0].mxu0
      %697 = vmatprep.mubr.f32.mxu0 0.0
      %698 = vmatmul.mubr.f32.gmra.mrb[0].mxu0 %v498
      %v699 = vpop.f32.mrb[0].mxu0
      %v700 = vadd.f32 0.0, %v699
      %v701 = vpop.f32.mrb[0].mxu0
      %702 = vmatprep.mubr.f32.mxu0 0.0
      %703 = vmatmul.mubr.f32.gmra.mrb[0].mxu0 %v501
      %v704 = vpop.f32.mrb[0].mxu0
      %v705 = vadd.f32 0.0, %v704
      %v706 = vpop.f32.mrb[0].mxu0
      %707 = vmatprep.mubr.f32.mxu0 0.0
      %708 = vmatmul.mubr.f32.gmra.mrb[0].mxu0 %v504
      %v709 = vpop.f32.mrb[0].mxu0
      %v710 = vadd.f32 0.0, %v709
      %v711 = vpop.f32.mrb[0].mxu0
      %712 = vmatprep.mubr.f32.mxu0 0.0
      %713 = vmatmul.mubr.f32.gmra.mrb[0].mxu0 %v507
      %v714 = vpop.f32.mrb[0].mxu0
      %v715 = vadd.f32 0.0, %v714
      %v716 = vpop.f32.mrb[0].mxu0
      %717 = vmatprep.mubr.f32.mxu0 0.0
      %718 = vmatmul.mubr.f32.gmra.mrb[0].mxu0 %v510
      %v719 = vpop.f32.mrb[0].mxu0
      %v720 = vadd.f32 0.0, %v719
      %v721 = vpop.f32.mrb[0].mxu0
      %722 = vmatprep.mubr.f32.mxu0 0.0
      %723 = vmatmul.mubr.f32.gmra.mrb[0].mxu0 %v513
      %v724 = vpop.f32.mrb[0].mxu0
      %v725 = vadd.f32 0.0, %v724
      %v726 = vpop.f32.mrb[0].mxu0
      %727 = vmatprep.mubr.f32.mxu0 0.0
      %728 = vmatmul.mubr.f32.gmra.mrb[0].mxu0 %v516
      %v729 = vpop.f32.mrb[0].mxu0
      %v730 = vadd.f32 0.0, %v729
      %v731 = vpop.f32.mrb[0].mxu0
      %732 = vmatprep.mubr.f32.mxu0 0.0
      %733 = vmatmul.mubr.f32.gmra.mrb[0].mxu0 %v519
      %v734 = vpop.f32.mrb[0].mxu0
      %v735 = vadd.f32 0.0, %v734
      %v736 = vpop.f32.mrb[0].mxu0
      %737 = vmatprep.mubr.f32.mxu0 0.0
      %738 = vmatmul.mubr.f32.gmra.mrb[0].mxu0 %v522
      %v739 = vpop.f32.mrb[0].mxu0
      %v740 = vadd.f32 0.0, %v739
      %v741 = vpop.f32.mrb[0].mxu0
      %742 = vmatprep.mubr.f32.mxu0 0.0
      %743 = vmatmul.mubr.f32.gmra.mrb[0].mxu0 %v525
      %v744 = vpop.f32.mrb[0].mxu0
      %v745 = vadd.f32 0.0, %v744
      %v746 = vpop.f32.mrb[0].mxu0
      %747 = vmatprep.mubr.f32.mxu0 0.0
      %748 = vmatmul.mubr.f32.gmra.mrb[0].mxu0 %v528
      %v749 = vpop.f32.mrb[0].mxu0
      %v750 = vadd.f32 0.0, %v749
      %v751 = vpop.f32.mrb[0].mxu0
      %752 = vmatprep.mubr.f32.mxu0 0.0
      %753 = vmatmul.mubr.f32.gmra.mrb[0].mxu0 %v531
      %v754 = vpop.f32.mrb[0].mxu0
      %v755 = vadd.f32 0.0, %v754
      %v756 = vpop.f32.mrb[0].mxu0
      %757 = vmatprep.mubr.f32.mxu0 0.0
      %758 = vmatmul.mubr.f32.gmra.mrb[0].mxu0 %v534
      %v759 = vpop.f32.mrb[0].mxu0
      %v760 = vadd.f32 0.0, %v759
      %v761 = vpop.f32.mrb[0].mxu0
      %762 = vmatprep.mubr.f32.mxu0 0.0
      %763 = vmatmul.mubr.f32.gmra.mrb[0].mxu0 %v537
      %v764 = vpop.f32.mrb[0].mxu0
      %v765 = vadd.f32 0.0, %v764
      %v766 = vpop.f32.mrb[0].mxu0
      %767 = vdwg.mxu0
      %v768 = vld [vmem:[%s5] sm:$0x1]
      %v770 = vlaneseq
      %v771 = vshrl.u32 %v770, 7
      %v772 = vsub.s32 0, %v771
      %v773 = vrot.slane %v768, %v772
      %v775 = vmul.f32 %v610, %v773
      %v776 = vmul.f32 %v615, %v773
      %v777 = vmul.f32 %v620, %v773
      %v778 = vmul.f32 %v625, %v773
      %v779 = vmul.f32 %v630, %v773
      %v780 = vmul.f32 %v635, %v773
      %v781 = vmul.f32 %v640, %v773
      %v782 = vmul.f32 %v645, %v773
      %v783 = vmul.f32 %v650, %v773
      %v784 = vmul.f32 %v655, %v773
      %v785 = vmul.f32 %v660, %v773
      %v786 = vmul.f32 %v665, %v773
      %v787 = vmul.f32 %v670, %v773
      %v788 = vmul.f32 %v675, %v773
      %v789 = vmul.f32 %v680, %v773
      %v790 = vmul.f32 %v685, %v773
      %v791 = vmul.f32 %v690, %v773
      %v792 = vmul.f32 %v695, %v773
      %v793 = vmul.f32 %v700, %v773
      %v794 = vmul.f32 %v705, %v773
      %v795 = vmul.f32 %v710, %v773
      %v796 = vmul.f32 %v715, %v773
      %v797 = vmul.f32 %v720, %v773
      %v798 = vmul.f32 %v725, %v773
      %v799 = vmul.f32 %v730, %v773
      %v800 = vmul.f32 %v735, %v773
      %v801 = vmul.f32 %v740, %v773
      %v802 = vmul.f32 %v745, %v773
      %v803 = vmul.f32 %v750, %v773
      %v804 = vmul.f32 %v755, %v773
      %v805 = vmul.f32 %v760, %v773
      %v806 = vmul.f32 %v765, %v773
      %v807 = vld [vmem:[%s6] sm:$0x1]
      %v809 = vlaneseq
      %v810 = vshrl.u32 %v809, 7
      %v811 = vsub.s32 0, %v810
      %v812 = vrot.slane %v807, %v811
      %v814 = vadd.f32 %v775, %v812
      %v815 = vadd.f32 %v776, %v812
      %v816 = vadd.f32 %v777, %v812
      %v817 = vadd.f32 %v778, %v812
      %v818 = vadd.f32 %v779, %v812
      %v819 = vadd.f32 %v780, %v812
      %v820 = vadd.f32 %v781, %v812
      %v821 = vadd.f32 %v782, %v812
      %v822 = vadd.f32 %v783, %v812
      %v823 = vadd.f32 %v784, %v812
      %v824 = vadd.f32 %v785, %v812
      %v825 = vadd.f32 %v786, %v812
      %v826 = vadd.f32 %v787, %v812
      %v827 = vadd.f32 %v788, %v812
      %v828 = vadd.f32 %v789, %v812
      %v829 = vadd.f32 %v790, %v812
      %v830 = vadd.f32 %v791, %v812
      %v831 = vadd.f32 %v792, %v812
      %v832 = vadd.f32 %v793, %v812
      %v833 = vadd.f32 %v794, %v812
      %v834 = vadd.f32 %v795, %v812
      %v835 = vadd.f32 %v796, %v812
      %v836 = vadd.f32 %v797, %v812
      %v837 = vadd.f32 %v798, %v812
      %v838 = vadd.f32 %v799, %v812
      %v839 = vadd.f32 %v800, %v812
      %v840 = vadd.f32 %v801, %v812
      %v841 = vadd.f32 %v802, %v812
      %v842 = vadd.f32 %v803, %v812
      %v843 = vadd.f32 %v804, %v812
      %v844 = vadd.f32 %v805, %v812
      %v845 = vadd.f32 %v806, %v812
      %v846 = vadd.f32 %v377, %v814
      %v847 = vadd.f32 %v378, %v815
      %v848 = vadd.f32 %v379, %v816
      %v849 = vadd.f32 %v380, %v817
      %v850 = vadd.f32 %v381, %v818
      %v851 = vadd.f32 %v382, %v819
      %v852 = vadd.f32 %v383, %v820
      %v853 = vadd.f32 %v384, %v821
      %v854 = vadd.f32 %v385, %v822
      %v855 = vadd.f32 %v386, %v823
      %v856 = vadd.f32 %v387, %v824
      %v857 = vadd.f32 %v388, %v825
      %v858 = vadd.f32 %v389, %v826
      %v859 = vadd.f32 %v390, %v827
      %v860 = vadd.f32 %v391, %v828
      %v861 = vadd.f32 %v392, %v829
      %v862 = vadd.f32 %v393, %v830
      %v863 = vadd.f32 %v394, %v831
      %v864 = vadd.f32 %v395, %v832
      %v865 = vadd.f32 %v396, %v833
      %v866 = vadd.f32 %v397, %v834
      %v867 = vadd.f32 %v398, %v835
      %v868 = vadd.f32 %v399, %v836
      %v869 = vadd.f32 %v400, %v837
      %v870 = vadd.f32 %v401, %v838
      %v871 = vadd.f32 %v402, %v839
      %v872 = vadd.f32 %v403, %v840
      %v873 = vadd.f32 %v404, %v841
      %v874 = vadd.f32 %v405, %v842
      %v875 = vadd.f32 %v406, %v843
      %v876 = vadd.f32 %v407, %v844
      %v877 = vadd.f32 %v408, %v845
      %v878 = vmax.f32 %v846, 0.0
      %v879 = vmax.f32 %v847, 0.0
      %v880 = vmax.f32 %v848, 0.0
      %v881 = vmax.f32 %v849, 0.0
      %v882 = vmax.f32 %v850, 0.0
      %v883 = vmax.f32 %v851, 0.0
      %v884 = vmax.f32 %v852, 0.0
      %v885 = vmax.f32 %v853, 0.0
      %v886 = vmax.f32 %v854, 0.0
      %v887 = vmax.f32 %v855, 0.0
      %v888 = vmax.f32 %v856, 0.0
      %v889 = vmax.f32 %v857, 0.0
      %v890 = vmax.f32 %v858, 0.0
      %v891 = vmax.f32 %v859, 0.0
      %v892 = vmax.f32 %v860, 0.0
      %v893 = vmax.f32 %v861, 0.0
      %v894 = vmax.f32 %v862, 0.0
      %v895 = vmax.f32 %v863, 0.0
      %v896 = vmax.f32 %v864, 0.0
      %v897 = vmax.f32 %v865, 0.0
      %v898 = vmax.f32 %v866, 0.0
      %v899 = vmax.f32 %v867, 0.0
      %v900 = vmax.f32 %v868, 0.0
      %v901 = vmax.f32 %v869, 0.0
      %v902 = vmax.f32 %v870, 0.0
      %v903 = vmax.f32 %v871, 0.0
      %v904 = vmax.f32 %v872, 0.0
      %v905 = vmax.f32 %v873, 0.0
      %v906 = vmax.f32 %v874, 0.0
      %v907 = vmax.f32 %v875, 0.0
      %v908 = vmax.f32 %v876, 0.0
      %v909 = vmax.f32 %v877, 0.0
      %vm910 = vcmask 64512
      %911 = vst.msk [vmem:[%s298] sm:$0xff] %vm910, %v878
      %912 = vst.msk [vmem:[%s298 + $0x8] sm:$0xff] %vm910, %v879
      %913 = vst.msk [vmem:[%s298 + $0x10] sm:$0xff] %vm910, %v880
      %914 = vst.msk [vmem:[%s298 + $0x18] sm:$0xff] %vm910, %v881
      %915 = vst.msk [vmem:[%s298 + $0x20] sm:$0xff] %vm910, %v882
      %916 = vst.msk [vmem:[%s298 + $0x28] sm:$0xff] %vm910, %v883
      %917 = vst.msk [vmem:[%s298 + $0x30] sm:$0xff] %vm910, %v884
      %918 = vst.msk [vmem:[%s298 + $0x38] sm:$0xff] %vm910, %v885
      %919 = vst.msk [vmem:[%s298 + $0x40] sm:$0xff] %vm910, %v886
      %920 = vst.msk [vmem:[%s298 + $0x48] sm:$0xff] %vm910, %v887
      %921 = vst.msk [vmem:[%s298 + $0x50] sm:$0xff] %vm910, %v888
      %922 = vst.msk [vmem:[%s298 + $0x58] sm:$0xff] %vm910, %v889
      %923 = vst.msk [vmem:[%s298 + $0x60] sm:$0xff] %vm910, %v890
      %924 = vst.msk [vmem:[%s298 + $0x68] sm:$0xff] %vm910, %v891
      %925 = vst.msk [vmem:[%s298 + $0x70] sm:$0xff] %vm910, %v892
      %926 = vst.msk [vmem:[%s298 + $0x78] sm:$0xff] %vm910, %v893
      %927 = vst.msk [vmem:[%s298 + $0x80] sm:$0xff] %vm910, %v894
      %928 = vst.msk [vmem:[%s298 + $0x88] sm:$0xff] %vm910, %v895
      %929 = vst.msk [vmem:[%s298 + $0x90] sm:$0xff] %vm910, %v896
      %930 = vst.msk [vmem:[%s298 + $0x98] sm:$0xff] %vm910, %v897
      %931 = vst.msk [vmem:[%s298 + $0xa0] sm:$0xff] %vm910, %v898
      %932 = vst.msk [vmem:[%s298 + $0xa8] sm:$0xff] %vm910, %v899
      %933 = vst.msk [vmem:[%s298 + $0xb0] sm:$0xff] %vm910, %v900
      %934 = vst.msk [vmem:[%s298 + $0xb8] sm:$0xff] %vm910, %v901
      %935 = vst.msk [vmem:[%s298 + $0xc0] sm:$0xff] %vm910, %v902
      %936 = vst.msk [vmem:[%s298 + $0xc8] sm:$0xff] %vm910, %v903
      %937 = vst.msk [vmem:[%s298 + $0xd0] sm:$0xff] %vm910, %v904
      %938 = vst.msk [vmem:[%s298 + $0xd8] sm:$0xff] %vm910, %v905
      %939 = vst.msk [vmem:[%s298 + $0xe0] sm:$0xff] %vm910, %v906
      %940 = vst.msk [vmem:[%s298 + $0xe8] sm:$0xff] %vm910, %v907
      %941 = vst.msk [vmem:[%s298 + $0xf0] sm:$0xff] %vm910, %v908
      %942 = vst.msk [vmem:[%s298 + $0xf8] sm:$0xff] %vm910, %v909
      %p943 = scmp.lt.s32.totalorder %s18, 1
      %s944 = scalar_select %p943, %s18, 1
      %s945 = smul.addr %s944, 32
      %s946 = smul.addr %s945, 8
      %s947 = scalar_lea.vmem %s7, %s946
      // Predicated region
      $region49: #{residual_block_forward.5} parent=47 // pred_check
        %p948 = pneg %p193
      $region50: #{residual_block_forward.5} parent=47 // pred_check_branch
        %950 = sbr.rel (%p948) target = $region52
      $region51: #{residual_block_forward.5} parent=47 // pred_region
        _
      $region52: #{residual_block_forward.5} parent=47 // pred_fallthru
        _
    $region48: #{residual_block_forward.5} parent=5 // pred_fallthru
      _
    %p951 = scmp.le.s32.totalorder 2, %s13
    // Predicated region
    $region53: #{residual_block_forward.5} parent=5 // pred_check
      %p952 = pneg %p951
    $region54: #{residual_block_forward.5} parent=5 // pred_check_branch
      %954 = sbr.rel (%p952) target = $region56
    $region55: #{residual_block_forward.5} parent=5 // pred_region
      %s955 = ssub.s32 %s13, 2
      // Predicated region
      $region57: #{residual_block_forward.5} parent=55 // pred_check
        %p956 = pneg %p199
      $region58: #{residual_block_forward.5} parent=55 // pred_check_branch
        %958 = sbr.rel (%p956) target = $region60
      $region59: #{residual_block_forward.5} parent=55 // pred_region
        %p959 = scmp.lt.s32.totalorder %s19, 1
        %s960 = scalar_select %p959, %s19, 1
        %s961 = smul.addr %s960, 32
        %s962 = smul.addr %s961, 8
        %s963 = scalar_lea.vmem %s7, %s962
      $region60: #{residual_block_forward.5} parent=55 // pred_fallthru
        _
    $region56: #{residual_block_forward.5} parent=5 // pred_fallthru
      _
  $region6: #{residual_block_forward.5} parent=0 // loop_footer
    %s17 = sadd.s32 1, %s13
  $region7: #{residual_block_forward.5} parent=0 // loop_footer_branch
    %12 = sbr.rel target = $region3
  $region8: #{residual_block_forward.5} parent=0 // loop_exit
    _

// kernel: residual_block_forward.3
$region0: #{residual_block_forward.3}
  #allocation0 [shape = 'u32[]', space=smem, size = 0x4, offset = 0x4, fixed_abs, tag = 'smem constant byte address 0x4 - core index']
  #allocation1 [shape = 'u32[144,128]{1,0:T(1,128)}', space=vmem, size = 0x12000, scoped, tag = 'internal scratch']
  #allocation2 [shape = 'f32[18,18,4]{2,1,0:T(8,128)}', space=vmem, size = 0x36000, scoped, tag = 'scratch operand']
  %s0 = inlined_call_operand.vmem [shape: f32[2,16,16,4], index: 0, kind: input, shape index: {}]
  %s1 = inlined_call_operand.vmem [shape: f32[36,8], index: 1, kind: input, shape index: {}]
  %s2 = inlined_call_operand.vmem [shape: f32[4,8], index: 2, kind: input, shape index: {}]
  %s3 = inlined_call_operand.vmem [shape: f32[2,16,16,8], index: 3, kind: output, shape index: {0}]
  %s4 = inlined_call_operand.vmem [shape: f32[2,2,8], index: 4, kind: output, shape index: {1}]
  %s5 = inlined_call_operand.vmem [shape: f32[2,2,8], index: 5, kind: output, shape index: {2}]
  %6 = xla_tuple %s3, %s4, %s5
  %s7 = sld [smem:[#allocation0]]
  $region61: #{residual_block_forward.3} parent=0
    _
  %s9 = ssub.s32 1, %s7
  %s10 = scalar_select 0, %s9, %s7
  loop: start=0, step=1, limit=4
  $region2: #{residual_block_forward.3} parent=0 // loop_pre_header
    _
  $region3: #{residual_block_forward.3} parent=0 // loop_header
    %s12 = sphi 0, %s16
    %p13 = scmp.ge.s32.totalorder %s12, 4
    %s22 = sphi 0, %s24
    %s25 = sphi 0, %s22
    %s26 = sphi 0, %s25
    %s42 = sphi 0, %s26
    %s46 = sphi 0, %s46
    %s48 = sphi 0, %s46
    %s49 = sphi 0, %s48
    %s63 = sphi 0, %s49
    %s67 = sphi 0, %s67
    %s69 = sphi 0, %s67
    %s70 = sphi 0, %s69
    %s84 = sphi 0, %s70
    %s90 = sphi 0, %s92
    %s93 = sphi 0, %s90
    %s94 = sphi 0, %s93
    %s110 = sphi 0, %s94
    %s116 = sphi 0, %s118
    %s119 = sphi 0, %s116
    %s120 = sphi 0, %s119
    %s136 = sphi 0, %s120
    %s142 = sphi 0, %s144
    %s145 = sphi 0, %s142
    %s146 = sphi 0, %s145
    %s162 = sphi 0, %s146
  $region4: #{residual_block_forward.3} parent=0 // loop_header_branch
    %15 = sbr.rel (%p13) target = $region8
  $region5: #{residual_block_forward.3} parent=0 // loop_body
    %s17 = ssub.s32 %s12, 1
    %s18 = ssub.s32 %s12, 2
    %s19 = sadd.s32 %s12, 1
    %s20 = ssub.s32 %s12, %s19
    %p21 = scmp.eq.s32.totalorder %s20, 0
    %s23 = sadd.s32 %s22, 1
    %s24 = scalar_select %p21, %s22, %s23
    %p27 = pneg %p21
    %p28 = scmp.eq.s32.totalorder %s12, 1
    %p29 = por %p27, %p28
    %p30 = scmp.ne.s32.totalorder %s22, %s25
    %p31 = scmp.eq.s32.totalorder %s12, 0
    %p32 = por %p30, %p31
    %p33 = scmp.ne.s32.totalorder %s22, %s25
    %p34 = scmp.eq.s32.totalorder %s17, 1
    %p35 = por %p33, %p34
    %p36 = scmp.ne.s32.totalorder %s25, %s26
    %p37 = scmp.eq.s32.totalorder %s17, 0
    %p38 = por %p36, %p37
    %p39 = scmp.ne.s32.totalorder %s25, %s26
    %p40 = scmp.eq.s32.totalorder %s18, 1
    %p41 = por %p39, %p40
    %p43 = scmp.ne.s32.totalorder %s26, %s42
    %p44 = scmp.eq.s32.totalorder %s18, 0
    %p45 = por %p43, %p44
    %s47 = sadd.s32 %s46, 1
    %p50 = scmp.eq.s32.totalorder %s12, 1
    %p51 = scmp.ne.s32.totalorder %s46, %s48
    %p52 = scmp.eq.s32.totalorder %s12, 0
    %p53 = por %p51, %p52
    %p54 = scmp.ne.s32.totalorder %s46, %s48
    %p55 = scmp.eq.s32.totalorder %s17, 1
    %p56 = por %p54, %p55
    %p57 = scmp.ne.s32.totalorder %s48, %s49
    %p58 = scmp.eq.s32.totalorder %s17, 0
    %p59 = por %p57, %p58
    %p60 = scmp.ne.s32.totalorder %s48, %s49
    %p61 = scmp.eq.s32.totalorder %s18, 1
    %p62 = por %p60, %p61
    %p64 = scmp.ne.s32.totalorder %s49, %s63
    %p65 = scmp.eq.s32.totalorder %s18, 0
    %p66 = por %p64, %p65
    %s68 = sadd.s32 %s67, 1
    %p71 = scmp.eq.s32.totalorder %s12, 1
    %p72 = scmp.ne.s32.totalorder %s67, %s69
    %p73 = scmp.eq.s32.totalorder %s12, 0
    %p74 = por %p72, %p73
    %p75 = scmp.ne.s32.totalorder %s67, %s69
    %p76 = scmp.eq.s32.totalorder %s17, 1
    %p77 = por %p75, %p76
    %p78 = scmp.ne.s32.totalorder %s69, %s70
    %p79 = scmp.eq.s32.totalorder %s17, 0
    %p80 = por %p78, %p79
    %p81 = scmp.ne.s32.totalorder %s69, %s70
    %p82 = scmp.eq.s32.totalorder %s18, 1
    %p83 = por %p81, %p82
    %p85 = scmp.ne.s32.totalorder %s70, %s84
    %p86 = scmp.eq.s32.totalorder %s18, 0
    %p87 = por %p85, %p86
    %s88 = ssub.s32 %s12, %s19
    %p89 = scmp.eq.s32.totalorder %s88, 0
    %s91 = sadd.s32 %s90, 1
    %s92 = scalar_select %p89, %s90, %s91
    %p95 = pneg %p89
    %p96 = scmp.eq.s32.totalorder %s12, 1
    %p97 = por %p95, %p96
    %p98 = scmp.ne.s32.totalorder %s90, %s93
    %p99 = scmp.eq.s32.totalorder %s12, 0
    %p100 = por %p98, %p99
    %p101 = scmp.ne.s32.totalorder %s90, %s93
    %p102 = scmp.eq.s32.totalorder %s17, 1
    %p103 = por %p101, %p102
    %p104 = scmp.ne.s32.totalorder %s93, %s94
    %p105 = scmp.eq.s32.totalorder %s17, 0
    %p106 = por %p104, %p105
    %p107 = scmp.ne.s32.totalorder %s93, %s94
    %p108 = scmp.eq.s32.totalorder %s18, 1
    %p109 = por %p107, %p108
    %p111 = scmp.ne.s32.totalorder %s94, %s110
    %p112 = scmp.eq.s32.totalorder %s18, 0
    %p113 = por %p111, %p112
    %s114 = ssub.s32 %s12, %s19
    %p115 = scmp.eq.s32.totalorder %s114, 0
    %s117 = sadd.s32 %s116, 1
    %s118 = scalar_select %p115, %s116, %s117
    %p121 = pneg %p115
    %p122 = scmp.eq.s32.totalorder %s12, 1
    %p123 = por %p121, %p122
    %p124 = scmp.ne.s32.totalorder %s116, %s119
    %p125 = scmp.eq.s32.totalorder %s12, 0
    %p126 = por %p124, %p125
    %p127 = scmp.ne.s32.totalorder %s116, %s119
    %p128 = scmp.eq.s32.totalorder %s17, 1
    %p129 = por %p127, %p128
    %p130 = scmp.ne.s32.totalorder %s119, %s120
    %p131 = scmp.eq.s32.totalorder %s17, 0
    %p132 = por %p130, %p131
    %p133 = scmp.ne.s32.totalorder %s119, %s120
    %p134 = scmp.eq.s32.totalorder %s18, 1
    %p135 = por %p133, %p134
    %p137 = scmp.ne.s32.totalorder %s120, %s136
    %p138 = scmp.eq.s32.totalorder %s18, 0
    %p139 = por %p137, %p138
    %s140 = ssub.s32 %s12, %s19
    %p141 = scmp.eq.s32.totalorder %s140, 0
    %s143 = sadd.s32 %s142, 1
    %s144 = scalar_select %p141, %s142, %s143
    %p147 = pneg %p141
    %p148 = scmp.eq.s32.totalorder %s12, 1
    %p149 = por %p147, %p148
    %p150 = scmp.ne.s32.totalorder %s142, %s145
    %p151 = scmp.eq.s32.totalorder %s12, 0
    %p152 = por %p150, %p151
    %p153 = scmp.ne.s32.totalorder %s142, %s145
    %p154 = scmp.eq.s32.totalorder %s17, 1
    %p155 = por %p153, %p154
    %p156 = scmp.ne.s32.totalorder %s145, %s146
    %p157 = scmp.eq.s32.totalorder %s17, 0
    %p158 = por %p156, %p157
    %p159 = scmp.ne.s32.totalorder %s145, %s146
    %p160 = scmp.eq.s32.totalorder %s18, 1
    %p161 = por %p159, %p160
    %p163 = scmp.ne.s32.totalorder %s146, %s162
    %p164 = scmp.eq.s32.totalorder %s18, 0
    %p165 = por %p163, %p164
    %p166 = scmp.le.s32.totalorder 1, %s12
    %p167 = scmp.lt.s32.totalorder %s12, 3
    %p168 = pnand %p166, %p167
    %p169 = pneg %p168
    // Predicated region
    $region9: #{residual_block_forward.3} parent=5 // pred_check
      _
    $region10: #{residual_block_forward.3} parent=5 // pred_check_branch
      %171 = sbr.rel (%p168) target = $region12
    $region11: #{residual_block_forward.3} parent=5 // pred_region
      %s172 = ssub.s32 %s12, 1
      // Predicated region
      $region13: #{residual_block_forward.3} parent=11 // pred_check
        %p173 = pneg %p59
      $region14: #{residual_block_forward.3} parent=11 // pred_check_branch
        %175 = sbr.rel (%p173) target = $region16
      $region15: #{residual_block_forward.3} parent=11 // pred_region
        _
      $region16: #{residual_block_forward.3} parent=11 // pred_fallthru
        _
      // Predicated region
      $region17: #{residual_block_forward.3} parent=11 // pred_check
        %p176 = pneg %p80
      $region18: #{residual_block_forward.3} parent=11 // pred_check_branch
        %178 = sbr.rel (%p176) target = $region20
      $region19: #{residual_block_forward.3} parent=11 // pred_region
        _
      $region20: #{residual_block_forward.3} parent=11 // pred_fallthru
        _
    $region12: #{residual_block_forward.3} parent=5 // pred_fallthru
      _
    %p179 = scmp.lt.s32.totalorder %s12, 2
    // Predicated region
    $region21: #{residual_block_forward.3} parent=5 // pred_check
      %p180 = pneg %p179
    $region22: #{residual_block_forward.3} parent=5 // pred_check_branch
      %182 = sbr.rel (%p180) target = $region24
    $region23: #{residual_block_forward.3} parent=5 // pred_region
      // Predicated region
      $region25: #{residual_block_forward.3} parent=23 // pred_check
        %p183 = pneg %p32
      $region26: #{residual_block_forward.3} parent=23 // pred_check_branch
        %185 = sbr.rel (%p183) target = $region28
      $region27: #{residual_block_forward.3} parent=23 // pred_region
        %p186 = scmp.lt.s32.totalorder %s12, 1
        %s187 = scalar_select %p186, %s12, 1
        %s188 = smul.addr %s187, 32
        %s189 = smul.addr %s188, 8
        %s190 = scalar_lea.vmem %s0, %s189
      $region28: #{residual_block_forward.3} parent=23 // pred_fallthru
        _
    $region24: #{residual_block_forward.3} parent=5 // pred_fallthru
      _
    %p191 = scmp.le.s32.totalorder 1, %s12
    %p192 = scmp.lt.s32.totalorder %s12, 3
    %p193 = pnand %p191, %p192
    %p194 = pneg %p193
    // Predicated region
    $region29: #{residual_block_forward.3} parent=5 // pred_check
      _
    $region30: #{residual_block_forward.3} parent=5 // pred_check_branch
      %196 = sbr.rel (%p193) target = $region32
    $region31: #{residual_block_forward.3} parent=5 // pred_region
      %s197 = ssub.s32 %s12, 1
      %p198 = scmp.lt.s32.totalorder %s17, 1
      %s199 = scalar_select %p198, %s17, 1
      %s200 = smul.addr %s199, 32
      %s201 = smul.addr %s200, 8
      %s202 = scalar_lea.vmem %s0, %s201
      %p203 = pneg %p38
      %p204 = pneg %p35
      %p205 = pneg %p59
      %p206 = pneg %p56
      %p207 = pneg %p80
      %p208 = pneg %p77
      %p209 = pneg %p106
      %p210 = pneg %p103
      %p211 = scmp.lt.s32.totalorder %s17, 1
      %s212 = scalar_select %p211, %s17, 1
      %s213 = smul.addr %s212, 32
      %s214 = smul.addr %s213, 8
      %s215 = scalar_lea.vmem %s3, %s214
      %p216 = pneg %p132
      %p217 = pneg %p129
      %p218 = scmp.lt.s32.totalorder %s17, 1
      %s219 = scalar_select %p218, %s17, 1
      %s220 = smul.addr %s219, 2
      %s221 = scalar_lea.vmem %s4, %s220
      %p222 = pneg %p158
      %p223 = pneg %p155
      %p224 = scmp.lt.s32.totalorder %s17, 1
      %s225 = scalar_select %p224, %s17, 1
      %s226 = smul.addr %s225, 2
      %s227 = scalar_lea.vmem %s5, %s226
      %p228 = scmp.lt.s32.totalorder %s17, 1
      %s229 = scalar_select %p228, %s17, 1
      %s230 = smul.addr %s229, 32
      %s231 = smul.addr %s230, 8
      %s232 = scalar_lea.vmem %s0, %s231
      %p233 = scmp.lt.s32.totalorder %s17, 1
      %s234 = scalar_select %p233, %s17, 1
      %s235 = smul.addr %s234, 32
      %s236 = smul.addr %s235, 8
      %s237 = scalar_lea.vmem %s3, %s236
      %p238 = scmp.lt.s32.totalorder %s17, 1
      %s239 = scalar_select %p238, %s17, 1
      %s240 = smul.addr %s239, 2
      %s241 = scalar_lea.vmem %s4, %s240
      %p242 = scmp.lt.s32.totalorder %s17, 1
      %s243 = scalar_select %p242, %s17, 1
      %s244 = smul.addr %s243, 2
      %s245 = scalar_lea.vmem %s5, %s244
      %v246 = vld [vmem:[%s232] sm:$0xff]
      %v247 = vld [vmem:[%s232 + $0x8] sm:$0xff]
      %v248 = vld [vmem:[%s232 + $0x10] sm:$0xff]
      %v249 = vld [vmem:[%s232 + $0x18] sm:$0xff]
      %v250 = vld [vmem:[%s232 + $0x20] sm:$0xff]
      %v251 = vld [vmem:[%s232 + $0x28] sm:$0xff]
      %v252 = vld [vmem:[%s232 + $0x30] sm:$0xff]
      %v253 = vld [vmem:[%s232 + $0x38] sm:$0xff]
      %v254 = vld [vmem:[%s232 + $0x40] sm:$0xff]
      %v255 = vld [vmem:[%s232 + $0x48] sm:$0xff]
      %v256 = vld [vmem:[%s232 + $0x50] sm:$0xff]
      %v257 = vld [vmem:[%s232 + $0x58] sm:$0xff]
      %v258 = vld [vmem:[%s232 + $0x60] sm:$0xff]
      %v259 = vld [vmem:[%s232 + $0x68] sm:$0xff]
      %v260 = vld [vmem:[%s232 + $0x70] sm:$0xff]
      %v261 = vld [vmem:[%s232 + $0x78] sm:$0xff]
      %v262 = vld [vmem:[%s232 + $0x80] sm:$0xff]
      %v263 = vld [vmem:[%s232 + $0x88] sm:$0xff]
      %v264 = vld [vmem:[%s232 + $0x90] sm:$0xff]
      %v265 = vld [vmem:[%s232 + $0x98] sm:$0xff]
      %v266 = vld [vmem:[%s232 + $0xa0] sm:$0xff]
      %v267 = vld [vmem:[%s232 + $0xa8] sm:$0xff]
      %v268 = vld [vmem:[%s232 + $0xb0] sm:$0xff]
      %v269 = vld [vmem:[%s232 + $0xb8] sm:$0xff]
      %v270 = vld [vmem:[%s232 + $0xc0] sm:$0xff]
      %v271 = vld [vmem:[%s232 + $0xc8] sm:$0xff]
      %v272 = vld [vmem:[%s232 + $0xd0] sm:$0xff]
      %v273 = vld [vmem:[%s232 + $0xd8] sm:$0xff]
      %v274 = vld [vmem:[%s232 + $0xe0] sm:$0xff]
      %v275 = vld [vmem:[%s232 + $0xe8] sm:$0xff]
      %v276 = vld [vmem:[%s232 + $0xf0] sm:$0xff]
      %v277 = vld [vmem:[%s232 + $0xf8] sm:$0xff]
      %vm278 = vcmask 31744
      %279 = vst.msk [vmem:[#allocation2] sm:$0xff] %vm278, 0.0
      %280 = vst.msk [vmem:[#allocation2 + $0x8] sm:$0xff] %vm278, 0.0
      %vm281 = vcmask 25600
      %282 = vst.msk [vmem:[#allocation2 + $0x10] sm:$0x3] %vm281, 0.0
      %283 = vst.msk [vmem:[#allocation2 + $0x18] sm:$0xff] %vm278, 0.0
      %284 = vst.msk [vmem:[#allocation2 + $0x20] sm:$0xff] %vm278, 0.0
      %285 = vst.msk [vmem:[#allocation2 + $0x28] sm:$0x3] %vm281, 0.0
      %286 = vst.msk [vmem:[#allocation2 + $0x30] sm:$0xff] %vm278, 0.0
      %287 = vst.msk [vmem:[#allocation2 + $0x38] sm:$0xff] %vm278, 0.0
      %288 = vst.msk [vmem:[#allocation2 + $0x40] sm:$0x3] %vm281, 0.0
      %289 = vst.msk [vmem:[#allocation2 + $0x48] sm:$0xff] %vm278, 0.0
      %290 = vst.msk [vmem:[#allocation2 + $0x50] sm:$0xff] %vm278, 0.0
      %291 = vst.msk [vmem:[#allocation2 + $0x58] sm:$0x3] %vm281, 0.0
      %292 = vst.msk [vmem:[#allocation2 + $0x60] sm:$0xff] %vm278, 0.0
      %293 = vst.msk [vmem:[#allocation2 + $0x68] sm:$0xff] %vm278, 0.0
      %294 = vst.msk [vmem:[#allocation2 + $0x70] sm:$0x3] %vm281, 0.0
      %295 = vst.msk [vmem:[#allocation2 + $0x78] sm:$0xff] %vm278, 0.0
      %296 = vst.msk [vmem:[#allocation2 + $0x80] sm:$0xff] %vm278, 0.0
      %297 = vst.msk [vmem:[#allocation2 + $0x88] sm:$0x3] %vm281, 0.0
      %298 = vst.msk [vmem:[#allocation2 + $0x90] sm:$0xff] %vm278, 0.0
      %299 = vst.msk [vmem:[#allocation2 + $0x98] sm:$0xff] %vm278, 0.0
      %300 = vst.msk [vmem:[#allocation2 + $0xa0] sm:$0x3] %vm281, 0.0
      %301 = vst.msk [vmem:[#allocation2 + $0xa8] sm:$0xff] %vm278, 0.0
      %302 = vst.msk [vmem:[#allocation2 + $0xb0] sm:$0xff] %vm278, 0.0
      %303 = vst.msk [vmem:[#allocation2 + $0xb8] sm:$0x3] %vm281, 0.0
      %304 = vst.msk [vmem:[#allocation2 + $0xc0] sm:$0xff] %vm278, 0.0
      %305 = vst.msk [vmem:[#allocation2 + $0xc8] sm:$0xff] %vm278, 0.0
      %306 = vst.msk [vmem:[#allocation2 + $0xd0] sm:$0x3] %vm281, 0.0
      %307 = vst.msk [vmem:[#allocation2 + $0xd8] sm:$0xff] %vm278, 0.0
      %308 = vst.msk [vmem:[#allocation2 + $0xe0] sm:$0xff] %vm278, 0.0
      %309 = vst.msk [vmem:[#allocation2 + $0xe8] sm:$0x3] %vm281, 0.0
      %310 = vst.msk [vmem:[#allocation2 + $0xf0] sm:$0xff] %vm278, 0.0
      %311 = vst.msk [vmem:[#allocation2 + $0xf8] sm:$0xff] %vm278, 0.0
      %312 = vst.msk [vmem:[#allocation2 + $0x100] sm:$0x3] %vm281, 0.0
      %313 = vst.msk [vmem:[#allocation2 + $0x108] sm:$0xff] %vm278, 0.0
      %314 = vst.msk [vmem:[#allocation2 + $0x110] sm:$0xff] %vm278, 0.0
      %315 = vst.msk [vmem:[#allocation2 + $0x118] sm:$0x3] %vm281, 0.0
      %316 = vst.msk [vmem:[#allocation2 + $0x120] sm:$0xff] %vm278, 0.0
      %317 = vst.msk [vmem:[#allocation2 + $0x128] sm:$0xff] %vm278, 0.0
      %318 = vst.msk [vmem:[#allocation2 + $0x130] sm:$0x3] %vm281, 0.0
      %319 = vst.msk [vmem:[#allocation2 + $0x138] sm:$0xff] %vm278, 0.0
      %320 = vst.msk [vmem:[#allocation2 + $0x140] sm:$0xff] %vm278, 0.0
      %321 = vst.msk [vmem:[#allocation2 + $0x148] sm:$0x3] %vm281, 0.0
      %322 = vst.msk [vmem:[#allocation2 + $0x150] sm:$0xff] %vm278, 0.0
      %323 = vst.msk [vmem:[#allocation2 + $0x158] sm:$0xff] %vm278, 0.0
      %324 = vst.msk [vmem:[#allocation2 + $0x160] sm:$0x3] %vm281, 0.0
      %325 = vst.msk [vmem:[#allocation2 + $0x168] sm:$0xff] %vm278, 0.0
      %326 = vst.msk [vmem:[#allocation2 + $0x170] sm:$0xff] %vm278, 0.0
      %327 = vst.msk [vmem:[#allocation2 + $0x178] sm:$0x3] %vm281, 0.0
      %328 = vst.msk [vmem:[#allocation2 + $0x180] sm:$0xff] %vm278, 0.0
      %329 = vst.msk [vmem:[#allocation2 + $0x188] sm:$0xff] %vm278, 0.0
      %330 = vst.msk [vmem:[#allocation2 + $0x190] sm:$0x3] %vm281, 0.0
      %331 = vst.msk [vmem:[#allocation2 + $0x198] sm:$0xff] %vm278, 0.0
      %332 = vst.msk [vmem:[#allocation2 + $0x1a0] sm:$0xff] %vm278, 0.0
      %333 = vst.msk [vmem:[#allocation2 + $0x1a8] sm:$0x3] %vm281, 0.0
      %s334 = scalar_lea.vmem [#allocation2], 24
      %335 = vst.msk [vmem:[%s334 + $0x1] sm:$0xff] %vm278, %v246
      %336 = vst.msk [vmem:[%s334 + $0x9] sm:$0xff] %vm278, %v247
      %337 = vst.msk [vmem:[%s334 + $0x19] sm:$0xff] %vm278, %v248
      %338 = vst.msk [vmem:[%s334 + $0x21] sm:$0xff] %vm278, %v249
      %339 = vst.msk [vmem:[%s334 + $0x31] sm:$0xff] %vm278, %v250
      %340 = vst.msk [vmem:[%s334 + $0x39] sm:$0xff] %vm278, %v251
      %341 = vst.msk [vmem:[%s334 + $0x49] sm:$0xff] %vm278, %v252
      %342 = vst.msk [vmem:[%s334 + $0x51] sm:$0xff] %vm278, %v253
      %343 = vst.msk [vmem:[%s334 + $0x61] sm:$0xff] %vm278, %v254
      %344 = vst.msk [vmem:[%s334 + $0x69] sm:$0xff] %vm278, %v255
      %345 = vst.msk [vmem:[%s334 + $0x79] sm:$0xff] %vm278, %v256
      %346 = vst.msk [vmem:[%s334 + $0x81] sm:$0xff] %vm278, %v257
      %347 = vst.msk [vmem:[%s334 + $0x91] sm:$0xff] %vm278, %v258
      %348 = vst.msk [vmem:[%s334 + $0x99] sm:$0xff] %vm278, %v259
      %349 = vst.msk [vmem:[%s334 + $0xa9] sm:$0xff] %vm278, %v260
      %350 = vst.msk [vmem:[%s334 + $0xb1] sm:$0xff] %vm278, %v261
      %351 = vst.msk [vmem:[%s334 + $0xc1] sm:$0xff] %vm278, %v262
      %352 = vst.msk [vmem:[%s334 + $0xc9] sm:$0xff] %vm278, %v263
      %353 = vst.msk [vmem:[%s334 + $0xd9] sm:$0xff] %vm278, %v264
      %354 = vst.msk [vmem:[%s334 + $0xe1] sm:$0xff] %vm278, %v265
      %355 = vst.msk [vmem:[%s334 + $0xf1] sm:$0xff] %vm278, %v266
      %356 = vst.msk [vmem:[%s334 + $0xf9] sm:$0xff] %vm278, %v267
      %357 = vst.msk [vmem:[%s334 + $0x109] sm:$0xff] %vm278, %v268
      %358 = vst.msk [vmem:[%s334 + $0x111] sm:$0xff] %vm278, %v269
      %359 = vst.msk [vmem:[%s334 + $0x121] sm:$0xff] %vm278, %v270
      %360 = vst.msk [vmem:[%s334 + $0x129] sm:$0xff] %vm278, %v271
      %361 = vst.msk [vmem:[%s334 + $0x139] sm:$0xff] %vm278, %v272
      %362 = vst.msk [vmem:[%s334 + $0x141] sm:$0xff] %vm278, %v273
      %363 = vst.msk [vmem:[%s334 + $0x151] sm:$0xff] %vm278, %v274
      %364 = vst.msk [vmem:[%s334 + $0x159] sm:$0xff] %vm278, %v275
      %365 = vst.msk [vmem:[%s334 + $0x169] sm:$0xff] %vm278, %v276
      %366 = vst.msk [vmem:[%s334 + $0x171] sm:$0xff] %vm278, %v277
      %v367 = vld [vmem:[#allocation2] sm:$0xff]
      %v368 = vld [vmem:[#allocation2 + $0x8] sm:$0xff]
      %v369 = vld [vmem:[#allocation2 + $0x18] sm:$0xff]
      %v370 = vld [vmem:[#allocation2 + $0x20] sm:$0xff]
      %v371 = vld [vmem:[#allocation2 + $0x30] sm:$0xff]
      %v372 = vld [vmem:[#allocation2 + $0x38] sm:$0xff]
      %v373 = vld [vmem:[#allocation2 + $0x48] sm:$0xff]
      %v374 = vld [vmem:[#allocation2 + $0x50] sm:$0xff]
      %v375 = vld [vmem:[#allocation2 + $0x60] sm:$0xff]
      %v376 = vld [vmem:[#allocation2 + $0x68] sm:$0xff]
      %v377 = vld [vmem:[#allocation2 + $0x78] sm:$0xff]
      %v378 = vld [vmem:[#allocation2 + $0x80] sm:$0xff]
      %v379 = vld [vmem:[#allocation2 + $0x90] sm:$0xff]
      %v380 = vld [vmem:[#allocation2 + $0x98] sm:$0xff]
      %v381 = vld [vmem:[#allocation2 + $0xa8] sm:$0xff]
      %v382 = vld [vmem:[#allocation2 + $0xb0] sm:$0xff]
      %v383 = vld [vmem:[#allocation2 + $0xc0] sm:$0xff]
      %v384 = vld [vmem:[#allocation2 + $0xc8] sm:$0xff]
      %v385 = vld [vmem:[#allocation2 + $0xd8] sm:$0xff]
      %v386 = vld [vmem:[#allocation2 + $0xe0] sm:$0xff]
      %v387 = vld [vmem:[#allocation2 + $0xf0] sm:$0xff]
      %v388 = vld [vmem:[#allocation2 + $0xf8] sm:$0xff]
      %v389 = vld [vmem:[#allocation2 + $0x108] sm:$0xff]
      %v390 = vld [vmem:[#allocation2 + $0x110] sm:$0xff]
      %v391 = vld [vmem:[#allocation2 + $0x120] sm:$0xff]
      %v392 = vld [vmem:[#allocation2 + $0x128] sm:$0xff]
      %v393 = vld [vmem:[#allocation2 + $0x138] sm:$0xff]
      %v394 = vld [vmem:[#allocation2 + $0x140] sm:$0xff]
      %v395 = vld [vmem:[#allocation2 + $0x150] sm:$0xff]
      %v396 = vld [vmem:[#allocation2 + $0x158] sm:$0xff]
      %v397 = vld [vmem:[#allocation2 + $0x168] sm:$0xff]
      %v398 = vld [vmem:[#allocation2 + $0x170] sm:$0xff]
      %v399 = vld [vmem:[#allocation2 + $0x1] sm:$0xff]
      %v400 = vld [vmem:[#allocation2 + $0x9] sm:$0xff]
      %v401 = vld [vmem:[#allocation2 + $0x19] sm:$0xff]
      %v402 = vld [vmem:[#allocation2 + $0x21] sm:$0xff]
      %v403 = vld [vmem:[#allocation2 + $0x31] sm:$0xff]
      %v404 = vld [vmem:[#allocation2 + $0x39] sm:$0xff]
      %v405 = vld [vmem:[#allocation2 + $0x49] sm:$0xff]
      %v406 = vld [vmem:[#allocation2 + $0x51] sm:$0xff]
      %v407 = vld [vmem:[#allocation2 + $0x61] sm:$0xff]
      %v408 = vld [vmem:[#allocation2 + $0x69] sm:$0xff]
      %v409 = vld [vmem:[#allocation2 + $0x79] sm:$0xff]
      %v410 = vld [vmem:[#allocation2 + $0x81] sm:$0xff]
      %v411 = vld [vmem:[#allocation2 + $0x91] sm:$0xff]
      %v412 = vld [vmem:[#allocation2 + $0x99] sm:$0xff]
      %v413 = vld [vmem:[#allocation2 + $0xa9] sm:$0xff]
      %v414 = vld [vmem:[#allocation2 + $0xb1] sm:$0xff]
      %v415 = vld [vmem:[#allocation2 + $0xc1] sm:$0xff]
      %v416 = vld [vmem:[#allocation2 + $0xc9] sm:$0xff]
      %v417 = vld [vmem:[#allocation2 + $0xd9] sm:$0xff]
      %v418 = vld [vmem:[#allocation2 + $0xe1] sm:$0xff]
      %v419 = vld [vmem:[#allocation2 + $0xf1] sm:$0xff]
      %v420 = vld [vmem:[#allocation2 + $0xf9] sm:$0xff]
      %v421 = vld [vmem:[#allocation2 + $0x109] sm:$0xff]
      %v422 = vld [vmem:[#allocation2 + $0x111] sm:$0xff]
      %v423 = vld [vmem:[#allocation2 + $0x121] sm:$0xff]
      %v424 = vld [vmem:[#allocation2 + $0x129] sm:$0xff]
      %v425 = vld [vmem:[#allocation2 + $0x139] sm:$0xff]
      %v426 = vld [vmem:[#allocation2 + $0x141] sm:$0xff]
      %v427 = vld [vmem:[#allocation2 + $0x151] sm:$0xff]
      %v428 = vld [vmem:[#allocation2 + $0x159] sm:$0xff]
      %v429 = vld [vmem:[#allocation2 + $0x169] sm:$0xff]
      %v430 = vld [vmem:[#allocation2 + $0x171] sm:$0xff]
      %v431 = vld [vmem:[#allocation2 + $0x2] sm:$0xff]
      %v432 = vld [vmem:[#allocation2 + $0xa] sm:$0xff]
      %v433 = vld [vmem:[#allocation2 + $0x1a] sm:$0xff]
      %v434 = vld [vmem:[#allocation2 + $0x22] sm:$0xff]
      %v435 = vld [vmem:[#allocation2 + $0x32] sm:$0xff]
      %v436 = vld [vmem:[#allocation2 + $0x3a] sm:$0xff]
      %v437 = vld [vmem:[#allocation2 + $0x4a] sm:$0xff]
      %v438 = vld [vmem:[#allocation2 + $0x52] sm:$0xff]
      %v439 = vld [vmem:[#allocation2 + $0x62] sm:$0xff]
      %v440 = vld [vmem:[#allocation2 + $0x6a] sm:$0xff]
      %v441 = vld [vmem:[#allocation2 + $0x7a] sm:$0xff]
      %v442 = vld [vmem:[#allocation2 + $0x82] sm:$0xff]
      %v443 = vld [vmem:[#allocation2 + $0x92] sm:$0xff]
      %v444 = vld [vmem:[#allocation2 + $0x9a] sm:$0xff]
      %v445 = vld [vmem:[#allocation2 + $0xaa] sm:$0xff]
      %v446 = vld [vmem:[#allocation2 + $0xb2] sm:$0xff]
      %v447 = vld [vmem:[#allocation2 + $0xc2] sm:$0xff]
      %v448 = vld [vmem:[#allocation2 + $0xca] sm:$0xff]
      %v449 = vld [vmem:[#allocation2 + $0xda] sm:$0xff]
      %v450 = vld [vmem:[#allocation2 + $0xe2] sm:$0xff]
      %v451 = vld [vmem:[#allocation2 + $0xf2] sm:$0xff]
      %v452 = vld [vmem:[#allocation2 + $0xfa] sm:$0xff]
      %v453 = vld [vmem:[#allocation2 + $0x10a] sm:$0xff]
      %v454 = vld [vmem:[#allocation2 + $0x112] sm:$0xff]
      %v455 = vld [vmem:[#allocation2 + $0x122] sm:$0xff]
      %v456 = vld [vmem:[#allocation2 + $0x12a] sm:$0xff]
      %v457 = vld [vmem:[#allocation2 + $0x13a] sm:$0xff]
      %v458 = vld [vmem:[#allocation2 + $0x142] sm:$0xff]
      %v459 = vld [vmem:[#allocation2 + $0x152] sm:$0xff]
      %v460 = vld [vmem:[#allocation2 + $0x15a] sm:$0xff]
      %v461 = vld [vmem:[#allocation2 + $0x16a] sm:$0xff]
      %v462 = vld [vmem:[#allocation2 + $0x172] sm:$0xff]
      %v463 = vld [vmem:[%s334] sm:$0xff]
      %v464 = vld [vmem:[%s334 + $0x8] sm:$0xff]
      %v465 = vld [vmem:[%s334 + $0x18] sm:$0xff]
      %v466 = vld [vmem:[%s334 + $0x20] sm:$0xff]
      %v467 = vld [vmem:[%s334 + $0x30] sm:$0xff]
      %v468 = vld [vmem:[%s334 + $0x38] sm:$0xff]
      %v469 = vld [vmem:[%s334 + $0x48] sm:$0xff]
      %v470 = vld [vmem:[%s334 + $0x50] sm:$0xff]
      %v471 = vld [vmem:[%s334 + $0x60] sm:$0xff]
      %v472 = vld [vmem:[%s334 + $0x68] sm:$0xff]
      %v473 = vld [vmem:[%s334 + $0x78] sm:$0xff]
      %v474 = vld [vmem:[%s334 + $0x80] sm:$0xff]
      %v475 = vld [vmem:[%s334 + $0x90] sm:$0xff]
      %v476 = vld [vmem:[%s334 + $0x98] sm:$0xff]
      %v477 = vld [vmem:[%s334 + $0xa8] sm:$0xff]
      %v478 = vld [vmem:[%s334 + $0xb0] sm:$0xff]
      %v479 = vld [vmem:[%s334 + $0xc0] sm:$0xff]
      %v480 = vld [vmem:[%s334 + $0xc8] sm:$0xff]
      %v481 = vld [vmem:[%s334 + $0xd8] sm:$0xff]
      %v482 = vld [vmem:[%s334 + $0xe0] sm:$0xff]
      %v483 = vld [vmem:[%s334 + $0xf0] sm:$0xff]
      %v484 = vld [vmem:[%s334 + $0xf8] sm:$0xff]
      %v485 = vld [vmem:[%s334 + $0x108] sm:$0xff]
      %v486 = vld [vmem:[%s334 + $0x110] sm:$0xff]
      %v487 = vld [vmem:[%s334 + $0x120] sm:$0xff]
      %v488 = vld [vmem:[%s334 + $0x128] sm:$0xff]
      %v489 = vld [vmem:[%s334 + $0x138] sm:$0xff]
      %v490 = vld [vmem:[%s334 + $0x140] sm:$0xff]
      %v491 = vld [vmem:[%s334 + $0x150] sm:$0xff]
      %v492 = vld [vmem:[%s334 + $0x158] sm:$0xff]
      %v493 = vld [vmem:[%s334 + $0x168] sm:$0xff]
      %v494 = vld [vmem:[%s334 + $0x170] sm:$0xff]
      %v495 = vld [vmem:[%s334 + $0x1] sm:$0xff]
      %v496 = vld [vmem:[%s334 + $0x9] sm:$0xff]
      %v497 = vld [vmem:[%s334 + $0x19] sm:$0xff]
      %v498 = vld [vmem:[%s334 + $0x21] sm:$0xff]
      %v499 = vld [vmem:[%s334 + $0x31] sm:$0xff]
      %v500 = vld [vmem:[%s334 + $0x39] sm:$0xff]
      %v501 = vld [vmem:[%s334 + $0x49] sm:$0xff]
      %v502 = vld [vmem:[%s334 + $0x51] sm:$0xff]
      %v503 = vld [vmem:[%s334 + $0x61] sm:$0xff]
      %v504 = vld [vmem:[%s334 + $0x69] sm:$0xff]
      %v505 = vld [vmem:[%s334 + $0x79] sm:$0xff]
      %v506 = vld [vmem:[%s334 + $0x81] sm:$0xff]
      %v507 = vld [vmem:[%s334 + $0x91] sm:$0xff]
      %v508 = vld [vmem:[%s334 + $0x99] sm:$0xff]
      %v509 = vld [vmem:[%s334 + $0xa9] sm:$0xff]
      %v510 = vld [vmem:[%s334 + $0xb1] sm:$0xff]
      %v511 = vld [vmem:[%s334 + $0xc1] sm:$0xff]
      %v512 = vld [vmem:[%s334 + $0xc9] sm:$0xff]
      %v513 = vld [vmem:[%s334 + $0xd9] sm:$0xff]
      %v514 = vld [vmem:[%s334 + $0xe1] sm:$0xff]
      %v515 = vld [vmem:[%s334 + $0xf1] sm:$0xff]
      %v516 = vld [vmem:[%s334 + $0xf9] sm:$0xff]
      %v517 = vld [vmem:[%s334 + $0x109] sm:$0xff]
      %v518 = vld [vmem:[%s334 + $0x111] sm:$0xff]
      %v519 = vld [vmem:[%s334 + $0x121] sm:$0xff]
      %v520 = vld [vmem:[%s334 + $0x129] sm:$0xff]
      %v521 = vld [vmem:[%s334 + $0x139] sm:$0xff]
      %v522 = vld [vmem:[%s334 + $0x141] sm:$0xff]
      %v523 = vld [vmem:[%s334 + $0x151] sm:$0xff]
      %v524 = vld [vmem:[%s334 + $0x159] sm:$0xff]
      %v525 = vld [vmem:[%s334 + $0x169] sm:$0xff]
      %v526 = vld [vmem:[%s334 + $0x171] sm:$0xff]
      %v527 = vld [vmem:[%s334 + $0x2] sm:$0xff]
      %v528 = vld [vmem:[%s334 + $0xa] sm:$0xff]
      %v529 = vld [vmem:[%s334 + $0x1a] sm:$0xff]
      %v530 = vld [vmem:[%s334 + $0x22] sm:$0xff]
      %v531 = vld [vmem:[%s334 + $0x32] sm:$0xff]
      %v532 = vld [vmem:[%s334 + $0x3a] sm:$0xff]
      %v533 = vld [vmem:[%s334 + $0x4a] sm:$0xff]
      %v534 = vld [vmem:[%s334 + $0x52] sm:$0xff]
      %v535 = vld [vmem:[%s334 + $0x62] sm:$0xff]
      %v536 = vld [vmem:[%s334 + $0x6a] sm:$0xff]
      %v537 = vld [vmem:[%s334 + $0x7a] sm:$0xff]
      %v538 = vld [vmem:[%s334 + $0x82] sm:$0xff]
      %v539 = vld [vmem:[%s334 + $0x92] sm:$0xff]
      %v540 = vld [vmem:[%s334 + $0x9a] sm:$0xff]
      %v541 = vld [vmem:[%s334 + $0xaa] sm:$0xff]
      %v542 = vld [vmem:[%s334 + $0xb2] sm:$0xff]
      %v543 = vld [vmem:[%s334 + $0xc2] sm:$0xff]
      %v544 = vld [vmem:[%s334 + $0xca] sm:$0xff]
      %v545 = vld [vmem:[%s334 + $0xda] sm:$0xff]
      %v546 = vld [vmem:[%s334 + $0xe2] sm:$0xff]
      %v547 = vld [vmem:[%s334 + $0xf2] sm:$0xff]
      %v548 = vld [vmem:[%s334 + $0xfa] sm:$0xff]
      %v549 = vld [vmem:[%s334 + $0x10a] sm:$0xff]
      %v550 = vld [vmem:[%s334 + $0x112] sm:$0xff]
      %v551 = vld [vmem:[%s334 + $0x122] sm:$0xff]
      %v552 = vld [vmem:[%s334 + $0x12a] sm:$0xff]
      %v553 = vld [vmem:[%s334 + $0x13a] sm:$0xff]
      %v554 = vld [vmem:[%s334 + $0x142] sm:$0xff]
      %v555 = vld [vmem:[%s334 + $0x152] sm:$0xff]
      %v556 = vld [vmem:[%s334 + $0x15a] sm:$0xff]
      %v557 = vld [vmem:[%s334 + $0x16a] sm:$0xff]
      %v558 = vld [vmem:[%s334 + $0x172] sm:$0xff]
      %s559 = scalar_lea.vmem [#allocation2], 48
      %v560 = vld [vmem:[%s559] sm:$0xff]
      %v561 = vld [vmem:[%s559 + $0x8] sm:$0xff]
      %v562 = vld [vmem:[%s559 + $0x18] sm:$0xff]
      %v563 = vld [vmem:[%s559 + $0x20] sm:$0xff]
      %v564 = vld [vmem:[%s559 + $0x30] sm:$0xff]
      %v565 = vld [vmem:[%s559 + $0x38] sm:$0xff]
      %v566 = vld [vmem:[%s559 + $0x48] sm:$0xff]
      %v567 = vld [vmem:[%s559 + $0x50] sm:$0xff]
      %v568 = vld [vmem:[%s559 + $0x60] sm:$0xff]
      %v569 = vld [vmem:[%s559 + $0x68] sm:$0xff]
      %v570 = vld [vmem:[%s559 + $0x78] sm:$0xff]
      %v571 = vld [vmem:[%s559 + $0x80] sm:$0xff]
      %v572 = vld [vmem:[%s559 + $0x90] sm:$0xff]
      %v573 = vld [vmem:[%s559 + $0x98] sm:$0xff]
      %v574 = vld [vmem:[%s559 + $0xa8] sm:$0xff]
      %v575 = vld [vmem:[%s559 + $0xb0] sm:$0xff]
      %v576 = vld [vmem:[%s559 + $0xc0] sm:$0xff]
      %v577 = vld [vmem:[%s559 + $0xc8] sm:$0xff]
      %v578 = vld [vmem:[%s559 + $0xd8] sm:$0xff]
      %v579 = vld [vmem:[%s559 + $0xe0] sm:$0xff]
      %v580 = vld [vmem:[%s559 + $0xf0] sm:$0xff]
      %v581 = vld [vmem:[%s559 + $0xf8] sm:$0xff]
      %v582 = vld [vmem:[%s559 + $0x108] sm:$0xff]
      %v583 = vld [vmem:[%s559 + $0x110] sm:$0xff]
      %v584 = vld [vmem:[%s559 + $0x120] sm:$0xff]
      %v585 = vld [vmem:[%s559 + $0x128] sm:$0xff]
      %v586 = vld [vmem:[%s559 + $0x138] sm:$0xff]
      %v587 = vld [vmem:[%s559 + $0x140] sm:$0xff]
      %v588 = vld [vmem:[%s559 + $0x150] sm:$0xff]
      %v589 = vld [vmem:[%s559 + $0x158] sm:$0xff]
      %v590 = vld [vmem:[%s559 + $0x168] sm:$0xff]
      %v591 = vld [vmem:[%s559 + $0x170] sm:$0xff]
      %v592 = vld [vmem:[%s559 + $0x1] sm:$0xff]
      %v593 = vld [vmem:[%s559 + $0x9] sm:$0xff]
      %v594 = vld [vmem:[%s559 + $0x19] sm:$0xff]
      %v595 = vld [vmem:[%s559 + $0x21] sm:$0xff]
      %v596 = vld [vmem:[%s559 + $0x31] sm:$0xff]
      %v597 = vld [vmem:[%s559 + $0x39] sm:$0xff]
      %v598 = vld [vmem:[%s559 + $0x49] sm:$0xff]
      %v599 = vld [vmem:[%s559 + $0x51] sm:$0xff]
      %v600 = vld [vmem:[%s559 + $0x61] sm:$0xff]
      %v601 = vld [vmem:[%s559 + $0x69] sm:$0xff]
      %v602 = vld [vmem:[%s559 + $0x79] sm:$0xff]
      %v603 = vld [vmem:[%s559 + $0x81] sm:$0xff]
      %v604 = vld [vmem:[%s559 + $0x91] sm:$0xff]
      %v605 = vld [vmem:[%s559 + $0x99] sm:$0xff]
      %v606 = vld [vmem:[%s559 + $0xa9] sm:$0xff]
      %v607 = vld [vmem:[%s559 + $0xb1] sm:$0xff]
      %v608 = vld [vmem:[%s559 + $0xc1] sm:$0xff]
      %v609 = vld [vmem:[%s559 + $0xc9] sm:$0xff]
      %v610 = vld [vmem:[%s559 + $0xd9] sm:$0xff]
      %v611 = vld [vmem:[%s559 + $0xe1] sm:$0xff]
      %v612 = vld [vmem:[%s559 + $0xf1] sm:$0xff]
      %v613 = vld [vmem:[%s559 + $0xf9] sm:$0xff]
      %v614 = vld [vmem:[%s559 + $0x109] sm:$0xff]
      %v615 = vld [vmem:[%s559 + $0x111] sm:$0xff]
      %v616 = vld [vmem:[%s559 + $0x121] sm:$0xff]
      %v617 = vld [vmem:[%s559 + $0x129] sm:$0xff]
      %v618 = vld [vmem:[%s559 + $0x139] sm:$0xff]
      %v619 = vld [vmem:[%s559 + $0x141] sm:$0xff]
      %v620 = vld [vmem:[%s559 + $0x151] sm:$0xff]
      %v621 = vld [vmem:[%s559 + $0x159] sm:$0xff]
      %v622 = vld [vmem:[%s559 + $0x169] sm:$0xff]
      %v623 = vld [vmem:[%s559 + $0x171] sm:$0xff]
      %v624 = vld [vmem:[%s559 + $0x2] sm:$0xff]
      %v625 = vld [vmem:[%s559 + $0xa] sm:$0xff]
      %v626 = vld [vmem:[%s559 + $0x1a] sm:$0xff]
      %v627 = vld [vmem:[%s559 + $0x22] sm:$0xff]
      %v628 = vld [vmem:[%s559 + $0x32] sm:$0xff]
      %v629 = vld [vmem:[%s559 + $0x3a] sm:$0xff]
      %v630 = vld [vmem:[%s559 + $0x4a] sm:$0xff]
      %v631 = vld [vmem:[%s559 + $0x52] sm:$0xff]
      %v632 = vld [vmem:[%s559 + $0x62] sm:$0xff]
      %v633 = vld [vmem:[%s559 + $0x6a] sm:$0xff]
      %v634 = vld [vmem:[%s559 + $0x7a] sm:$0xff]
      %v635 = vld [vmem:[%s559 + $0x82] sm:$0xff]
      %v636 = vld [vmem:[%s559 + $0x92] sm:$0xff]
      %v637 = vld [vmem:[%s559 + $0x9a] sm:$0xff]
      %v638 = vld [vmem:[%s559 + $0xaa] sm:$0xff]
      %v639 = vld [vmem:[%s559 + $0xb2] sm:$0xff]
      %v640 = vld [vmem:[%s559 + $0xc2] sm:$0xff]
      %v641 = vld [vmem:[%s559 + $0xca] sm:$0xff]
      %v642 = vld [vmem:[%s559 + $0xda] sm:$0xff]
      %v643 = vld [vmem:[%s559 + $0xe2] sm:$0xff]
      %v644 = vld [vmem:[%s559 + $0xf2] sm:$0xff]
      %v645 = vld [vmem:[%s559 + $0xfa] sm:$0xff]
      %v646 = vld [vmem:[%s559 + $0x10a] sm:$0xff]
      %v647 = vld [vmem:[%s559 + $0x112] sm:$0xff]
      %v648 = vld [vmem:[%s559 + $0x122] sm:$0xff]
      %v649 = vld [vmem:[%s559 + $0x12a] sm:$0xff]
      %v650 = vld [vmem:[%s559 + $0x13a] sm:$0xff]
      %v651 = vld [vmem:[%s559 + $0x142] sm:$0xff]
      %v652 = vld [vmem:[%s559 + $0x152] sm:$0xff]
      %v653 = vld [vmem:[%s559 + $0x15a] sm:$0xff]
      %v654 = vld [vmem:[%s559 + $0x16a] sm:$0xff]
      %v655 = vld [vmem:[%s559 + $0x172] sm:$0xff]
      %688 = vrot.lane.b32.xlu0 %v399, 4
      %v689 = vpop.permute.xlu0 %688
      %690 = vrot.lane.b32.xlu0 %v400, 4
      %v691 = vpop.permute.xlu0 %690
      %692 = vrot.lane.b32.xlu0 %v401, 4
      %v693 = vpop.permute.xlu0 %692
      %694 = vrot.lane.b32.xlu0 %v402, 4
      %v695 = vpop.permute.xlu0 %694
      %696 = vrot.lane.b32.xlu0 %v403, 4
      %v697 = vpop.permute.xlu0 %696
      %698 = vrot.lane.b32.xlu0 %v404, 4
      %v699 = vpop.permute.xlu0 %698
      %700 = vrot.lane.b32.xlu0 %v405, 4
      %v701 = vpop.permute.xlu0 %700
      %702 = vrot.lane.b32.xlu0 %v406, 4
      %v703 = vpop.permute.xlu0 %702
      %704 = vrot.lane.b32.xlu0 %v407, 4
      %v705 = vpop.permute.xlu0 %704
      %706 = vrot.lane.b32.xlu0 %v408, 4
      %v707 = vpop.permute.xlu0 %706
      %708 = vrot.lane.b32.xlu0 %v409, 4
      %v709 = vpop.permute.xlu0 %708
      %710 = vrot.lane.b32.xlu0 %v410, 4
      %v711 = vpop.permute.xlu0 %710
      %712 = vrot.lane.b32.xlu0 %v411, 4
      %v713 = vpop.permute.xlu0 %712
      %714 = vrot.lane.b32.xlu0 %v412, 4
      %v715 = vpop.permute.xlu0 %714
      %716 = vrot.lane.b32.xlu0 %v413, 4
      %v717 = vpop.permute.xlu0 %716
      %718 = vrot.lane.b32.xlu0 %v414, 4
      %v719 = vpop.permute.xlu0 %718
      %720 = vrot.lane.b32.xlu0 %v415, 4
      %v721 = vpop.permute.xlu0 %720
      %722 = vrot.lane.b32.xlu0 %v416, 4
      %v723 = vpop.permute.xlu0 %722
      %724 = vrot.lane.b32.xlu0 %v417, 4
      %v725 = vpop.permute.xlu0 %724
      %726 = vrot.lane.b32.xlu0 %v418, 4
      %v727 = vpop.permute.xlu0 %726
      %728 = vrot.lane.b32.xlu0 %v419, 4
      %v729 = vpop.permute.xlu0 %728
      %730 = vrot.lane.b32.xlu0 %v420, 4
      %v731 = vpop.permute.xlu0 %730
      %732 = vrot.lane.b32.xlu0 %v421, 4
      %v733 = vpop.permute.xlu0 %732
      %734 = vrot.lane.b32.xlu0 %v422, 4
      %v735 = vpop.permute.xlu0 %734
      %736 = vrot.lane.b32.xlu0 %v423, 4
      %v737 = vpop.permute.xlu0 %736
      %738 = vrot.lane.b32.xlu0 %v424, 4
      %v739 = vpop.permute.xlu0 %738
      %740 = vrot.lane.b32.xlu0 %v425, 4
      %v741 = vpop.permute.xlu0 %740
      %742 = vrot.lane.b32.xlu0 %v426, 4
      %v743 = vpop.permute.xlu0 %742
      %744 = vrot.lane.b32.xlu0 %v427, 4
      %v745 = vpop.permute.xlu0 %744
      %746 = vrot.lane.b32.xlu0 %v428, 4
      %v747 = vpop.permute.xlu0 %746
      %748 = vrot.lane.b32.xlu0 %v429, 4
      %v749 = vpop.permute.xlu0 %748
      %750 = vrot.lane.b32.xlu0 %v430, 4
      %v751 = vpop.permute.xlu0 %750
      %816 = vrot.lane.b32.xlu0 %v431, 8
      %v817 = vpop.permute.xlu0 %816
      %818 = vrot.lane.b32.xlu0 %v432, 8
      %v819 = vpop.permute.xlu0 %818
      %820 = vrot.lane.b32.xlu0 %v433, 8
      %v821 = vpop.permute.xlu0 %820
      %822 = vrot.lane.b32.xlu0 %v434, 8
      %v823 = vpop.permute.xlu0 %822
      %824 = vrot.lane.b32.xlu0 %v435, 8
      %v825 = vpop.permute.xlu0 %824
      %826 = vrot.lane.b32.xlu0 %v436, 8
      %v827 = vpop.permute.xlu0 %826
      %828 = vrot.lane.b32.xlu0 %v437, 8
      %v829 = vpop.permute.xlu0 %828
      %830 = vrot.lane.b32.xlu0 %v438, 8
      %v831 = vpop.permute.xlu0 %830
      %832 = vrot.lane.b32.xlu0 %v439, 8
      %v833 = vpop.permute.xlu0 %832
      %834 = vrot.lane.b32.xlu0 %v440, 8
      %v835 = vpop.permute.xlu0 %834
      %836 = vrot.lane.b32.xlu0 %v441, 8
      %v837 = vpop.permute.xlu0 %836
      %838 = vrot.lane.b32.xlu0 %v442, 8
      %v839 = vpop.permute.xlu0 %838
      %840 = vrot.lane.b32.xlu0 %v443, 8
      %v841 = vpop.permute.xlu0 %840
      %842 = vrot.lane.b32.xlu0 %v444, 8
      %v843 = vpop.permute.xlu0 %842
      %844 = vrot.lane.b32.xlu0 %v445, 8
      %v845 = vpop.permute.xlu0 %844
      %846 = vrot.lane.b32.xlu0 %v446, 8
      %v847 = vpop.permute.xlu0 %846
      %848 = vrot.lane.b32.xlu0 %v447, 8
      %v849 = vpop.permute.xlu0 %848
      %850 = vrot.lane.b32.xlu0 %v448, 8
      %v851 = vpop.permute.xlu0 %850
      %852 = vrot.lane.b32.xlu0 %v449, 8
      %v853 = vpop.permute.xlu0 %852
      %854 = vrot.lane.b32.xlu0 %v450, 8
      %v855 = vpop.permute.xlu0 %854
      %856 = vrot.lane.b32.xlu0 %v451, 8
      %v857 = vpop.permute.xlu0 %856
      %858 = vrot.lane.b32.xlu0 %v452, 8
      %v859 = vpop.permute.xlu0 %858
      %860 = vrot.lane.b32.xlu0 %v453, 8
      %v861 = vpop.permute.xlu0 %860
      %862 = vrot.lane.b32.xlu0 %v454, 8
      %v863 = vpop.permute.xlu0 %862
      %864 = vrot.lane.b32.xlu0 %v455, 8
      %v865 = vpop.permute.xlu0 %864
      %866 = vrot.lane.b32.xlu0 %v456, 8
      %v867 = vpop.permute.xlu0 %866
      %868 = vrot.lane.b32.xlu0 %v457, 8
      %v869 = vpop.permute.xlu0 %868
      %870 = vrot.lane.b32.xlu0 %v458, 8
      %v871 = vpop.permute.xlu0 %870
      %872 = vrot.lane.b32.xlu0 %v459, 8
      %v873 = vpop.permute.xlu0 %872
      %874 = vrot.lane.b32.xlu0 %v460, 8
      %v875 = vpop.permute.xlu0 %874
      %876 = vrot.lane.b32.xlu0 %v461, 8
      %v877 = vpop.permute.xlu0 %876
      %878 = vrot.lane.b32.xlu0 %v462, 8
      %v879 = vpop.permute.xlu0 %878
      %944 = vrot.lane.b32.xlu0 %v463, 12
      %v945 = vpop.permute.xlu0 %944
      %946 = vrot.lane.b32.xlu0 %v464, 12
      %v947 = vpop.permute.xlu0 %946
      %948 = vrot.lane.b32.xlu0 %v465, 12
      %v949 = vpop.permute.xlu0 %948
      %950 = vrot.lane.b32.xlu0 %v466, 12
      %v951 = vpop.permute.xlu0 %950
      %952 = vrot.lane.b32.xlu0 %v467, 12
      %v953 = vpop.permute.xlu0 %952
      %954 = vrot.lane.b32.xlu0 %v468, 12
      %v955 = vpop.permute.xlu0 %954
      %956 = vrot.lane.b32.xlu0 %v469, 12
      %v957 = vpop.permute.xlu0 %956
      %958 = vrot.lane.b32.xlu0 %v470, 12
      %v959 = vpop.permute.xlu0 %958
      %960 = vrot.lane.b32.xlu0 %v471, 12
      %v961 = vpop.permute.xlu0 %960
      %962 = vrot.lane.b32.xlu0 %v472, 12
      %v963 = vpop.permute.xlu0 %962
      %964 = vrot.lane.b32.xlu0 %v473, 12
      %v965 = vpop.permute.xlu0 %964
      %966 = vrot.lane.b32.xlu0 %v474, 12
      %v967 = vpop.permute.xlu0 %966
      %968 = vrot.lane.b32.xlu0 %v475, 12
      %v969 = vpop.permute.xlu0 %968
      %970 = vrot.lane.b32.xlu0 %v476, 12
      %v971 = vpop.permute.xlu0 %970
      %972 = vrot.lane.b32.xlu0 %v477, 12
      %v973 = vpop.permute.xlu0 %972
      %974 = vrot.lane.b32.xlu0 %v478, 12
      %v975 = vpop.permute.xlu0 %974
      %976 = vrot.lane.b32.xlu0 %v479, 12
      %v977 = vpop.permute.xlu0 %976
      %978 = vrot.lane.b32.xlu0 %v480, 12
      %v979 = vpop.permute.xlu0 %978
      %980 = vrot.lane.b32.xlu0 %v481, 12
      %v981 = vpop.permute.xlu0 %980
      %982 = vrot.lane.b32.xlu0 %v482, 12
      %v983 = vpop.permute.xlu0 %982
      %984 = vrot.lane.b32.xlu0 %v483, 12
      %v985 = vpop.permute.xlu0 %984
      %986 = vrot.lane.b32.xlu0 %v484, 12
      %v987 = vpop.permute.xlu0 %986
      %988 = vrot.lane.b32.xlu0 %v485, 12
      %v989 = vpop.permute.xlu0 %988
      %990 = vrot.lane.b32.xlu0 %v486, 12
      %v991 = vpop.permute.xlu0 %990
      %992 = vrot.lane.b32.xlu0 %v487, 12
      %v993 = vpop.permute.xlu0 %992
      %994 = vrot.lane.b32.xlu0 %v488, 12
      %v995 = vpop.permute.xlu0 %994
      %996 = vrot.lane.b32.xlu0 %v489, 12
      %v997 = vpop.permute.xlu0 %996
      %998 = vrot.lane.b32.xlu0 %v490, 12
      %v999 = vpop.permute.xlu0 %998
      %1000 = vrot.lane.b32.xlu0 %v491, 12
      %v1001 = vpop.permute.xlu0 %1000
      %1002 = vrot.lane.b32.xlu0 %v492, 12
      %v1003 = vpop.permute.xlu0 %1002
      %1004 = vrot.lane.b32.xlu0 %v493, 12
      %v1005 = vpop.permute.xlu0 %1004
      %1006 = vrot.lane.b32.xlu0 %v494, 12
      %v1007 = vpop.permute.xlu0 %1006
      %1072 = vrot.lane.b32.xlu0 %v495, 16
      %v1073 = vpop.permute.xlu0 %1072
      %1074 = vrot.lane.b32.xlu0 %v496, 16
      %v1075 = vpop.permute.xlu0 %1074
      %1076 = vrot.lane.b32.xlu0 %v497, 16
      %v1077 = vpop.permute.xlu0 %1076
      %1078 = vrot.lane.b32.xlu0 %v498, 16
      %v1079 = vpop.permute.xlu0 %1078
      %1080 = vrot.lane.b32.xlu0 %v499, 16
      %v1081 = vpop.permute.xlu0 %1080
      %1082 = vrot.lane.b32.xlu0 %v500, 16
      %v1083 = vpop.permute.xlu0 %1082
      %1084 = vrot.lane.b32.xlu0 %v501, 16
      %v1085 = vpop.permute.xlu0 %1084
      %1086 = vrot.lane.b32.xlu0 %v502, 16
      %v1087 = vpop.permute.xlu0 %1086
      %1088 = vrot.lane.b32.xlu0 %v503, 16
      %v1089 = vpop.permute.xlu0 %1088
      %1090 = vrot.lane.b32.xlu0 %v504, 16
      %v1091 = vpop.permute.xlu0 %1090
      %1092 = vrot.lane.b32.xlu0 %v505, 16
      %v1093 = vpop.permute.xlu0 %1092
      %1094 = vrot.lane.b32.xlu0 %v506, 16
      %v1095 = vpop.permute.xlu0 %1094
      %1096 = vrot.lane.b32.xlu0 %v507, 16
      %v1097 = vpop.permute.xlu0 %1096
      %1098 = vrot.lane.b32.xlu0 %v508, 16
      %v1099 = vpop.permute.xlu0 %1098
      %1100 = vrot.lane.b32.xlu0 %v509, 16
      %v1101 = vpop.permute.xlu0 %1100
      %1102 = vrot.lane.b32.xlu0 %v510, 16
      %v1103 = vpop.permute.xlu0 %1102
      %1104 = vrot.lane.b32.xlu0 %v511, 16
      %v1105 = vpop.permute.xlu0 %1104
      %1106 = vrot.lane.b32.xlu0 %v512, 16
      %v1107 = vpop.permute.xlu0 %1106
      %1108 = vrot.lane.b32.xlu0 %v513, 16
      %v1109 = vpop.permute.xlu0 %1108
      %1110 = vrot.lane.b32.xlu0 %v514, 16
      %v1111 = vpop.permute.xlu0 %1110
      %1112 = vrot.lane.b32.xlu0 %v515, 16
      %v1113 = vpop.permute.xlu0 %1112
      %1114 = vrot.lane.b32.xlu0 %v516, 16
      %v1115 = vpop.permute.xlu0 %1114
      %1116 = vrot.lane.b32.xlu0 %v517, 16
      %v1117 = vpop.permute.xlu0 %1116
      %1118 = vrot.lane.b32.xlu0 %v518, 16
      %v1119 = vpop.permute.xlu0 %1118
      %1120 = vrot.lane.b32.xlu0 %v519, 16
      %v1121 = vpop.permute.xlu0 %1120
      %1122 = vrot.lane.b32.xlu0 %v520, 16
      %v1123 = vpop.permute.xlu0 %1122
      %1124 = vrot.lane.b32.xlu0 %v521, 16
      %v1125 = vpop.permute.xlu0 %1124
      %1126 = vrot.lane.b32.xlu0 %v522, 16
      %v1127 = vpop.permute.xlu0 %1126
      %1128 = vrot.lane.b32.xlu0 %v523, 16
      %v1129 = vpop.permute.xlu0 %1128
      %1130 = vrot.lane.b32.xlu0 %v524, 16
      %v1131 = vpop.permute.xlu0 %1130
      %1132 = vrot.lane.b32.xlu0 %v525, 16
      %v1133 = vpop.permute.xlu0 %1132
      %1134 = vrot.lane.b32.xlu0 %v526, 16
      %v1135 = vpop.permute.xlu0 %1134
      %1200 = vrot.lane.b32.xlu0 %v527, 20
      %v1201 = vpop.permute.xlu0 %1200
      %1202 = vrot.lane.b32.xlu0 %v528, 20
      %v1203 = vpop.permute.xlu0 %1202
      %1204 = vrot.lane.b32.xlu0 %v529, 20
      %v1205 = vpop.permute.xlu0 %1204
      %1206 = vrot.lane.b32.xlu0 %v530, 20
      %v1207 = vpop.permute.xlu0 %1206
      %1208 = vrot.lane.b32.xlu0 %v531, 20
      %v1209 = vpop.permute.xlu0 %1208
      %1210 = vrot.lane.b32.xlu0 %v532, 20
      %v1211 = vpop.permute.xlu0 %1210
      %1212 = vrot.lane.b32.xlu0 %v533, 20
      %v1213 = vpop.permute.xlu0 %1212
      %1214 = vrot.lane.b32.xlu0 %v534, 20
      %v1215 = vpop.permute.xlu0 %1214
      %1216 = vrot.lane.b32.xlu0 %v535, 20
      %v1217 = vpop.permute.xlu0 %1216
      %1218 = vrot.lane.b32.xlu0 %v536, 20
      %v1219 = vpop.permute.xlu0 %1218
      %1220 = vrot.lane.b32.xlu0 %v537, 20
      %v1221 = vpop.permute.xlu0 %1220
      %1222 = vrot.lane.b32.xlu0 %v538, 20
      %v1223 = vpop.permute.xlu0 %1222
      %1224 = vrot.lane.b32.xlu0 %v539, 20
      %v1225 = vpop.permute.xlu0 %1224
      %1226 = vrot.lane.b32.xlu0 %v540, 20
      %v1227 = vpop.permute.xlu0 %1226
      %1228 = vrot.lane.b32.xlu0 %v541, 20
      %v1229 = vpop.permute.xlu0 %1228
      %1230 = vrot.lane.b32.xlu0 %v542, 20
      %v1231 = vpop.permute.xlu0 %1230
      %1232 = vrot.lane.b32.xlu0 %v543, 20
      %v1233 = vpop.permute.xlu0 %1232
      %1234 = vrot.lane.b32.xlu0 %v544, 20
      %v1235 = vpop.permute.xlu0 %1234
      %1236 = vrot.lane.b32.xlu0 %v545, 20
      %v1237 = vpop.permute.xlu0 %1236
      %1238 = vrot.lane.b32.xlu0 %v546, 20
      %v1239 = vpop.permute.xlu0 %1238
      %1240 = vrot.lane.b32.xlu0 %v547, 20
      %v1241 = vpop.permute.xlu0 %1240
      %1242 = vrot.lane.b32.xlu0 %v548, 20
      %v1243 = vpop.permute.xlu0 %1242
      %1244 = vrot.lane.b32.xlu0 %v549, 20
      %v1245 = vpop.permute.xlu0 %1244
      %1246 = vrot.lane.b32.xlu0 %v550, 20
      %v1247 = vpop.permute.xlu0 %1246
      %1248 = vrot.lane.b32.xlu0 %v551, 20
      %v1249 = vpop.permute.xlu0 %1248
      %1250 = vrot.lane.b32.xlu0 %v552, 20
      %v1251 = vpop.permute.xlu0 %1250
      %1252 = vrot.lane.b32.xlu0 %v553, 20
      %v1253 = vpop.permute.xlu0 %1252
      %1254 = vrot.lane.b32.xlu0 %v554, 20
      %v1255 = vpop.permute.xlu0 %1254
      %1256 = vrot.lane.b32.xlu0 %v555, 20
      %v1257 = vpop.permute.xlu0 %1256
      %1258 = vrot.lane.b32.xlu0 %v556, 20
      %v1259 = vpop.permute.xlu0 %1258
      %1260 = vrot.lane.b32.xlu0 %v557, 20
      %v1261 = vpop.permute.xlu0 %1260
      %1262 = vrot.lane.b32.xlu0 %v558, 20
      %v1263 = vpop.permute.xlu0 %1262
      %1328 = vrot.lane.b32.xlu0 %v560, 24
      %v1329 = vpop.permute.xlu0 %1328
      %1330 = vrot.lane.b32.xlu0 %v561, 24
      %v1331 = vpop.permute.xlu0 %1330
      %1332 = vrot.lane.b32.xlu0 %v562, 24
      %v1333 = vpop.permute.xlu0 %1332
      %1334 = vrot.lane.b32.xlu0 %v563, 24
      %v1335 = vpop.permute.xlu0 %1334
      %1336 = vrot.lane.b32.xlu0 %v564, 24
      %v1337 = vpop.permute.xlu0 %1336
      %1338 = vrot.lane.b32.xlu0 %v565, 24
      %v1339 = vpop.permute.xlu0 %1338
      %1340 = vrot.lane.b32.xlu0 %v566, 24
      %v1341 = vpop.permute.xlu0 %1340
      %1342 = vrot.lane.b32.xlu0 %v567, 24
      %v1343 = vpop.permute.xlu0 %1342
      %1344 = vrot.lane.b32.xlu0 %v568, 24
      %v1345 = vpop.permute.xlu0 %1344
      %1346 = vrot.lane.b32.xlu0 %v569, 24
      %v1347 = vpop.permute.xlu0 %1346
      %1348 = vrot.lane.b32.xlu0 %v570, 24
      %v1349 = vpop.permute.xlu0 %1348
      %1350 = vrot.lane.b32.xlu0 %v571, 24
      %v1351 = vpop.permute.xlu0 %1350
      %1352 = vrot.lane.b32.xlu0 %v572, 24
      %v1353 = vpop.permute.xlu0 %1352
      %1354 = vrot.lane.b32.xlu0 %v573, 24
      %v1355 = vpop.permute.xlu0 %1354
      %1356 = vrot.lane.b32.xlu0 %v574, 24
      %v1357 = vpop.permute.xlu0 %1356
      %1358 = vrot.lane.b32.xlu0 %v575, 24
      %v1359 = vpop.permute.xlu0 %1358
      %1360 = vrot.lane.b32.xlu0 %v576, 24
      %v1361 = vpop.permute.xlu0 %1360
      %1362 = vrot.lane.b32.xlu0 %v577, 24
      %v1363 = vpop.permute.xlu0 %1362
      %1364 = vrot.lane.b32.xlu0 %v578, 24
      %v1365 = vpop.permute.xlu0 %1364
      %1366 = vrot.lane.b32.xlu0 %v579, 24
      %v1367 = vpop.permute.xlu0 %1366
      %1368 = vrot.lane.b32.xlu0 %v580, 24
      %v1369 = vpop.permute.xlu0 %1368
      %1370 = vrot.lane.b32.xlu0 %v581, 24
      %v1371 = vpop.permute.xlu0 %1370
      %1372 = vrot.lane.b32.xlu0 %v582, 24
      %v1373 = vpop.permute.xlu0 %1372
      %1374 = vrot.lane.b32.xlu0 %v583, 24
      %v1375 = vpop.permute.xlu0 %1374
      %1376 = vrot.lane.b32.xlu0 %v584, 24
      %v1377 = vpop.permute.xlu0 %1376
      %1378 = vrot.lane.b32.xlu0 %v585, 24
      %v1379 = vpop.permute.xlu0 %1378
      %1380 = vrot.lane.b32.xlu0 %v586, 24
      %v1381 = vpop.permute.xlu0 %1380
      %1382 = vrot.lane.b32.xlu0 %v587, 24
      %v1383 = vpop.permute.xlu0 %1382
      %1384 = vrot.lane.b32.xlu0 %v588, 24
      %v1385 = vpop.permute.xlu0 %1384
      %1386 = vrot.lane.b32.xlu0 %v589, 24
      %v1387 = vpop.permute.xlu0 %1386
      %1388 = vrot.lane.b32.xlu0 %v590, 24
      %v1389 = vpop.permute.xlu0 %1388
      %1390 = vrot.lane.b32.xlu0 %v591, 24
      %v1391 = vpop.permute.xlu0 %1390
      %1456 = vrot.lane.b32.xlu0 %v592, 28
      %v1457 = vpop.permute.xlu0 %1456
      %1458 = vrot.lane.b32.xlu0 %v593, 28
      %v1459 = vpop.permute.xlu0 %1458
      %1460 = vrot.lane.b32.xlu0 %v594, 28
      %v1461 = vpop.permute.xlu0 %1460
      %1462 = vrot.lane.b32.xlu0 %v595, 28
      %v1463 = vpop.permute.xlu0 %1462
      %1464 = vrot.lane.b32.xlu0 %v596, 28
      %v1465 = vpop.permute.xlu0 %1464
      %1466 = vrot.lane.b32.xlu0 %v597, 28
      %v1467 = vpop.permute.xlu0 %1466
      %1468 = vrot.lane.b32.xlu0 %v598, 28
      %v1469 = vpop.permute.xlu0 %1468
      %1470 = vrot.lane.b32.xlu0 %v599, 28
      %v1471 = vpop.permute.xlu0 %1470
      %1472 = vrot.lane.b32.xlu0 %v600, 28
      %v1473 = vpop.permute.xlu0 %1472
      %1474 = vrot.lane.b32.xlu0 %v601, 28
      %v1475 = vpop.permute.xlu0 %1474
      %1476 = vrot.lane.b32.xlu0 %v602, 28
      %v1477 = vpop.permute.xlu0 %1476
      %1478 = vrot.lane.b32.xlu0 %v603, 28
      %v1479 = vpop.permute.xlu0 %1478
      %1480 = vrot.lane.b32.xlu0 %v604, 28
      %v1481 = vpop.permute.xlu0 %1480
      %1482 = vrot.lane.b32.xlu0 %v605, 28
      %v1483 = vpop.permute.xlu0 %1482
      %1484 = vrot.lane.b32.xlu0 %v606, 28
      %v1485 = vpop.permute.xlu0 %1484
      %1486 = vrot.lane.b32.xlu0 %v607, 28
      %v1487 = vpop.permute.xlu0 %1486
      %1488 = vrot.lane.b32.xlu0 %v608, 28
      %v1489 = vpop.permute.xlu0 %1488
      %1490 = vrot.lane.b32.xlu0 %v609, 28
      %v1491 = vpop.permute.xlu0 %1490
      %1492 = vrot.lane.b32.xlu0 %v610, 28
      %v1493 = vpop.permute.xlu0 %1492
      %1494 = vrot.lane.b32.xlu0 %v611, 28
      %v1495 = vpop.permute.xlu0 %1494
      %1496 = vrot.lane.b32.xlu0 %v612, 28
      %v1497 = vpop.permute.xlu0 %1496
      %1498 = vrot.lane.b32.xlu0 %v613, 28
      %v1499 = vpop.permute.xlu0 %1498
      %1500 = vrot.lane.b32.xlu0 %v614, 28
      %v1501 = vpop.permute.xlu0 %1500
      %1502 = vrot.lane.b32.xlu0 %v615, 28
      %v1503 = vpop.permute.xlu0 %1502
      %1504 = vrot.lane.b32.xlu0 %v616, 28
      %v1505 = vpop.permute.xlu0 %1504
      %1506 = vrot.lane.b32.xlu0 %v617, 28
      %v1507 = vpop.permute.xlu0 %1506
      %1508 = vrot.lane.b32.xlu0 %v618, 28
      %v1509 = vpop.permute.xlu0 %1508
      %1510 = vrot.lane.b32.xlu0 %v619, 28
      %v1511 = vpop.permute.xlu0 %1510
      %1512 = vrot.lane.b32.xlu0 %v620, 28
      %v1513 = vpop.permute.xlu0 %1512
      %1514 = vrot.lane.b32.xlu0 %v621, 28
      %v1515 = vpop.permute.xlu0 %1514
      %1516 = vrot.lane.b32.xlu0 %v622, 28
      %v1517 = vpop.permute.xlu0 %1516
      %1518 = vrot.lane.b32.xlu0 %v623, 28
      %v1519 = vpop.permute.xlu0 %1518
      %1584 = vrot.lane.b32.xlu0 %v624, 32
      %v1585 = vpop.permute.xlu0 %1584
      %1586 = vrot.lane.b32.xlu0 %v625, 32
      %v1587 = vpop.permute.xlu0 %1586
      %1588 = vrot.lane.b32.xlu0 %v626, 32
      %v1589 = vpop.permute.xlu0 %1588
      %1590 = vrot.lane.b32.xlu0 %v627, 32
      %v1591 = vpop.permute.xlu0 %1590
      %1592 = vrot.lane.b32.xlu0 %v628, 32
      %v1593 = vpop.permute.xlu0 %1592
      %1594 = vrot.lane.b32.xlu0 %v629, 32
      %v1595 = vpop.permute.xlu0 %1594
      %1596 = vrot.lane.b32.xlu0 %v630, 32
      %v1597 = vpop.permute.xlu0 %1596
      %1598 = vrot.lane.b32.xlu0 %v631, 32
      %v1599 = vpop.permute.xlu0 %1598
      %1600 = vrot.lane.b32.xlu0 %v632, 32
      %v1601 = vpop.permute.xlu0 %1600
      %1602 = vrot.lane.b32.xlu0 %v633, 32
      %v1603 = vpop.permute.xlu0 %1602
      %1604 = vrot.lane.b32.xlu0 %v634, 32
      %v1605 = vpop.permute.xlu0 %1604
      %1606 = vrot.lane.b32.xlu0 %v635, 32
      %v1607 = vpop.permute.xlu0 %1606
      %1608 = vrot.lane.b32.xlu0 %v636, 32
      %v1609 = vpop.permute.xlu0 %1608
      %1610 = vrot.lane.b32.xlu0 %v637, 32
      %v1611 = vpop.permute.xlu0 %1610
      %1612 = vrot.lane.b32.xlu0 %v638, 32
      %v1613 = vpop.permute.xlu0 %1612
      %1614 = vrot.lane.b32.xlu0 %v639, 32
      %v1615 = vpop.permute.xlu0 %1614
      %1616 = vrot.lane.b32.xlu0 %v640, 32
      %v1617 = vpop.permute.xlu0 %1616
      %1618 = vrot.lane.b32.xlu0 %v641, 32
      %v1619 = vpop.permute.xlu0 %1618
      %1620 = vrot.lane.b32.xlu0 %v642, 32
      %v1621 = vpop.permute.xlu0 %1620
      %1622 = vrot.lane.b32.xlu0 %v643, 32
      %v1623 = vpop.permute.xlu0 %1622
      %1624 = vrot.lane.b32.xlu0 %v644, 32
      %v1625 = vpop.permute.xlu0 %1624
      %1626 = vrot.lane.b32.xlu0 %v645, 32
      %v1627 = vpop.permute.xlu0 %1626
      %1628 = vrot.lane.b32.xlu0 %v646, 32
      %v1629 = vpop.permute.xlu0 %1628
      %1630 = vrot.lane.b32.xlu0 %v647, 32
      %v1631 = vpop.permute.xlu0 %1630
      %1632 = vrot.lane.b32.xlu0 %v648, 32
      %v1633 = vpop.permute.xlu0 %1632
      %1634 = vrot.lane.b32.xlu0 %v649, 32
      %v1635 = vpop.permute.xlu0 %1634
      %1636 = vrot.lane.b32.xlu0 %v650, 32
      %v1637 = vpop.permute.xlu0 %1636
      %1638 = vrot.lane.b32.xlu0 %v651, 32
      %v1639 = vpop.permute.xlu0 %1638
      %1640 = vrot.lane.b32.xlu0 %v652, 32
      %v1641 = vpop.permute.xlu0 %1640
      %1642 = vrot.lane.b32.xlu0 %v653, 32
      %v1643 = vpop.permute.xlu0 %1642
      %1644 = vrot.lane.b32.xlu0 %v654, 32
      %v1645 = vpop.permute.xlu0 %1644
      %1646 = vrot.lane.b32.xlu0 %v655, 32
      %v1647 = vpop.permute.xlu0 %1646
      %v1680 = vsel %vm278, %v367, %v689
      %v1681 = vsel %vm278, %v368, %v691
      %v1682 = vsel %vm278, %v369, %v693
      %v1683 = vsel %vm278, %v370, %v695
      %v1684 = vsel %vm278, %v371, %v697
      %v1685 = vsel %vm278, %v372, %v699
      %v1686 = vsel %vm278, %v373, %v701
      %v1687 = vsel %vm278, %v374, %v703
      %v1688 = vsel %vm278, %v375, %v705
      %v1689 = vsel %vm278, %v376, %v707
      %v1690 = vsel %vm278, %v377, %v709
      %v1691 = vsel %vm278, %v378, %v711
      %v1692 = vsel %vm278, %v379, %v713
      %v1693 = vsel %vm278, %v380, %v715
      %v1694 = vsel %vm278, %v381, %v717
      %v1695 = vsel %vm278, %v382, %v719
      %v1696 = vsel %vm278, %v383, %v721
      %v1697 = vsel %vm278, %v384, %v723
      %v1698 = vsel %vm278, %v385, %v725
      %v1699 = vsel %vm278, %v386, %v727
      %v1700 = vsel %vm278, %v387, %v729
      %v1701 = vsel %vm278, %v388, %v731
      %v1702 = vsel %vm278, %v389, %v733
      %v1703 = vsel %vm278, %v390, %v735
      %v1704 = vsel %vm278, %v391, %v737
      %v1705 = vsel %vm278, %v392, %v739
      %v1706 = vsel %vm278, %v393, %v741
      %v1707 = vsel %vm278, %v394, %v743
      %v1708 = vsel %vm278, %v395, %v745
      %v1709 = vsel %vm278, %v396, %v747
      %v1710 = vsel %vm278, %v397, %v749
      %v1711 = vsel %vm278, %v398, %v751
      %vm1712 = vcmask 64512
      %v1713 = vsel %vm1712, %v1680, %v817
      %v1714 = vsel %vm1712, %v1681, %v819
      %v1715 = vsel %vm1712, %v1682, %v821
      %v1716 = vsel %vm1712, %v1683, %v823
      %v1717 = vsel %vm1712, %v1684, %v825
      %v1718 = vsel %vm1712, %v1685, %v827
      %v1719 = vsel %vm1712, %v1686, %v829
      %v1720 = vsel %vm1712, %v1687, %v831
      %v1721 = vsel %vm1712, %v1688, %v833
      %v1722 = vsel %vm1712, %v1689, %v835
      %v1723 = vsel %vm1712, %v1690, %v837
      %v1724 = vsel %vm1712, %v1691, %v839
      %v1725 = vsel %vm1712, %v1692, %v841
      %v1726 = vsel %vm1712, %v1693, %v843
      %v1727 = vsel %vm1712, %v1694, %v845
      %v1728 = vsel %vm1712, %v1695, %v847
      %v1729 = vsel %vm1712, %v1696, %v849
      %v1730 = vsel %vm1712, %v1697, %v851
      %v1731 = vsel %vm1712, %v1698, %v853
      %v1732 = vsel %vm1712, %v1699, %v855
      %v1733 = vsel %vm1712, %v1700, %v857
      %v1734 = vsel %vm1712, %v1701, %v859
      %v1735 = vsel %vm1712, %v1702, %v861
      %v1736 = vsel %vm1712, %v1703, %v863
      %v1737 = vsel %vm1712, %v1704, %v865
      %v1738 = vsel %vm1712, %v1705, %v867
      %v1739 = vsel %vm1712, %v1706, %v869
      %v1740 = vsel %vm1712, %v1707, %v871
      %v1741 = vsel %vm1712, %v1708, %v873
      %v1742 = vsel %vm1712, %v1709, %v875
      %v1743 = vsel %vm1712, %v1710, %v877
      %v1744 = vsel %vm1712, %v1711, %v879
      %vm1745 = vcmask 97280
      %v1746 = vsel %vm1745, %v1713, %v945
      %v1747 = vsel %vm1745, %v1714, %v947
      %v1748 = vsel %vm1745, %v1715, %v949
      %v1749 = vsel %vm1745, %v1716, %v951
      %v1750 = vsel %vm1745, %v1717, %v953
      %v1751 = vsel %vm1745, %v1718, %v955
      %v1752 = vsel %vm1745, %v1719, %v957
      %v1753 = vsel %vm1745, %v1720, %v959
      %v1754 = vsel %vm1745, %v1721, %v961
      %v1755 = vsel %vm1745, %v1722, %v963
      %v1756 = vsel %vm1745, %v1723, %v965
      %v1757 = vsel %vm1745, %v1724, %v967
      %v1758 = vsel %vm1745, %v1725, %v969
      %v1759 = vsel %vm1745, %v1726, %v971
      %v1760 = vsel %vm1745, %v1727, %v973
      %v1761 = vsel %vm1745, %v1728, %v975
      %v1762 = vsel %vm1745, %v1729, %v977
      %v1763 = vsel %vm1745, %v1730, %v979
      %v1764 = vsel %vm1745, %v1731, %v981
      %v1765 = vsel %vm1745, %v1732, %v983
      %v1766 = vsel %vm1745, %v1733, %v985
      %v1767 = vsel %vm1745, %v1734, %v987
      %v1768 = vsel %vm1745, %v1735, %v989
      %v1769 = vsel %vm1745, %v1736, %v991
      %v1770 = vsel %vm1745, %v1737, %v993
      %v1771 = vsel %vm1745, %v1738, %v995
      %v1772 = vsel %vm1745, %v1739, %v997
      %v1773 = vsel %vm1745, %v1740, %v999
      %v1774 = vsel %vm1745, %v1741, %v1001
      %v1775 = vsel %vm1745, %v1742, %v1003
      %v1776 = vsel %vm1745, %v1743, %v1005
      %v1777 = vsel %vm1745, %v1744, %v1007
      %vm1778 = vcmask 130048
      %v1779 = vsel %vm1778, %v1746, %v1073
      %v1780 = vsel %vm1778, %v1747, %v1075
      %v1781 = vsel %vm1778, %v1748, %v1077
      %v1782 = vsel %vm1778, %v1749, %v1079
      %v1783 = vsel %vm1778, %v1750, %v1081
      %v1784 = vsel %vm1778, %v1751, %v1083
      %v1785 = vsel %vm1778, %v1752, %v1085
      %v1786 = vsel %vm1778, %v1753, %v1087
      %v1787 = vsel %vm1778, %v1754, %v1089
      %v1788 = vsel %vm1778, %v1755, %v1091
      %v1789 = vsel %vm1778, %v1756, %v1093
      %v1790 = vsel %vm1778, %v1757, %v1095
      %v1791 = vsel %vm1778, %v1758, %v1097
      %v1792 = vsel %vm1778, %v1759, %v1099
      %v1793 = vsel %vm1778, %v1760, %v1101
      %v1794 = vsel %vm1778, %v1761, %v1103
      %v1795 = vsel %vm1778, %v1762, %v1105
      %v1796 = vsel %vm1778, %v1763, %v1107
      %v1797 = vsel %vm1778, %v1764, %v1109
      %v1798 = vsel %vm1778, %v1765, %v1111
      %v1799 = vsel %vm1778, %v1766, %v1113
      %v1800 = vsel %vm1778, %v1767, %v1115
      %v1801 = vsel %vm1778, %v1768, %v1117
      %v1802 = vsel %vm1778, %v1769, %v1119
      %v1803 = vsel %vm1778, %v1770, %v1121
      %v1804 = vsel %vm1778, %v1771, %v1123
      %v1805 = vsel %vm1778, %v1772, %v1125
      %v1806 = vsel %vm1778, %v1773, %v1127
      %v1807 = vsel %vm1778, %v1774, %v1129
      %v1808 = vsel %vm1778, %v1775, %v1131
      %v1809 = vsel %vm1778, %v1776, %v1133
      %v1810 = vsel %vm1778, %v1777, %v1135
      %vm1811 = vcmask 162816
      %v1812 = vsel %vm1811, %v1779, %v1201
      %v1813 = vsel %vm1811, %v1780, %v1203
      %v1814 = vsel %vm1811, %v1781, %v1205
      %v1815 = vsel %vm1811, %v1782, %v1207
      %v1816 = vsel %vm1811, %v1783, %v1209
      %v1817 = vsel %vm1811, %v1784, %v1211
      %v1818 = vsel %vm1811, %v1785, %v1213
      %v1819 = vsel %vm1811, %v1786, %v1215
      %v1820 = vsel %vm1811, %v1787, %v1217
      %v1821 = vsel %vm1811, %v1788, %v1219
      %v1822 = vsel %vm1811, %v1789, %v1221
      %v1823 = vsel %vm1811, %v1790, %v1223
      %v1824 = vsel %vm1811, %v1791, %v1225
      %v1825 = vsel %vm1811, %v1792, %v1227
      %v1826 = vsel %vm1811, %v1793, %v1229
      %v1827 = vsel %vm1811, %v1794, %v1231
      %v1828 = vsel %vm1811, %v1795, %v1233
      %v1829 = vsel %vm1811, %v1796, %v1235
      %v1830 = vsel %vm1811, %v1797, %v1237
      %v1831 = vsel %vm1811, %v1798, %v1239
      %v1832 = vsel %vm1811, %v1799, %v1241
      %v1833 = vsel %vm1811, %v1800, %v1243
      %v1834 = vsel %vm1811, %v1801, %v1245
      %v1835 = vsel %vm1811, %v1802, %v1247
      %v1836 = vsel %vm1811, %v1803, %v1249
      %v1837 = vsel %vm1811, %v1804, %v1251
      %v1838 = vsel %vm1811, %v1805, %v1253
      %v1839 = vsel %vm1811, %v1806, %v1255
      %v1840 = vsel %vm1811, %v1807, %v1257
      %v1841 = vsel %vm1811, %v1808, %v1259
      %v1842 = vsel %vm1811, %v1809, %v1261
      %v1843 = vsel %vm1811, %v1810, %v1263
      %vm1844 = vcmask 195584
      %v1845 = vsel %vm1844, %v1812, %v1329
      %v1846 = vsel %vm1844, %v1813, %v1331
      %v1847 = vsel %vm1844, %v1814, %v1333
      %v1848 = vsel %vm1844, %v1815, %v1335
      %v1849 = vsel %vm1844, %v1816, %v1337
      %v1850 = vsel %vm1844, %v1817, %v1339
      %v1851 = vsel %vm1844, %v1818, %v1341
      %v1852 = vsel %vm1844, %v1819, %v1343
      %v1853 = vsel %vm1844, %v1820, %v1345
      %v1854 = vsel %vm1844, %v1821, %v1347
      %v1855 = vsel %vm1844, %v1822, %v1349
      %v1856 = vsel %vm1844, %v1823, %v1351
      %v1857 = vsel %vm1844, %v1824, %v1353
      %v1858 = vsel %vm1844, %v1825, %v1355
      %v1859 = vsel %vm1844, %v1826, %v1357
      %v1860 = vsel %vm1844, %v1827, %v1359
      %v1861 = vsel %vm1844, %v1828, %v1361
      %v1862 = vsel %vm1844, %v1829, %v1363
      %v1863 = vsel %vm1844, %v1830, %v1365
      %v1864 = vsel %vm1844, %v1831, %v1367
      %v1865 = vsel %vm1844, %v1832, %v1369
      %v1866 = vsel %vm1844, %v1833, %v1371
      %v1867 = vsel %vm1844, %v1834, %v1373
      %v1868 = vsel %vm1844, %v1835, %v1375
      %v1869 = vsel %vm1844, %v1836, %v1377
      %v1870 = vsel %vm1844, %v1837, %v1379
      %v1871 = vsel %vm1844, %v1838, %v1381
      %v1872 = vsel %vm1844, %v1839, %v1383
      %v1873 = vsel %vm1844, %v1840, %v1385
      %v1874 = vsel %vm1844, %v1841, %v1387
      %v1875 = vsel %vm1844, %v1842, %v1389
      %v1876 = vsel %vm1844, %v1843, %v1391
      %vm1877 = vcmask 228352
      %v1878 = vsel %vm1877, %v1845, %v1457
      %v1879 = vsel %vm1877, %v1846, %v1459
      %v1880 = vsel %vm1877, %v1847, %v1461
      %v1881 = vsel %vm1877, %v1848, %v1463
      %v1882 = vsel %vm1877, %v1849, %v1465
      %v1883 = vsel %vm1877, %v1850, %v1467
      %v1884 = vsel %vm1877, %v1851, %v1469
      %v1885 = vsel %vm1877, %v1852, %v1471
      %v1886 = vsel %vm1877, %v1853, %v1473
      %v1887 = vsel %vm1877, %v1854, %v1475
      %v1888 = vsel %vm1877, %v1855, %v1477
      %v1889 = vsel %vm1877, %v1856, %v1479
      %v1890 = vsel %vm1877, %v1857, %v1481
      %v1891 = vsel %vm1877, %v1858, %v1483
      %v1892 = vsel %vm1877, %v1859, %v1485
      %v1893 = vsel %vm1877, %v1860, %v1487
      %v1894 = vsel %vm1877, %v1861, %v1489
      %v1895 = vsel %vm1877, %v1862, %v1491
      %v1896 = vsel %vm1877, %v1863, %v1493
      %v1897 = vsel %vm1877, %v1864, %v1495
      %v1898 = vsel %vm1877, %v1865, %v1497
      %v1899 = vsel %vm1877, %v1866, %v1499
      %v1900 = vsel %vm1877, %v1867, %v1501
      %v1901 = vsel %vm1877, %v1868, %v1503
      %v1902 = vsel %vm1877, %v1869, %v1505
      %v1903 = vsel %vm1877, %v1870, %v1507
      %v1904 = vsel %vm1877, %v1871, %v1509
      %v1905 = vsel %vm1877, %v1872, %v1511
      %v1906 = vsel %vm1877, %v1873, %v1513
      %v1907 = vsel %vm1877, %v1874, %v1515
      %v1908 = vsel %vm1877, %v1875, %v1517
      %v1909 = vsel %vm1877, %v1876, %v1519
      %vm1910 = vcmask 261120
      %v1911 = vsel %vm1910, %v1878, %v1585
      %v1912 = vsel %vm1910, %v1879, %v1587
      %v1913 = vsel %vm1910, %v1880, %v1589
      %v1914 = vsel %vm1910, %v1881, %v1591
      %v1915 = vsel %vm1910, %v1882, %v1593
      %v1916 = vsel %vm1910, %v1883, %v1595
      %v1917 = vsel %vm1910, %v1884, %v1597
      %v1918 = vsel %vm1910, %v1885, %v1599
      %v1919 = vsel %vm1910, %v1886, %v1601
      %v1920 = vsel %vm1910, %v1887, %v1603
      %v1921 = vsel %vm1910, %v1888, %v1605
      %v1922 = vsel %vm1910, %v1889, %v1607
      %v1923 = vsel %vm1910, %v1890, %v1609
      %v1924 = vsel %vm1910, %v1891, %v1611
      %v1925 = vsel %vm1910, %v1892, %v1613
      %v1926 = vsel %vm1910, %v1893, %v1615
      %v1927 = vsel %vm1910, %v1894, %v1617
      %v1928 = vsel %vm1910, %v1895, %v1619
      %v1929 = vsel %vm1910, %v1896, %v1621
      %v1930 = vsel %vm1910, %v1897, %v1623
      %v1931 = vsel %vm1910, %v1898, %v1625
      %v1932 = vsel %vm1910, %v1899, %v1627
      %v1933 = vsel %vm1910, %v1900, %v1629
      %v1934 = vsel %vm1910, %v1901, %v1631
      %v1935 = vsel %vm1910, %v1902, %v1633
      %v1936 = vsel %vm1910, %v1903, %v1635
      %v1937 = vsel %vm1910, %v1904, %v1637
      %v1938 = vsel %vm1910, %v1905, %v1639
      %v1939 = vsel %vm1910, %v1906, %v1641
      %v1940 = vsel %vm1910, %v1907, %v1643
      %v1941 = vsel %vm1910, %v1908, %v1645
      %v1942 = vsel %vm1910, %v1909, %v1647
      %v1943 = vld [vmem:[%s1] sm:$0xff]
      %v1944 = vld [vmem:[%s1 + $0x8] sm:$0xff]
      %v1945 = vld [vmem:[%s1 + $0x10] sm:$0xff]
      %v1946 = vld [vmem:[%s1 + $0x18] sm:$0xff]
      %v1947 = vld [vmem:[%s1 + $0x20] sm:$0xf]
      %vm1948 = vcmask 293888
      %v1950 = vsel %vm1948, %v1911, 0
      %v1953 = vsel %vm1948, %v1912, 0
      %v1956 = vsel %vm1948, %v1913, 0
      %v1959 = vsel %vm1948, %v1914, 0
      %v1962 = vsel %vm1948, %v1915, 0
      %v1965 = vsel %vm1948, %v1916, 0
      %v1968 = vsel %vm1948, %v1917, 0
      %v1971 = vsel %vm1948, %v1918, 0
      %v1974 = vsel %vm1948, %v1919, 0
      %v1977 = vsel %vm1948, %v1920, 0
      %v1980 = vsel %vm1948, %v1921, 0
      %v1983 = vsel %vm1948, %v1922, 0
      %v1986 = vsel %vm1948, %v1923, 0
      %v1989 = vsel %vm1948, %v1924, 0
      %v1992 = vsel %vm1948, %v1925, 0
      %v1995 = vsel %vm1948, %v1926, 0
      %v1998 = vsel %vm1948, %v1927, 0
      %v2001 = vsel %vm1948, %v1928, 0
      %v2004 = vsel %vm1948, %v1929, 0
      %v2007 = vsel %vm1948, %v1930, 0
      %v2010 = vsel %vm1948, %v1931, 0
      %v2013 = vsel %vm1948, %v1932, 0
      %v2016 = vsel %vm1948, %v1933, 0
      %v2019 = vsel %vm1948, %v1934, 0
      %v2022 = vsel %vm1948, %v1935, 0
      %v2025 = vsel %vm1948, %v1936, 0
      %v2028 = vsel %vm1948, %v1937, 0
      %v2031 = vsel %vm1948, %v1938, 0
      %v2034 = vsel %vm1948, %v1939, 0
      %v2037 = vsel %vm1948, %v1940, 0
      %v2040 = vsel %vm1948, %v1941, 0
      %v2043 = vsel %vm1948, %v1942, 0
      %vm2045 = vcmask 1043456
      %v2047 = vsel %vm2045, %v1947, 0
      %2049 = vmatprep.subr.mxu0 0.0
      %2050 = vmatpush1.msra.mxu0 %v1943
      %2051 = vmatprep.subr.mxu0 0.0
      %2052 = vmatpush1.msra.mxu0 %v1944
      %2053 = vmatprep.subr.mxu0 0.0
      %2054 = vmatpush1.msra.mxu0 %v1945
      %2055 = vmatprep.subr.mxu0 0.0
      %2056 = vmatpush1.msra.mxu0 %v1946
      %2057 = vmatprep.subr.mxu0 0.0
      %2058 = vmatpush1.msra.mxu0 %v2047
      %2059 = vmatprep.subr.mxu0 0.0
      %2060 = vmatpush1.msra.mxu0 0.0
      %2061 = vmatprep.subr.mxu0 0.0
      %2062 = vmatpush1.msra.mxu0 0.0
      %2063 = vmatprep.subr.mxu0 0.0
      %2064 = vmatpush1.msra.mxu0 0.0
      %2065 = vmatprep.subr.mxu0 0.0
      %2066 = vmatpush1.msra.mxu0 0.0
      %2067 = vmatprep.subr.mxu0 0.0
      %2068 = vmatpush1.msra.mxu0 0.0
      %2069 = vmatprep.subr.mxu0 0.0
      %2070 = vmatpush1.msra.mxu0 0.0
      %2071 = vmatprep.subr.mxu0 0.0
      %2072 = vmatpush1.msra.mxu0 0.0
      %2073 = vmatprep.subr.mxu0 0.0
      %2074 = vmatpush1.msra.mxu0 0.0
      %2075 = vmatprep.subr.mxu0 0.0
      %2076 = vmatpush1.msra.mxu0 0.0
      %2077 = vmatprep.subr.mxu0 0.0
      %2078 = vmatpush1.msra.mxu0 0.0
      %2079 = vmatprep.subr.mxu0 0.0
      %2080 = vmatpush1.msra.mxu0 0.0
      %2081 = vmatprep.subr.mxu0 0.0
      %2082 = vmatpush1.msra.mxu0 0.0
      %2083 = vmatprep.subr.mxu0 0.0
      %2084 = vmatpush1.msra.mxu0 0.0
      %2085 = vmatprep.subr.mxu0 0.0
      %2086 = vmatpush1.msra.mxu0 0.0
      %2087 = vmatprep.subr.mxu0 0.0
      %2088 = vmatpush1.msra.mxu0 0.0
      %2089 = vmatprep.subr.mxu0 0.0
      %2090 = vmatpush1.msra.mxu0 0.0
      %2091 = vmatprep.subr.mxu0 0.0
      %2092 = vmatpush1.msra.mxu0 0.0
      %2093 = vmatprep.subr.mxu0 0.0
      %2094 = vmatpush1.msra.mxu0 0.0
      %2095 = vmatprep.subr.mxu0 0.0
      %2096 = vmatpush1.msra.mxu0 0.0
      %2097 = vmatprep.subr.mxu0 0.0
      %2098 = vmatpush1.msra.mxu0 0.0
      %2099 = vmatprep.subr.mxu0 0.0
      %2100 = vmatpush1.msra.mxu0 0.0
      %2101 = vmatprep.subr.mxu0 0.0
      %2102 = vmatpush1.msra.mxu0 0.0
      %2103 = vmatprep.subr.mxu0 0.0
      %2104 = vmatpush1.msra.mxu0 0.0
      %2105 = vmatprep.subr.mxu0 0.0
      %2106 = vmatpush1.msra.mxu0 0.0
      %2107 = vmatprep.subr.mxu0 0.0
      %2108 = vmatpush1.msra.mxu0 0.0
      %2109 = vmatprep.subr.mxu0 0.0
      %2110 = vmatpush1.msra.mxu0 0.0
      %2111 = vmatprep.subr.mxu0 0.0
      %2112 = vmatpush1.msra.mxu0 0.0
      %2113 = vmatprep.mubr.f32.mxu0 0.0
      %2114 = vmatmul.mubr.f32.gmra.mrb[0].mxu0 %v1950
      %v2115 = vpop.f32.mrb[0].mxu0
      %v2116 = vadd.f32 0.0, %v2115
      %v2117 = vpop.f32.mrb[0].mxu0
      %2118 = vmatprep.mubr.f32.mxu0 0.0
      %2119 = vmatmul.mubr.f32.gmra.mrb[0].mxu0 %v1953
      %v2120 = vpop.f32.mrb[0].mxu0
      %v2121 = vadd.f32 0.0, %v2120
      %v2122 = vpop.f32.mrb[0].mxu0
      %2123 = vmatprep.mubr.f32.mxu0 0.0
      %2124 = vmatmul.mubr.f32.gmra.mrb[0].mxu0 %v1956
      %v2125 = vpop.f32.mrb[0].mxu0
      %v2126 = vadd.f32 0.0, %v2125
      %v2127 = vpop.f32.mrb[0].mxu0
      %2128 = vmatprep.mubr.f32.mxu0 0.0
      %2129 = vmatmul.mubr.f32.gmra.mrb[0].mxu0 %v1959
      %v2130 = vpop.f32.mrb[0].mxu0
      %v2131 = vadd.f32 0.0, %v2130
      %v2132 = vpop.f32.mrb[0].mxu0
      %2133 = vmatprep.mubr.f32.mxu0 0.0
      %2134 = vmatmul.mubr.f32.gmra.mrb[0].mxu0 %v1962
      %v2135 = vpop.f32.mrb[0].mxu0
      %v2136 = vadd.f32 0.0, %v2135
      %v2137 = vpop.f32.mrb[0].mxu0
      %2138 = vmatprep.mubr.f32.mxu0 0.0
      %2139 = vmatmul.mubr.f32.gmra.mrb[0].mxu0 %v1965
      %v2140 = vpop.f32.mrb[0].mxu0
      %v2141 = vadd.f32 0.0, %v2140
      %v2142 = vpop.f32.mrb[0].mxu0
      %2143 = vmatprep.mubr.f32.mxu0 0.0
      %2144 = vmatmul.mubr.f32.gmra.mrb[0].mxu0 %v1968
      %v2145 = vpop.f32.mrb[0].mxu0
      %v2146 = vadd.f32 0.0, %v2145
      %v2147 = vpop.f32.mrb[0].mxu0
      %2148 = vmatprep.mubr.f32.mxu0 0.0
      %2149 = vmatmul.mubr.f32.gmra.mrb[0].mxu0 %v1971
      %v2150 = vpop.f32.mrb[0].mxu0
      %v2151 = vadd.f32 0.0, %v2150
      %v2152 = vpop.f32.mrb[0].mxu0
      %2153 = vmatprep.mubr.f32.mxu0 0.0
      %2154 = vmatmul.mubr.f32.gmra.mrb[0].mxu0 %v1974
      %v2155 = vpop.f32.mrb[0].mxu0
      %v2156 = vadd.f32 0.0, %v2155
      %v2157 = vpop.f32.mrb[0].mxu0
      %2158 = vmatprep.mubr.f32.mxu0 0.0
      %2159 = vmatmul.mubr.f32.gmra.mrb[0].mxu0 %v1977
      %v2160 = vpop.f32.mrb[0].mxu0
      %v2161 = vadd.f32 0.0, %v2160
      %v2162 = vpop.f32.mrb[0].mxu0
      %2163 = vmatprep.mubr.f32.mxu0 0.0
      %2164 = vmatmul.mubr.f32.gmra.mrb[0].mxu0 %v1980
      %v2165 = vpop.f32.mrb[0].mxu0
      %v2166 = vadd.f32 0.0, %v2165
      %v2167 = vpop.f32.mrb[0].mxu0
      %2168 = vmatprep.mubr.f32.mxu0 0.0
      %2169 = vmatmul.mubr.f32.gmra.mrb[0].mxu0 %v1983
      %v2170 = vpop.f32.mrb[0].mxu0
      %v2171 = vadd.f32 0.0, %v2170
      %v2172 = vpop.f32.mrb[0].mxu0
      %2173 = vmatprep.mubr.f32.mxu0 0.0
      %2174 = vmatmul.mubr.f32.gmra.mrb[0].mxu0 %v1986
      %v2175 = vpop.f32.mrb[0].mxu0
      %v2176 = vadd.f32 0.0, %v2175
      %v2177 = vpop.f32.mrb[0].mxu0
      %2178 = vmatprep.mubr.f32.mxu0 0.0
      %2179 = vmatmul.mubr.f32.gmra.mrb[0].mxu0 %v1989
      %v2180 = vpop.f32.mrb[0].mxu0
      %v2181 = vadd.f32 0.0, %v2180
      %v2182 = vpop.f32.mrb[0].mxu0
      %2183 = vmatprep.mubr.f32.mxu0 0.0
      %2184 = vmatmul.mubr.f32.gmra.mrb[0].mxu0 %v1992
      %v2185 = vpop.f32.mrb[0].mxu0
      %v2186 = vadd.f32 0.0, %v2185
      %v2187 = vpop.f32.mrb[0].mxu0
      %2188 = vmatprep.mubr.f32.mxu0 0.0
      %2189 = vmatmul.mubr.f32.gmra.mrb[0].mxu0 %v1995
      %v2190 = vpop.f32.mrb[0].mxu0
      %v2191 = vadd.f32 0.0, %v2190
      %v2192 = vpop.f32.mrb[0].mxu0
      %2193 = vmatprep.mubr.f32.mxu0 0.0
      %2194 = vmatmul.mubr.f32.gmra.mrb[0].mxu0 %v1998
      %v2195 = vpop.f32.mrb[0].mxu0
      %v2196 = vadd.f32 0.0, %v2195
      %v2197 = vpop.f32.mrb[0].mxu0
      %2198 = vmatprep.mubr.f32.mxu0 0.0
      %2199 = vmatmul.mubr.f32.gmra.mrb[0].mxu0 %v2001
      %v2200 = vpop.f32.mrb[0].mxu0
      %v2201 = vadd.f32 0.0, %v2200
      %v2202 = vpop.f32.mrb[0].mxu0
      %2203 = vmatprep.mubr.f32.mxu0 0.0
      %2204 = vmatmul.mubr.f32.gmra.mrb[0].mxu0 %v2004
      %v2205 = vpop.f32.mrb[0].mxu0
      %v2206 = vadd.f32 0.0, %v2205
      %v2207 = vpop.f32.mrb[0].mxu0
      %2208 = vmatprep.mubr.f32.mxu0 0.0
      %2209 = vmatmul.mubr.f32.gmra.mrb[0].mxu0 %v2007
      %v2210 = vpop.f32.mrb[0].mxu0
      %v2211 = vadd.f32 0.0, %v2210
      %v2212 = vpop.f32.mrb[0].mxu0
      %2213 = vmatprep.mubr.f32.mxu0 0.0
      %2214 = vmatmul.mubr.f32.gmra.mrb[0].mxu0 %v2010
      %v2215 = vpop.f32.mrb[0].mxu0
      %v2216 = vadd.f32 0.0, %v2215
      %v2217 = vpop.f32.mrb[0].mxu0
      %2218 = vmatprep.mubr.f32.mxu0 0.0
      %2219 = vmatmul.mubr.f32.gmra.mrb[0].mxu0 %v2013
      %v2220 = vpop.f32.mrb[0].mxu0
      %v2221 = vadd.f32 0.0, %v2220
      %v2222 = vpop.f32.mrb[0].mxu0
      %2223 = vmatprep.mubr.f32.mxu0 0.0
      %2224 = vmatmul.mubr.f32.gmra.mrb[0].mxu0 %v2016
      %v2225 = vpop.f32.mrb[0].mxu0
      %v2226 = vadd.f32 0.0, %v2225
      %v2227 = vpop.f32.mrb[0].mxu0
      %2228 = vmatprep.mubr.f32.mxu0 0.0
      %2229 = vmatmul.mubr.f32.gmra.mrb[0].mxu0 %v2019
      %v2230 = vpop.f32.mrb[0].mxu0
      %v2231 = vadd.f32 0.0, %v2230
      %v2232 = vpop.f32.mrb[0].mxu0
      %2233 = vmatprep.mubr.f32.mxu0 0.0
      %2234 = vmatmul.mubr.f32.gmra.mrb[0].mxu0 %v2022
      %v2235 = vpop.f32.mrb[0].mxu0
      %v2236 = vadd.f32 0.0, %v2235
      %v2237 = vpop.f32.mrb[0].mxu0
      %2238 = vmatprep.mubr.f32.mxu0 0.0
      %2239 = vmatmul.mubr.f32.gmra.mrb[0].mxu0 %v2025
      %v2240 = vpop.f32.mrb[0].mxu0
      %v2241 = vadd.f32 0.0, %v2240
      %v2242 = vpop.f32.mrb[0].mxu0
      %2243 = vmatprep.mubr.f32.mxu0 0.0
      %2244 = vmatmul.mubr.f32.gmra.mrb[0].mxu0 %v2028
      %v2245 = vpop.f32.mrb[0].mxu0
      %v2246 = vadd.f32 0.0, %v2245
      %v2247 = vpop.f32.mrb[0].mxu0
      %2248 = vmatprep.mubr.f32.mxu0 0.0
      %2249 = vmatmul.mubr.f32.gmra.mrb[0].mxu0 %v2031
      %v2250 = vpop.f32.mrb[0].mxu0
      %v2251 = vadd.f32 0.0, %v2250
      %v2252 = vpop.f32.mrb[0].mxu0
      %2253 = vmatprep.mubr.f32.mxu0 0.0
      %2254 = vmatmul.mubr.f32.gmra.mrb[0].mxu0 %v2034
      %v2255 = vpop.f32.mrb[0].mxu0
      %v2256 = vadd.f32 0.0, %v2255
      %v2257 = vpop.f32.mrb[0].mxu0
      %2258 = vmatprep.mubr.f32.mxu0 0.0
      %2259 = vmatmul.mubr.f32.gmra.mrb[0].mxu0 %v2037
      %v2260 = vpop.f32.mrb[0].mxu0
      %v2261 = vadd.f32 0.0, %v2260
      %v2262 = vpop.f32.mrb[0].mxu0
      %2263 = vmatprep.mubr.f32.mxu0 0.0
      %2264 = vmatmul.mubr.f32.gmra.mrb[0].mxu0 %v2040
      %v2265 = vpop.f32.mrb[0].mxu0
      %v2266 = vadd.f32 0.0, %v2265
      %v2267 = vpop.f32.mrb[0].mxu0
      %2268 = vmatprep.mubr.f32.mxu0 0.0
      %2269 = vmatmul.mubr.f32.gmra.mrb[0].mxu0 %v2043
      %v2270 = vpop.f32.mrb[0].mxu0
      %v2271 = vadd.f32 0.0, %v2270
      %v2272 = vpop.f32.mrb[0].mxu0
      %2273 = vdwg.mxu0
      %v2274 = vsel %vm1712, %v2116, 0.0
      %v2275 = vsel %vm1712, %v2121, 0.0
      %v2276 = vadd.f32 %v2274, %v2275
      %v2277 = vsel %vm1712, %v2126, 0.0
      %v2278 = vadd.f32 %v2276, %v2277
      %v2279 = vsel %vm1712, %v2131, 0.0
      %v2280 = vadd.f32 %v2278, %v2279
      %v2281 = vsel %vm1712, %v2136, 0.0
      %v2282 = vadd.f32 %v2280, %v2281
      %v2283 = vsel %vm1712, %v2141, 0.0
      %v2284 = vadd.f32 %v2282, %v2283
      %v2285 = vsel %vm1712, %v2146, 0.0
      %v2286 = vadd.f32 %v2284, %v2285
      %v2287 = vsel %vm1712, %v2151, 0.0
      %v2288 = vadd.f32 %v2286, %v2287
      %v2289 = vsel %vm1712, %v2156, 0.0
      %v2290 = vadd.f32 %v2288, %v2289
      %v2291 = vsel %vm1712, %v2161, 0.0
      %v2292 = vadd.f32 %v2290, %v2291
      %v2293 = vsel %vm1712, %v2166, 0.0
      %v2294 = vadd.f32 %v2292, %v2293
      %v2295 = vsel %vm1712, %v2171, 0.0
      %v2296 = vadd.f32 %v2294, %v2295
      %v2297 = vsel %vm1712, %v2176, 0.0
      %v2298 = vadd.f32 %v2296, %v2297
      %v2299 = vsel %vm1712, %v2181, 0.0
      %v2300 = vadd.f32 %v2298, %v2299
      %v2301 = vsel %vm1712, %v2186, 0.0
      %v2302 = vadd.f32 %v2300, %v2301
      %v2303 = vsel %vm1712, %v2191, 0.0
      %v2304 = vadd.f32 %v2302, %v2303
      %v2305 = vsel %vm1712, %v2196, 0.0
      %v2306 = vadd.f32 %v2304, %v2305
      %v2307 = vsel %vm1712, %v2201, 0.0
      %v2308 = vadd.f32 %v2306, %v2307
      %v2309 = vsel %vm1712, %v2206, 0.0
      %v2310 = vadd.f32 %v2308, %v2309
      %v2311 = vsel %vm1712, %v2211, 0.0
      %v2312 = vadd.f32 %v2310, %v2311
      %v2313 = vsel %vm1712, %v2216, 0.0
      %v2314 = vadd.f32 %v2312, %v2313
      %v2315 = vsel %vm1712, %v2221, 0.0
      %v2316 = vadd.f32 %v2314, %v2315
      %v2317 = vsel %vm1712, %v2226, 0.0
      %v2318 = vadd.f32 %v2316, %v2317
      %v2319 = vsel %vm1712, %v2231, 0.0
      %v2320 = vadd.f32 %v2318, %v2319
      %v2321 = vsel %vm1712, %v2236, 0.0
      %v2322 = vadd.f32 %v2320, %v2321
      %v2323 = vsel %vm1712, %v2241, 0.0
      %v2324 = vadd.f32 %v2322, %v2323
      %v2325 = vsel %vm1712, %v2246, 0.0
      %v2326 = vadd.f32 %v2324, %v2325
      %v2327 = vsel %vm1712, %v2251, 0.0
      %v2328 = vadd.f32 %v2326, %v2327
      %v2329 = vsel %vm1712, %v2256, 0.0
      %v2330 = vadd.f32 %v2328, %v2329
      %v2331 = vsel %vm1712, %v2261, 0.0
      %v2332 = vadd.f32 %v2330, %v2331
      %v2333 = vsel %vm1712, %v2266, 0.0
      %v2334 = vadd.f32 %v2332, %v2333
      %v2335 = vsel %vm1712, %v2271, 0.0
      %v2336 = vadd.f32 %v2334, %v2335
      %v2337 = vrot.slane %v2336, 4
      %v2338 = vadd.f32 %v2336, %v2337
      %v2339 = vrot.slane %v2338, 2
      %v2340 = vadd.f32 %v2338, %v2339
      %v2341 = vrot.slane %v2340, 1
      %v2342 = vadd.f32 %v2340, %v2341
      %vm2343 = vcmask 57344
      %2344 = vst.msk [vmem:[%s241] sm:$0x1] %vm2343, %v2342
      %v2345 = vmul.f32 %v2116, %v2116
      %v2346 = vmul.f32 %v2121, %v2121
      %v2347 = vmul.f32 %v2126, %v2126
      %v2348 = vmul.f32 %v2131, %v2131
      %v2349 = vmul.f32 %v2136, %v2136
      %v2350 = vmul.f32 %v2141, %v2141
      %v2351 = vmul.f32 %v2146, %v2146
      %v2352 = vmul.f32 %v2151, %v2151
      %v2353 = vmul.f32 %v2156, %v2156
      %v2354 = vmul.f32 %v2161, %v2161
      %v2355 = vmul.f32 %v2166, %v2166
      %v2356 = vmul.f32 %v2171, %v2171
      %v2357 = vmul.f32 %v2176, %v2176
      %v2358 = vmul.f32 %v2181, %v2181
      %v2359 = vmul.f32 %v2186, %v2186
      %v2360 = vmul.f32 %v2191, %v2191
      %v2361 = vmul.f32 %v2196, %v2196
      %v2362 = vmul.f32 %v2201, %v2201
      %v2363 = vmul.f32 %v2206, %v2206
      %v2364 = vmul.f32 %v2211, %v2211
      %v2365 = vmul.f32 %v2216, %v2216
      %v2366 = vmul.f32 %v2221, %v2221
      %v2367 = vmul.f32 %v2226, %v2226
      %v2368 = vmul.f32 %v2231, %v2231
      %v2369 = vmul.f32 %v2236, %v2236
      %v2370 = vmul.f32 %v2241, %v2241
      %v2371 = vmul.f32 %v2246, %v2246
      %v2372 = vmul.f32 %v2251, %v2251
      %v2373 = vmul.f32 %v2256, %v2256
      %v2374 = vmul.f32 %v2261, %v2261
      %v2375 = vmul.f32 %v2266, %v2266
      %v2376 = vmul.f32 %v2271, %v2271
      %v2377 = vsel %vm1712, %v2345, 0.0
      %v2378 = vsel %vm1712, %v2346, 0.0
      %v2379 = vadd.f32 %v2377, %v2378
      %v2380 = vsel %vm1712, %v2347, 0.0
      %v2381 = vadd.f32 %v2379, %v2380
      %v2382 = vsel %vm1712, %v2348, 0.0
      %v2383 = vadd.f32 %v2381, %v2382
      %v2384 = vsel %vm1712, %v2349, 0.0
      %v2385 = vadd.f32 %v2383, %v2384
      %v2386 = vsel %vm1712, %v2350, 0.0
      %v2387 = vadd.f32 %v2385, %v2386
      %v2388 = vsel %vm1712, %v2351, 0.0
      %v2389 = vadd.f32 %v2387, %v2388
      %v2390 = vsel %vm1712, %v2352, 0.0
      %v2391 = vadd.f32 %v2389, %v2390
      %v2392 = vsel %vm1712, %v2353, 0.0
      %v2393 = vadd.f32 %v2391, %v2392
      %v2394 = vsel %vm1712, %v2354, 0.0
      %v2395 = vadd.f32 %v2393, %v2394
      %v2396 = vsel %vm1712, %v2355, 0.0
      %v2397 = vadd.f32 %v2395, %v2396
      %v2398 = vsel %vm1712, %v2356, 0.0
      %v2399 = vadd.f32 %v2397, %v2398
      %v2400 = vsel %vm1712, %v2357, 0.0
      %v2401 = vadd.f32 %v2399, %v2400
      %v2402 = vsel %vm1712, %v2358, 0.0
      %v2403 = vadd.f32 %v2401, %v2402
      %v2404 = vsel %vm1712, %v2359, 0.0
      %v2405 = vadd.f32 %v2403, %v2404
      %v2406 = vsel %vm1712, %v2360, 0.0
      %v2407 = vadd.f32 %v2405, %v2406
      %v2408 = vsel %vm1712, %v2361, 0.0
      %v2409 = vadd.f32 %v2407, %v2408
      %v2410 = vsel %vm1712, %v2362, 0.0
      %v2411 = vadd.f32 %v2409, %v2410
      %v2412 = vsel %vm1712, %v2363, 0.0
      %v2413 = vadd.f32 %v2411, %v2412
      %v2414 = vsel %vm1712, %v2364, 0.0
      %v2415 = vadd.f32 %v2413, %v2414
      %v2416 = vsel %vm1712, %v2365, 0.0
      %v2417 = vadd.f32 %v2415, %v2416
      %v2418 = vsel %vm1712, %v2366, 0.0
      %v2419 = vadd.f32 %v2417, %v2418
      %v2420 = vsel %vm1712, %v2367, 0.0
      %v2421 = vadd.f32 %v2419, %v2420
      %v2422 = vsel %vm1712, %v2368, 0.0
      %v2423 = vadd.f32 %v2421, %v2422
      %v2424 = vsel %vm1712, %v2369, 0.0
      %v2425 = vadd.f32 %v2423, %v2424
      %v2426 = vsel %vm1712, %v2370, 0.0
      %v2427 = vadd.f32 %v2425, %v2426
      %v2428 = vsel %vm1712, %v2371, 0.0
      %v2429 = vadd.f32 %v2427, %v2428
      %v2430 = vsel %vm1712, %v2372, 0.0
      %v2431 = vadd.f32 %v2429, %v2430
      %v2432 = vsel %vm1712, %v2373, 0.0
      %v2433 = vadd.f32 %v2431, %v2432
      %v2434 = vsel %vm1712, %v2374, 0.0
      %v2435 = vadd.f32 %v2433, %v2434
      %v2436 = vsel %vm1712, %v2375, 0.0
      %v2437 = vadd.f32 %v2435, %v2436
      %v2438 = vsel %vm1712, %v2376, 0.0
      %v2439 = vadd.f32 %v2437, %v2438
      %v2440 = vrot.slane %v2439, 4
      %v2441 = vadd.f32 %v2439, %v2440
      %v2442 = vrot.slane %v2441, 2
      %v2443 = vadd.f32 %v2441, %v2442
      %v2444 = vrot.slane %v2443, 1
      %v2445 = vadd.f32 %v2443, %v2444
      %2446 = vst.msk [vmem:[%s241 + $0x1] sm:$0x1] %vm2343, %v2445
      %2447 = vst.msk [vmem:[%s237] sm:$0xff] %vm1712, %v2116
      %2448 = vst.msk [vmem:[%s237 + $0x8] sm:$0xff] %vm1712, %v2121
      %2449 = vst.msk [vmem:[%s237 + $0x10] sm:$0xff] %vm1712, %v2126
      %2450 = vst.msk [vmem:[%s237 + $0x18] sm:$0xff] %vm1712, %v2131
      %2451 = vst.msk [vmem:[%s237 + $0x20] sm:$0xff] %vm1712, %v2136
      %2452 = vst.msk [vmem:[%s237 + $0x28] sm:$0xff] %vm1712, %v2141
      %2453 = vst.msk [vmem:[%s237 + $0x30] sm:$0xff] %vm1712, %v2146
      %2454 = vst.msk [vmem:[%s237 + $0x38] sm:$0xff] %vm1712, %v2151
      %2455 = vst.msk [vmem:[%s237 + $0x40] sm:$0xff] %vm1712, %v2156
      %2456 = vst.msk [vmem:[%s237 + $0x48] sm:$0xff] %vm1712, %v2161
      %2457 = vst.msk [vmem:[%s237 + $0x50] sm:$0xff] %vm1712, %v2166
      %2458 = vst.msk [vmem:[%s237 + $0x58] sm:$0xff] %vm1712, %v2171
      %2459 = vst.msk [vmem:[%s237 + $0x60] sm:$0xff] %vm1712, %v2176
      %2460 = vst.msk [vmem:[%s237 + $0x68] sm:$0xff] %vm1712, %v2181
      %2461 = vst.msk [vmem:[%s237 + $0x70] sm:$0xff] %vm1712, %v2186
      %2462 = vst.msk [vmem:[%s237 + $0x78] sm:$0xff] %vm1712, %v2191
      %2463 = vst.msk [vmem:[%s237 + $0x80] sm:$0xff] %vm1712, %v2196
      %2464 = vst.msk [vmem:[%s237 + $0x88] sm:$0xff] %vm1712, %v2201
      %2465 = vst.msk [vmem:[%s237 + $0x90] sm:$0xff] %vm1712, %v2206
      %2466 = vst.msk [vmem:[%s237 + $0x98] sm:$0xff] %vm1712, %v2211
      %2467 = vst.msk [vmem:[%s237 + $0xa0] sm:$0xff] %vm1712, %v2216
      %2468 = vst.msk [vmem:[%s237 + $0xa8] sm:$0xff] %vm1712, %v2221
      %2469 = vst.msk [vmem:[%s237 + $0xb0] sm:$0xff] %vm1712, %v2226
      %2470 = vst.msk [vmem:[%s237 + $0xb8] sm:$0xff] %vm1712, %v2231
      %2471 = vst.msk [vmem:[%s237 + $0xc0] sm:$0xff] %vm1712, %v2236
      %2472 = vst.msk [vmem:[%s237 + $0xc8] sm:$0xff] %vm1712, %v2241
      %2473 = vst.msk [vmem:[%s237 + $0xd0] sm:$0xff] %vm1712, %v2246
      %2474 = vst.msk [vmem:[%s237 + $0xd8] sm:$0xff] %vm1712, %v2251
      %2475 = vst.msk [vmem:[%s237 + $0xe0] sm:$0xff] %vm1712, %v2256
      %2476 = vst.msk [vmem:[%s237 + $0xe8] sm:$0xff] %vm1712, %v2261
      %2477 = vst.msk [vmem:[%s237 + $0xf0] sm:$0xff] %vm1712, %v2266
      %2478 = vst.msk [vmem:[%s237 + $0xf8] sm:$0xff] %vm1712, %v2271
      %v2479 = vld [vmem:[%s232] sm:$0xff]
      %v2480 = vld [vmem:[%s232 + $0x8] sm:$0xff]
      %v2481 = vld [vmem:[%s232 + $0x10] sm:$0xff]
      %v2482 = vld [vmem:[%s232 + $0x18] sm:$0xff]
      %v2483 = vld [vmem:[%s232 + $0x20] sm:$0xff]
      %v2484 = vld [vmem:[%s232 + $0x28] sm:$0xff]
      %v2485 = vld [vmem:[%s232 + $0x30] sm:$0xff]
      %v2486 = vld [vmem:[%s232 + $0x38] sm:$0xff]
      %v2487 = vld [vmem:[%s232 + $0x40] sm:$0xff]
      %v2488 = vld [vmem:[%s232 + $0x48] sm:$0xff]
      %v2489 = vld [vmem:[%s232 + $0x50] sm:$0xff]
      %v2490 = vld [vmem:[%s232 + $0x58] sm:$0xff]
      %v2491 = vld [vmem:[%s232 + $0x60] sm:$0xff]
      %v2492 = vld [vmem:[%s232 + $0x68] sm:$0xff]
      %v2493 = vld [vmem:[%s232 + $0x70] sm:$0xff]
      %v2494 = vld [vmem:[%s232 + $0x78] sm:$0xff]
      %v2495 = vld [vmem:[%s232 + $0x80] sm:$0xff]
      %v2496 = vld [vmem:[%s232 + $0x88] sm:$0xff]
      %v2497 = vld [vmem:[%s232 + $0x90] sm:$0xff]
      %v2498 = vld [vmem:[%s232 + $0x98] sm:$0xff]
      %v2499 = vld [vmem:[%s232 + $0xa0] sm:$0xff]
      %v2500 = vld [vmem:[%s232 + $0xa8] sm:$0xff]
      %v2501 = vld [vmem:[%s232 + $0xb0] sm:$0xff]
      %v2502 = vld [vmem:[%s232 + $0xb8] sm:$0xff]
      %v2503 = vld [vmem:[%s232 + $0xc0] sm:$0xff]
      %v2504 = vld [vmem:[%s232 + $0xc8] sm:$0xff]
      %v2505 = vld [vmem:[%s232 + $0xd0] sm:$0xff]
      %v2506 = vld [vmem:[%s232 + $0xd8] sm:$0xff]
      %v2507 = vld [vmem:[%s232 + $0xe0] sm:$0xff]
      %v2508 = vld [vmem:[%s232 + $0xe8] sm:$0xff]
      %v2509 = vld [vmem:[%s232 + $0xf0] sm:$0xff]
      %v2510 = vld [vmem:[%s232 + $0xf8] sm:$0xff]
      %v2511 = vld [vmem:[%s2] sm:$0xf]
      %v2513 = vsel %vm278, %v2479, 0
      %v2516 = vsel %vm278, %v2480, 0
      %v2519 = vsel %vm278, %v2481, 0
      %v2522 = vsel %vm278, %v2482, 0
      %v2525 = vsel %vm278, %v2483, 0
      %v2528 = vsel %vm278, %v2484, 0
      %v2531 = vsel %vm278, %v2485, 0
      %v2534 = vsel %vm278, %v2486, 0
      %v2537 = vsel %vm278, %v2487, 0
      %v2540 = vsel %vm278, %v2488, 0
      %v2543 = vsel %vm278, %v2489, 0
      %v2546 = vsel %vm278, %v2490, 0
      %v2549 = vsel %vm278, %v2491, 0
      %v2552 = vsel %vm278, %v2492, 0
      %v2555 = vsel %vm278, %v2493, 0
      %v2558 = vsel %vm278, %v2494, 0
      %v2561 = vsel %vm278, %v2495, 0
      %v2564 = vsel %vm278, %v2496, 0
      %v2567 = vsel %vm278, %v2497, 0
      %v2570 = vsel %vm278, %v2498, 0
      %v2573 = vsel %vm278, %v2499, 0
      %v2576 = vsel %vm278, %v2500, 0
      %v2579 = vsel %vm278, %v2501, 0
      %v2582 = vsel %vm278, %v2502, 0
      %v2585 = vsel %vm278, %v2503, 0
      %v2588 = vsel %vm278, %v2504, 0
      %v2591 = vsel %vm278, %v2505, 0
      %v2594 = vsel %vm278, %v2506, 0
      %v2597 = vsel %vm278, %v2507, 0
      %v2600 = vsel %vm278, %v2508, 0
      %v2603 = vsel %vm278, %v2509, 0
      %v2606 = vsel %vm278, %v2510, 0
      %v2609 = vsel %vm2045, %v2511, 0
      %2611 = vmatprep.subr.mxu0 0.0
      %2612 = vmatpush1.msra.mxu0 %v2609
      %2613 = vmatprep.subr.mxu0 0.0
      %2614 = vmatpush1.msra.mxu0 0.0
      %2615 = vmatprep.subr.mxu0 0.0
      %2616 = vmatpush1.msra.mxu0 0.0
      %2617 = vmatprep.subr.mxu0 0.0
      %2618 = vmatpush1.msra.mxu0 0.0
      %2619 = vmatprep.subr.mxu0 0.0
      %2620 = vmatpush1.msra.mxu0 0.0
      %2621 = vmatprep.subr.mxu0 0.0
      %2622 = vmatpush1.msra.mxu0 0.0
      %2623 = vmatprep.subr.mxu0 0.0
      %2624 = vmatpush1.msra.mxu0 0.0
      %2625 = vmatprep.subr.mxu0 0.0
      %2626 = vmatpush1.msra.mxu0 0.0
      %2627 = vmatprep.subr.mxu0 0.0
      %2628 = vmatpush1.msra.mxu0 0.0
      %2629 = vmatprep.subr.mxu0 0.0
      %2630 = vmatpush1.msra.mxu0 0.0
      %2631 = vmatprep.subr.mxu0 0.0
      %2632 = vmatpush1.msra.mxu0 0.0
      %2633 = vmatprep.subr.mxu0 0.0
      %2634 = vmatpush1.msra.mxu0 0.0
      %2635 = vmatprep.subr.mxu0 0.0
      %2636 = vmatpush1.msra.mxu0 0.0
      %2637 = vmatprep.subr.mxu0 0.0
      %2638 = vmatpush1.msra.mxu0 0.0
      %2639 = vmatprep.subr.mxu0 0.0
      %2640 = vmatpush1.msra.mxu0 0.0
      %2641 = vmatprep.subr.mxu0 0.0
      %2642 = vmatpush1.msra.mxu0 0.0
      %2643 = vmatprep.subr.mxu0 0.0
      %2644 = vmatpush1.msra.mxu0 0.0
      %2645 = vmatprep.subr.mxu0 0.0
      %2646 = vmatpush1.msra.mxu0 0.0
      %2647 = vmatprep.subr.mxu0 0.0
      %2648 = vmatpush1.msra.mxu0 0.0
      %2649 = vmatprep.subr.mxu0 0.0
      %2650 = vmatpush1.msra.mxu0 0.0
      %2651 = vmatprep.subr.mxu0 0.0
      %2652 = vmatpush1.msra.mxu0 0.0
      %2653 = vmatprep.subr.mxu0 0.0
      %2654 = vmatpush1.msra.mxu0 0.0
      %2655 = vmatprep.subr.mxu0 0.0
      %2656 = vmatpush1.msra.mxu0 0.0
      %2657 = vmatprep.subr.mxu0 0.0
      %2658 = vmatpush1.msra.mxu0 0.0
      %2659 = vmatprep.subr.mxu0 0.0
      %2660 = vmatpush1.msra.mxu0 0.0
      %2661 = vmatprep.subr.mxu0 0.0
      %2662 = vmatpush1.msra.mxu0 0.0
      %2663 = vmatprep.subr.mxu0 0.0
      %2664 = vmatpush1.msra.mxu0 0.0
      %2665 = vmatprep.subr.mxu0 0.0
      %2666 = vmatpush1.msra.mxu0 0.0
      %2667 = vmatprep.subr.mxu0 0.0
      %2668 = vmatpush1.msra.mxu0 0.0
      %2669 = vmatprep.subr.mxu0 0.0
      %2670 = vmatpush1.msra.mxu0 0.0
      %2671 = vmatprep.subr.mxu0 0.0
      %2672 = vmatpush1.msra.mxu0 0.0
      %2673 = vmatprep.subr.mxu0 0.0
      %2674 = vmatpush1.msra.mxu0 0.0
      %2675 = vmatprep.mubr.f32.mxu0 0.0
      %2676 = vmatmul.mubr.f32.gmra.mrb[0].mxu0 %v2513
      %v2677 = vpop.f32.mrb[0].mxu0
      %v2678 = vadd.f32 0.0, %v2677
      %v2679 = vpop.f32.mrb[0].mxu0
      %2680 = vmatprep.mubr.f32.mxu0 0.0
      %2681 = vmatmul.mubr.f32.gmra.mrb[0].mxu0 %v2516
      %v2682 = vpop.f32.mrb[0].mxu0
      %v2683 = vadd.f32 0.0, %v2682
      %v2684 = vpop.f32.mrb[0].mxu0
      %2685 = vmatprep.mubr.f32.mxu0 0.0
      %2686 = vmatmul.mubr.f32.gmra.mrb[0].mxu0 %v2519
      %v2687 = vpop.f32.mrb[0].mxu0
      %v2688 = vadd.f32 0.0, %v2687
      %v2689 = vpop.f32.mrb[0].mxu0
      %2690 = vmatprep.mubr.f32.mxu0 0.0
      %2691 = vmatmul.mubr.f32.gmra.mrb[0].mxu0 %v2522
      %v2692 = vpop.f32.mrb[0].mxu0
      %v2693 = vadd.f32 0.0, %v2692
      %v2694 = vpop.f32.mrb[0].mxu0
      %2695 = vmatprep.mubr.f32.mxu0 0.0
      %2696 = vmatmul.mubr.f32.gmra.mrb[0].mxu0 %v2525
      %v2697 = vpop.f32.mrb[0].mxu0
      %v2698 = vadd.f32 0.0, %v2697
      %v2699 = vpop.f32.mrb[0].mxu0
      %2700 = vmatprep.mubr.f32.mxu0 0.0
      %2701 = vmatmul.mubr.f32.gmra.mrb[0].mxu0 %v2528
      %v2702 = vpop.f32.mrb[0].mxu0
      %v2703 = vadd.f32 0.0, %v2702
      %v2704 = vpop.f32.mrb[0].mxu0
      %2705 = vmatprep.mubr.f32.mxu0 0.0
      %2706 = vmatmul.mubr.f32.gmra.mrb[0].mxu0 %v2531
      %v2707 = vpop.f32.mrb[0].mxu0
      %v2708 = vadd.f32 0.0, %v2707
      %v2709 = vpop.f32.mrb[0].mxu0
      %2710 = vmatprep.mubr.f32.mxu0 0.0
      %2711 = vmatmul.mubr.f32.gmra.mrb[0].mxu0 %v2534
      %v2712 = vpop.f32.mrb[0].mxu0
      %v2713 = vadd.f32 0.0, %v2712
      %v2714 = vpop.f32.mrb[0].mxu0
      %2715 = vmatprep.mubr.f32.mxu0 0.0
      %2716 = vmatmul.mubr.f32.gmra.mrb[0].mxu0 %v2537
      %v2717 = vpop.f32.mrb[0].mxu0
      %v2718 = vadd.f32 0.0, %v2717
      %v2719 = vpop.f32.mrb[0].mxu0
      %2720 = vmatprep.mubr.f32.mxu0 0.0
      %2721 = vmatmul.mubr.f32.gmra.mrb[0].mxu0 %v2540
      %v2722 = vpop.f32.mrb[0].mxu0
      %v2723 = vadd.f32 0.0, %v2722
      %v2724 = vpop.f32.mrb[0].mxu0
      %2725 = vmatprep.mubr.f32.mxu0 0.0
      %2726 = vmatmul.mubr.f32.gmra.mrb[0].mxu0 %v2543
      %v2727 = vpop.f32.mrb[0].mxu0
      %v2728 = vadd.f32 0.0, %v2727
      %v2729 = vpop.f32.mrb[0].mxu0
      %2730 = vmatprep.mubr.f32.mxu0 0.0
      %2731 = vmatmul.mubr.f32.gmra.mrb[0].mxu0 %v2546
      %v2732 = vpop.f32.mrb[0].mxu0
      %v2733 = vadd.f32 0.0, %v2732
      %v2734 = vpop.f32.mrb[0].mxu0
      %2735 = vmatprep.mubr.f32.mxu0 0.0
      %2736 = vmatmul.mubr.f32.gmra.mrb[0].mxu0 %v2549
      %v2737 = vpop.f32.mrb[0].mxu0
      %v2738 = vadd.f32 0.0, %v2737
      %v2739 = vpop.f32.mrb[0].mxu0
      %2740 = vmatprep.mubr.f32.mxu0 0.0
      %2741 = vmatmul.mubr.f32.gmra.mrb[0].mxu0 %v2552
      %v2742 = vpop.f32.mrb[0].mxu0
      %v2743 = vadd.f32 0.0, %v2742
      %v2744 = vpop.f32.mrb[0].mxu0
      %2745 = vmatprep.mubr.f32.mxu0 0.0
      %2746 = vmatmul.mubr.f32.gmra.mrb[0].mxu0 %v2555
      %v2747 = vpop.f32.mrb[0].mxu0
      %v2748 = vadd.f32 0.0, %v2747
      %v2749 = vpop.f32.mrb[0].mxu0
      %2750 = vmatprep.mubr.f32.mxu0 0.0
      %2751 = vmatmul.mubr.f32.gmra.mrb[0].mxu0 %v2558
      %v2752 = vpop.f32.mrb[0].mxu0
      %v2753 = vadd.f32 0.0, %v2752
      %v2754 = vpop.f32.mrb[0].mxu0
      %2755 = vmatprep.mubr.f32.mxu0 0.0
      %2756 = vmatmul.mubr.f32.gmra.mrb[0].mxu0 %v2561
      %v2757 = vpop.f32.mrb[0].mxu0
      %v2758 = vadd.f32 0.0, %v2757
      %v2759 = vpop.f32.mrb[0].mxu0
      %2760 = vmatprep.mubr.f32.mxu0 0.0
      %2761 = vmatmul.mubr.f32.gmra.mrb[0].mxu0 %v2564
      %v2762 = vpop.f32.mrb[0].mxu0
      %v2763 = vadd.f32 0.0, %v2762
      %v2764 = vpop.f32.mrb[0].mxu0
      %2765 = vmatprep.mubr.f32.mxu0 0.0
      %2766 = vmatmul.mubr.f32.gmra.mrb[0].mxu0 %v2567
      %v2767 = vpop.f32.mrb[0].mxu0
      %v2768 = vadd.f32 0.0, %v2767
      %v2769 = vpop.f32.mrb[0].mxu0
      %2770 = vmatprep.mubr.f32.mxu0 0.0
      %2771 = vmatmul.mubr.f32.gmra.mrb[0].mxu0 %v2570
      %v2772 = vpop.f32.mrb[0].mxu0
      %v2773 = vadd.f32 0.0, %v2772
      %v2774 = vpop.f32.mrb[0].mxu0
      %2775 = vmatprep.mubr.f32.mxu0 0.0
      %2776 = vmatmul.mubr.f32.gmra.mrb[0].mxu0 %v2573
      %v2777 = vpop.f32.mrb[0].mxu0
      %v2778 = vadd.f32 0.0, %v2777
      %v2779 = vpop.f32.mrb[0].mxu0
      %2780 = vmatprep.mubr.f32.mxu0 0.0
      %2781 = vmatmul.mubr.f32.gmra.mrb[0].mxu0 %v2576
      %v2782 = vpop.f32.mrb[0].mxu0
      %v2783 = vadd.f32 0.0, %v2782
      %v2784 = vpop.f32.mrb[0].mxu0
      %2785 = vmatprep.mubr.f32.mxu0 0.0
      %2786 = vmatmul.mubr.f32.gmra.mrb[0].mxu0 %v2579
      %v2787 = vpop.f32.mrb[0].mxu0
      %v2788 = vadd.f32 0.0, %v2787
      %v2789 = vpop.f32.mrb[0].mxu0
      %2790 = vmatprep.mubr.f32.mxu0 0.0
      %2791 = vmatmul.mubr.f32.gmra.mrb[0].mxu0 %v2582
      %v2792 = vpop.f32.mrb[0].mxu0
      %v2793 = vadd.f32 0.0, %v2792
      %v2794 = vpop.f32.mrb[0].mxu0
      %2795 = vmatprep.mubr.f32.mxu0 0.0
      %2796 = vmatmul.mubr.f32.gmra.mrb[0].mxu0 %v2585
      %v2797 = vpop.f32.mrb[0].mxu0
      %v2798 = vadd.f32 0.0, %v2797
      %v2799 = vpop.f32.mrb[0].mxu0
      %2800 = vmatprep.mubr.f32.mxu0 0.0
      %2801 = vmatmul.mubr.f32.gmra.mrb[0].mxu0 %v2588
      %v2802 = vpop.f32.mrb[0].mxu0
      %v2803 = vadd.f32 0.0, %v2802
      %v2804 = vpop.f32.mrb[0].mxu0
      %2805 = vmatprep.mubr.f32.mxu0 0.0
      %2806 = vmatmul.mubr.f32.gmra.mrb[0].mxu0 %v2591
      %v2807 = vpop.f32.mrb[0].mxu0
      %v2808 = vadd.f32 0.0, %v2807
      %v2809 = vpop.f32.mrb[0].mxu0
      %2810 = vmatprep.mubr.f32.mxu0 0.0
      %2811 = vmatmul.mubr.f32.gmra.mrb[0].mxu0 %v2594
      %v2812 = vpop.f32.mrb[0].mxu0
      %v2813 = vadd.f32 0.0, %v2812
      %v2814 = vpop.f32.mrb[0].mxu0
      %2815 = vmatprep.mubr.f32.mxu0 0.0
      %2816 = vmatmul.mubr.f32.gmra.mrb[0].mxu0 %v2597
      %v2817 = vpop.f32.mrb[0].mxu0
      %v2818 = vadd.f32 0.0, %v2817
      %v2819 = vpop.f32.mrb[0].mxu0
      %2820 = vmatprep.mubr.f32.mxu0 0.0
      %2821 = vmatmul.mubr.f32.gmra.mrb[0].mxu0 %v2600
      %v2822 = vpop.f32.mrb[0].mxu0
      %v2823 = vadd.f32 0.0, %v2822
      %v2824 = vpop.f32.mrb[0].mxu0
      %2825 = vmatprep.mubr.f32.mxu0 0.0
      %2826 = vmatmul.mubr.f32.gmra.mrb[0].mxu0 %v2603
      %v2827 = vpop.f32.mrb[0].mxu0
      %v2828 = vadd.f32 0.0, %v2827
      %v2829 = vpop.f32.mrb[0].mxu0
      %2830 = vmatprep.mubr.f32.mxu0 0.0
      %2831 = vmatmul.mubr.f32.gmra.mrb[0].mxu0 %v2606
      %v2832 = vpop.f32.mrb[0].mxu0
      %v2833 = vadd.f32 0.0, %v2832
      %v2834 = vpop.f32.mrb[0].mxu0
      %2835 = vdwg.mxu0
      %v2836 = vsel %vm1712, %v2678, 0.0
      %v2837 = vsel %vm1712, %v2683, 0.0
      %v2838 = vadd.f32 %v2836, %v2837
      %v2839 = vsel %vm1712, %v2688, 0.0
      %v2840 = vadd.f32 %v2838, %v2839
      %v2841 = vsel %vm1712, %v2693, 0.0
      %v2842 = vadd.f32 %v2840, %v2841
      %v2843 = vsel %vm1712, %v2698, 0.0
      %v2844 = vadd.f32 %v2842, %v2843
      %v2845 = vsel %vm1712, %v2703, 0.0
      %v2846 = vadd.f32 %v2844, %v2845
      %v2847 = vsel %vm1712, %v2708, 0.0
      %v2848 = vadd.f32 %v2846, %v2847
      %v2849 = vsel %vm1712, %v2713, 0.0
      %v2850 = vadd.f32 %v2848, %v2849
      %v2851 = vsel %vm1712, %v2718, 0.0
      %v2852 = vadd.f32 %v2850, %v2851
      %v2853 = vsel %vm1712, %v2723, 0.0
      %v2854 = vadd.f32 %v2852, %v2853
      %v2855 = vsel %vm1712, %v2728, 0.0
      %v2856 = vadd.f32 %v2854, %v2855
      %v2857 = vsel %vm1712, %v2733, 0.0
      %v2858 = vadd.f32 %v2856, %v2857
      %v2859 = vsel %vm1712, %v2738, 0.0
      %v2860 = vadd.f32 %v2858, %v2859
      %v2861 = vsel %vm1712, %v2743, 0.0
      %v2862 = vadd.f32 %v2860, %v2861
      %v2863 = vsel %vm1712, %v2748, 0.0
      %v2864 = vadd.f32 %v2862, %v2863
      %v2865 = vsel %vm1712, %v2753, 0.0
      %v2866 = vadd.f32 %v2864, %v2865
      %v2867 = vsel %vm1712, %v2758, 0.0
      %v2868 = vadd.f32 %v2866, %v2867
      %v2869 = vsel %vm1712, %v2763, 0.0
      %v2870 = vadd.f32 %v2868, %v2869
      %v2871 = vsel %vm1712, %v2768, 0.0
      %v2872 = vadd.f32 %v2870, %v2871
      %v2873 = vsel %vm1712, %v2773, 0.0
      %v2874 = vadd.f32 %v2872, %v2873
      %v2875 = vsel %vm1712, %v2778, 0.0
      %v2876 = vadd.f32 %v2874, %v2875
      %v2877 = vsel %vm1712, %v2783, 0.0
      %v2878 = vadd.f32 %v2876, %v2877
      %v2879 = vsel %vm1712, %v2788, 0.0
      %v2880 = vadd.f32 %v2878, %v2879
      %v2881 = vsel %vm1712, %v2793, 0.0
      %v2882 = vadd.f32 %v2880, %v2881
      %v2883 = vsel %vm1712, %v2798, 0.0
      %v2884 = vadd.f32 %v2882, %v2883
      %v2885 = vsel %vm1712, %v2803, 0.0
      %v2886 = vadd.f32 %v2884, %v2885
      %v2887 = vsel %vm1712, %v2808, 0.0
      %v2888 = vadd.f32 %v2886, %v2887
      %v2889 = vsel %vm1712, %v2813, 0.0
      %v2890 = vadd.f32 %v2888, %v2889
      %v2891 = vsel %vm1712, %v2818, 0.0
      %v2892 = vadd.f32 %v2890, %v2891
      %v2893 = vsel %vm1712, %v2823, 0.0
      %v2894 = vadd.f32 %v2892, %v2893
      %v2895 = vsel %vm1712, %v2828, 0.0
      %v2896 = vadd.f32 %v2894, %v2895
      %v2897 = vsel %vm1712, %v2833, 0.0
      %v2898 = vadd.f32 %v2896, %v2897
      %v2899 = vrot.slane %v2898, 4
      %v2900 = vadd.f32 %v2898, %v2899
      %v2901 = vrot.slane %v2900, 2
      %v2902 = vadd.f32 %v2900, %v2901
      %v2903 = vrot.slane %v2902, 1
      %v2904 = vadd.f32 %v2902, %v2903
      %2905 = vst.msk [vmem:[%s245] sm:$0x1] %vm2343, %v2904
      %v2906 = vmul.f32 %v2678, %v2678
      %v2907 = vmul.f32 %v2683, %v2683
      %v2908 = vmul.f32 %v2688, %v2688
      %v2909 = vmul.f32 %v2693, %v2693
      %v2910 = vmul.f32 %v2698, %v2698
      %v2911 = vmul.f32 %v2703, %v2703
      %v2912 = vmul.f32 %v2708, %v2708
      %v2913 = vmul.f32 %v2713, %v2713
      %v2914 = vmul.f32 %v2718, %v2718
      %v2915 = vmul.f32 %v2723, %v2723
      %v2916 = vmul.f32 %v2728, %v2728
      %v2917 = vmul.f32 %v2733, %v2733
      %v2918 = vmul.f32 %v2738, %v2738
      %v2919 = vmul.f32 %v2743, %v2743
      %v2920 = vmul.f32 %v2748, %v2748
      %v2921 = vmul.f32 %v2753, %v2753
      %v2922 = vmul.f32 %v2758, %v2758
      %v2923 = vmul.f32 %v2763, %v2763
      %v2924 = vmul.f32 %v2768, %v2768
      %v2925 = vmul.f32 %v2773, %v2773
      %v2926 = vmul.f32 %v2778, %v2778
      %v2927 = vmul.f32 %v2783, %v2783
      %v2928 = vmul.f32 %v2788, %v2788
      %v2929 = vmul.f32 %v2793, %v2793
      %v2930 = vmul.f32 %v2798, %v2798
      %v2931 = vmul.f32 %v2803, %v2803
      %v2932 = vmul.f32 %v2808, %v2808
      %v2933 = vmul.f32 %v2813, %v2813
      %v2934 = vmul.f32 %v2818, %v2818
      %v2935 = vmul.f32 %v2823, %v2823
      %v2936 = vmul.f32 %v2828, %v2828
      %v2937 = vmul.f32 %v2833, %v2833
      %v2938 = vsel %vm1712, %v2906, 0.0
      %v2939 = vsel %vm1712, %v2907, 0.0
      %v2940 = vadd.f32 %v2938, %v2939
      %v2941 = vsel %vm1712, %v2908, 0.0
      %v2942 = vadd.f32 %v2940, %v2941
      %v2943 = vsel %vm1712, %v2909, 0.0
      %v2944 = vadd.f32 %v2942, %v2943
      %v2945 = vsel %vm1712, %v2910, 0.0
      %v2946 = vadd.f32 %v2944, %v2945
      %v2947 = vsel %vm1712, %v2911, 0.0
      %v2948 = vadd.f32 %v2946, %v2947
      %v2949 = vsel %vm1712, %v2912, 0.0
      %v2950 = vadd.f32 %v2948, %v2949
      %v2951 = vsel %vm1712, %v2913, 0.0
      %v2952 = vadd.f32 %v2950, %v2951
      %v2953 = vsel %vm1712, %v2914, 0.0
      %v2954 = vadd.f32 %v2952, %v2953
      %v2955 = vsel %vm1712, %v2915, 0.0
      %v2956 = vadd.f32 %v2954, %v2955
      %v2957 = vsel %vm1712, %v2916, 0.0
      %v2958 = vadd.f32 %v2956, %v2957
      %v2959 = vsel %vm1712, %v2917, 0.0
      %v2960 = vadd.f32 %v2958, %v2959
      %v2961 = vsel %vm1712, %v2918, 0.0
      %v2962 = vadd.f32 %v2960, %v2961
      %v2963 = vsel %vm1712, %v2919, 0.0
      %v2964 = vadd.f32 %v2962, %v2963
      %v2965 = vsel %vm1712, %v2920, 0.0
      %v2966 = vadd.f32 %v2964, %v2965
      %v2967 = vsel %vm1712, %v2921, 0.0
      %v2968 = vadd.f32 %v2966, %v2967
      %v2969 = vsel %vm1712, %v2922, 0.0
      %v2970 = vadd.f32 %v2968, %v2969
      %v2971 = vsel %vm1712, %v2923, 0.0
      %v2972 = vadd.f32 %v2970, %v2971
      %v2973 = vsel %vm1712, %v2924, 0.0
      %v2974 = vadd.f32 %v2972, %v2973
      %v2975 = vsel %vm1712, %v2925, 0.0
      %v2976 = vadd.f32 %v2974, %v2975
      %v2977 = vsel %vm1712, %v2926, 0.0
      %v2978 = vadd.f32 %v2976, %v2977
      %v2979 = vsel %vm1712, %v2927, 0.0
      %v2980 = vadd.f32 %v2978, %v2979
      %v2981 = vsel %vm1712, %v2928, 0.0
      %v2982 = vadd.f32 %v2980, %v2981
      %v2983 = vsel %vm1712, %v2929, 0.0
      %v2984 = vadd.f32 %v2982, %v2983
      %v2985 = vsel %vm1712, %v2930, 0.0
      %v2986 = vadd.f32 %v2984, %v2985
      %v2987 = vsel %vm1712, %v2931, 0.0
      %v2988 = vadd.f32 %v2986, %v2987
      %v2989 = vsel %vm1712, %v2932, 0.0
      %v2990 = vadd.f32 %v2988, %v2989
      %v2991 = vsel %vm1712, %v2933, 0.0
      %v2992 = vadd.f32 %v2990, %v2991
      %v2993 = vsel %vm1712, %v2934, 0.0
      %v2994 = vadd.f32 %v2992, %v2993
      %v2995 = vsel %vm1712, %v2935, 0.0
      %v2996 = vadd.f32 %v2994, %v2995
      %v2997 = vsel %vm1712, %v2936, 0.0
      %v2998 = vadd.f32 %v2996, %v2997
      %v2999 = vsel %vm1712, %v2937, 0.0
      %v3000 = vadd.f32 %v2998, %v2999
      %v3001 = vrot.slane %v3000, 4
      %v3002 = vadd.f32 %v3000, %v3001
      %v3003 = vrot.slane %v3002, 2
      %v3004 = vadd.f32 %v3002, %v3003
      %v3005 = vrot.slane %v3004, 1
      %v3006 = vadd.f32 %v3004, %v3005
      %3007 = vst.msk [vmem:[%s245 + $0x1] sm:$0x1] %vm2343, %v3006
      %p3008 = scmp.lt.s32.totalorder %s17, 1
      %s3009 = scalar_select %p3008, %s17, 1
      %s3010 = smul.addr %s3009, 32
      %s3011 = smul.addr %s3010, 8
      %s3012 = scalar_lea.vmem %s3, %s3011
      %p3013 = scmp.lt.s32.totalorder %s17, 1
      %s3014 = scalar_select %p3013, %s17, 1
      %s3015 = smul.addr %s3014, 2
      %s3016 = scalar_lea.vmem %s4, %s3015
      %p3017 = scmp.lt.s32.totalorder %s17, 1
      %s3018 = scalar_select %p3017, %s17, 1
      %s3019 = smul.addr %s3018, 2
      %s3020 = scalar_lea.vmem %s5, %s3019
      // Predicated region
      $region33: #{residual_block_forward.3} parent=31 // pred_check
        %p3021 = pneg %p103
      $region34: #{residual_block_forward.3} parent=31 // pred_check_branch
        %3023 = sbr.rel (%p3021) target = $region36
      $region35: #{residual_block_forward.3} parent=31 // pred_region
        _
      $region36: #{residual_block_forward.3} parent=31 // pred_fallthru
        _
      // Predicated region
      $region37: #{residual_block_forward.3} parent=31 // pred_check
        %p3024 = pneg %p129
      $region38: #{residual_block_forward.3} parent=31 // pred_check_branch
        %3026 = sbr.rel (%p3024) target = $region40
      $region39: #{residual_block_forward.3} parent=31 // pred_region
        _
      $region40: #{residual_block_forward.3} parent=31 // pred_fallthru
        _
      // Predicated region
      $region41: #{residual_block_forward.3} parent=31 // pred_check
        %p3027 = pneg %p155
      $region42: #{residual_block_forward.3} parent=31 // pred_check_branch
        %3029 = sbr.rel (%p3027) target = $region44
      $region43: #{residual_block_forward.3} parent=31 // pred_region
        _
      $region44: #{residual_block_forward.3} parent=31 // pred_fallthru
        _
    $region32: #{residual_block_forward.3} parent=5 // pred_fallthru
      _
    %p3030 = scmp.le.s32.totalorder 2, %s12
    // Predicated region
    $region45: #{residual_block_forward.3} parent=5 // pred_check
      %p3031 = pneg %p3030
    $region46: #{residual_block_forward.3} parent=5 // pred_check_branch
      %3033 = sbr.rel (%p3031) target = $region48
    $region47: #{residual_block_forward.3} parent=5 // pred_region
      %s3034 = ssub.s32 %s12, 2
      // Predicated region
      $region49: #{residual_block_forward.3} parent=47 // pred_check
        %p3035 = pneg %p109
      $region50: #{residual_block_forward.3} parent=47 // pred_check_branch
        %3037 = sbr.rel (%p3035) target = $region52
      $region51: #{residual_block_forward.3} parent=47 // pred_region
        %p3038 = scmp.lt.s32.totalorder %s18, 1
        %s3039 = scalar_select %p3038, %s18, 1
        %s3040 = smul.addr %s3039, 32
        %s3041 = smul.addr %s3040, 8
        %s3042 = scalar_lea.vmem %s3, %s3041
      $region52: #{residual_block_forward.3} parent=47 // pred_fallthru
        _
      // Predicated region
      $region53: #{residual_block_forward.3} parent=47 // pred_check
        %p3043 = pneg %p135
      $region54: #{residual_block_forward.3} parent=47 // pred_check_branch
        %3045 = sbr.rel (%p3043) target = $region56
      $region55: #{residual_block_forward.3} parent=47 // pred_region
        %p3046 = scmp.lt.s32.totalorder %s18, 1
        %s3047 = scalar_select %p3046, %s18, 1
        %s3048 = smul.addr %s3047, 2
        %s3049 = scalar_lea.vmem %s4, %s3048
      $region56: #{residual_block_forward.3} parent=47 // pred_fallthru
        _
      // Predicated region
      $region57: #{residual_block_forward.3} parent=47 // pred_check
        %p3050 = pneg %p161
      $region58: #{residual_block_forward.3} parent=47 // pred_check_branch
        %3052 = sbr.rel (%p3050) target = $region60
      $region59: #{residual_block_forward.3} parent=47 // pred_region
        %p3053 = scmp.lt.s32.totalorder %s18, 1
        %s3054 = scalar_select %p3053, %s18, 1
        %s3055 = smul.addr %s3054, 2
        %s3056 = scalar_lea.vmem %s5, %s3055
      $region60: #{residual_block_forward.3} parent=47 // pred_fallthru
        _
    $region48: #{residual_block_forward.3} parent=5 // pred_fallthru
      _
  $region6: #{residual_block_forward.3} parent=0 // loop_footer
    %s16 = sadd.s32 1, %s12
  $region7: #{residual_block_forward.3} parent=0 // loop_footer_branch
    %11 = sbr.rel target = $region3
  $region8: #{residual_block_forward.3} parent=0 // loop_exit
    _

// kernel: residual_block_forward.4
$region0: #{residual_block_forward.4}
  #allocation0 [shape = 'u32[]', space=smem, size = 0x4, offset = 0x4, fixed_abs, tag = 'smem constant byte address 0x4 - core index']
  #allocation1 [shape = 'u32[144,128]{1,0:T(1,128)}', space=vmem, size = 0x12000, scoped, tag = 'internal scratch']
  #allocation2 [shape = 'f32[18,18,8]{2,1,0:T(8,128)}', space=vmem, size = 0x36000, scoped, tag = 'scratch operand']
  %s0 = inlined_call_operand.vmem [shape: f32[2,16,16,8], index: 0, kind: input, shape index: {}]
  %s1 = inlined_call_operand.vmem [shape: f32[72,8], index: 1, kind: input, shape index: {}]
  %s2 = inlined_call_operand.vmem [shape: f32[1,8], index: 2, kind: input, shape index: {}]
  %s3 = inlined_call_operand.vmem [shape: f32[1,8], index: 3, kind: input, shape index: {}]
  %s4 = inlined_call_operand.vmem [shape: f32[2,16,16,8], index: 4, kind: output, shape index: {0}]
  %s5 = inlined_call_operand.vmem [shape: f32[2,2,8], index: 5, kind: output, shape index: {1}]
  %6 = xla_tuple %s4, %s5
  %s7 = sld [smem:[#allocation0]]
  $region57: #{residual_block_forward.4} parent=0
    _
  %s9 = ssub.s32 1, %s7
  %s10 = scalar_select 0, %s9, %s7
  loop: start=0, step=1, limit=4
  $region2: #{residual_block_forward.4} parent=0 // loop_pre_header
    _
  $region3: #{residual_block_forward.4} parent=0 // loop_header
    %s12 = sphi 0, %s16
    %p13 = scmp.ge.s32.totalorder %s12, 4
    %s22 = sphi 0, %s24
    %s25 = sphi 0, %s22
    %s26 = sphi 0, %s25
    %s42 = sphi 0, %s26
    %s46 = sphi 0, %s46
    %s48 = sphi 0, %s46
    %s49 = sphi 0, %s48
    %s63 = sphi 0, %s49
    %s67 = sphi 0, %s67
    %s69 = sphi 0, %s67
    %s70 = sphi 0, %s69
    %s84 = sphi 0, %s70
    %s88 = sphi 0, %s88
    %s90 = sphi 0, %s88
    %s91 = sphi 0, %s90
    %s105 = sphi 0, %s91
    %s111 = sphi 0, %s113
    %s114 = sphi 0, %s111
    %s115 = sphi 0, %s114
    %s131 = sphi 0, %s115
    %s137 = sphi 0, %s139
    %s140 = sphi 0, %s137
    %s141 = sphi 0, %s140
    %s157 = sphi 0, %s141
  $region4: #{residual_block_forward.4} parent=0 // loop_header_branch
    %15 = sbr.rel (%p13) target = $region8
  $region5: #{residual_block_forward.4} parent=0 // loop_body
    %s17 = ssub.s32 %s12, 1
    %s18 = ssub.s32 %s12, 2
    %s19 = sadd.s32 %s12, 1
    %s20 = ssub.s32 %s12, %s19
    %p21 = scmp.eq.s32.totalorder %s20, 0
    %s23 = sadd.s32 %s22, 1
    %s24 = scalar_select %p21, %s22, %s23
    %p27 = pneg %p21
    %p28 = scmp.eq.s32.totalorder %s12, 1
    %p29 = por %p27, %p28
    %p30 = scmp.ne.s32.totalorder %s22, %s25
    %p31 = scmp.eq.s32.totalorder %s12, 0
    %p32 = por %p30, %p31
    %p33 = scmp.ne.s32.totalorder %s22, %s25
    %p34 = scmp.eq.s32.totalorder %s17, 1
    %p35 = por %p33, %p34
    %p36 = scmp.ne.s32.totalorder %s25, %s26
    %p37 = scmp.eq.s32.totalorder %s17, 0
    %p38 = por %p36, %p37
    %p39 = scmp.ne.s32.totalorder %s25, %s26
    %p40 = scmp.eq.s32.totalorder %s18, 1
    %p41 = por %p39, %p40
    %p43 = scmp.ne.s32.totalorder %s26, %s42
    %p44 = scmp.eq.s32.totalorder %s18, 0
    %p45 = por %p43, %p44
    %s47 = sadd.s32 %s46, 1
    %p50 = scmp.eq.s32.totalorder %s12, 1
    %p51 = scmp.ne.s32.totalorder %s46, %s48
    %p52 = scmp.eq.s32.totalorder %s12, 0
    %p53 = por %p51, %p52
    %p54 = scmp.ne.s32.totalorder %s46, %s48
    %p55 = scmp.eq.s32.totalorder %s17, 1
    %p56 = por %p54, %p55
    %p57 = scmp.ne.s32.totalorder %s48, %s49
    %p58 = scmp.eq.s32.totalorder %s17, 0
    %p59 = por %p57, %p58
    %p60 = scmp.ne.s32.totalorder %s48, %s49
    %p61 = scmp.eq.s32.totalorder %s18, 1
    %p62 = por %p60, %p61
    %p64 = scmp.ne.s32.totalorder %s49, %s63
    %p65 = scmp.eq.s32.totalorder %s18, 0
    %p66 = por %p64, %p65
    %s68 = sadd.s32 %s67, 1
    %p71 = scmp.eq.s32.totalorder %s12, 1
    %p72 = scmp.ne.s32.totalorder %s67, %s69
    %p73 = scmp.eq.s32.totalorder %s12, 0
    %p74 = por %p72, %p73
    %p75 = scmp.ne.s32.totalorder %s67, %s69
    %p76 = scmp.eq.s32.totalorder %s17, 1
    %p77 = por %p75, %p76
    %p78 = scmp.ne.s32.totalorder %s69, %s70
    %p79 = scmp.eq.s32.totalorder %s17, 0
    %p80 = por %p78, %p79
    %p81 = scmp.ne.s32.totalorder %s69, %s70
    %p82 = scmp.eq.s32.totalorder %s18, 1
    %p83 = por %p81, %p82
    %p85 = scmp.ne.s32.totalorder %s70, %s84
    %p86 = scmp.eq.s32.totalorder %s18, 0
    %p87 = por %p85, %p86
    %s89 = sadd.s32 %s88, 1
    %p92 = scmp.eq.s32.totalorder %s12, 1
    %p93 = scmp.ne.s32.totalorder %s88, %s90
    %p94 = scmp.eq.s32.totalorder %s12, 0
    %p95 = por %p93, %p94
    %p96 = scmp.ne.s32.totalorder %s88, %s90
    %p97 = scmp.eq.s32.totalorder %s17, 1
    %p98 = por %p96, %p97
    %p99 = scmp.ne.s32.totalorder %s90, %s91
    %p100 = scmp.eq.s32.totalorder %s17, 0
    %p101 = por %p99, %p100
    %p102 = scmp.ne.s32.totalorder %s90, %s91
    %p103 = scmp.eq.s32.totalorder %s18, 1
    %p104 = por %p102, %p103
    %p106 = scmp.ne.s32.totalorder %s91, %s105
    %p107 = scmp.eq.s32.totalorder %s18, 0
    %p108 = por %p106, %p107
    %s109 = ssub.s32 %s12, %s19
    %p110 = scmp.eq.s32.totalorder %s109, 0
    %s112 = sadd.s32 %s111, 1
    %s113 = scalar_select %p110, %s111, %s112
    %p116 = pneg %p110
    %p117 = scmp.eq.s32.totalorder %s12, 1
    %p118 = por %p116, %p117
    %p119 = scmp.ne.s32.totalorder %s111, %s114
    %p120 = scmp.eq.s32.totalorder %s12, 0
    %p121 = por %p119, %p120
    %p122 = scmp.ne.s32.totalorder %s111, %s114
    %p123 = scmp.eq.s32.totalorder %s17, 1
    %p124 = por %p122, %p123
    %p125 = scmp.ne.s32.totalorder %s114, %s115
    %p126 = scmp.eq.s32.totalorder %s17, 0
    %p127 = por %p125, %p126
    %p128 = scmp.ne.s32.totalorder %s114, %s115
    %p129 = scmp.eq.s32.totalorder %s18, 1
    %p130 = por %p128, %p129
    %p132 = scmp.ne.s32.totalorder %s115, %s131
    %p133 = scmp.eq.s32.totalorder %s18, 0
    %p134 = por %p132, %p133
    %s135 = ssub.s32 %s12, %s19
    %p136 = scmp.eq.s32.totalorder %s135, 0
    %s138 = sadd.s32 %s137, 1
    %s139 = scalar_select %p136, %s137, %s138
    %p142 = pneg %p136
    %p143 = scmp.eq.s32.totalorder %s12, 1
    %p144 = por %p142, %p143
    %p145 = scmp.ne.s32.totalorder %s137, %s140
    %p146 = scmp.eq.s32.totalorder %s12, 0
    %p147 = por %p145, %p146
    %p148 = scmp.ne.s32.totalorder %s137, %s140
    %p149 = scmp.eq.s32.totalorder %s17, 1
    %p150 = por %p148, %p149
    %p151 = scmp.ne.s32.totalorder %s140, %s141
    %p152 = scmp.eq.s32.totalorder %s17, 0
    %p153 = por %p151, %p152
    %p154 = scmp.ne.s32.totalorder %s140, %s141
    %p155 = scmp.eq.s32.totalorder %s18, 1
    %p156 = por %p154, %p155
    %p158 = scmp.ne.s32.totalorder %s141, %s157
    %p159 = scmp.eq.s32.totalorder %s18, 0
    %p160 = por %p158, %p159
    %p161 = scmp.le.s32.totalorder 1, %s12
    %p162 = scmp.lt.s32.totalorder %s12, 3
    %p163 = pnand %p161, %p162
    %p164 = pneg %p163
    // Predicated region
    $region9: #{residual_block_forward.4} parent=5 // pred_check
      _
    $region10: #{residual_block_forward.4} parent=5 // pred_check_branch
      %166 = sbr.rel (%p163) target = $region12
    $region11: #{residual_block_forward.4} parent=5 // pred_region
      %s167 = ssub.s32 %s12, 1
      // Predicated region
      $region13: #{residual_block_forward.4} parent=11 // pred_check
        %p168 = pneg %p59
      $region14: #{residual_block_forward.4} parent=11 // pred_check_branch
        %170 = sbr.rel (%p168) target = $region16
      $region15: #{residual_block_forward.4} parent=11 // pred_region
        _
      $region16: #{residual_block_forward.4} parent=11 // pred_fallthru
        _
      // Predicated region
      $region17: #{residual_block_forward.4} parent=11 // pred_check
        %p171 = pneg %p80
      $region18: #{residual_block_forward.4} parent=11 // pred_check_branch
        %173 = sbr.rel (%p171) target = $region20
      $region19: #{residual_block_forward.4} parent=11 // pred_region
        _
      $region20: #{residual_block_forward.4} parent=11 // pred_fallthru
        _
      // Predicated region
      $region21: #{residual_block_forward.4} parent=11 // pred_check
        %p174 = pneg %p101
      $region22: #{residual_block_forward.4} parent=11 // pred_check_branch
        %176 = sbr.rel (%p174) target = $region24
      $region23: #{residual_block_forward.4} parent=11 // pred_region
        _
      $region24: #{residual_block_forward.4} parent=11 // pred_fallthru
        _
    $region12: #{residual_block_forward.4} parent=5 // pred_fallthru
      _
    %p177 = scmp.lt.s32.totalorder %s12, 2
    // Predicated region
    $region25: #{residual_block_forward.4} parent=5 // pred_check
      %p178 = pneg %p177
    $region26: #{residual_block_forward.4} parent=5 // pred_check_branch
      %180 = sbr.rel (%p178) target = $region28
    $region27: #{residual_block_forward.4} parent=5 // pred_region
      // Predicated region
      $region29: #{residual_block_forward.4} parent=27 // pred_check
        %p181 = pneg %p32
      $region30: #{residual_block_forward.4} parent=27 // pred_check_branch
        %183 = sbr.rel (%p181) target = $region32
      $region31: #{residual_block_forward.4} parent=27 // pred_region
        %p184 = scmp.lt.s32.totalorder %s12, 1
        %s185 = scalar_select %p184, %s12, 1
        %s186 = smul.addr %s185, 32
        %s187 = smul.addr %s186, 8
        %s188 = scalar_lea.vmem %s0, %s187
      $region32: #{residual_block_forward.4} parent=27 // pred_fallthru
        _
    $region28: #{residual_block_forward.4} parent=5 // pred_fallthru
      _
    %p189 = scmp.le.s32.totalorder 1, %s12
    %p190 = scmp.lt.s32.totalorder %s12, 3
    %p191 = pnand %p189, %p190
    %p192 = pneg %p191
    // Predicated region
    $region33: #{residual_block_forward.4} parent=5 // pred_check
      _
    $region34: #{residual_block_forward.4} parent=5 // pred_check_branch
      %194 = sbr.rel (%p191) target = $region36
    $region35: #{residual_block_forward.4} parent=5 // pred_region
      %s195 = ssub.s32 %s12, 1
      %p196 = scmp.lt.s32.totalorder %s17, 1
      %s197 = scalar_select %p196, %s17, 1
      %s198 = smul.addr %s197, 32
      %s199 = smul.addr %s198, 8
      %s200 = scalar_lea.vmem %s0, %s199
      %p201 = pneg %p38
      %p202 = pneg %p35
      %p203 = pneg %p59
      %p204 = pneg %p56
      %p205 = pneg %p80
      %p206 = pneg %p77
      %p207 = pneg %p101
      %p208 = pneg %p98
      %p209 = pneg %p127
      %p210 = pneg %p124
      %p211 = scmp.lt.s32.totalorder %s17, 1
      %s212 = scalar_select %p211, %s17, 1
      %s213 = smul.addr %s212, 32
      %s214 = smul.addr %s213, 8
      %s215 = scalar_lea.vmem %s4, %s214
      %p216 = pneg %p153
      %p217 = pneg %p150
      %p218 = scmp.lt.s32.totalorder %s17, 1
      %s219 = scalar_select %p218, %s17, 1
      %s220 = smul.addr %s219, 2
      %s221 = scalar_lea.vmem %s5, %s220
      %p222 = scmp.lt.s32.totalorder %s17, 1
      %s223 = scalar_select %p222, %s17, 1
      %s224 = smul.addr %s223, 32
      %s225 = smul.addr %s224, 8
      %s226 = scalar_lea.vmem %s0, %s225
      %p227 = scmp.lt.s32.totalorder %s17, 1
      %s228 = scalar_select %p227, %s17, 1
      %s229 = smul.addr %s228, 32
      %s230 = smul.addr %s229, 8
      %s231 = scalar_lea.vmem %s4, %s230
      %p232 = scmp.lt.s32.totalorder %s17, 1
      %s233 = scalar_select %p232, %s17, 1
      %s234 = smul.addr %s233, 2
      %s235 = scalar_lea.vmem %s5, %s234
      %v236 = vld [vmem:[%s226] sm:$0xff]
      %v237 = vld [vmem:[%s226 + $0x8] sm:$0xff]
      %v238 = vld [vmem:[%s226 + $0x10] sm:$0xff]
      %v239 = vld [vmem:[%s226 + $0x18] sm:$0xff]
      %v240 = vld [vmem:[%s226 + $0x20] sm:$0xff]
      %v241 = vld [vmem:[%s226 + $0x28] sm:$0xff]
      %v242 = vld [vmem:[%s226 + $0x30] sm:$0xff]
      %v243 = vld [vmem:[%s226 + $0x38] sm:$0xff]
      %v244 = vld [vmem:[%s226 + $0x40] sm:$0xff]
      %v245 = vld [vmem:[%s226 + $0x48] sm:$0xff]
      %v246 = vld [vmem:[%s226 + $0x50] sm:$0xff]
      %v247 = vld [vmem:[%s226 + $0x58] sm:$0xff]
      %v248 = vld [vmem:[%s226 + $0x60] sm:$0xff]
      %v249 = vld [vmem:[%s226 + $0x68] sm:$0xff]
      %v250 = vld [vmem:[%s226 + $0x70] sm:$0xff]
      %v251 = vld [vmem:[%s226 + $0x78] sm:$0xff]
      %v252 = vld [vmem:[%s226 + $0x80] sm:$0xff]
      %v253 = vld [vmem:[%s226 + $0x88] sm:$0xff]
      %v254 = vld [vmem:[%s226 + $0x90] sm:$0xff]
      %v255 = vld [vmem:[%s226 + $0x98] sm:$0xff]
      %v256 = vld [vmem:[%s226 + $0xa0] sm:$0xff]
      %v257 = vld [vmem:[%s226 + $0xa8] sm:$0xff]
      %v258 = vld [vmem:[%s226 + $0xb0] sm:$0xff]
      %v259 = vld [vmem:[%s226 + $0xb8] sm:$0xff]
      %v260 = vld [vmem:[%s226 + $0xc0] sm:$0xff]
      %v261 = vld [vmem:[%s226 + $0xc8] sm:$0xff]
      %v262 = vld [vmem:[%s226 + $0xd0] sm:$0xff]
      %v263 = vld [vmem:[%s226 + $0xd8] sm:$0xff]
      %v264 = vld [vmem:[%s226 + $0xe0] sm:$0xff]
      %v265 = vld [vmem:[%s226 + $0xe8] sm:$0xff]
      %v266 = vld [vmem:[%s226 + $0xf0] sm:$0xff]
      %v267 = vld [vmem:[%s226 + $0xf8] sm:$0xff]
      %v268 = vld [vmem:[%s2] sm:$0x1]
      %v270 = vlaneseq
      %v271 = vshrl.u32 %v270, 7
      %v272 = vsub.s32 0, %v271
      %v273 = vrot.slane %v268, %v272
      %v275 = vmul.f32 %v236, %v273
      %v276 = vmul.f32 %v237, %v273
      %v277 = vmul.f32 %v238, %v273
      %v278 = vmul.f32 %v239, %v273
      %v279 = vmul.f32 %v240, %v273
      %v280 = vmul.f32 %v241, %v273
      %v281 = vmul.f32 %v242, %v273
      %v282 = vmul.f32 %v243, %v273
      %v283 = vmul.f32 %v244, %v273
      %v284 = vmul.f32 %v245, %v273
      %v285 = vmul.f32 %v246, %v273
      %v286 = vmul.f32 %v247, %v273
      %v287 = vmul.f32 %v248, %v273
      %v288 = vmul.f32 %v249, %v273
      %v289 = vmul.f32 %v250, %v273
      %v290 = vmul.f32 %v251, %v273
      %v291 = vmul.f32 %v252, %v273
      %v292 = vmul.f32 %v253, %v273
      %v293 = vmul.f32 %v254, %v273
      %v294 = vmul.f32 %v255, %v273
      %v295 = vmul.f32 %v256, %v273
      %v296 = vmul.f32 %v257, %v273
      %v297 = vmul.f32 %v258, %v273
      %v298 = vmul.f32 %v259, %v273
      %v299 = vmul.f32 %v260, %v273
      %v300 = vmul.f32 %v261, %v273
      %v301 = vmul.f32 %v262, %v273
      %v302 = vmul.f32 %v263, %v273
      %v303 = vmul.f32 %v264, %v273
      %v304 = vmul.f32 %v265, %v273
      %v305 = vmul.f32 %v266, %v273
      %v306 = vmul.f32 %v267, %v273
      %v307 = vld [vmem:[%s3] sm:$0x1]
      %v309 = vlaneseq
      %v310 = vshrl.u32 %v309, 7
      %v311 = vsub.s32 0, %v310
      %v312 = vrot.slane %v307, %v311
      %v314 = vadd.f32 %v275, %v312
      %v315 = vadd.f32 %v276, %v312
      %v316 = vadd.f32 %v277, %v312
      %v317 = vadd.f32 %v278, %v312
      %v318 = vadd.f32 %v279, %v312
      %v319 = vadd.f32 %v280, %v312
      %v320 = vadd.f32 %v281, %v312
      %v321 = vadd.f32 %v282, %v312
      %v322 = vadd.f32 %v283, %v312
      %v323 = vadd.f32 %v284, %v312
      %v324 = vadd.f32 %v285, %v312
      %v325 = vadd.f32 %v286, %v312
      %v326 = vadd.f32 %v287, %v312
      %v327 = vadd.f32 %v288, %v312
      %v328 = vadd.f32 %v289, %v312
      %v329 = vadd.f32 %v290, %v312
      %v330 = vadd.f32 %v291, %v312
      %v331 = vadd.f32 %v292, %v312
      %v332 = vadd.f32 %v293, %v312
      %v333 = vadd.f32 %v294, %v312
      %v334 = vadd.f32 %v295, %v312
      %v335 = vadd.f32 %v296, %v312
      %v336 = vadd.f32 %v297, %v312
      %v337 = vadd.f32 %v298, %v312
      %v338 = vadd.f32 %v299, %v312
      %v339 = vadd.f32 %v300, %v312
      %v340 = vadd.f32 %v301, %v312
      %v341 = vadd.f32 %v302, %v312
      %v342 = vadd.f32 %v303, %v312
      %v343 = vadd.f32 %v304, %v312
      %v344 = vadd.f32 %v305, %v312
      %v345 = vadd.f32 %v306, %v312
      %v346 = vmax.f32 %v314, 0.0
      %v347 = vmax.f32 %v315, 0.0
      %v348 = vmax.f32 %v316, 0.0
      %v349 = vmax.f32 %v317, 0.0
      %v350 = vmax.f32 %v318, 0.0
      %v351 = vmax.f32 %v319, 0.0
      %v352 = vmax.f32 %v320, 0.0
      %v353 = vmax.f32 %v321, 0.0
      %v354 = vmax.f32 %v322, 0.0
      %v355 = vmax.f32 %v323, 0.0
      %v356 = vmax.f32 %v324, 0.0
      %v357 = vmax.f32 %v325, 0.0
      %v358 = vmax.f32 %v326, 0.0
      %v359 = vmax.f32 %v327, 0.0
      %v360 = vmax.f32 %v328, 0.0
      %v361 = vmax.f32 %v329, 0.0
      %v362 = vmax.f32 %v330, 0.0
      %v363 = vmax.f32 %v331, 0.0
      %v364 = vmax.f32 %v332, 0.0
      %v365 = vmax.f32 %v333, 0.0
      %v366 = vmax.f32 %v334, 0.0
      %v367 = vmax.f32 %v335, 0.0
      %v368 = vmax.f32 %v336, 0.0
      %v369 = vmax.f32 %v337, 0.0
      %v370 = vmax.f32 %v338, 0.0
      %v371 = vmax.f32 %v339, 0.0
      %v372 = vmax.f32 %v340, 0.0
      %v373 = vmax.f32 %v341, 0.0
      %v374 = vmax.f32 %v342, 0.0
      %v375 = vmax.f32 %v343, 0.0
      %v376 = vmax.f32 %v344, 0.0
      %v377 = vmax.f32 %v345, 0.0
      %vm378 = vcmask 64512
      %379 = vst.msk [vmem:[#allocation2] sm:$0xff] %vm378, 0.0
      %380 = vst.msk [vmem:[#allocation2 + $0x8] sm:$0xff] %vm378, 0.0
      %vm381 = vcmask 58368
      %382 = vst.msk [vmem:[#allocation2 + $0x10] sm:$0x3] %vm381, 0.0
      %383 = vst.msk [vmem:[#allocation2 + $0x18] sm:$0xff] %vm378, 0.0
      %384 = vst.msk [vmem:[#allocation2 + $0x20] sm:$0xff] %vm378, 0.0
      %385 = vst.msk [vmem:[#allocation2 + $0x28] sm:$0x3] %vm381, 0.0
      %386 = vst.msk [vmem:[#allocation2 + $0x30] sm:$0xff] %vm378, 0.0
      %387 = vst.msk [vmem:[#allocation2 + $0x38] sm:$0xff] %vm378, 0.0
      %388 = vst.msk [vmem:[#allocation2 + $0x40] sm:$0x3] %vm381, 0.0
      %389 = vst.msk [vmem:[#allocation2 + $0x48] sm:$0xff] %vm378, 0.0
      %390 = vst.msk [vmem:[#allocation2 + $0x50] sm:$0xff] %vm378, 0.0
      %391 = vst.msk [vmem:[#allocation2 + $0x58] sm:$0x3] %vm381, 0.0
      %392 = vst.msk [vmem:[#allocation2 + $0x60] sm:$0xff] %vm378, 0.0
      %393 = vst.msk [vmem:[#allocation2 + $0x68] sm:$0xff] %vm378, 0.0
      %394 = vst.msk [vmem:[#allocation2 + $0x70] sm:$0x3] %vm381, 0.0
      %395 = vst.msk [vmem:[#allocation2 + $0x78] sm:$0xff] %vm378, 0.0
      %396 = vst.msk [vmem:[#allocation2 + $0x80] sm:$0xff] %vm378, 0.0
      %397 = vst.msk [vmem:[#allocation2 + $0x88] sm:$0x3] %vm381, 0.0
      %398 = vst.msk [vmem:[#allocation2 + $0x90] sm:$0xff] %vm378, 0.0
      %399 = vst.msk [vmem:[#allocation2 + $0x98] sm:$0xff] %vm378, 0.0
      %400 = vst.msk [vmem:[#allocation2 + $0xa0] sm:$0x3] %vm381, 0.0
      %401 = vst.msk [vmem:[#allocation2 + $0xa8] sm:$0xff] %vm378, 0.0
      %402 = vst.msk [vmem:[#allocation2 + $0xb0] sm:$0xff] %vm378, 0.0
      %403 = vst.msk [vmem:[#allocation2 + $0xb8] sm:$0x3] %vm381, 0.0
      %404 = vst.msk [vmem:[#allocation2 + $0xc0] sm:$0xff] %vm378, 0.0
      %405 = vst.msk [vmem:[#allocation2 + $0xc8] sm:$0xff] %vm378, 0.0
      %406 = vst.msk [vmem:[#allocation2 + $0xd0] sm:$0x3] %vm381, 0.0
      %407 = vst.msk [vmem:[#allocation2 + $0xd8] sm:$0xff] %vm378, 0.0
      %408 = vst.msk [vmem:[#allocation2 + $0xe0] sm:$0xff] %vm378, 0.0
      %409 = vst.msk [vmem:[#allocation2 + $0xe8] sm:$0x3] %vm381, 0.0
      %410 = vst.msk [vmem:[#allocation2 + $0xf0] sm:$0xff] %vm378, 0.0
      %411 = vst.msk [vmem:[#allocation2 + $0xf8] sm:$0xff] %vm378, 0.0
      %412 = vst.msk [vmem:[#allocation2 + $0x100] sm:$0x3] %vm381, 0.0
      %413 = vst.msk [vmem:[#allocation2 + $0x108] sm:$0xff] %vm378, 0.0
      %414 = vst.msk [vmem:[#allocation2 + $0x110] sm:$0xff] %vm378, 0.0
      %415 = vst.msk [vmem:[#allocation2 + $0x118] sm:$0x3] %vm381, 0.0
      %416 = vst.msk [vmem:[#allocation2 + $0x120] sm:$0xff] %vm378, 0.0
      %417 = vst.msk [vmem:[#allocation2 + $0x128] sm:$0xff] %vm378, 0.0
      %418 = vst.msk [vmem:[#allocation2 + $0x130] sm:$0x3] %vm381, 0.0
      %419 = vst.msk [vmem:[#allocation2 + $0x138] sm:$0xff] %vm378, 0.0
      %420 = vst.msk [vmem:[#allocation2 + $0x140] sm:$0xff] %vm378, 0.0
      %421 = vst.msk [vmem:[#allocation2 + $0x148] sm:$0x3] %vm381, 0.0
      %422 = vst.msk [vmem:[#allocation2 + $0x150] sm:$0xff] %vm378, 0.0
      %423 = vst.msk [vmem:[#allocation2 + $0x158] sm:$0xff] %vm378, 0.0
      %424 = vst.msk [vmem:[#allocation2 + $0x160] sm:$0x3] %vm381, 0.0
      %425 = vst.msk [vmem:[#allocation2 + $0x168] sm:$0xff] %vm378, 0.0
      %426 = vst.msk [vmem:[#allocation2 + $0x170] sm:$0xff] %vm378, 0.0
      %427 = vst.msk [vmem:[#allocation2 + $0x178] sm:$0x3] %vm381, 0.0
      %428 = vst.msk [vmem:[#allocation2 + $0x180] sm:$0xff] %vm378, 0.0
      %429 = vst.msk [vmem:[#allocation2 + $0x188] sm:$0xff] %vm378, 0.0
      %430 = vst.msk [vmem:[#allocation2 + $0x190] sm:$0x3] %vm381, 0.0
      %431 = vst.msk [vmem:[#allocation2 + $0x198] sm:$0xff] %vm378, 0.0
      %432 = vst.msk [vmem:[#allocation2 + $0x1a0] sm:$0xff] %vm378, 0.0
      %433 = vst.msk [vmem:[#allocation2 + $0x1a8] sm:$0x3] %vm381, 0.0
      %s434 = scalar_lea.vmem [#allocation2], 24
      %435 = vst.msk [vmem:[%s434 + $0x1] sm:$0xff] %vm378, %v346
      %436 = vst.msk [vmem:[%s434 + $0x9] sm:$0xff] %vm378, %v347
      %437 = vst.msk [vmem:[%s434 + $0x19] sm:$0xff] %vm378, %v348
      %438 = vst.msk [vmem:[%s434 + $0x21] sm:$0xff] %vm378, %v349
      %439 = vst.msk [vmem:[%s434 + $0x31] sm:$0xff] %vm378, %v350
      %440 = vst.msk [vmem:[%s434 + $0x39] sm:$0xff] %vm378, %v351
      %441 = vst.msk [vmem:[%s434 + $0x49] sm:$0xff] %vm378, %v352
      %442 = vst.msk [vmem:[%s434 + $0x51] sm:$0xff] %vm378, %v353
      %443 = vst.msk [vmem:[%s434 + $0x61] sm:$0xff] %vm378, %v354
      %444 = vst.msk [vmem:[%s434 + $0x69] sm:$0xff] %vm378, %v355
      %445 = vst.msk [vmem:[%s434 + $0x79] sm:$0xff] %vm378, %v356
      %446 = vst.msk [vmem:[%s434 + $0x81] sm:$0xff] %vm378, %v357
      %447 = vst.msk [vmem:[%s434 + $0x91] sm:$0xff] %vm378, %v358
      %448 = vst.msk [vmem:[%s434 + $0x99] sm:$0xff] %vm378, %v359
      %449 = vst.msk [vmem:[%s434 + $0xa9] sm:$0xff] %vm378, %v360
      %450 = vst.msk [vmem:[%s434 + $0xb1] sm:$0xff] %vm378, %v361
      %451 = vst.msk [vmem:[%s434 + $0xc1] sm:$0xff] %vm378, %v362
      %452 = vst.msk [vmem:[%s434 + $0xc9] sm:$0xff] %vm378, %v363
      %453 = vst.msk [vmem:[%s434 + $0xd9] sm:$0xff] %vm378, %v364
      %454 = vst.msk [vmem:[%s434 + $0xe1] sm:$0xff] %vm378, %v365
      %455 = vst.msk [vmem:[%s434 + $0xf1] sm:$0xff] %vm378, %v366
      %456 = vst.msk [vmem:[%s434 + $0xf9] sm:$0xff] %vm378, %v367
      %457 = vst.msk [vmem:[%s434 + $0x109] sm:$0xff] %vm378, %v368
      %458 = vst.msk [vmem:[%s434 + $0x111] sm:$0xff] %vm378, %v369
      %459 = vst.msk [vmem:[%s434 + $0x121] sm:$0xff] %vm378, %v370
      %460 = vst.msk [vmem:[%s434 + $0x129] sm:$0xff] %vm378, %v371
      %461 = vst.msk [vmem:[%s434 + $0x139] sm:$0xff] %vm378, %v372
      %462 = vst.msk [vmem:[%s434 + $0x141] sm:$0xff] %vm378, %v373
      %463 = vst.msk [vmem:[%s434 + $0x151] sm:$0xff] %vm378, %v374
      %464 = vst.msk [vmem:[%s434 + $0x159] sm:$0xff] %vm378, %v375
      %465 = vst.msk [vmem:[%s434 + $0x169] sm:$0xff] %vm378, %v376
      %466 = vst.msk [vmem:[%s434 + $0x171] sm:$0xff] %vm378, %v377
      %v467 = vld [vmem:[#allocation2] sm:$0xff]
      %v468 = vld [vmem:[#allocation2 + $0x8] sm:$0xff]
      %v469 = vld [vmem:[#allocation2 + $0x18] sm:$0xff]
      %v470 = vld [vmem:[#allocation2 + $0x20] sm:$0xff]
      %v471 = vld [vmem:[#allocation2 + $0x30] sm:$0xff]
      %v472 = vld [vmem:[#allocation2 + $0x38] sm:$0xff]
      %v473 = vld [vmem:[#allocation2 + $0x48] sm:$0xff]
      %v474 = vld [vmem:[#allocation2 + $0x50] sm:$0xff]
      %v475 = vld [vmem:[#allocation2 + $0x60] sm:$0xff]
      %v476 = vld [vmem:[#allocation2 + $0x68] sm:$0xff]
      %v477 = vld [vmem:[#allocation2 + $0x78] sm:$0xff]
      %v478 = vld [vmem:[#allocation2 + $0x80] sm:$0xff]
      %v479 = vld [vmem:[#allocation2 + $0x90] sm:$0xff]
      %v480 = vld [vmem:[#allocation2 + $0x98] sm:$0xff]
      %v481 = vld [vmem:[#allocation2 + $0xa8] sm:$0xff]
      %v482 = vld [vmem:[#allocation2 + $0xb0] sm:$0xff]
      %v483 = vld [vmem:[#allocation2 + $0xc0] sm:$0xff]
      %v484 = vld [vmem:[#allocation2 + $0xc8] sm:$0xff]
      %v485 = vld [vmem:[#allocation2 + $0xd8] sm:$0xff]
      %v486 = vld [vmem:[#allocation2 + $0xe0] sm:$0xff]
      %v487 = vld [vmem:[#allocation2 + $0xf0] sm:$0xff]
      %v488 = vld [vmem:[#allocation2 + $0xf8] sm:$0xff]
      %v489 = vld [vmem:[#allocation2 + $0x108] sm:$0xff]
      %v490 = vld [vmem:[#allocation2 + $0x110] sm:$0xff]
      %v491 = vld [vmem:[#allocation2 + $0x120] sm:$0xff]
      %v492 = vld [vmem:[#allocation2 + $0x128] sm:$0xff]
      %v493 = vld [vmem:[#allocation2 + $0x138] sm:$0xff]
      %v494 = vld [vmem:[#allocation2 + $0x140] sm:$0xff]
      %v495 = vld [vmem:[#allocation2 + $0x150] sm:$0xff]
      %v496 = vld [vmem:[#allocation2 + $0x158] sm:$0xff]
      %v497 = vld [vmem:[#allocation2 + $0x168] sm:$0xff]
      %v498 = vld [vmem:[#allocation2 + $0x170] sm:$0xff]
      %v499 = vld [vmem:[#allocation2 + $0x1] sm:$0xff]
      %v500 = vld [vmem:[#allocation2 + $0x9] sm:$0xff]
      %v501 = vld [vmem:[#allocation2 + $0x19] sm:$0xff]
      %v502 = vld [vmem:[#allocation2 + $0x21] sm:$0xff]
      %v503 = vld [vmem:[#allocation2 + $0x31] sm:$0xff]
      %v504 = vld [vmem:[#allocation2 + $0x39] sm:$0xff]
      %v505 = vld [vmem:[#allocation2 + $0x49] sm:$0xff]
      %v506 = vld [vmem:[#allocation2 + $0x51] sm:$0xff]
      %v507 = vld [vmem:[#allocation2 + $0x61] sm:$0xff]
      %v508 = vld [vmem:[#allocation2 + $0x69] sm:$0xff]
      %v509 = vld [vmem:[#allocation2 + $0x79] sm:$0xff]
      %v510 = vld [vmem:[#allocation2 + $0x81] sm:$0xff]
      %v511 = vld [vmem:[#allocation2 + $0x91] sm:$0xff]
      %v512 = vld [vmem:[#allocation2 + $0x99] sm:$0xff]
      %v513 = vld [vmem:[#allocation2 + $0xa9] sm:$0xff]
      %v514 = vld [vmem:[#allocation2 + $0xb1] sm:$0xff]
      %v515 = vld [vmem:[#allocation2 + $0xc1] sm:$0xff]
      %v516 = vld [vmem:[#allocation2 + $0xc9] sm:$0xff]
      %v517 = vld [vmem:[#allocation2 + $0xd9] sm:$0xff]
      %v518 = vld [vmem:[#allocation2 + $0xe1] sm:$0xff]
      %v519 = vld [vmem:[#allocation2 + $0xf1] sm:$0xff]
      %v520 = vld [vmem:[#allocation2 + $0xf9] sm:$0xff]
      %v521 = vld [vmem:[#allocation2 + $0x109] sm:$0xff]
      %v522 = vld [vmem:[#allocation2 + $0x111] sm:$0xff]
      %v523 = vld [vmem:[#allocation2 + $0x121] sm:$0xff]
      %v524 = vld [vmem:[#allocation2 + $0x129] sm:$0xff]
      %v525 = vld [vmem:[#allocation2 + $0x139] sm:$0xff]
      %v526 = vld [vmem:[#allocation2 + $0x141] sm:$0xff]
      %v527 = vld [vmem:[#allocation2 + $0x151] sm:$0xff]
      %v528 = vld [vmem:[#allocation2 + $0x159] sm:$0xff]
      %v529 = vld [vmem:[#allocation2 + $0x169] sm:$0xff]
      %v530 = vld [vmem:[#allocation2 + $0x171] sm:$0xff]
      %v531 = vld [vmem:[#allocation2 + $0x2] sm:$0xff]
      %v532 = vld [vmem:[#allocation2 + $0xa] sm:$0xff]
      %v533 = vld [vmem:[#allocation2 + $0x1a] sm:$0xff]
      %v534 = vld [vmem:[#allocation2 + $0x22] sm:$0xff]
      %v535 = vld [vmem:[#allocation2 + $0x32] sm:$0xff]
      %v536 = vld [vmem:[#allocation2 + $0x3a] sm:$0xff]
      %v537 = vld [vmem:[#allocation2 + $0x4a] sm:$0xff]
      %v538 = vld [vmem:[#allocation2 + $0x52] sm:$0xff]
      %v539 = vld [vmem:[#allocation2 + $0x62] sm:$0xff]
      %v540 = vld [vmem:[#allocation2 + $0x6a] sm:$0xff]
      %v541 = vld [vmem:[#allocation2 + $0x7a] sm:$0xff]
      %v542 = vld [vmem:[#allocation2 + $0x82] sm:$0xff]
      %v543 = vld [vmem:[#allocation2 + $0x92] sm:$0xff]
      %v544 = vld [vmem:[#allocation2 + $0x9a] sm:$0xff]
      %v545 = vld [vmem:[#allocation2 + $0xaa] sm:$0xff]
      %v546 = vld [vmem:[#allocation2 + $0xb2] sm:$0xff]
      %v547 = vld [vmem:[#allocation2 + $0xc2] sm:$0xff]
      %v548 = vld [vmem:[#allocation2 + $0xca] sm:$0xff]
      %v549 = vld [vmem:[#allocation2 + $0xda] sm:$0xff]
      %v550 = vld [vmem:[#allocation2 + $0xe2] sm:$0xff]
      %v551 = vld [vmem:[#allocation2 + $0xf2] sm:$0xff]
      %v552 = vld [vmem:[#allocation2 + $0xfa] sm:$0xff]
      %v553 = vld [vmem:[#allocation2 + $0x10a] sm:$0xff]
      %v554 = vld [vmem:[#allocation2 + $0x112] sm:$0xff]
      %v555 = vld [vmem:[#allocation2 + $0x122] sm:$0xff]
      %v556 = vld [vmem:[#allocation2 + $0x12a] sm:$0xff]
      %v557 = vld [vmem:[#allocation2 + $0x13a] sm:$0xff]
      %v558 = vld [vmem:[#allocation2 + $0x142] sm:$0xff]
      %v559 = vld [vmem:[#allocation2 + $0x152] sm:$0xff]
      %v560 = vld [vmem:[#allocation2 + $0x15a] sm:$0xff]
      %v561 = vld [vmem:[#allocation2 + $0x16a] sm:$0xff]
      %v562 = vld [vmem:[#allocation2 + $0x172] sm:$0xff]
      %v563 = vld [vmem:[%s434] sm:$0xff]
      %v564 = vld [vmem:[%s434 + $0x8] sm:$0xff]
      %v565 = vld [vmem:[%s434 + $0x18] sm:$0xff]
      %v566 = vld [vmem:[%s434 + $0x20] sm:$0xff]
      %v567 = vld [vmem:[%s434 + $0x30] sm:$0xff]
      %v568 = vld [vmem:[%s434 + $0x38] sm:$0xff]
      %v569 = vld [vmem:[%s434 + $0x48] sm:$0xff]
      %v570 = vld [vmem:[%s434 + $0x50] sm:$0xff]
      %v571 = vld [vmem:[%s434 + $0x60] sm:$0xff]
      %v572 = vld [vmem:[%s434 + $0x68] sm:$0xff]
      %v573 = vld [vmem:[%s434 + $0x78] sm:$0xff]
      %v574 = vld [vmem:[%s434 + $0x80] sm:$0xff]
      %v575 = vld [vmem:[%s434 + $0x90] sm:$0xff]
      %v576 = vld [vmem:[%s434 + $0x98] sm:$0xff]
      %v577 = vld [vmem:[%s434 + $0xa8] sm:$0xff]
      %v578 = vld [vmem:[%s434 + $0xb0] sm:$0xff]
      %v579 = vld [vmem:[%s434 + $0xc0] sm:$0xff]
      %v580 = vld [vmem:[%s434 + $0xc8] sm:$0xff]
      %v581 = vld [vmem:[%s434 + $0xd8] sm:$0xff]
      %v582 = vld [vmem:[%s434 + $0xe0] sm:$0xff]
      %v583 = vld [vmem:[%s434 + $0xf0] sm:$0xff]
      %v584 = vld [vmem:[%s434 + $0xf8] sm:$0xff]
      %v585 = vld [vmem:[%s434 + $0x108] sm:$0xff]
      %v586 = vld [vmem:[%s434 + $0x110] sm:$0xff]
      %v587 = vld [vmem:[%s434 + $0x120] sm:$0xff]
      %v588 = vld [vmem:[%s434 + $0x128] sm:$0xff]
      %v589 = vld [vmem:[%s434 + $0x138] sm:$0xff]
      %v590 = vld [vmem:[%s434 + $0x140] sm:$0xff]
      %v591 = vld [vmem:[%s434 + $0x150] sm:$0xff]
      %v592 = vld [vmem:[%s434 + $0x158] sm:$0xff]
      %v593 = vld [vmem:[%s434 + $0x168] sm:$0xff]
      %v594 = vld [vmem:[%s434 + $0x170] sm:$0xff]
      %v595 = vld [vmem:[%s434 + $0x1] sm:$0xff]
      %v596 = vld [vmem:[%s434 + $0x9] sm:$0xff]
      %v597 = vld [vmem:[%s434 + $0x19] sm:$0xff]
      %v598 = vld [vmem:[%s434 + $0x21] sm:$0xff]
      %v599 = vld [vmem:[%s434 + $0x31] sm:$0xff]
      %v600 = vld [vmem:[%s434 + $0x39] sm:$0xff]
      %v601 = vld [vmem:[%s434 + $0x49] sm:$0xff]
      %v602 = vld [vmem:[%s434 + $0x51] sm:$0xff]
      %v603 = vld [vmem:[%s434 + $0x61] sm:$0xff]
      %v604 = vld [vmem:[%s434 + $0x69] sm:$0xff]
      %v605 = vld [vmem:[%s434 + $0x79] sm:$0xff]
      %v606 = vld [vmem:[%s434 + $0x81] sm:$0xff]
      %v607 = vld [vmem:[%s434 + $0x91] sm:$0xff]
      %v608 = vld [vmem:[%s434 + $0x99] sm:$0xff]
      %v609 = vld [vmem:[%s434 + $0xa9] sm:$0xff]
      %v610 = vld [vmem:[%s434 + $0xb1] sm:$0xff]
      %v611 = vld [vmem:[%s434 + $0xc1] sm:$0xff]
      %v612 = vld [vmem:[%s434 + $0xc9] sm:$0xff]
      %v613 = vld [vmem:[%s434 + $0xd9] sm:$0xff]
      %v614 = vld [vmem:[%s434 + $0xe1] sm:$0xff]
      %v615 = vld [vmem:[%s434 + $0xf1] sm:$0xff]
      %v616 = vld [vmem:[%s434 + $0xf9] sm:$0xff]
      %v617 = vld [vmem:[%s434 + $0x109] sm:$0xff]
      %v618 = vld [vmem:[%s434 + $0x111] sm:$0xff]
      %v619 = vld [vmem:[%s434 + $0x121] sm:$0xff]
      %v620 = vld [vmem:[%s434 + $0x129] sm:$0xff]
      %v621 = vld [vmem:[%s434 + $0x139] sm:$0xff]
      %v622 = vld [vmem:[%s434 + $0x141] sm:$0xff]
      %v623 = vld [vmem:[%s434 + $0x151] sm:$0xff]
      %v624 = vld [vmem:[%s434 + $0x159] sm:$0xff]
      %v625 = vld [vmem:[%s434 + $0x169] sm:$0xff]
      %v626 = vld [vmem:[%s434 + $0x171] sm:$0xff]
      %v627 = vld [vmem:[%s434 + $0x2] sm:$0xff]
      %v628 = vld [vmem:[%s434 + $0xa] sm:$0xff]
      %v629 = vld [vmem:[%s434 + $0x1a] sm:$0xff]
      %v630 = vld [vmem:[%s434 + $0x22] sm:$0xff]
      %v631 = vld [vmem:[%s434 + $0x32] sm:$0xff]
      %v632 = vld [vmem:[%s434 + $0x3a] sm:$0xff]
      %v633 = vld [vmem:[%s434 + $0x4a] sm:$0xff]
      %v634 = vld [vmem:[%s434 + $0x52] sm:$0xff]
      %v635 = vld [vmem:[%s434 + $0x62] sm:$0xff]
      %v636 = vld [vmem:[%s434 + $0x6a] sm:$0xff]
      %v637 = vld [vmem:[%s434 + $0x7a] sm:$0xff]
      %v638 = vld [vmem:[%s434 + $0x82] sm:$0xff]
      %v639 = vld [vmem:[%s434 + $0x92] sm:$0xff]
      %v640 = vld [vmem:[%s434 + $0x9a] sm:$0xff]
      %v641 = vld [vmem:[%s434 + $0xaa] sm:$0xff]
      %v642 = vld [vmem:[%s434 + $0xb2] sm:$0xff]
      %v643 = vld [vmem:[%s434 + $0xc2] sm:$0xff]
      %v644 = vld [vmem:[%s434 + $0xca] sm:$0xff]
      %v645 = vld [vmem:[%s434 + $0xda] sm:$0xff]
      %v646 = vld [vmem:[%s434 + $0xe2] sm:$0xff]
      %v647 = vld [vmem:[%s434 + $0xf2] sm:$0xff]
      %v648 = vld [vmem:[%s434 + $0xfa] sm:$0xff]
      %v649 = vld [vmem:[%s434 + $0x10a] sm:$0xff]
      %v650 = vld [vmem:[%s434 + $0x112] sm:$0xff]
      %v651 = vld [vmem:[%s434 + $0x122] sm:$0xff]
      %v652 = vld [vmem:[%s434 + $0x12a] sm:$0xff]
      %v653 = vld [vmem:[%s434 + $0x13a] sm:$0xff]
      %v654 = vld [vmem:[%s434 + $0x142] sm:$0xff]
      %v655 = vld [vmem:[%s434 + $0x152] sm:$0xff]
      %v656 = vld [vmem:[%s434 + $0x15a] sm:$0xff]
      %v657 = vld [vmem:[%s434 + $0x16a] sm:$0xff]
      %v658 = vld [vmem:[%s434 + $0x172] sm:$0xff]
      %s659 = scalar_lea.vmem [#allocation2], 48
      %v660 = vld [vmem:[%s659] sm:$0xff]
      %v661 = vld [vmem:[%s659 + $0x8] sm:$0xff]
      %v662 = vld [vmem:[%s659 + $0x18] sm:$0xff]
      %v663 = vld [vmem:[%s659 + $0x20] sm:$0xff]
      %v664 = vld [vmem:[%s659 + $0x30] sm:$0xff]
      %v665 = vld [vmem:[%s659 + $0x38] sm:$0xff]
      %v666 = vld [vmem:[%s659 + $0x48] sm:$0xff]
      %v667 = vld [vmem:[%s659 + $0x50] sm:$0xff]
      %v668 = vld [vmem:[%s659 + $0x60] sm:$0xff]
      %v669 = vld [vmem:[%s659 + $0x68] sm:$0xff]
      %v670 = vld [vmem:[%s659 + $0x78] sm:$0xff]
      %v671 = vld [vmem:[%s659 + $0x80] sm:$0xff]
      %v672 = vld [vmem:[%s659 + $0x90] sm:$0xff]
      %v673 = vld [vmem:[%s659 + $0x98] sm:$0xff]
      %v674 = vld [vmem:[%s659 + $0xa8] sm:$0xff]
      %v675 = vld [vmem:[%s659 + $0xb0] sm:$0xff]
      %v676 = vld [vmem:[%s659 + $0xc0] sm:$0xff]
      %v677 = vld [vmem:[%s659 + $0xc8] sm:$0xff]
      %v678 = vld [vmem:[%s659 + $0xd8] sm:$0xff]
      %v679 = vld [vmem:[%s659 + $0xe0] sm:$0xff]
      %v680 = vld [vmem:[%s659 + $0xf0] sm:$0xff]
      %v681 = vld [vmem:[%s659 + $0xf8] sm:$0xff]
      %v682 = vld [vmem:[%s659 + $0x108] sm:$0xff]
      %v683 = vld [vmem:[%s659 + $0x110] sm:$0xff]
      %v684 = vld [vmem:[%s659 + $0x120] sm:$0xff]
      %v685 = vld [vmem:[%s659 + $0x128] sm:$0xff]
      %v686 = vld [vmem:[%s659 + $0x138] sm:$0xff]
      %v687 = vld [vmem:[%s659 + $0x140] sm:$0xff]
      %v688 = vld [vmem:[%s659 + $0x150] sm:$0xff]
      %v689 = vld [vmem:[%s659 + $0x158] sm:$0xff]
      %v690 = vld [vmem:[%s659 + $0x168] sm:$0xff]
      %v691 = vld [vmem:[%s659 + $0x170] sm:$0xff]
      %v692 = vld [vmem:[%s659 + $0x1] sm:$0xff]
      %v693 = vld [vmem:[%s659 + $0x9] sm:$0xff]
      %v694 = vld [vmem:[%s659 + $0x19] sm:$0xff]
      %v695 = vld [vmem:[%s659 + $0x21] sm:$0xff]
      %v696 = vld [vmem:[%s659 + $0x31] sm:$0xff]
      %v697 = vld [vmem:[%s659 + $0x39] sm:$0xff]
      %v698 = vld [vmem:[%s659 + $0x49] sm:$0xff]
      %v699 = vld [vmem:[%s659 + $0x51] sm:$0xff]
      %v700 = vld [vmem:[%s659 + $0x61] sm:$0xff]
      %v701 = vld [vmem:[%s659 + $0x69] sm:$0xff]
      %v702 = vld [vmem:[%s659 + $0x79] sm:$0xff]
      %v703 = vld [vmem:[%s659 + $0x81] sm:$0xff]
      %v704 = vld [vmem:[%s659 + $0x91] sm:$0xff]
      %v705 = vld [vmem:[%s659 + $0x99] sm:$0xff]
      %v706 = vld [vmem:[%s659 + $0xa9] sm:$0xff]
      %v707 = vld [vmem:[%s659 + $0xb1] sm:$0xff]
      %v708 = vld [vmem:[%s659 + $0xc1] sm:$0xff]
      %v709 = vld [vmem:[%s659 + $0xc9] sm:$0xff]
      %v710 = vld [vmem:[%s659 + $0xd9] sm:$0xff]
      %v711 = vld [vmem:[%s659 + $0xe1] sm:$0xff]
      %v712 = vld [vmem:[%s659 + $0xf1] sm:$0xff]
      %v713 = vld [vmem:[%s659 + $0xf9] sm:$0xff]
      %v714 = vld [vmem:[%s659 + $0x109] sm:$0xff]
      %v715 = vld [vmem:[%s659 + $0x111] sm:$0xff]
      %v716 = vld [vmem:[%s659 + $0x121] sm:$0xff]
      %v717 = vld [vmem:[%s659 + $0x129] sm:$0xff]
      %v718 = vld [vmem:[%s659 + $0x139] sm:$0xff]
      %v719 = vld [vmem:[%s659 + $0x141] sm:$0xff]
      %v720 = vld [vmem:[%s659 + $0x151] sm:$0xff]
      %v721 = vld [vmem:[%s659 + $0x159] sm:$0xff]
      %v722 = vld [vmem:[%s659 + $0x169] sm:$0xff]
      %v723 = vld [vmem:[%s659 + $0x171] sm:$0xff]
      %v724 = vld [vmem:[%s659 + $0x2] sm:$0xff]
      %v725 = vld [vmem:[%s659 + $0xa] sm:$0xff]
      %v726 = vld [vmem:[%s659 + $0x1a] sm:$0xff]
      %v727 = vld [vmem:[%s659 + $0x22] sm:$0xff]
      %v728 = vld [vmem:[%s659 + $0x32] sm:$0xff]
      %v729 = vld [vmem:[%s659 + $0x3a] sm:$0xff]
      %v730 = vld [vmem:[%s659 + $0x4a] sm:$0xff]
      %v731 = vld [vmem:[%s659 + $0x52] sm:$0xff]
      %v732 = vld [vmem:[%s659 + $0x62] sm:$0xff]
      %v733 = vld [vmem:[%s659 + $0x6a] sm:$0xff]
      %v734 = vld [vmem:[%s659 + $0x7a] sm:$0xff]
      %v735 = vld [vmem:[%s659 + $0x82] sm:$0xff]
      %v736 = vld [vmem:[%s659 + $0x92] sm:$0xff]
      %v737 = vld [vmem:[%s659 + $0x9a] sm:$0xff]
      %v738 = vld [vmem:[%s659 + $0xaa] sm:$0xff]
      %v739 = vld [vmem:[%s659 + $0xb2] sm:$0xff]
      %v740 = vld [vmem:[%s659 + $0xc2] sm:$0xff]
      %v741 = vld [vmem:[%s659 + $0xca] sm:$0xff]
      %v742 = vld [vmem:[%s659 + $0xda] sm:$0xff]
      %v743 = vld [vmem:[%s659 + $0xe2] sm:$0xff]
      %v744 = vld [vmem:[%s659 + $0xf2] sm:$0xff]
      %v745 = vld [vmem:[%s659 + $0xfa] sm:$0xff]
      %v746 = vld [vmem:[%s659 + $0x10a] sm:$0xff]
      %v747 = vld [vmem:[%s659 + $0x112] sm:$0xff]
      %v748 = vld [vmem:[%s659 + $0x122] sm:$0xff]
      %v749 = vld [vmem:[%s659 + $0x12a] sm:$0xff]
      %v750 = vld [vmem:[%s659 + $0x13a] sm:$0xff]
      %v751 = vld [vmem:[%s659 + $0x142] sm:$0xff]
      %v752 = vld [vmem:[%s659 + $0x152] sm:$0xff]
      %v753 = vld [vmem:[%s659 + $0x15a] sm:$0xff]
      %v754 = vld [vmem:[%s659 + $0x16a] sm:$0xff]
      %v755 = vld [vmem:[%s659 + $0x172] sm:$0xff]
      %788 = vrot.lane.b32.xlu0 %v499, 8
      %v789 = vpop.permute.xlu0 %788
      %790 = vrot.lane.b32.xlu0 %v500, 8
      %v791 = vpop.permute.xlu0 %790
      %792 = vrot.lane.b32.xlu0 %v501, 8
      %v793 = vpop.permute.xlu0 %792
      %794 = vrot.lane.b32.xlu0 %v502, 8
      %v795 = vpop.permute.xlu0 %794
      %796 = vrot.lane.b32.xlu0 %v503, 8
      %v797 = vpop.permute.xlu0 %796
      %798 = vrot.lane.b32.xlu0 %v504, 8
      %v799 = vpop.permute.xlu0 %798
      %800 = vrot.lane.b32.xlu0 %v505, 8
      %v801 = vpop.permute.xlu0 %800
      %802 = vrot.lane.b32.xlu0 %v506, 8
      %v803 = vpop.permute.xlu0 %802
      %804 = vrot.lane.b32.xlu0 %v507, 8
      %v805 = vpop.permute.xlu0 %804
      %806 = vrot.lane.b32.xlu0 %v508, 8
      %v807 = vpop.permute.xlu0 %806
      %808 = vrot.lane.b32.xlu0 %v509, 8
      %v809 = vpop.permute.xlu0 %808
      %810 = vrot.lane.b32.xlu0 %v510, 8
      %v811 = vpop.permute.xlu0 %810
      %812 = vrot.lane.b32.xlu0 %v511, 8
      %v813 = vpop.permute.xlu0 %812
      %814 = vrot.lane.b32.xlu0 %v512, 8
      %v815 = vpop.permute.xlu0 %814
      %816 = vrot.lane.b32.xlu0 %v513, 8
      %v817 = vpop.permute.xlu0 %816
      %818 = vrot.lane.b32.xlu0 %v514, 8
      %v819 = vpop.permute.xlu0 %818
      %820 = vrot.lane.b32.xlu0 %v515, 8
      %v821 = vpop.permute.xlu0 %820
      %822 = vrot.lane.b32.xlu0 %v516, 8
      %v823 = vpop.permute.xlu0 %822
      %824 = vrot.lane.b32.xlu0 %v517, 8
      %v825 = vpop.permute.xlu0 %824
      %826 = vrot.lane.b32.xlu0 %v518, 8
      %v827 = vpop.permute.xlu0 %826
      %828 = vrot.lane.b32.xlu0 %v519, 8
      %v829 = vpop.permute.xlu0 %828
      %830 = vrot.lane.b32.xlu0 %v520, 8
      %v831 = vpop.permute.xlu0 %830
      %832 = vrot.lane.b32.xlu0 %v521, 8
      %v833 = vpop.permute.xlu0 %832
      %834 = vrot.lane.b32.xlu0 %v522, 8
      %v835 = vpop.permute.xlu0 %834
      %836 = vrot.lane.b32.xlu0 %v523, 8
      %v837 = vpop.permute.xlu0 %836
      %838 = vrot.lane.b32.xlu0 %v524, 8
      %v839 = vpop.permute.xlu0 %838
      %840 = vrot.lane.b32.xlu0 %v525, 8
      %v841 = vpop.permute.xlu0 %840
      %842 = vrot.lane.b32.xlu0 %v526, 8
      %v843 = vpop.permute.xlu0 %842
      %844 = vrot.lane.b32.xlu0 %v527, 8
      %v845 = vpop.permute.xlu0 %844
      %846 = vrot.lane.b32.xlu0 %v528, 8
      %v847 = vpop.permute.xlu0 %846
      %848 = vrot.lane.b32.xlu0 %v529, 8
      %v849 = vpop.permute.xlu0 %848
      %850 = vrot.lane.b32.xlu0 %v530, 8
      %v851 = vpop.permute.xlu0 %850
      %916 = vrot.lane.b32.xlu0 %v531, 16
      %v917 = vpop.permute.xlu0 %916
      %918 = vrot.lane.b32.xlu0 %v532, 16
      %v919 = vpop.permute.xlu0 %918
      %920 = vrot.lane.b32.xlu0 %v533, 16
      %v921 = vpop.permute.xlu0 %920
      %922 = vrot.lane.b32.xlu0 %v534, 16
      %v923 = vpop.permute.xlu0 %922
      %924 = vrot.lane.b32.xlu0 %v535, 16
      %v925 = vpop.permute.xlu0 %924
      %926 = vrot.lane.b32.xlu0 %v536, 16
      %v927 = vpop.permute.xlu0 %926
      %928 = vrot.lane.b32.xlu0 %v537, 16
      %v929 = vpop.permute.xlu0 %928
      %930 = vrot.lane.b32.xlu0 %v538, 16
      %v931 = vpop.permute.xlu0 %930
      %932 = vrot.lane.b32.xlu0 %v539, 16
      %v933 = vpop.permute.xlu0 %932
      %934 = vrot.lane.b32.xlu0 %v540, 16
      %v935 = vpop.permute.xlu0 %934
      %936 = vrot.lane.b32.xlu0 %v541, 16
      %v937 = vpop.permute.xlu0 %936
      %938 = vrot.lane.b32.xlu0 %v542, 16
      %v939 = vpop.permute.xlu0 %938
      %940 = vrot.lane.b32.xlu0 %v543, 16
      %v941 = vpop.permute.xlu0 %940
      %942 = vrot.lane.b32.xlu0 %v544, 16
      %v943 = vpop.permute.xlu0 %942
      %944 = vrot.lane.b32.xlu0 %v545, 16
      %v945 = vpop.permute.xlu0 %944
      %946 = vrot.lane.b32.xlu0 %v546, 16
      %v947 = vpop.permute.xlu0 %946
      %948 = vrot.lane.b32.xlu0 %v547, 16
      %v949 = vpop.permute.xlu0 %948
      %950 = vrot.lane.b32.xlu0 %v548, 16
      %v951 = vpop.permute.xlu0 %950
      %952 = vrot.lane.b32.xlu0 %v549, 16
      %v953 = vpop.permute.xlu0 %952
      %954 = vrot.lane.b32.xlu0 %v550, 16
      %v955 = vpop.permute.xlu0 %954
      %956 = vrot.lane.b32.xlu0 %v551, 16
      %v957 = vpop.permute.xlu0 %956
      %958 = vrot.lane.b32.xlu0 %v552, 16
      %v959 = vpop.permute.xlu0 %958
      %960 = vrot.lane.b32.xlu0 %v553, 16
      %v961 = vpop.permute.xlu0 %960
      %962 = vrot.lane.b32.xlu0 %v554, 16
      %v963 = vpop.permute.xlu0 %962
      %964 = vrot.lane.b32.xlu0 %v555, 16
      %v965 = vpop.permute.xlu0 %964
      %966 = vrot.lane.b32.xlu0 %v556, 16
      %v967 = vpop.permute.xlu0 %966
      %968 = vrot.lane.b32.xlu0 %v557, 16
      %v969 = vpop.permute.xlu0 %968
      %970 = vrot.lane.b32.xlu0 %v558, 16
      %v971 = vpop.permute.xlu0 %970
      %972 = vrot.lane.b32.xlu0 %v559, 16
      %v973 = vpop.permute.xlu0 %972
      %974 = vrot.lane.b32.xlu0 %v560, 16
      %v975 = vpop.permute.xlu0 %974
      %976 = vrot.lane.b32.xlu0 %v561, 16
      %v977 = vpop.permute.xlu0 %976
      %978 = vrot.lane.b32.xlu0 %v562, 16
      %v979 = vpop.permute.xlu0 %978
      %1044 = vrot.lane.b32.xlu0 %v563, 24
      %v1045 = vpop.permute.xlu0 %1044
      %1046 = vrot.lane.b32.xlu0 %v564, 24
      %v1047 = vpop.permute.xlu0 %1046
      %1048 = vrot.lane.b32.xlu0 %v565, 24
      %v1049 = vpop.permute.xlu0 %1048
      %1050 = vrot.lane.b32.xlu0 %v566, 24
      %v1051 = vpop.permute.xlu0 %1050
      %1052 = vrot.lane.b32.xlu0 %v567, 24
      %v1053 = vpop.permute.xlu0 %1052
      %1054 = vrot.lane.b32.xlu0 %v568, 24
      %v1055 = vpop.permute.xlu0 %1054
      %1056 = vrot.lane.b32.xlu0 %v569, 24
      %v1057 = vpop.permute.xlu0 %1056
      %1058 = vrot.lane.b32.xlu0 %v570, 24
      %v1059 = vpop.permute.xlu0 %1058
      %1060 = vrot.lane.b32.xlu0 %v571, 24
      %v1061 = vpop.permute.xlu0 %1060
      %1062 = vrot.lane.b32.xlu0 %v572, 24
      %v1063 = vpop.permute.xlu0 %1062
      %1064 = vrot.lane.b32.xlu0 %v573, 24
      %v1065 = vpop.permute.xlu0 %1064
      %1066 = vrot.lane.b32.xlu0 %v574, 24
      %v1067 = vpop.permute.xlu0 %1066
      %1068 = vrot.lane.b32.xlu0 %v575, 24
      %v1069 = vpop.permute.xlu0 %1068
      %1070 = vrot.lane.b32.xlu0 %v576, 24
      %v1071 = vpop.permute.xlu0 %1070
      %1072 = vrot.lane.b32.xlu0 %v577, 24
      %v1073 = vpop.permute.xlu0 %1072
      %1074 = vrot.lane.b32.xlu0 %v578, 24
      %v1075 = vpop.permute.xlu0 %1074
      %1076 = vrot.lane.b32.xlu0 %v579, 24
      %v1077 = vpop.permute.xlu0 %1076
      %1078 = vrot.lane.b32.xlu0 %v580, 24
      %v1079 = vpop.permute.xlu0 %1078
      %1080 = vrot.lane.b32.xlu0 %v581, 24
      %v1081 = vpop.permute.xlu0 %1080
      %1082 = vrot.lane.b32.xlu0 %v582, 24
      %v1083 = vpop.permute.xlu0 %1082
      %1084 = vrot.lane.b32.xlu0 %v583, 24
      %v1085 = vpop.permute.xlu0 %1084
      %1086 = vrot.lane.b32.xlu0 %v584, 24
      %v1087 = vpop.permute.xlu0 %1086
      %1088 = vrot.lane.b32.xlu0 %v585, 24
      %v1089 = vpop.permute.xlu0 %1088
      %1090 = vrot.lane.b32.xlu0 %v586, 24
      %v1091 = vpop.permute.xlu0 %1090
      %1092 = vrot.lane.b32.xlu0 %v587, 24
      %v1093 = vpop.permute.xlu0 %1092
      %1094 = vrot.lane.b32.xlu0 %v588, 24
      %v1095 = vpop.permute.xlu0 %1094
      %1096 = vrot.lane.b32.xlu0 %v589, 24
      %v1097 = vpop.permute.xlu0 %1096
      %1098 = vrot.lane.b32.xlu0 %v590, 24
      %v1099 = vpop.permute.xlu0 %1098
      %1100 = vrot.lane.b32.xlu0 %v591, 24
      %v1101 = vpop.permute.xlu0 %1100
      %1102 = vrot.lane.b32.xlu0 %v592, 24
      %v1103 = vpop.permute.xlu0 %1102
      %1104 = vrot.lane.b32.xlu0 %v593, 24
      %v1105 = vpop.permute.xlu0 %1104
      %1106 = vrot.lane.b32.xlu0 %v594, 24
      %v1107 = vpop.permute.xlu0 %1106
      %1172 = vrot.lane.b32.xlu0 %v595, 32
      %v1173 = vpop.permute.xlu0 %1172
      %1174 = vrot.lane.b32.xlu0 %v596, 32
      %v1175 = vpop.permute.xlu0 %1174
      %1176 = vrot.lane.b32.xlu0 %v597, 32
      %v1177 = vpop.permute.xlu0 %1176
      %1178 = vrot.lane.b32.xlu0 %v598, 32
      %v1179 = vpop.permute.xlu0 %1178
      %1180 = vrot.lane.b32.xlu0 %v599, 32
      %v1181 = vpop.permute.xlu0 %1180
      %1182 = vrot.lane.b32.xlu0 %v600, 32
      %v1183 = vpop.permute.xlu0 %1182
      %1184 = vrot.lane.b32.xlu0 %v601, 32
      %v1185 = vpop.permute.xlu0 %1184
      %1186 = vrot.lane.b32.xlu0 %v602, 32
      %v1187 = vpop.permute.xlu0 %1186
      %1188 = vrot.lane.b32.xlu0 %v603, 32
      %v1189 = vpop.permute.xlu0 %1188
      %1190 = vrot.lane.b32.xlu0 %v604, 32
      %v1191 = vpop.permute.xlu0 %1190
      %1192 = vrot.lane.b32.xlu0 %v605, 32
      %v1193 = vpop.permute.xlu0 %1192
      %1194 = vrot.lane.b32.xlu0 %v606, 32
      %v1195 = vpop.permute.xlu0 %1194
      %1196 = vrot.lane.b32.xlu0 %v607, 32
      %v1197 = vpop.permute.xlu0 %1196
      %1198 = vrot.lane.b32.xlu0 %v608, 32
      %v1199 = vpop.permute.xlu0 %1198
      %1200 = vrot.lane.b32.xlu0 %v609, 32
      %v1201 = vpop.permute.xlu0 %1200
      %1202 = vrot.lane.b32.xlu0 %v610, 32
      %v1203 = vpop.permute.xlu0 %1202
      %1204 = vrot.lane.b32.xlu0 %v611, 32
      %v1205 = vpop.permute.xlu0 %1204
      %1206 = vrot.lane.b32.xlu0 %v612, 32
      %v1207 = vpop.permute.xlu0 %1206
      %1208 = vrot.lane.b32.xlu0 %v613, 32
      %v1209 = vpop.permute.xlu0 %1208
      %1210 = vrot.lane.b32.xlu0 %v614, 32
      %v1211 = vpop.permute.xlu0 %1210
      %1212 = vrot.lane.b32.xlu0 %v615, 32
      %v1213 = vpop.permute.xlu0 %1212
      %1214 = vrot.lane.b32.xlu0 %v616, 32
      %v1215 = vpop.permute.xlu0 %1214
      %1216 = vrot.lane.b32.xlu0 %v617, 32
      %v1217 = vpop.permute.xlu0 %1216
      %1218 = vrot.lane.b32.xlu0 %v618, 32
      %v1219 = vpop.permute.xlu0 %1218
      %1220 = vrot.lane.b32.xlu0 %v619, 32
      %v1221 = vpop.permute.xlu0 %1220
      %1222 = vrot.lane.b32.xlu0 %v620, 32
      %v1223 = vpop.permute.xlu0 %1222
      %1224 = vrot.lane.b32.xlu0 %v621, 32
      %v1225 = vpop.permute.xlu0 %1224
      %1226 = vrot.lane.b32.xlu0 %v622, 32
      %v1227 = vpop.permute.xlu0 %1226
      %1228 = vrot.lane.b32.xlu0 %v623, 32
      %v1229 = vpop.permute.xlu0 %1228
      %1230 = vrot.lane.b32.xlu0 %v624, 32
      %v1231 = vpop.permute.xlu0 %1230
      %1232 = vrot.lane.b32.xlu0 %v625, 32
      %v1233 = vpop.permute.xlu0 %1232
      %1234 = vrot.lane.b32.xlu0 %v626, 32
      %v1235 = vpop.permute.xlu0 %1234
      %1300 = vrot.lane.b32.xlu0 %v627, 40
      %v1301 = vpop.permute.xlu0 %1300
      %1302 = vrot.lane.b32.xlu0 %v628, 40
      %v1303 = vpop.permute.xlu0 %1302
      %1304 = vrot.lane.b32.xlu0 %v629, 40
      %v1305 = vpop.permute.xlu0 %1304
      %1306 = vrot.lane.b32.xlu0 %v630, 40
      %v1307 = vpop.permute.xlu0 %1306
      %1308 = vrot.lane.b32.xlu0 %v631, 40
      %v1309 = vpop.permute.xlu0 %1308
      %1310 = vrot.lane.b32.xlu0 %v632, 40
      %v1311 = vpop.permute.xlu0 %1310
      %1312 = vrot.lane.b32.xlu0 %v633, 40
      %v1313 = vpop.permute.xlu0 %1312
      %1314 = vrot.lane.b32.xlu0 %v634, 40
      %v1315 = vpop.permute.xlu0 %1314
      %1316 = vrot.lane.b32.xlu0 %v635, 40
      %v1317 = vpop.permute.xlu0 %1316
      %1318 = vrot.lane.b32.xlu0 %v636, 40
      %v1319 = vpop.permute.xlu0 %1318
      %1320 = vrot.lane.b32.xlu0 %v637, 40
      %v1321 = vpop.permute.xlu0 %1320
      %1322 = vrot.lane.b32.xlu0 %v638, 40
      %v1323 = vpop.permute.xlu0 %1322
      %1324 = vrot.lane.b32.xlu0 %v639, 40
      %v1325 = vpop.permute.xlu0 %1324
      %1326 = vrot.lane.b32.xlu0 %v640, 40
      %v1327 = vpop.permute.xlu0 %1326
      %1328 = vrot.lane.b32.xlu0 %v641, 40
      %v1329 = vpop.permute.xlu0 %1328
      %1330 = vrot.lane.b32.xlu0 %v642, 40
      %v1331 = vpop.permute.xlu0 %1330
      %1332 = vrot.lane.b32.xlu0 %v643, 40
      %v1333 = vpop.permute.xlu0 %1332
      %1334 = vrot.lane.b32.xlu0 %v644, 40
      %v1335 = vpop.permute.xlu0 %1334
      %1336 = vrot.lane.b32.xlu0 %v645, 40
      %v1337 = vpop.permute.xlu0 %1336
      %1338 = vrot.lane.b32.xlu0 %v646, 40
      %v1339 = vpop.permute.xlu0 %1338
      %1340 = vrot.lane.b32.xlu0 %v647, 40
      %v1341 = vpop.permute.xlu0 %1340
      %1342 = vrot.lane.b32.xlu0 %v648, 40
      %v1343 = vpop.permute.xlu0 %1342
      %1344 = vrot.lane.b32.xlu0 %v649, 40
      %v1345 = vpop.permute.xlu0 %1344
      %1346 = vrot.lane.b32.xlu0 %v650, 40
      %v1347 = vpop.permute.xlu0 %1346
      %1348 = vrot.lane.b32.xlu0 %v651, 40
      %v1349 = vpop.permute.xlu0 %1348
      %1350 = vrot.lane.b32.xlu0 %v652, 40
      %v1351 = vpop.permute.xlu0 %1350
      %1352 = vrot.lane.b32.xlu0 %v653, 40
      %v1353 = vpop.permute.xlu0 %1352
      %1354 = vrot.lane.b32.xlu0 %v654, 40
      %v1355 = vpop.permute.xlu0 %1354
      %1356 = vrot.lane.b32.xlu0 %v655, 40
      %v1357 = vpop.permute.xlu0 %1356
      %1358 = vrot.lane.b32.xlu0 %v656, 40
      %v1359 = vpop.permute.xlu0 %1358
      %1360 = vrot.lane.b32.xlu0 %v657, 40
      %v1361 = vpop.permute.xlu0 %1360
      %1362 = vrot.lane.b32.xlu0 %v658, 40
      %v1363 = vpop.permute.xlu0 %1362
      %1428 = vrot.lane.b32.xlu0 %v660, 48
      %v1429 = vpop.permute.xlu0 %1428
      %1430 = vrot.lane.b32.xlu0 %v661, 48
      %v1431 = vpop.permute.xlu0 %1430
      %1432 = vrot.lane.b32.xlu0 %v662, 48
      %v1433 = vpop.permute.xlu0 %1432
      %1434 = vrot.lane.b32.xlu0 %v663, 48
      %v1435 = vpop.permute.xlu0 %1434
      %1436 = vrot.lane.b32.xlu0 %v664, 48
      %v1437 = vpop.permute.xlu0 %1436
      %1438 = vrot.lane.b32.xlu0 %v665, 48
      %v1439 = vpop.permute.xlu0 %1438
      %1440 = vrot.lane.b32.xlu0 %v666, 48
      %v1441 = vpop.permute.xlu0 %1440
      %1442 = vrot.lane.b32.xlu0 %v667, 48
      %v1443 = vpop.permute.xlu0 %1442
      %1444 = vrot.lane.b32.xlu0 %v668, 48
      %v1445 = vpop.permute.xlu0 %1444
      %1446 = vrot.lane.b32.xlu0 %v669, 48
      %v1447 = vpop.permute.xlu0 %1446
      %1448 = vrot.lane.b32.xlu0 %v670, 48
      %v1449 = vpop.permute.xlu0 %1448
      %1450 = vrot.lane.b32.xlu0 %v671, 48
      %v1451 = vpop.permute.xlu0 %1450
      %1452 = vrot.lane.b32.xlu0 %v672, 48
      %v1453 = vpop.permute.xlu0 %1452
      %1454 = vrot.lane.b32.xlu0 %v673, 48
      %v1455 = vpop.permute.xlu0 %1454
      %1456 = vrot.lane.b32.xlu0 %v674, 48
      %v1457 = vpop.permute.xlu0 %1456
      %1458 = vrot.lane.b32.xlu0 %v675, 48
      %v1459 = vpop.permute.xlu0 %1458
      %1460 = vrot.lane.b32.xlu0 %v676, 48
      %v1461 = vpop.permute.xlu0 %1460
      %1462 = vrot.lane.b32.xlu0 %v677, 48
      %v1463 = vpop.permute.xlu0 %1462
      %1464 = vrot.lane.b32.xlu0 %v678, 48
      %v1465 = vpop.permute.xlu0 %1464
      %1466 = vrot.lane.b32.xlu0 %v679, 48
      %v1467 = vpop.permute.xlu0 %1466
      %1468 = vrot.lane.b32.xlu0 %v680, 48
      %v1469 = vpop.permute.xlu0 %1468
      %1470 = vrot.lane.b32.xlu0 %v681, 48
      %v1471 = vpop.permute.xlu0 %1470
      %1472 = vrot.lane.b32.xlu0 %v682, 48
      %v1473 = vpop.permute.xlu0 %1472
      %1474 = vrot.lane.b32.xlu0 %v683, 48
      %v1475 = vpop.permute.xlu0 %1474
      %1476 = vrot.lane.b32.xlu0 %v684, 48
      %v1477 = vpop.permute.xlu0 %1476
      %1478 = vrot.lane.b32.xlu0 %v685, 48
      %v1479 = vpop.permute.xlu0 %1478
      %1480 = vrot.lane.b32.xlu0 %v686, 48
      %v1481 = vpop.permute.xlu0 %1480
      %1482 = vrot.lane.b32.xlu0 %v687, 48
      %v1483 = vpop.permute.xlu0 %1482
      %1484 = vrot.lane.b32.xlu0 %v688, 48
      %v1485 = vpop.permute.xlu0 %1484
      %1486 = vrot.lane.b32.xlu0 %v689, 48
      %v1487 = vpop.permute.xlu0 %1486
      %1488 = vrot.lane.b32.xlu0 %v690, 48
      %v1489 = vpop.permute.xlu0 %1488
      %1490 = vrot.lane.b32.xlu0 %v691, 48
      %v1491 = vpop.permute.xlu0 %1490
      %1556 = vrot.lane.b32.xlu0 %v692, 56
      %v1557 = vpop.permute.xlu0 %1556
      %1558 = vrot.lane.b32.xlu0 %v693, 56
      %v1559 = vpop.permute.xlu0 %1558
      %1560 = vrot.lane.b32.xlu0 %v694, 56
      %v1561 = vpop.permute.xlu0 %1560
      %1562 = vrot.lane.b32.xlu0 %v695, 56
      %v1563 = vpop.permute.xlu0 %1562
      %1564 = vrot.lane.b32.xlu0 %v696, 56
      %v1565 = vpop.permute.xlu0 %1564
      %1566 = vrot.lane.b32.xlu0 %v697, 56
      %v1567 = vpop.permute.xlu0 %1566
      %1568 = vrot.lane.b32.xlu0 %v698, 56
      %v1569 = vpop.permute.xlu0 %1568
      %1570 = vrot.lane.b32.xlu0 %v699, 56
      %v1571 = vpop.permute.xlu0 %1570
      %1572 = vrot.lane.b32.xlu0 %v700, 56
      %v1573 = vpop.permute.xlu0 %1572
      %1574 = vrot.lane.b32.xlu0 %v701, 56
      %v1575 = vpop.permute.xlu0 %1574
      %1576 = vrot.lane.b32.xlu0 %v702, 56
      %v1577 = vpop.permute.xlu0 %1576
      %1578 = vrot.lane.b32.xlu0 %v703, 56
      %v1579 = vpop.permute.xlu0 %1578
      %1580 = vrot.lane.b32.xlu0 %v704, 56
      %v1581 = vpop.permute.xlu0 %1580
      %1582 = vrot.lane.b32.xlu0 %v705, 56
      %v1583 = vpop.permute.xlu0 %1582
      %1584 = vrot.lane.b32.xlu0 %v706, 56
      %v1585 = vpop.permute.xlu0 %1584
      %1586 = vrot.lane.b32.xlu0 %v707, 56
      %v1587 = vpop.permute.xlu0 %1586
      %1588 = vrot.lane.b32.xlu0 %v708, 56
      %v1589 = vpop.permute.xlu0 %1588
      %1590 = vrot.lane.b32.xlu0 %v709, 56
      %v1591 = vpop.permute.xlu0 %1590
      %1592 = vrot.lane.b32.xlu0 %v710, 56
      %v1593 = vpop.permute.xlu0 %1592
      %1594 = vrot.lane.b32.xlu0 %v711, 56
      %v1595 = vpop.permute.xlu0 %1594
      %1596 = vrot.lane.b32.xlu0 %v712, 56
      %v1597 = vpop.permute.xlu0 %1596
      %1598 = vrot.lane.b32.xlu0 %v713, 56
      %v1599 = vpop.permute.xlu0 %1598
      %1600 = vrot.lane.b32.xlu0 %v714, 56
      %v1601 = vpop.permute.xlu0 %1600
      %1602 = vrot.lane.b32.xlu0 %v715, 56
      %v1603 = vpop.permute.xlu0 %1602
      %1604 = vrot.lane.b32.xlu0 %v716, 56
      %v1605 = vpop.permute.xlu0 %1604
      %1606 = vrot.lane.b32.xlu0 %v717, 56
      %v1607 = vpop.permute.xlu0 %1606
      %1608 = vrot.lane.b32.xlu0 %v718, 56
      %v1609 = vpop.permute.xlu0 %1608
      %1610 = vrot.lane.b32.xlu0 %v719, 56
      %v1611 = vpop.permute.xlu0 %1610
      %1612 = vrot.lane.b32.xlu0 %v720, 56
      %v1613 = vpop.permute.xlu0 %1612
      %1614 = vrot.lane.b32.xlu0 %v721, 56
      %v1615 = vpop.permute.xlu0 %1614
      %1616 = vrot.lane.b32.xlu0 %v722, 56
      %v1617 = vpop.permute.xlu0 %1616
      %1618 = vrot.lane.b32.xlu0 %v723, 56
      %v1619 = vpop.permute.xlu0 %1618
      %1684 = vrot.lane.b32.xlu0 %v724, 64
      %v1685 = vpop.permute.xlu0 %1684
      %1686 = vrot.lane.b32.xlu0 %v725, 64
      %v1687 = vpop.permute.xlu0 %1686
      %1688 = vrot.lane.b32.xlu0 %v726, 64
      %v1689 = vpop.permute.xlu0 %1688
      %1690 = vrot.lane.b32.xlu0 %v727, 64
      %v1691 = vpop.permute.xlu0 %1690
      %1692 = vrot.lane.b32.xlu0 %v728, 64
      %v1693 = vpop.permute.xlu0 %1692
      %1694 = vrot.lane.b32.xlu0 %v729, 64
      %v1695 = vpop.permute.xlu0 %1694
      %1696 = vrot.lane.b32.xlu0 %v730, 64
      %v1697 = vpop.permute.xlu0 %1696
      %1698 = vrot.lane.b32.xlu0 %v731, 64
      %v1699 = vpop.permute.xlu0 %1698
      %1700 = vrot.lane.b32.xlu0 %v732, 64
      %v1701 = vpop.permute.xlu0 %1700
      %1702 = vrot.lane.b32.xlu0 %v733, 64
      %v1703 = vpop.permute.xlu0 %1702
      %1704 = vrot.lane.b32.xlu0 %v734, 64
      %v1705 = vpop.permute.xlu0 %1704
      %1706 = vrot.lane.b32.xlu0 %v735, 64
      %v1707 = vpop.permute.xlu0 %1706
      %1708 = vrot.lane.b32.xlu0 %v736, 64
      %v1709 = vpop.permute.xlu0 %1708
      %1710 = vrot.lane.b32.xlu0 %v737, 64
      %v1711 = vpop.permute.xlu0 %1710
      %1712 = vrot.lane.b32.xlu0 %v738, 64
      %v1713 = vpop.permute.xlu0 %1712
      %1714 = vrot.lane.b32.xlu0 %v739, 64
      %v1715 = vpop.permute.xlu0 %1714
      %1716 = vrot.lane.b32.xlu0 %v740, 64
      %v1717 = vpop.permute.xlu0 %1716
      %1718 = vrot.lane.b32.xlu0 %v741, 64
      %v1719 = vpop.permute.xlu0 %1718
      %1720 = vrot.lane.b32.xlu0 %v742, 64
      %v1721 = vpop.permute.xlu0 %1720
      %1722 = vrot.lane.b32.xlu0 %v743, 64
      %v1723 = vpop.permute.xlu0 %1722
      %1724 = vrot.lane.b32.xlu0 %v744, 64
      %v1725 = vpop.permute.xlu0 %1724
      %1726 = vrot.lane.b32.xlu0 %v745, 64
      %v1727 = vpop.permute.xlu0 %1726
      %1728 = vrot.lane.b32.xlu0 %v746, 64
      %v1729 = vpop.permute.xlu0 %1728
      %1730 = vrot.lane.b32.xlu0 %v747, 64
      %v1731 = vpop.permute.xlu0 %1730
      %1732 = vrot.lane.b32.xlu0 %v748, 64
      %v1733 = vpop.permute.xlu0 %1732
      %1734 = vrot.lane.b32.xlu0 %v749, 64
      %v1735 = vpop.permute.xlu0 %1734
      %1736 = vrot.lane.b32.xlu0 %v750, 64
      %v1737 = vpop.permute.xlu0 %1736
      %1738 = vrot.lane.b32.xlu0 %v751, 64
      %v1739 = vpop.permute.xlu0 %1738
      %1740 = vrot.lane.b32.xlu0 %v752, 64
      %v1741 = vpop.permute.xlu0 %1740
      %1742 = vrot.lane.b32.xlu0 %v753, 64
      %v1743 = vpop.permute.xlu0 %1742
      %1744 = vrot.lane.b32.xlu0 %v754, 64
      %v1745 = vpop.permute.xlu0 %1744
      %1746 = vrot.lane.b32.xlu0 %v755, 64
      %v1747 = vpop.permute.xlu0 %1746
      %v1780 = vsel %vm378, %v467, %v789
      %v1781 = vsel %vm378, %v468, %v791
      %v1782 = vsel %vm378, %v469, %v793
      %v1783 = vsel %vm378, %v470, %v795
      %v1784 = vsel %vm378, %v471, %v797
      %v1785 = vsel %vm378, %v472, %v799
      %v1786 = vsel %vm378, %v473, %v801
      %v1787 = vsel %vm378, %v474, %v803
      %v1788 = vsel %vm378, %v475, %v805
      %v1789 = vsel %vm378, %v476, %v807
      %v1790 = vsel %vm378, %v477, %v809
      %v1791 = vsel %vm378, %v478, %v811
      %v1792 = vsel %vm378, %v479, %v813
      %v1793 = vsel %vm378, %v480, %v815
      %v1794 = vsel %vm378, %v481, %v817
      %v1795 = vsel %vm378, %v482, %v819
      %v1796 = vsel %vm378, %v483, %v821
      %v1797 = vsel %vm378, %v484, %v823
      %v1798 = vsel %vm378, %v485, %v825
      %v1799 = vsel %vm378, %v486, %v827
      %v1800 = vsel %vm378, %v487, %v829
      %v1801 = vsel %vm378, %v488, %v831
      %v1802 = vsel %vm378, %v489, %v833
      %v1803 = vsel %vm378, %v490, %v835
      %v1804 = vsel %vm378, %v491, %v837
      %v1805 = vsel %vm378, %v492, %v839
      %v1806 = vsel %vm378, %v493, %v841
      %v1807 = vsel %vm378, %v494, %v843
      %v1808 = vsel %vm378, %v495, %v845
      %v1809 = vsel %vm378, %v496, %v847
      %v1810 = vsel %vm378, %v497, %v849
      %v1811 = vsel %vm378, %v498, %v851
      %vm1812 = vcmask 130048
      %v1813 = vsel %vm1812, %v1780, %v917
      %v1814 = vsel %vm1812, %v1781, %v919
      %v1815 = vsel %vm1812, %v1782, %v921
      %v1816 = vsel %vm1812, %v1783, %v923
      %v1817 = vsel %vm1812, %v1784, %v925
      %v1818 = vsel %vm1812, %v1785, %v927
      %v1819 = vsel %vm1812, %v1786, %v929
      %v1820 = vsel %vm1812, %v1787, %v931
      %v1821 = vsel %vm1812, %v1788, %v933
      %v1822 = vsel %vm1812, %v1789, %v935
      %v1823 = vsel %vm1812, %v1790, %v937
      %v1824 = vsel %vm1812, %v1791, %v939
      %v1825 = vsel %vm1812, %v1792, %v941
      %v1826 = vsel %vm1812, %v1793, %v943
      %v1827 = vsel %vm1812, %v1794, %v945
      %v1828 = vsel %vm1812, %v1795, %v947
      %v1829 = vsel %vm1812, %v1796, %v949
      %v1830 = vsel %vm1812, %v1797, %v951
      %v1831 = vsel %vm1812, %v1798, %v953
      %v1832 = vsel %vm1812, %v1799, %v955
      %v1833 = vsel %vm1812, %v1800, %v957
      %v1834 = vsel %vm1812, %v1801, %v959
      %v1835 = vsel %vm1812, %v1802, %v961
      %v1836 = vsel %vm1812, %v1803, %v963
      %v1837 = vsel %vm1812, %v1804, %v965
      %v1838 = vsel %vm1812, %v1805, %v967
      %v1839 = vsel %vm1812, %v1806, %v969
      %v1840 = vsel %vm1812, %v1807, %v971
      %v1841 = vsel %vm1812, %v1808, %v973
      %v1842 = vsel %vm1812, %v1809, %v975
      %v1843 = vsel %vm1812, %v1810, %v977
      %v1844 = vsel %vm1812, %v1811, %v979
      %vm1845 = vcmask 195584
      %v1846 = vsel %vm1845, %v1813, %v1045
      %v1847 = vsel %vm1845, %v1814, %v1047
      %v1848 = vsel %vm1845, %v1815, %v1049
      %v1849 = vsel %vm1845, %v1816, %v1051
      %v1850 = vsel %vm1845, %v1817, %v1053
      %v1851 = vsel %vm1845, %v1818, %v1055
      %v1852 = vsel %vm1845, %v1819, %v1057
      %v1853 = vsel %vm1845, %v1820, %v1059
      %v1854 = vsel %vm1845, %v1821, %v1061
      %v1855 = vsel %vm1845, %v1822, %v1063
      %v1856 = vsel %vm1845, %v1823, %v1065
      %v1857 = vsel %vm1845, %v1824, %v1067
      %v1858 = vsel %vm1845, %v1825, %v1069
      %v1859 = vsel %vm1845, %v1826, %v1071
      %v1860 = vsel %vm1845, %v1827, %v1073
      %v1861 = vsel %vm1845, %v1828, %v1075
      %v1862 = vsel %vm1845, %v1829, %v1077
      %v1863 = vsel %vm1845, %v1830, %v1079
      %v1864 = vsel %vm1845, %v1831, %v1081
      %v1865 = vsel %vm1845, %v1832, %v1083
      %v1866 = vsel %vm1845, %v1833, %v1085
      %v1867 = vsel %vm1845, %v1834, %v1087
      %v1868 = vsel %vm1845, %v1835, %v1089
      %v1869 = vsel %vm1845, %v1836, %v1091
      %v1870 = vsel %vm1845, %v1837, %v1093
      %v1871 = vsel %vm1845, %v1838, %v1095
      %v1872 = vsel %vm1845, %v1839, %v1097
      %v1873 = vsel %vm1845, %v1840, %v1099
      %v1874 = vsel %vm1845, %v1841, %v1101
      %v1875 = vsel %vm1845, %v1842, %v1103
      %v1876 = vsel %vm1845, %v1843, %v1105
      %v1877 = vsel %vm1845, %v1844, %v1107
      %vm1878 = vcmask 261120
      %v1879 = vsel %vm1878, %v1846, %v1173
      %v1880 = vsel %vm1878, %v1847, %v1175
      %v1881 = vsel %vm1878, %v1848, %v1177
      %v1882 = vsel %vm1878, %v1849, %v1179
      %v1883 = vsel %vm1878, %v1850, %v1181
      %v1884 = vsel %vm1878, %v1851, %v1183
      %v1885 = vsel %vm1878, %v1852, %v1185
      %v1886 = vsel %vm1878, %v1853, %v1187
      %v1887 = vsel %vm1878, %v1854, %v1189
      %v1888 = vsel %vm1878, %v1855, %v1191
      %v1889 = vsel %vm1878, %v1856, %v1193
      %v1890 = vsel %vm1878, %v1857, %v1195
      %v1891 = vsel %vm1878, %v1858, %v1197
      %v1892 = vsel %vm1878, %v1859, %v1199
      %v1893 = vsel %vm1878, %v1860, %v1201
      %v1894 = vsel %vm1878, %v1861, %v1203
      %v1895 = vsel %vm1878, %v1862, %v1205
      %v1896 = vsel %vm1878, %v1863, %v1207
      %v1897 = vsel %vm1878, %v1864, %v1209
      %v1898 = vsel %vm1878, %v1865, %v1211
      %v1899 = vsel %vm1878, %v1866, %v1213
      %v1900 = vsel %vm1878, %v1867, %v1215
      %v1901 = vsel %vm1878, %v1868, %v1217
      %v1902 = vsel %vm1878, %v1869, %v1219
      %v1903 = vsel %vm1878, %v1870, %v1221
      %v1904 = vsel %vm1878, %v1871, %v1223
      %v1905 = vsel %vm1878, %v1872, %v1225
      %v1906 = vsel %vm1878, %v1873, %v1227
      %v1907 = vsel %vm1878, %v1874, %v1229
      %v1908 = vsel %vm1878, %v1875, %v1231
      %v1909 = vsel %vm1878, %v1876, %v1233
      %v1910 = vsel %vm1878, %v1877, %v1235
      %vm1911 = vcmask 326656
      %v1912 = vsel %vm1911, %v1879, %v1301
      %v1913 = vsel %vm1911, %v1880, %v1303
      %v1914 = vsel %vm1911, %v1881, %v1305
      %v1915 = vsel %vm1911, %v1882, %v1307
      %v1916 = vsel %vm1911, %v1883, %v1309
      %v1917 = vsel %vm1911, %v1884, %v1311
      %v1918 = vsel %vm1911, %v1885, %v1313
      %v1919 = vsel %vm1911, %v1886, %v1315
      %v1920 = vsel %vm1911, %v1887, %v1317
      %v1921 = vsel %vm1911, %v1888, %v1319
      %v1922 = vsel %vm1911, %v1889, %v1321
      %v1923 = vsel %vm1911, %v1890, %v1323
      %v1924 = vsel %vm1911, %v1891, %v1325
      %v1925 = vsel %vm1911, %v1892, %v1327
      %v1926 = vsel %vm1911, %v1893, %v1329
      %v1927 = vsel %vm1911, %v1894, %v1331
      %v1928 = vsel %vm1911, %v1895, %v1333
      %v1929 = vsel %vm1911, %v1896, %v1335
      %v1930 = vsel %vm1911, %v1897, %v1337
      %v1931 = vsel %vm1911, %v1898, %v1339
      %v1932 = vsel %vm1911, %v1899, %v1341
      %v1933 = vsel %vm1911, %v1900, %v1343
      %v1934 = vsel %vm1911, %v1901, %v1345
      %v1935 = vsel %vm1911, %v1902, %v1347
      %v1936 = vsel %vm1911, %v1903, %v1349
      %v1937 = vsel %vm1911, %v1904, %v1351
      %v1938 = vsel %vm1911, %v1905, %v1353
      %v1939 = vsel %vm1911, %v1906, %v1355
      %v1940 = vsel %vm1911, %v1907, %v1357
      %v1941 = vsel %vm1911, %v1908, %v1359
      %v1942 = vsel %vm1911, %v1909, %v1361
      %v1943 = vsel %vm1911, %v1910, %v1363
      %vm1944 = vcmask 392192
      %v1945 = vsel %vm1944, %v1912, %v1429
      %v1946 = vsel %vm1944, %v1913, %v1431
      %v1947 = vsel %vm1944, %v1914, %v1433
      %v1948 = vsel %vm1944, %v1915, %v1435
      %v1949 = vsel %vm1944, %v1916, %v1437
      %v1950 = vsel %vm1944, %v1917, %v1439
      %v1951 = vsel %vm1944, %v1918, %v1441
      %v1952 = vsel %vm1944, %v1919, %v1443
      %v1953 = vsel %vm1944, %v1920, %v1445
      %v1954 = vsel %vm1944, %v1921, %v1447
      %v1955 = vsel %vm1944, %v1922, %v1449
      %v1956 = vsel %vm1944, %v1923, %v1451
      %v1957 = vsel %vm1944, %v1924, %v1453
      %v1958 = vsel %vm1944, %v1925, %v1455
      %v1959 = vsel %vm1944, %v1926, %v1457
      %v1960 = vsel %vm1944, %v1927, %v1459
      %v1961 = vsel %vm1944, %v1928, %v1461
      %v1962 = vsel %vm1944, %v1929, %v1463
      %v1963 = vsel %vm1944, %v1930, %v1465
      %v1964 = vsel %vm1944, %v1931, %v1467
      %v1965 = vsel %vm1944, %v1932, %v1469
      %v1966 = vsel %vm1944, %v1933, %v1471
      %v1967 = vsel %vm1944, %v1934, %v1473
      %v1968 = vsel %vm1944, %v1935, %v1475
      %v1969 = vsel %vm1944, %v1936, %v1477
      %v1970 = vsel %vm1944, %v1937, %v1479
      %v1971 = vsel %vm1944, %v1938, %v1481
      %v1972 = vsel %vm1944, %v1939, %v1483
      %v1973 = vsel %vm1944, %v1940, %v1485
      %v1974 = vsel %vm1944, %v1941, %v1487
      %v1975 = vsel %vm1944, %v1942, %v1489
      %v1976 = vsel %vm1944, %v1943, %v1491
      %vm1977 = vcmask 457728
      %v1978 = vsel %vm1977, %v1945, %v1557
      %v1979 = vsel %vm1977, %v1946, %v1559
      %v1980 = vsel %vm1977, %v1947, %v1561
      %v1981 = vsel %vm1977, %v1948, %v1563
      %v1982 = vsel %vm1977, %v1949, %v1565
      %v1983 = vsel %vm1977, %v1950, %v1567
      %v1984 = vsel %vm1977, %v1951, %v1569
      %v1985 = vsel %vm1977, %v1952, %v1571
      %v1986 = vsel %vm1977, %v1953, %v1573
      %v1987 = vsel %vm1977, %v1954, %v1575
      %v1988 = vsel %vm1977, %v1955, %v1577
      %v1989 = vsel %vm1977, %v1956, %v1579
      %v1990 = vsel %vm1977, %v1957, %v1581
      %v1991 = vsel %vm1977, %v1958, %v1583
      %v1992 = vsel %vm1977, %v1959, %v1585
      %v1993 = vsel %vm1977, %v1960, %v1587
      %v1994 = vsel %vm1977, %v1961, %v1589
      %v1995 = vsel %vm1977, %v1962, %v1591
      %v1996 = vsel %vm1977, %v1963, %v1593
      %v1997 = vsel %vm1977, %v1964, %v1595
      %v1998 = vsel %vm1977, %v1965, %v1597
      %v1999 = vsel %vm1977, %v1966, %v1599
      %v2000 = vsel %vm1977, %v1967, %v1601
      %v2001 = vsel %vm1977, %v1968, %v1603
      %v2002 = vsel %vm1977, %v1969, %v1605
      %v2003 = vsel %vm1977, %v1970, %v1607
      %v2004 = vsel %vm1977, %v1971, %v1609
      %v2005 = vsel %vm1977, %v1972, %v1611
      %v2006 = vsel %vm1977, %v1973, %v1613
      %v2007 = vsel %vm1977, %v1974, %v1615
      %v2008 = vsel %vm1977, %v1975, %v1617
      %v2009 = vsel %vm1977, %v1976, %v1619
      %vm2010 = vcmask 523264
      %v2011 = vsel %vm2010, %v1978, %v1685
      %v2012 = vsel %vm2010, %v1979, %v1687
      %v2013 = vsel %vm2010, %v1980, %v1689
      %v2014 = vsel %vm2010, %v1981, %v1691
      %v2015 = vsel %vm2010, %v1982, %v1693
      %v2016 = vsel %vm2010, %v1983, %v1695
      %v2017 = vsel %vm2010, %v1984, %v1697
      %v2018 = vsel %vm2010, %v1985, %v1699
      %v2019 = vsel %vm2010, %v1986, %v1701
      %v2020 = vsel %vm2010, %v1987, %v1703
      %v2021 = vsel %vm2010, %v1988, %v1705
      %v2022 = vsel %vm2010, %v1989, %v1707
      %v2023 = vsel %vm2010, %v1990, %v1709
      %v2024 = vsel %vm2010, %v1991, %v1711
      %v2025 = vsel %vm2010, %v1992, %v1713
      %v2026 = vsel %vm2010, %v1993, %v1715
      %v2027 = vsel %vm2010, %v1994, %v1717
      %v2028 = vsel %vm2010, %v1995, %v1719
      %v2029 = vsel %vm2010, %v1996, %v1721
      %v2030 = vsel %vm2010, %v1997, %v1723
      %v2031 = vsel %vm2010, %v1998, %v1725
      %v2032 = vsel %vm2010, %v1999, %v1727
      %v2033 = vsel %vm2010, %v2000, %v1729
      %v2034 = vsel %vm2010, %v2001, %v1731
      %v2035 = vsel %vm2010, %v2002, %v1733
      %v2036 = vsel %vm2010, %v2003, %v1735
      %v2037 = vsel %vm2010, %v2004, %v1737
      %v2038 = vsel %vm2010, %v2005, %v1739
      %v2039 = vsel %vm2010, %v2006, %v1741
      %v2040 = vsel %vm2010, %v2007, %v1743
      %v2041 = vsel %vm2010, %v2008, %v1745
      %v2042 = vsel %vm2010, %v2009, %v1747
      %v2043 = vld [vmem:[%s1] sm:$0xff]
      %v2044 = vld [vmem:[%s1 + $0x8] sm:$0xff]
      %v2045 = vld [vmem:[%s1 + $0x10] sm:$0xff]
      %v2046 = vld [vmem:[%s1 + $0x18] sm:$0xff]
      %v2047 = vld [vmem:[%s1 + $0x20] sm:$0xff]
      %v2048 = vld [vmem:[%s1 + $0x28] sm:$0xff]
      %v2049 = vld [vmem:[%s1 + $0x30] sm:$0xff]
      %v2050 = vld [vmem:[%s1 + $0x38] sm:$0xff]
      %v2051 = vld [vmem:[%s1 + $0x40] sm:$0xff]
      %vm2052 = vcmask 588800
      %v2054 = vsel %vm2052, %v2011, 0
      %v2057 = vsel %vm2052, %v2012, 0
      %v2060 = vsel %vm2052, %v2013, 0
      %v2063 = vsel %vm2052, %v2014, 0
      %v2066 = vsel %vm2052, %v2015, 0
      %v2069 = vsel %vm2052, %v2016, 0
      %v2072 = vsel %vm2052, %v2017, 0
      %v2075 = vsel %vm2052, %v2018, 0
      %v2078 = vsel %vm2052, %v2019, 0
      %v2081 = vsel %vm2052, %v2020, 0
      %v2084 = vsel %vm2052, %v2021, 0
      %v2087 = vsel %vm2052, %v2022, 0
      %v2090 = vsel %vm2052, %v2023, 0
      %v2093 = vsel %vm2052, %v2024, 0
      %v2096 = vsel %vm2052, %v2025, 0
      %v2099 = vsel %vm2052, %v2026, 0
      %v2102 = vsel %vm2052, %v2027, 0
      %v2105 = vsel %vm2052, %v2028, 0
      %v2108 = vsel %vm2052, %v2029, 0
      %v2111 = vsel %vm2052, %v2030, 0
      %v2114 = vsel %vm2052, %v2031, 0
      %v2117 = vsel %vm2052, %v2032, 0
      %v2120 = vsel %vm2052, %v2033, 0
      %v2123 = vsel %vm2052, %v2034, 0
      %v2126 = vsel %vm2052, %v2035, 0
      %v2129 = vsel %vm2052, %v2036, 0
      %v2132 = vsel %vm2052, %v2037, 0
      %v2135 = vsel %vm2052, %v2038, 0
      %v2138 = vsel %vm2052, %v2039, 0
      %v2141 = vsel %vm2052, %v2040, 0
      %v2144 = vsel %vm2052, %v2041, 0
      %v2147 = vsel %vm2052, %v2042, 0
      %2149 = vmatprep.subr.mxu0 0.0
      %2150 = vmatpush1.msra.mxu0 %v2043
      %2151 = vmatprep.subr.mxu0 0.0
      %2152 = vmatpush1.msra.mxu0 %v2044
      %2153 = vmatprep.subr.mxu0 0.0
      %2154 = vmatpush1.msra.mxu0 %v2045
      %2155 = vmatprep.subr.mxu0 0.0
      %2156 = vmatpush1.msra.mxu0 %v2046
      %2157 = vmatprep.subr.mxu0 0.0
      %2158 = vmatpush1.msra.mxu0 %v2047
      %2159 = vmatprep.subr.mxu0 0.0
      %2160 = vmatpush1.msra.mxu0 %v2048
      %2161 = vmatprep.subr.mxu0 0.0
      %2162 = vmatpush1.msra.mxu0 %v2049
      %2163 = vmatprep.subr.mxu0 0.0
      %2164 = vmatpush1.msra.mxu0 %v2050
      %2165 = vmatprep.subr.mxu0 0.0
      %2166 = vmatpush1.msra.mxu0 %v2051
      %2167 = vmatprep.subr.mxu0 0.0
      %2168 = vmatpush1.msra.mxu0 0.0
      %2169 = vmatprep.subr.mxu0 0.0
      %2170 = vmatpush1.msra.mxu0 0.0
      %2171 = vmatprep.subr.mxu0 0.0
      %2172 = vmatpush1.msra.mxu0 0.0
      %2173 = vmatprep.subr.mxu0 0.0
      %2174 = vmatpush1.msra.mxu0 0.0
      %2175 = vmatprep.subr.mxu0 0.0
      %2176 = vmatpush1.msra.mxu0 0.0
      %2177 = vmatprep.subr.mxu0 0.0
      %2178 = vmatpush1.msra.mxu0 0.0
      %2179 = vmatprep.subr.mxu0 0.0
      %2180 = vmatpush1.msra.mxu0 0.0
      %2181 = vmatprep.subr.mxu0 0.0
      %2182 = vmatpush1.msra.mxu0 0.0
      %2183 = vmatprep.subr.mxu0 0.0
      %2184 = vmatpush1.msra.mxu0 0.0
      %2185 = vmatprep.subr.mxu0 0.0
      %2186 = vmatpush1.msra.mxu0 0.0
      %2187 = vmatprep.subr.mxu0 0.0
      %2188 = vmatpush1.msra.mxu0 0.0
      %2189 = vmatprep.subr.mxu0 0.0
      %2190 = vmatpush1.msra.mxu0 0.0
      %2191 = vmatprep.subr.mxu0 0.0
      %2192 = vmatpush1.msra.mxu0 0.0
      %2193 = vmatprep.subr.mxu0 0.0
      %2194 = vmatpush1.msra.mxu0 0.0
      %2195 = vmatprep.subr.mxu0 0.0
      %2196 = vmatpush1.msra.mxu0 0.0
      %2197 = vmatprep.subr.mxu0 0.0
      %2198 = vmatpush1.msra.mxu0 0.0
      %2199 = vmatprep.subr.mxu0 0.0
      %2200 = vmatpush1.msra.mxu0 0.0
      %2201 = vmatprep.subr.mxu0 0.0
      %2202 = vmatpush1.msra.mxu0 0.0
      %2203 = vmatprep.subr.mxu0 0.0
      %2204 = vmatpush1.msra.mxu0 0.0
      %2205 = vmatprep.subr.mxu0 0.0
      %2206 = vmatpush1.msra.mxu0 0.0
      %2207 = vmatprep.subr.mxu0 0.0
      %2208 = vmatpush1.msra.mxu0 0.0
      %2209 = vmatprep.subr.mxu0 0.0
      %2210 = vmatpush1.msra.mxu0 0.0
      %2211 = vmatprep.subr.mxu0 0.0
      %2212 = vmatpush1.msra.mxu0 0.0
      %2213 = vmatprep.mubr.f32.mxu0 0.0
      %2214 = vmatmul.mubr.f32.gmra.mrb[0].mxu0 %v2054
      %v2215 = vpop.f32.mrb[0].mxu0
      %v2216 = vadd.f32 0.0, %v2215
      %v2217 = vpop.f32.mrb[0].mxu0
      %2218 = vmatprep.mubr.f32.mxu0 0.0
      %2219 = vmatmul.mubr.f32.gmra.mrb[0].mxu0 %v2057
      %v2220 = vpop.f32.mrb[0].mxu0
      %v2221 = vadd.f32 0.0, %v2220
      %v2222 = vpop.f32.mrb[0].mxu0
      %2223 = vmatprep.mubr.f32.mxu0 0.0
      %2224 = vmatmul.mubr.f32.gmra.mrb[0].mxu0 %v2060
      %v2225 = vpop.f32.mrb[0].mxu0
      %v2226 = vadd.f32 0.0, %v2225
      %v2227 = vpop.f32.mrb[0].mxu0
      %2228 = vmatprep.mubr.f32.mxu0 0.0
      %2229 = vmatmul.mubr.f32.gmra.mrb[0].mxu0 %v2063
      %v2230 = vpop.f32.mrb[0].mxu0
      %v2231 = vadd.f32 0.0, %v2230
      %v2232 = vpop.f32.mrb[0].mxu0
      %2233 = vmatprep.mubr.f32.mxu0 0.0
      %2234 = vmatmul.mubr.f32.gmra.mrb[0].mxu0 %v2066
      %v2235 = vpop.f32.mrb[0].mxu0
      %v2236 = vadd.f32 0.0, %v2235
      %v2237 = vpop.f32.mrb[0].mxu0
      %2238 = vmatprep.mubr.f32.mxu0 0.0
      %2239 = vmatmul.mubr.f32.gmra.mrb[0].mxu0 %v2069
      %v2240 = vpop.f32.mrb[0].mxu0
      %v2241 = vadd.f32 0.0, %v2240
      %v2242 = vpop.f32.mrb[0].mxu0
      %2243 = vmatprep.mubr.f32.mxu0 0.0
      %2244 = vmatmul.mubr.f32.gmra.mrb[0].mxu0 %v2072
      %v2245 = vpop.f32.mrb[0].mxu0
      %v2246 = vadd.f32 0.0, %v2245
      %v2247 = vpop.f32.mrb[0].mxu0
      %2248 = vmatprep.mubr.f32.mxu0 0.0
      %2249 = vmatmul.mubr.f32.gmra.mrb[0].mxu0 %v2075
      %v2250 = vpop.f32.mrb[0].mxu0
      %v2251 = vadd.f32 0.0, %v2250
      %v2252 = vpop.f32.mrb[0].mxu0
      %2253 = vmatprep.mubr.f32.mxu0 0.0
      %2254 = vmatmul.mubr.f32.gmra.mrb[0].mxu0 %v2078
      %v2255 = vpop.f32.mrb[0].mxu0
      %v2256 = vadd.f32 0.0, %v2255
      %v2257 = vpop.f32.mrb[0].mxu0
      %2258 = vmatprep.mubr.f32.mxu0 0.0
      %2259 = vmatmul.mubr.f32.gmra.mrb[0].mxu0 %v2081
      %v2260 = vpop.f32.mrb[0].mxu0
      %v2261 = vadd.f32 0.0, %v2260
      %v2262 = vpop.f32.mrb[0].mxu0
      %2263 = vmatprep.mubr.f32.mxu0 0.0
      %2264 = vmatmul.mubr.f32.gmra.mrb[0].mxu0 %v2084
      %v2265 = vpop.f32.mrb[0].mxu0
      %v2266 = vadd.f32 0.0, %v2265
      %v2267 = vpop.f32.mrb[0].mxu0
      %2268 = vmatprep.mubr.f32.mxu0 0.0
      %2269 = vmatmul.mubr.f32.gmra.mrb[0].mxu0 %v2087
      %v2270 = vpop.f32.mrb[0].mxu0
      %v2271 = vadd.f32 0.0, %v2270
      %v2272 = vpop.f32.mrb[0].mxu0
      %2273 = vmatprep.mubr.f32.mxu0 0.0
      %2274 = vmatmul.mubr.f32.gmra.mrb[0].mxu0 %v2090
      %v2275 = vpop.f32.mrb[0].mxu0
      %v2276 = vadd.f32 0.0, %v2275
      %v2277 = vpop.f32.mrb[0].mxu0
      %2278 = vmatprep.mubr.f32.mxu0 0.0
      %2279 = vmatmul.mubr.f32.gmra.mrb[0].mxu0 %v2093
      %v2280 = vpop.f32.mrb[0].mxu0
      %v2281 = vadd.f32 0.0, %v2280
      %v2282 = vpop.f32.mrb[0].mxu0
      %2283 = vmatprep.mubr.f32.mxu0 0.0
      %2284 = vmatmul.mubr.f32.gmra.mrb[0].mxu0 %v2096
      %v2285 = vpop.f32.mrb[0].mxu0
      %v2286 = vadd.f32 0.0, %v2285
      %v2287 = vpop.f32.mrb[0].mxu0
      %2288 = vmatprep.mubr.f32.mxu0 0.0
      %2289 = vmatmul.mubr.f32.gmra.mrb[0].mxu0 %v2099
      %v2290 = vpop.f32.mrb[0].mxu0
      %v2291 = vadd.f32 0.0, %v2290
      %v2292 = vpop.f32.mrb[0].mxu0
      %2293 = vmatprep.mubr.f32.mxu0 0.0
      %2294 = vmatmul.mubr.f32.gmra.mrb[0].mxu0 %v2102
      %v2295 = vpop.f32.mrb[0].mxu0
      %v2296 = vadd.f32 0.0, %v2295
      %v2297 = vpop.f32.mrb[0].mxu0
      %2298 = vmatprep.mubr.f32.mxu0 0.0
      %2299 = vmatmul.mubr.f32.gmra.mrb[0].mxu0 %v2105
      %v2300 = vpop.f32.mrb[0].mxu0
      %v2301 = vadd.f32 0.0, %v2300
      %v2302 = vpop.f32.mrb[0].mxu0
      %2303 = vmatprep.mubr.f32.mxu0 0.0
      %2304 = vmatmul.mubr.f32.gmra.mrb[0].mxu0 %v2108
      %v2305 = vpop.f32.mrb[0].mxu0
      %v2306 = vadd.f32 0.0, %v2305
      %v2307 = vpop.f32.mrb[0].mxu0
      %2308 = vmatprep.mubr.f32.mxu0 0.0
      %2309 = vmatmul.mubr.f32.gmra.mrb[0].mxu0 %v2111
      %v2310 = vpop.f32.mrb[0].mxu0
      %v2311 = vadd.f32 0.0, %v2310
      %v2312 = vpop.f32.mrb[0].mxu0
      %2313 = vmatprep.mubr.f32.mxu0 0.0
      %2314 = vmatmul.mubr.f32.gmra.mrb[0].mxu0 %v2114
      %v2315 = vpop.f32.mrb[0].mxu0
      %v2316 = vadd.f32 0.0, %v2315
      %v2317 = vpop.f32.mrb[0].mxu0
      %2318 = vmatprep.mubr.f32.mxu0 0.0
      %2319 = vmatmul.mubr.f32.gmra.mrb[0].mxu0 %v2117
      %v2320 = vpop.f32.mrb[0].mxu0
      %v2321 = vadd.f32 0.0, %v2320
      %v2322 = vpop.f32.mrb[0].mxu0
      %2323 = vmatprep.mubr.f32.mxu0 0.0
      %2324 = vmatmul.mubr.f32.gmra.mrb[0].mxu0 %v2120
      %v2325 = vpop.f32.mrb[0].mxu0
      %v2326 = vadd.f32 0.0, %v2325
      %v2327 = vpop.f32.mrb[0].mxu0
      %2328 = vmatprep.mubr.f32.mxu0 0.0
      %2329 = vmatmul.mubr.f32.gmra.mrb[0].mxu0 %v2123
      %v2330 = vpop.f32.mrb[0].mxu0
      %v2331 = vadd.f32 0.0, %v2330
      %v2332 = vpop.f32.mrb[0].mxu0
      %2333 = vmatprep.mubr.f32.mxu0 0.0
      %2334 = vmatmul.mubr.f32.gmra.mrb[0].mxu0 %v2126
      %v2335 = vpop.f32.mrb[0].mxu0
      %v2336 = vadd.f32 0.0, %v2335
      %v2337 = vpop.f32.mrb[0].mxu0
      %2338 = vmatprep.mubr.f32.mxu0 0.0
      %2339 = vmatmul.mubr.f32.gmra.mrb[0].mxu0 %v2129
      %v2340 = vpop.f32.mrb[0].mxu0
      %v2341 = vadd.f32 0.0, %v2340
      %v2342 = vpop.f32.mrb[0].mxu0
      %2343 = vmatprep.mubr.f32.mxu0 0.0
      %2344 = vmatmul.mubr.f32.gmra.mrb[0].mxu0 %v2132
      %v2345 = vpop.f32.mrb[0].mxu0
      %v2346 = vadd.f32 0.0, %v2345
      %v2347 = vpop.f32.mrb[0].mxu0
      %2348 = vmatprep.mubr.f32.mxu0 0.0
      %2349 = vmatmul.mubr.f32.gmra.mrb[0].mxu0 %v2135
      %v2350 = vpop.f32.mrb[0].mxu0
      %v2351 = vadd.f32 0.0, %v2350
      %v2352 = vpop.f32.mrb[0].mxu0
      %2353 = vmatprep.mubr.f32.mxu0 0.0
      %2354 = vmatmul.mubr.f32.gmra.mrb[0].mxu0 %v2138
      %v2355 = vpop.f32.mrb[0].mxu0
      %v2356 = vadd.f32 0.0, %v2355
      %v2357 = vpop.f32.mrb[0].mxu0
      %2358 = vmatprep.mubr.f32.mxu0 0.0
      %2359 = vmatmul.mubr.f32.gmra.mrb[0].mxu0 %v2141
      %v2360 = vpop.f32.mrb[0].mxu0
      %v2361 = vadd.f32 0.0, %v2360
      %v2362 = vpop.f32.mrb[0].mxu0
      %2363 = vmatprep.mubr.f32.mxu0 0.0
      %2364 = vmatmul.mubr.f32.gmra.mrb[0].mxu0 %v2144
      %v2365 = vpop.f32.mrb[0].mxu0
      %v2366 = vadd.f32 0.0, %v2365
      %v2367 = vpop.f32.mrb[0].mxu0
      %2368 = vmatprep.mubr.f32.mxu0 0.0
      %2369 = vmatmul.mubr.f32.gmra.mrb[0].mxu0 %v2147
      %v2370 = vpop.f32.mrb[0].mxu0
      %v2371 = vadd.f32 0.0, %v2370
      %v2372 = vpop.f32.mrb[0].mxu0
      %2373 = vdwg.mxu0
      %v2374 = vsel %vm378, %v2216, 0.0
      %v2375 = vsel %vm378, %v2221, 0.0
      %v2376 = vadd.f32 %v2374, %v2375
      %v2377 = vsel %vm378, %v2226, 0.0
      %v2378 = vadd.f32 %v2376, %v2377
      %v2379 = vsel %vm378, %v2231, 0.0
      %v2380 = vadd.f32 %v2378, %v2379
      %v2381 = vsel %vm378, %v2236, 0.0
      %v2382 = vadd.f32 %v2380, %v2381
      %v2383 = vsel %vm378, %v2241, 0.0
      %v2384 = vadd.f32 %v2382, %v2383
      %v2385 = vsel %vm378, %v2246, 0.0
      %v2386 = vadd.f32 %v2384, %v2385
      %v2387 = vsel %vm378, %v2251, 0.0
      %v2388 = vadd.f32 %v2386, %v2387
      %v2389 = vsel %vm378, %v2256, 0.0
      %v2390 = vadd.f32 %v2388, %v2389
      %v2391 = vsel %vm378, %v2261, 0.0
      %v2392 = vadd.f32 %v2390, %v2391
      %v2393 = vsel %vm378, %v2266, 0.0
      %v2394 = vadd.f32 %v2392, %v2393
      %v2395 = vsel %vm378, %v2271, 0.0
      %v2396 = vadd.f32 %v2394, %v2395
      %v2397 = vsel %vm378, %v2276, 0.0
      %v2398 = vadd.f32 %v2396, %v2397
      %v2399 = vsel %vm378, %v2281, 0.0
      %v2400 = vadd.f32 %v2398, %v2399
      %v2401 = vsel %vm378, %v2286, 0.0
      %v2402 = vadd.f32 %v2400, %v2401
      %v2403 = vsel %vm378, %v2291, 0.0
      %v2404 = vadd.f32 %v2402, %v2403
      %v2405 = vsel %vm378, %v2296, 0.0
      %v2406 = vadd.f32 %v2404, %v2405
      %v2407 = vsel %vm378, %v2301, 0.0
      %v2408 = vadd.f32 %v2406, %v2407
      %v2409 = vsel %vm378, %v2306, 0.0
      %v2410 = vadd.f32 %v2408, %v2409
      %v2411 = vsel %vm378, %v2311, 0.0
      %v2412 = vadd.f32 %v2410, %v2411
      %v2413 = vsel %vm378, %v2316, 0.0
      %v2414 = vadd.f32 %v2412, %v2413
      %v2415 = vsel %vm378, %v2321, 0.0
      %v2416 = vadd.f32 %v2414, %v2415
      %v2417 = vsel %vm378, %v2326, 0.0
      %v2418 = vadd.f32 %v2416, %v2417
      %v2419 = vsel %vm378, %v2331, 0.0
      %v2420 = vadd.f32 %v2418, %v2419
      %v2421 = vsel %vm378, %v2336, 0.0
      %v2422 = vadd.f32 %v2420, %v2421
      %v2423 = vsel %vm378, %v2341, 0.0
      %v2424 = vadd.f32 %v2422, %v2423
      %v2425 = vsel %vm378, %v2346, 0.0
      %v2426 = vadd.f32 %v2424, %v2425
      %v2427 = vsel %vm378, %v2351, 0.0
      %v2428 = vadd.f32 %v2426, %v2427
      %v2429 = vsel %vm378, %v2356, 0.0
      %v2430 = vadd.f32 %v2428, %v2429
      %v2431 = vsel %vm378, %v2361, 0.0
      %v2432 = vadd.f32 %v2430, %v2431
      %v2433 = vsel %vm378, %v2366, 0.0
      %v2434 = vadd.f32 %v2432, %v2433
      %v2435 = vsel %vm378, %v2371, 0.0
      %v2436 = vadd.f32 %v2434, %v2435
      %v2437 = vrot.slane %v2436, 4
      %v2438 = vadd.f32 %v2436, %v2437
      %v2439 = vrot.slane %v2438, 2
      %v2440 = vadd.f32 %v2438, %v2439
      %v2441 = vrot.slane %v2440, 1
      %v2442 = vadd.f32 %v2440, %v2441
      %vm2443 = vcmask 57344
      %2444 = vst.msk [vmem:[%s235] sm:$0x1] %vm2443, %v2442
      %v2445 = vmul.f32 %v2216, %v2216
      %v2446 = vmul.f32 %v2221, %v2221
      %v2447 = vmul.f32 %v2226, %v2226
      %v2448 = vmul.f32 %v2231, %v2231
      %v2449 = vmul.f32 %v2236, %v2236
      %v2450 = vmul.f32 %v2241, %v2241
      %v2451 = vmul.f32 %v2246, %v2246
      %v2452 = vmul.f32 %v2251, %v2251
      %v2453 = vmul.f32 %v2256, %v2256
      %v2454 = vmul.f32 %v2261, %v2261
      %v2455 = vmul.f32 %v2266, %v2266
      %v2456 = vmul.f32 %v2271, %v2271
      %v2457 = vmul.f32 %v2276, %v2276
      %v2458 = vmul.f32 %v2281, %v2281
      %v2459 = vmul.f32 %v2286, %v2286
      %v2460 = vmul.f32 %v2291, %v2291
      %v2461 = vmul.f32 %v2296, %v2296
      %v2462 = vmul.f32 %v2301, %v2301
      %v2463 = vmul.f32 %v2306, %v2306
      %v2464 = vmul.f32 %v2311, %v2311
      %v2465 = vmul.f32 %v2316, %v2316
      %v2466 = vmul.f32 %v2321, %v2321
      %v2467 = vmul.f32 %v2326, %v2326
      %v2468 = vmul.f32 %v2331, %v2331
      %v2469 = vmul.f32 %v2336, %v2336
      %v2470 = vmul.f32 %v2341, %v2341
      %v2471 = vmul.f32 %v2346, %v2346
      %v2472 = vmul.f32 %v2351, %v2351
      %v2473 = vmul.f32 %v2356, %v2356
      %v2474 = vmul.f32 %v2361, %v2361
      %v2475 = vmul.f32 %v2366, %v2366
      %v2476 = vmul.f32 %v2371, %v2371
      %v2477 = vsel %vm378, %v2445, 0.0
      %v2478 = vsel %vm378, %v2446, 0.0
      %v2479 = vadd.f32 %v2477, %v2478
      %v2480 = vsel %vm378, %v2447, 0.0
      %v2481 = vadd.f32 %v2479, %v2480
      %v2482 = vsel %vm378, %v2448, 0.0
      %v2483 = vadd.f32 %v2481, %v2482
      %v2484 = vsel %vm378, %v2449, 0.0
      %v2485 = vadd.f32 %v2483, %v2484
      %v2486 = vsel %vm378, %v2450, 0.0
      %v2487 = vadd.f32 %v2485, %v2486
      %v2488 = vsel %vm378, %v2451, 0.0
      %v2489 = vadd.f32 %v2487, %v2488
      %v2490 = vsel %vm378, %v2452, 0.0
      %v2491 = vadd.f32 %v2489, %v2490
      %v2492 = vsel %vm378, %v2453, 0.0
      %v2493 = vadd.f32 %v2491, %v2492
      %v2494 = vsel %vm378, %v2454, 0.0
      %v2495 = vadd.f32 %v2493, %v2494
      %v2496 = vsel %vm378, %v2455, 0.0
      %v2497 = vadd.f32 %v2495, %v2496
      %v2498 = vsel %vm378, %v2456, 0.0
      %v2499 = vadd.f32 %v2497, %v2498
      %v2500 = vsel %vm378, %v2457, 0.0
      %v2501 = vadd.f32 %v2499, %v2500
      %v2502 = vsel %vm378, %v2458, 0.0
      %v2503 = vadd.f32 %v2501, %v2502
      %v2504 = vsel %vm378, %v2459, 0.0
      %v2505 = vadd.f32 %v2503, %v2504
      %v2506 = vsel %vm378, %v2460, 0.0
      %v2507 = vadd.f32 %v2505, %v2506
      %v2508 = vsel %vm378, %v2461, 0.0
      %v2509 = vadd.f32 %v2507, %v2508
      %v2510 = vsel %vm378, %v2462, 0.0
      %v2511 = vadd.f32 %v2509, %v2510
      %v2512 = vsel %vm378, %v2463, 0.0
      %v2513 = vadd.f32 %v2511, %v2512
      %v2514 = vsel %vm378, %v2464, 0.0
      %v2515 = vadd.f32 %v2513, %v2514
      %v2516 = vsel %vm378, %v2465, 0.0
      %v2517 = vadd.f32 %v2515, %v2516
      %v2518 = vsel %vm378, %v2466, 0.0
      %v2519 = vadd.f32 %v2517, %v2518
      %v2520 = vsel %vm378, %v2467, 0.0
      %v2521 = vadd.f32 %v2519, %v2520
      %v2522 = vsel %vm378, %v2468, 0.0
      %v2523 = vadd.f32 %v2521, %v2522
      %v2524 = vsel %vm378, %v2469, 0.0
      %v2525 = vadd.f32 %v2523, %v2524
      %v2526 = vsel %vm378, %v2470, 0.0
      %v2527 = vadd.f32 %v2525, %v2526
      %v2528 = vsel %vm378, %v2471, 0.0
      %v2529 = vadd.f32 %v2527, %v2528
      %v2530 = vsel %vm378, %v2472, 0.0
      %v2531 = vadd.f32 %v2529, %v2530
      %v2532 = vsel %vm378, %v2473, 0.0
      %v2533 = vadd.f32 %v2531, %v2532
      %v2534 = vsel %vm378, %v2474, 0.0
      %v2535 = vadd.f32 %v2533, %v2534
      %v2536 = vsel %vm378, %v2475, 0.0
      %v2537 = vadd.f32 %v2535, %v2536
      %v2538 = vsel %vm378, %v2476, 0.0
      %v2539 = vadd.f32 %v2537, %v2538
      %v2540 = vrot.slane %v2539, 4
      %v2541 = vadd.f32 %v2539, %v2540
      %v2542 = vrot.slane %v2541, 2
      %v2543 = vadd.f32 %v2541, %v2542
      %v2544 = vrot.slane %v2543, 1
      %v2545 = vadd.f32 %v2543, %v2544
      %2546 = vst.msk [vmem:[%s235 + $0x1] sm:$0x1] %vm2443, %v2545
      %2547 = vst.msk [vmem:[%s231] sm:$0xff] %vm378, %v2216
      %2548 = vst.msk [vmem:[%s231 + $0x8] sm:$0xff] %vm378, %v2221
      %2549 = vst.msk [vmem:[%s231 + $0x10] sm:$0xff] %vm378, %v2226
      %2550 = vst.msk [vmem:[%s231 + $0x18] sm:$0xff] %vm378, %v2231
      %2551 = vst.msk [vmem:[%s231 + $0x20] sm:$0xff] %vm378, %v2236
      %2552 = vst.msk [vmem:[%s231 + $0x28] sm:$0xff] %vm378, %v2241
      %2553 = vst.msk [vmem:[%s231 + $0x30] sm:$0xff] %vm378, %v2246
      %2554 = vst.msk [vmem:[%s231 + $0x38] sm:$0xff] %vm378, %v2251
      %2555 = vst.msk [vmem:[%s231 + $0x40] sm:$0xff] %vm378, %v2256
      %2556 = vst.msk [vmem:[%s231 + $0x48] sm:$0xff] %vm378, %v2261
      %2557 = vst.msk [vmem:[%s231 + $0x50] sm:$0xff] %vm378, %v2266
      %2558 = vst.msk [vmem:[%s231 + $0x58] sm:$0xff] %vm378, %v2271
      %2559 = vst.msk [vmem:[%s231 + $0x60] sm:$0xff] %vm378, %v2276
      %2560 = vst.msk [vmem:[%s231 + $0x68] sm:$0xff] %vm378, %v2281
      %2561 = vst.msk [vmem:[%s231 + $0x70] sm:$0xff] %vm378, %v2286
      %2562 = vst.msk [vmem:[%s231 + $0x78] sm:$0xff] %vm378, %v2291
      %2563 = vst.msk [vmem:[%s231 + $0x80] sm:$0xff] %vm378, %v2296
      %2564 = vst.msk [vmem:[%s231 + $0x88] sm:$0xff] %vm378, %v2301
      %2565 = vst.msk [vmem:[%s231 + $0x90] sm:$0xff] %vm378, %v2306
      %2566 = vst.msk [vmem:[%s231 + $0x98] sm:$0xff] %vm378, %v2311
      %2567 = vst.msk [vmem:[%s231 + $0xa0] sm:$0xff] %vm378, %v2316
      %2568 = vst.msk [vmem:[%s231 + $0xa8] sm:$0xff] %vm378, %v2321
      %2569 = vst.msk [vmem:[%s231 + $0xb0] sm:$0xff] %vm378, %v2326
      %2570 = vst.msk [vmem:[%s231 + $0xb8] sm:$0xff] %vm378, %v2331
      %2571 = vst.msk [vmem:[%s231 + $0xc0] sm:$0xff] %vm378, %v2336
      %2572 = vst.msk [vmem:[%s231 + $0xc8] sm:$0xff] %vm378, %v2341
      %2573 = vst.msk [vmem:[%s231 + $0xd0] sm:$0xff] %vm378, %v2346
      %2574 = vst.msk [vmem:[%s231 + $0xd8] sm:$0xff] %vm378, %v2351
      %2575 = vst.msk [vmem:[%s231 + $0xe0] sm:$0xff] %vm378, %v2356
      %2576 = vst.msk [vmem:[%s231 + $0xe8] sm:$0xff] %vm378, %v2361
      %2577 = vst.msk [vmem:[%s231 + $0xf0] sm:$0xff] %vm378, %v2366
      %2578 = vst.msk [vmem:[%s231 + $0xf8] sm:$0xff] %vm378, %v2371
      %p2579 = scmp.lt.s32.totalorder %s17, 1
      %s2580 = scalar_select %p2579, %s17, 1
      %s2581 = smul.addr %s2580, 32
      %s2582 = smul.addr %s2581, 8
      %s2583 = scalar_lea.vmem %s4, %s2582
      %p2584 = scmp.lt.s32.totalorder %s17, 1
      %s2585 = scalar_select %p2584, %s17, 1
      %s2586 = smul.addr %s2585, 2
      %s2587 = scalar_lea.vmem %s5, %s2586
      // Predicated region
      $region37: #{residual_block_forward.4} parent=35 // pred_check
        %p2588 = pneg %p124
      $region38: #{residual_block_forward.4} parent=35 // pred_check_branch
        %2590 = sbr.rel (%p2588) target = $region40
      $region39: #{residual_block_forward.4} parent=35 // pred_region
        _
      $region40: #{residual_block_forward.4} parent=35 // pred_fallthru
        _
      // Predicated region
      $region41: #{residual_block_forward.4} parent=35 // pred_check
        %p2591 = pneg %p150
      $region42: #{residual_block_forward.4} parent=35 // pred_check_branch
        %2593 = sbr.rel (%p2591) target = $region44
      $region43: #{residual_block_forward.4} parent=35 // pred_region
        _
      $region44: #{residual_block_forward.4} parent=35 // pred_fallthru
        _
    $region36: #{residual_block_forward.4} parent=5 // pred_fallthru
      _
    %p2594 = scmp.le.s32.totalorder 2, %s12
    // Predicated region
    $region45: #{residual_block_forward.4} parent=5 // pred_check
      %p2595 = pneg %p2594
    $region46: #{residual_block_forward.4} parent=5 // pred_check_branch
      %2597 = sbr.rel (%p2595) target = $region48
    $region47: #{residual_block_forward.4} parent=5 // pred_region
      %s2598 = ssub.s32 %s12, 2
      // Predicated region
      $region49: #{residual_block_forward.4} parent=47 // pred_check
        %p2599 = pneg %p130
      $region50: #{residual_block_forward.4} parent=47 // pred_check_branch
        %2601 = sbr.rel (%p2599) target = $region52
      $region51: #{residual_block_forward.4} parent=47 // pred_region
        %p2602 = scmp.lt.s32.totalorder %s18, 1
        %s2603 = scalar_select %p2602, %s18, 1
        %s2604 = smul.addr %s2603, 32
        %s2605 = smul.addr %s2604, 8
        %s2606 = scalar_lea.vmem %s4, %s2605
      $region52: #{residual_block_forward.4} parent=47 // pred_fallthru
        _
      // Predicated region
      $region53: #{residual_block_forward.4} parent=47 // pred_check
        %p2607 = pneg %p156
      $region54: #{residual_block_forward.4} parent=47 // pred_check_branch
        %2609 = sbr.rel (%p2607) target = $region56
      $region55: #{residual_block_forward.4} parent=47 // pred_region
        %p2610 = scmp.lt.s32.totalorder %s18, 1
        %s2611 = scalar_select %p2610, %s18, 1
        %s2612 = smul.addr %s2611, 2
        %s2613 = scalar_lea.vmem %s5, %s2612
      $region56: #{residual_block_forward.4} parent=47 // pred_fallthru
        _
    $region48: #{residual_block_forward.4} parent=5 // pred_fallthru
      _
  $region6: #{residual_block_forward.4} parent=0 // loop_footer
    %s16 = sadd.s32 1, %s12
  $region7: #{residual_block_forward.4} parent=0 // loop_footer_branch
    %11 = sbr.rel target = $region3
  $region8: #{residual_block_forward.4} parent=0 // loop_exit
    _

</llo_original>
